<compile_context>
chip_gen: v7x
topology: tpu7x:2x2x1
jax: 0.10.0
libtpu: 0.0.40
codegen_flags: <defaults>
</compile_context>

<pallas_src>
import math
import numpy as np
import jax
import jax.numpy as jnp
from jax import lax
from jax.experimental import pallas as pl
from jax.experimental.pallas import tpu as pltpu

KWS = (2, 3, 4, 5)          # width kernel sizes of the 4 parallel branches
N_BRANCH_OUT = 10           # out channels per branch
N_HEIGHT = 4                # input "height" rows == conv kernel height
N_CH = 4 * N_BRANCH_OUT     # 40 channels after the branch concat
FEAT = N_HEIGHT * N_CH      # 160 lanes: lane = h*40 + branch*10 + o
GUARD = 8                   # zero guard rows in the shift scratch buffer
NORM_EPS = 1e-12            # F.normalize eps


def _shifted(pad_ref, d, m):
    """Rows r -> value stored at row (r + d); zero-filled at the block edges."""
    return pad_ref[GUARD + d: GUARD + d + m, :]


def _inp_model2_kernel(x1_ref, mask_ref, w1_ref, b1_ref,
                       w2a_ref, w2b_ref, w2c_ref, w2d_ref, w2e_ref,
                       b2_ref, s_ref, st_ref, out_ref, pad_ref):
    m = x1_ref.shape[0]
    f = out_ref.shape[1]
    zeros_g = jnp.zeros((GUARD, f), jnp.float32)
    pad_ref[0:GUARD, :] = zeros_g               # zero guards (stay zero)
    pad_ref[GUARD + m:, :] = zeros_g

    # ---- Inp_Layer 1: four 'same' convs folded into a single matmul --------
    y1 = jnp.dot(x1_ref[...], w1_ref[...], preferred_element_type=jnp.float32)
    y1 = jnp.maximum(y1 + b1_ref[...], 0.0)

    # MaxPool2d((1, 5), stride (1,1)) along width.
    pad_ref[GUARD:GUARD + m, :] = y1
    p1 = y1
    for k in range(1, 5):
        p1 = jnp.maximum(p1, _shifted(pad_ref, k, m))
    # Zero the per-sample 'same'-padding rows (they are layer 2's zero pad).
    p1 = p1 * mask_ref[...]

    # F.normalize over the 40 channels of each height row (segment matmuls).
    ssq = jnp.dot(p1 * p1, s_ref[...], preferred_element_type=jnp.float32)
    inv = 1.0 / jnp.maximum(jnp.sqrt(ssq), NORM_EPS)
    h1 = p1 * jnp.dot(inv, st_ref[...], preferred_element_type=jnp.float32)

    # ---- Inp_Layer 2: one matmul per width tap d in {-2..2} ----------------
    pad_ref[GUARD:GUARD + m, :] = h1
    y2 = jnp.dot(h1, w2c_ref[...], preferred_element_type=jnp.float32)   # d=0
    for d, wref in ((-2, w2a_ref), (-1, w2b_ref), (1, w2d_ref), (2, w2e_ref)):
        y2 = y2 + jnp.dot(_shifted(pad_ref, d, m), wref[...],
                          preferred_element_type=jnp.float32)
    y2 = jnp.maximum(y2 + b2_ref[...], 0.0)

    # MaxPool2d((1, 3), stride (1,1)) along width.
    pad_ref[GUARD:GUARD + m, :] = y2
    p2 = y2
    for k in range(1, 3):
        p2 = jnp.maximum(p2, _shifted(pad_ref, k, m))

    ssq2 = jnp.dot(p2 * p2, s_ref[...], preferred_element_type=jnp.float32)
    inv2 = 1.0 / jnp.maximum(jnp.sqrt(ssq2), NORM_EPS)
    out_ref[...] = p2 * jnp.dot(inv2, st_ref[...],
                                preferred_element_type=jnp.float32)


# --------------------------- host-side weight folding ------------------------

def _same_pad(k):
    total = k - 1
    lo = total // 2
    return (lo, total - lo)      # PyTorch padding='same': extra pad on the right


def _build_tap_weights(branch_params, cin):
    """Per width-tap d in {-2..2}: dense [4*cin, 160] matrix folding the
    'same' height conv + branch concat.  Also returns the [1, 160] bias."""
    taps = []
    for d in range(-2, 3):
        m = np.zeros((N_HEIGHT * cin, FEAT), np.float32)
        for bi, ((w, b), kw) in enumerate(zip(branch_params, KWS)):
            wn = np.asarray(w, np.float32)                 # [10, cin, 4, kw]
            pad_l = _same_pad(kw)[0]
            kwi = d + pad_l
            if kwi < 0 or kwi >= kw:
                continue
            for h_out in range(N_HEIGHT):
                for h_in in range(N_HEIGHT):
                    kh = h_in - h_out + 1                  # height pad = (1, 2)
                    if kh < 0 or kh >= N_HEIGHT:
                        continue
                    col = h_out * N_CH + bi * N_BRANCH_OUT
                    m[h_in * cin:(h_in + 1) * cin, col:col + N_BRANCH_OUT] = \
                        wn[:, :, kh, kwi].T
        taps.append(m)
    bias = np.zeros((1, FEAT), np.float32)
    for bi, (w, b) in enumerate(branch_params):
        bn = np.asarray(b, np.float32)
        for h_out in range(N_HEIGHT):
            col = h_out * N_CH + bi * N_BRANCH_OUT
            bias[0, col:col + N_BRANCH_OUT] = bn
    return taps, bias


# --------------------------------- wrapper -----------------------------------

def inp_model2_forward(x_nchw, params1, params2, block_b=8):
    """x_nchw: [N, 1, 4, W] -> [N, 40 * 4 * (W - 6)] (matches torch Flatten)."""
    N, C, H, W = x_nchw.shape
    assert C == 1 and H == N_HEIGHT and W >= 7
    Wp, W1, W2 = W + 4, W - 4, W - 6

    # Keep the per-block row count a multiple of 8 (sublane tiling).
    step = 8 // math.gcd(Wp, 8)
    block_b = max(1, int(block_b))
    block_b = ((block_b + step - 1) // step) * step
    nb = -(-N // block_b)
    n_pad = nb * block_b
    M = block_b * Wp

    # ---- fold the PyTorch conv weights into per-tap dense matrices ----
    taps1, b1 = _build_tap_weights(params1, 1)
    w1_all = jnp.asarray(np.concatenate(taps1, axis=0))        # [20, 160]
    b1 = jnp.asarray(b1)
    taps2, b2 = _build_tap_weights(params2, N_CH)
    w2 = [jnp.asarray(t) for t in taps2]                       # 5 x [160, 160]
    b2 = jnp.asarray(b2)

    s_np = np.zeros((FEAT, N_HEIGHT), np.float32)              # channel-segment
    s_np[np.arange(FEAT), np.arange(FEAT) // N_CH] = 1.0       # sum matrix
    s_mat = jnp.asarray(s_np)
    st_mat = jnp.asarray(s_np.T)

    mrow = np.zeros((Wp, 1), np.float32)
    mrow[2:2 + W1] = 1.0                                       # valid pooled rows
    mask1 = jnp.asarray(np.tile(mrow, (block_b, 1)))           # [M, 1]

    # ---- layer-1 width im2col built in the wrapper (pure layout work) ----
    x_whc = jnp.transpose(x_nchw[:, 0], (0, 2, 1))             # [N, W, 4]
    x_whc = jnp.pad(x_whc, ((0, n_pad - N), (4, 4), (0, 0)))   # [n_pad, W+8, 4]
    x1 = jnp.concatenate(
        [x_whc[:, 2 + d: 2 + d + Wp, :] for d in range(-2, 3)], axis=2)
    x1 = x1.reshape(n_pad * Wp, 5 * N_HEIGHT)                  # [n_pad*Wp, 20]

    params = [mask1, w1_all, b1, *w2, b2, s_mat, st_mat]
    full = lambda a: pl.BlockSpec(a.shape, lambda i: (0,) * a.ndim)
    in_specs = [pl.BlockSpec((M, 5 * N_HEIGHT), lambda i: (i, 0))]
    in_specs += [full(a) for a in params]

    out = pl.pallas_call(
        _inp_model2_kernel,
        out_shape=jax.ShapeDtypeStruct((n_pad * Wp, FEAT), jnp.float32),
        grid=(nb,),
        in_specs=in_specs,
        out_specs=pl.BlockSpec((M, FEAT), lambda i: (i, 0)),
        scratch_shapes=[pltpu.VMEM((M + 2 * GUARD, FEAT), jnp.float32)],
        compiler_params=pltpu.CompilerParams(
            dimension_semantics=("parallel",)),
    )(x1, *params)

    # Extract valid rows and apply the NCHW flatten permutation in the wrapper.
    out = out.reshape(n_pad, Wp, FEAT)[:N, 2:2 + W2, :]        # [N, W2, 160]
    out = out.reshape(N, W2, N_HEIGHT, N_CH)
    out = jnp.transpose(out, (0, 3, 2, 1))                     # [N, 40, 4, W2]
    return out.reshape(N, N_CH * N_HEIGHT * W2)


# ----------------------------- params & reference ----------------------------

def init_params(key):
    def make_layer(key, cin):
        branch = []
        for kw in KWS:
            key, k1, k2 = jax.random.split(key, 3)
            fan_in = cin * N_HEIGHT * kw
            w = jax.random.normal(k1, (N_BRANCH_OUT, cin, N_HEIGHT, kw),
                                  jnp.float32) / np.sqrt(fan_in)
            b = 0.05 * jax.random.normal(k2, (N_BRANCH_OUT,), jnp.float32)
            branch.append((w, b))
        return key, branch
    key, p1 = make_layer(key, 1)
    key, p2 = make_layer(key, N_CH)
    return p1, p2


def _inp_layer_ref(x, branch_params, out_max):
    outs = []
    for (w, b), kw in zip(branch_params, KWS):
        y = lax.conv_general_dilated(
            x, w, window_strides=(1, 1),
            padding=(_same_pad(N_HEIGHT), _same_pad(kw)),
            dimension_numbers=("NCHW", "OIHW", "NCHW"),
            precision=lax.Precision.HIGHEST)
        y = jnp.maximum(y + b.reshape(1, -1, 1, 1), 0.0)
        y = lax.reduce_window(y, -jnp.inf, lax.max,
                              (1, 1, 1, out_max), (1, 1, 1, 1), "VALID")
        outs.append(y)
    out = jnp.concatenate(outs, axis=1)
    norm = jnp.sqrt(jnp.sum(out * out, axis=1, keepdims=True))
    return out / jnp.maximum(norm, NORM_EPS)


def reference_forward(x, params1, params2):
    h = _inp_layer_ref(x, params1, 5)
    h = _inp_layer_ref(h, params2, 3)
    return h.reshape(h.shape[0], -1)


if __name__ == "__main__":
    key = jax.random.PRNGKey(0)
    key, kx = jax.random.split(key)

    N, W = 16, 20                                   # seq_n20 -> width 20
    x = jax.random.normal(kx, (N, 1, 4, W), jnp.float32)
    params1, params2 = init_params(key)

    out = jax.block_until_ready(inp_model2_forward(x, params1, params2, block_b=8))
    ref = jax.block_until_ready(reference_forward(x, params1, params2))

    assert out.shape == (N, N_CH * N_HEIGHT * (W - 6)), out.shape
    np.testing.assert_allclose(np.asarray(out), np.asarray(ref),
                               rtol=2e-3, atol=2e-3)
    print("KERNEL_OK")
</pallas_src>

<mosaic_0001>
module attributes {stable_mosaic.version = 11 : i64} {
  func.func @_inp_model2_kernel(%arg0: i32, %arg1: memref<192x20xf32, #tpu.memory_space<vmem>>, %arg2: memref<192x1xf32, #tpu.memory_space<vmem>>, %arg3: memref<20x160xf32, #tpu.memory_space<vmem>>, %arg4: memref<1x160xf32, #tpu.memory_space<vmem>>, %arg5: memref<160x160xf32, #tpu.memory_space<vmem>>, %arg6: memref<160x160xf32, #tpu.memory_space<vmem>>, %arg7: memref<160x160xf32, #tpu.memory_space<vmem>>, %arg8: memref<160x160xf32, #tpu.memory_space<vmem>>, %arg9: memref<160x160xf32, #tpu.memory_space<vmem>>, %arg10: memref<1x160xf32, #tpu.memory_space<vmem>>, %arg11: memref<160x4xf32, #tpu.memory_space<vmem>>, %arg12: memref<4x160xf32, #tpu.memory_space<vmem>>, %arg13: memref<192x160xf32, #tpu.memory_space<vmem>>, %arg14: memref<208x160xf32, #tpu.memory_space<vmem>>) attributes {dimension_semantics = [#tpu.dimension_semantics<parallel>], iteration_bounds = array<i64: 2>, scalar_prefetch = 0 : i64, scratch_operands = 1 : i64, tpu.core_type = #tpu.core_type<tc>, window_params = [{transform_indices = @transform_0, window_bounds = array<i64: 192, 20>}, {pipeline_mode = #tpu.pipeline_mode<synchronous>, transform_indices = @transform_1, window_bounds = array<i64: 192, 1>}, {pipeline_mode = #tpu.pipeline_mode<synchronous>, transform_indices = @transform_2, window_bounds = array<i64: 20, 160>}, {pipeline_mode = #tpu.pipeline_mode<synchronous>, transform_indices = @transform_3, window_bounds = array<i64: 1, 160>}, {pipeline_mode = #tpu.pipeline_mode<synchronous>, transform_indices = @transform_4, window_bounds = array<i64: 160, 160>}, {pipeline_mode = #tpu.pipeline_mode<synchronous>, transform_indices = @transform_5, window_bounds = array<i64: 160, 160>}, {pipeline_mode = #tpu.pipeline_mode<synchronous>, transform_indices = @transform_6, window_bounds = array<i64: 160, 160>}, {pipeline_mode = #tpu.pipeline_mode<synchronous>, transform_indices = @transform_7, window_bounds = array<i64: 160, 160>}, {pipeline_mode = #tpu.pipeline_mode<synchronous>, transform_indices = @transform_8, window_bounds = array<i64: 160, 160>}, {pipeline_mode = #tpu.pipeline_mode<synchronous>, transform_indices = @transform_9, window_bounds = array<i64: 1, 160>}, {pipeline_mode = #tpu.pipeline_mode<synchronous>, transform_indices = @transform_10, window_bounds = array<i64: 160, 4>}, {pipeline_mode = #tpu.pipeline_mode<synchronous>, transform_indices = @transform_11, window_bounds = array<i64: 4, 160>}, {transform_indices = @transform_12, window_bounds = array<i64: 192, 160>}]} {
    %cst = arith.constant 0.000000e+00 : f32
    %0 = vector.broadcast %cst : f32 to vector<8x160xf32>
    %c0 = arith.constant 0 : index
    %c0_0 = arith.constant 0 : index
    %1 = vector.load %arg14[%c0, %c0_0] : memref<208x160xf32, #tpu.memory_space<vmem>>, vector<8x160xf32>
    tpu.vector_store %arg14[%c0, %c0_0], %0 {strides = array<i32>} : memref<208x160xf32, #tpu.memory_space<vmem>>, vector<8x160xf32>,
    %c200 = arith.constant 200 : index
    %c0_1 = arith.constant 0 : index
    %2 = vector.load %arg14[%c200, %c0_1] : memref<208x160xf32, #tpu.memory_space<vmem>>, vector<8x160xf32>
    tpu.vector_store %arg14[%c200, %c0_1], %0 {strides = array<i32>} : memref<208x160xf32, #tpu.memory_space<vmem>>, vector<8x160xf32>,
    %c0_2 = arith.constant 0 : index
    %c0_3 = arith.constant 0 : index
    %3 = vector.load %arg1[%c0_2, %c0_3] : memref<192x20xf32, #tpu.memory_space<vmem>>, vector<192x20xf32>
    %c0_4 = arith.constant 0 : index
    %c0_5 = arith.constant 0 : index
    %4 = vector.load %arg3[%c0_4, %c0_5] : memref<20x160xf32, #tpu.memory_space<vmem>>, vector<20x160xf32>
    %cst_6 = arith.constant dense<0.000000e+00> : vector<192x160xf32>
    %5 = tpu.matmul %3, %4, %cst_6 {dimension_numbers = #tpu.dot_dimension_numbers<[1], [0], [0], [1], [0, 0, 1, 1], [], []>} : vector<192x20xf32>, vector<20x160xf32>, vector<192x160xf32> -> vector<192x160xf32>
    %c0_7 = arith.constant 0 : index
    %c0_8 = arith.constant 0 : index
    %6 = vector.load %arg4[%c0_7, %c0_8] : memref<1x160xf32, #tpu.memory_space<vmem>>, vector<1x160xf32>
    %7 = vector.broadcast %6 : vector<1x160xf32> to vector<192x160xf32>
    %8 = arith.addf %5, %7 : vector<192x160xf32>
    %cst_9 = arith.constant 0.000000e+00 : f32
    %9 = vector.broadcast %cst_9 : f32 to vector<192x160xf32>
    %10 = arith.maximumf %8, %9 : vector<192x160xf32>
    %c8 = arith.constant 8 : index
    %c0_10 = arith.constant 0 : index
    %11 = vector.load %arg14[%c8, %c0_10] : memref<208x160xf32, #tpu.memory_space<vmem>>, vector<192x160xf32>
    tpu.vector_store %arg14[%c8, %c0_10], %10 {strides = array<i32>} : memref<208x160xf32, #tpu.memory_space<vmem>>, vector<192x160xf32>,
    %c9 = arith.constant 9 : index
    %c0_11 = arith.constant 0 : index
    %12 = vector.load %arg14[%c9, %c0_11] : memref<208x160xf32, #tpu.memory_space<vmem>>, vector<192x160xf32>
    %13 = arith.maximumf %10, %12 : vector<192x160xf32>
    %c10 = arith.constant 10 : index
    %c0_12 = arith.constant 0 : index
    %14 = vector.load %arg14[%c10, %c0_12] : memref<208x160xf32, #tpu.memory_space<vmem>>, vector<192x160xf32>
    %15 = arith.maximumf %13, %14 : vector<192x160xf32>
    %c11 = arith.constant 11 : index
    %c0_13 = arith.constant 0 : index
    %16 = vector.load %arg14[%c11, %c0_13] : memref<208x160xf32, #tpu.memory_space<vmem>>, vector<192x160xf32>
    %17 = arith.maximumf %15, %16 : vector<192x160xf32>
    %c12 = arith.constant 12 : index
    %c0_14 = arith.constant 0 : index
    %18 = vector.load %arg14[%c12, %c0_14] : memref<208x160xf32, #tpu.memory_space<vmem>>, vector<192x160xf32>
    %19 = arith.maximumf %17, %18 : vector<192x160xf32>
    %c0_15 = arith.constant 0 : index
    %c0_16 = arith.constant 0 : index
    %20 = vector.load %arg2[%c0_15, %c0_16] : memref<192x1xf32, #tpu.memory_space<vmem>>, vector<192x1xf32>
    %21 = vector.broadcast %20 : vector<192x1xf32> to vector<192x160xf32>
    %22 = arith.mulf %19, %21 : vector<192x160xf32>
    %23 = arith.mulf %22, %22 : vector<192x160xf32>
    %c0_17 = arith.constant 0 : index
    %c0_18 = arith.constant 0 : index
    %24 = vector.load %arg11[%c0_17, %c0_18] : memref<160x4xf32, #tpu.memory_space<vmem>>, vector<160x4xf32>
    %cst_19 = arith.constant dense<0.000000e+00> : vector<192x4xf32>
    %25 = tpu.matmul %23, %24, %cst_19 {dimension_numbers = #tpu.dot_dimension_numbers<[1], [0], [0], [1], [0, 0, 1, 1], [], []>} : vector<192x160xf32>, vector<160x4xf32>, vector<192x4xf32> -> vector<192x4xf32>
    %26 = math.sqrt %25 : vector<192x4xf32>
    %cst_20 = arith.constant 9.99999996E-13 : f32
    %27 = vector.broadcast %cst_20 : f32 to vector<192x4xf32>
    %28 = arith.maximumf %26, %27 : vector<192x4xf32>
    %cst_21 = arith.constant 1.000000e+00 : f32
    %29 = vector.broadcast %cst_21 : f32 to vector<192x4xf32>
    %30 = arith.divf %29, %28 : vector<192x4xf32>
    %c0_22 = arith.constant 0 : index
    %c0_23 = arith.constant 0 : index
    %31 = vector.load %arg12[%c0_22, %c0_23] : memref<4x160xf32, #tpu.memory_space<vmem>>, vector<4x160xf32>
    %cst_24 = arith.constant dense<0.000000e+00> : vector<192x160xf32>
    %32 = tpu.matmul %30, %31, %cst_24 {dimension_numbers = #tpu.dot_dimension_numbers<[1], [0], [0], [1], [0, 0, 1, 1], [], []>} : vector<192x4xf32>, vector<4x160xf32>, vector<192x160xf32> -> vector<192x160xf32>
    %33 = arith.mulf %22, %32 : vector<192x160xf32>
    %c8_25 = arith.constant 8 : index
    %c0_26 = arith.constant 0 : index
    %34 = vector.load %arg14[%c8_25, %c0_26] : memref<208x160xf32, #tpu.memory_space<vmem>>, vector<192x160xf32>
    tpu.vector_store %arg14[%c8_25, %c0_26], %33 {strides = array<i32>} : memref<208x160xf32, #tpu.memory_space<vmem>>, vector<192x160xf32>,
    %c0_27 = arith.constant 0 : index
    %c0_28 = arith.constant 0 : index
    %35 = vector.load %arg7[%c0_27, %c0_28] : memref<160x160xf32, #tpu.memory_space<vmem>>, vector<160x160xf32>
    %cst_29 = arith.constant dense<0.000000e+00> : vector<192x160xf32>
    %36 = tpu.matmul %33, %35, %cst_29 {dimension_numbers = #tpu.dot_dimension_numbers<[1], [0], [0], [1], [0, 0, 1, 1], [], []>} : vector<192x160xf32>, vector<160x160xf32>, vector<192x160xf32> -> vector<192x160xf32>
    %c6 = arith.constant 6 : index
    %c0_30 = arith.constant 0 : index
    %37 = vector.load %arg14[%c6, %c0_30] : memref<208x160xf32, #tpu.memory_space<vmem>>, vector<192x160xf32>
    %c0_31 = arith.constant 0 : index
    %c0_32 = arith.constant 0 : index
    %38 = vector.load %arg5[%c0_31, %c0_32] : memref<160x160xf32, #tpu.memory_space<vmem>>, vector<160x160xf32>
    %cst_33 = arith.constant dense<0.000000e+00> : vector<192x160xf32>
    %39 = tpu.matmul %37, %38, %cst_33 {dimension_numbers = #tpu.dot_dimension_numbers<[1], [0], [0], [1], [0, 0, 1, 1], [], []>} : vector<192x160xf32>, vector<160x160xf32>, vector<192x160xf32> -> vector<192x160xf32>
    %40 = arith.addf %36, %39 : vector<192x160xf32>
    %c7 = arith.constant 7 : index
    %c0_34 = arith.constant 0 : index
    %41 = vector.load %arg14[%c7, %c0_34] : memref<208x160xf32, #tpu.memory_space<vmem>>, vector<192x160xf32>
    %c0_35 = arith.constant 0 : index
    %c0_36 = arith.constant 0 : index
    %42 = vector.load %arg6[%c0_35, %c0_36] : memref<160x160xf32, #tpu.memory_space<vmem>>, vector<160x160xf32>
    %cst_37 = arith.constant dense<0.000000e+00> : vector<192x160xf32>
    %43 = tpu.matmul %41, %42, %cst_37 {dimension_numbers = #tpu.dot_dimension_numbers<[1], [0], [0], [1], [0, 0, 1, 1], [], []>} : vector<192x160xf32>, vector<160x160xf32>, vector<192x160xf32> -> vector<192x160xf32>
    %44 = arith.addf %40, %43 : vector<192x160xf32>
    %c9_38 = arith.constant 9 : index
    %c0_39 = arith.constant 0 : index
    %45 = vector.load %arg14[%c9_38, %c0_39] : memref<208x160xf32, #tpu.memory_space<vmem>>, vector<192x160xf32>
    %c0_40 = arith.constant 0 : index
    %c0_41 = arith.constant 0 : index
    %46 = vector.load %arg8[%c0_40, %c0_41] : memref<160x160xf32, #tpu.memory_space<vmem>>, vector<160x160xf32>
    %cst_42 = arith.constant dense<0.000000e+00> : vector<192x160xf32>
    %47 = tpu.matmul %45, %46, %cst_42 {dimension_numbers = #tpu.dot_dimension_numbers<[1], [0], [0], [1], [0, 0, 1, 1], [], []>} : vector<192x160xf32>, vector<160x160xf32>, vector<192x160xf32> -> vector<192x160xf32>
    %48 = arith.addf %44, %47 : vector<192x160xf32>
    %c10_43 = arith.constant 10 : index
    %c0_44 = arith.constant 0 : index
    %49 = vector.load %arg14[%c10_43, %c0_44] : memref<208x160xf32, #tpu.memory_space<vmem>>, vector<192x160xf32>
    %c0_45 = arith.constant 0 : index
    %c0_46 = arith.constant 0 : index
    %50 = vector.load %arg9[%c0_45, %c0_46] : memref<160x160xf32, #tpu.memory_space<vmem>>, vector<160x160xf32>
    %cst_47 = arith.constant dense<0.000000e+00> : vector<192x160xf32>
    %51 = tpu.matmul %49, %50, %cst_47 {dimension_numbers = #tpu.dot_dimension_numbers<[1], [0], [0], [1], [0, 0, 1, 1], [], []>} : vector<192x160xf32>, vector<160x160xf32>, vector<192x160xf32> -> vector<192x160xf32>
    %52 = arith.addf %48, %51 : vector<192x160xf32>
    %c0_48 = arith.constant 0 : index
    %c0_49 = arith.constant 0 : index
    %53 = vector.load %arg10[%c0_48, %c0_49] : memref<1x160xf32, #tpu.memory_space<vmem>>, vector<1x160xf32>
    %54 = vector.broadcast %53 : vector<1x160xf32> to vector<192x160xf32>
    %55 = arith.addf %52, %54 : vector<192x160xf32>
    %cst_50 = arith.constant 0.000000e+00 : f32
    %56 = vector.broadcast %cst_50 : f32 to vector<192x160xf32>
    %57 = arith.maximumf %55, %56 : vector<192x160xf32>
    %c8_51 = arith.constant 8 : index
    %c0_52 = arith.constant 0 : index
    %58 = vector.load %arg14[%c8_51, %c0_52] : memref<208x160xf32, #tpu.memory_space<vmem>>, vector<192x160xf32>
    tpu.vector_store %arg14[%c8_51, %c0_52], %57 {strides = array<i32>} : memref<208x160xf32, #tpu.memory_space<vmem>>, vector<192x160xf32>,
    %c9_53 = arith.constant 9 : index
    %c0_54 = arith.constant 0 : index
    %59 = vector.load %arg14[%c9_53, %c0_54] : memref<208x160xf32, #tpu.memory_space<vmem>>, vector<192x160xf32>
    %60 = arith.maximumf %57, %59 : vector<192x160xf32>
    %c10_55 = arith.constant 10 : index
    %c0_56 = arith.constant 0 : index
    %61 = vector.load %arg14[%c10_55, %c0_56] : memref<208x160xf32, #tpu.memory_space<vmem>>, vector<192x160xf32>
    %62 = arith.maximumf %60, %61 : vector<192x160xf32>
    %63 = arith.mulf %62, %62 : vector<192x160xf32>
    %c0_57 = arith.constant 0 : index
    %c0_58 = arith.constant 0 : index
    %64 = vector.load %arg11[%c0_57, %c0_58] : memref<160x4xf32, #tpu.memory_space<vmem>>, vector<160x4xf32>
    %cst_59 = arith.constant dense<0.000000e+00> : vector<192x4xf32>
    %65 = tpu.matmul %63, %64, %cst_59 {dimension_numbers = #tpu.dot_dimension_numbers<[1], [0], [0], [1], [0, 0, 1, 1], [], []>} : vector<192x160xf32>, vector<160x4xf32>, vector<192x4xf32> -> vector<192x4xf32>
    %66 = math.sqrt %65 : vector<192x4xf32>
    %cst_60 = arith.constant 9.99999996E-13 : f32
    %67 = vector.broadcast %cst_60 : f32 to vector<192x4xf32>
    %68 = arith.maximumf %66, %67 : vector<192x4xf32>
    %cst_61 = arith.constant 1.000000e+00 : f32
    %69 = vector.broadcast %cst_61 : f32 to vector<192x4xf32>
    %70 = arith.divf %69, %68 : vector<192x4xf32>
    %c0_62 = arith.constant 0 : index
    %c0_63 = arith.constant 0 : index
    %71 = vector.load %arg12[%c0_62, %c0_63] : memref<4x160xf32, #tpu.memory_space<vmem>>, vector<4x160xf32>
    %cst_64 = arith.constant dense<0.000000e+00> : vector<192x160xf32>
    %72 = tpu.matmul %70, %71, %cst_64 {dimension_numbers = #tpu.dot_dimension_numbers<[1], [0], [0], [1], [0, 0, 1, 1], [], []>} : vector<192x4xf32>, vector<4x160xf32>, vector<192x160xf32> -> vector<192x160xf32>
    %73 = arith.mulf %62, %72 : vector<192x160xf32>
    %c0_65 = arith.constant 0 : index
    %c0_66 = arith.constant 0 : index
    %74 = vector.load %arg13[%c0_65, %c0_66] : memref<192x160xf32, #tpu.memory_space<vmem>>, vector<192x160xf32>
    tpu.vector_store %arg13[%c0_65, %c0_66], %73 {strides = array<i32>} : memref<192x160xf32, #tpu.memory_space<vmem>>, vector<192x160xf32>,
    return
  }
  func.func @transform_0(%arg0: i32) -> (i32, i32) {
    %c0_i32 = arith.constant 0 : i32
    %c0_i32_0 = arith.constant 0 : i32
    return %arg0, %c0_i32 : i32, i32
  }
  func.func @transform_1(%arg0: i32) -> (i32, i32) {
    %c0_i32 = arith.constant 0 : i32
    %c0_i32_0 = arith.constant 0 : i32
    %c0_i32_1 = arith.constant 0 : i32
    return %c0_i32, %c0_i32_0 : i32, i32
  }
  func.func @transform_2(%arg0: i32) -> (i32, i32) {
    %c0_i32 = arith.constant 0 : i32
    %c0_i32_0 = arith.constant 0 : i32
    %c0_i32_1 = arith.constant 0 : i32
    return %c0_i32, %c0_i32_0 : i32, i32
  }
  func.func @transform_3(%arg0: i32) -> (i32, i32) {
    %c0_i32 = arith.constant 0 : i32
    %c0_i32_0 = arith.constant 0 : i32
    %c0_i32_1 = arith.constant 0 : i32
    return %c0_i32, %c0_i32_0 : i32, i32
  }
  func.func @transform_4(%arg0: i32) -> (i32, i32) {
    %c0_i32 = arith.constant 0 : i32
    %c0_i32_0 = arith.constant 0 : i32
    %c0_i32_1 = arith.constant 0 : i32
    return %c0_i32, %c0_i32_0 : i32, i32
  }
  func.func @transform_5(%arg0: i32) -> (i32, i32) {
    %c0_i32 = arith.constant 0 : i32
    %c0_i32_0 = arith.constant 0 : i32
    %c0_i32_1 = arith.constant 0 : i32
    return %c0_i32, %c0_i32_0 : i32, i32
  }
  func.func @transform_6(%arg0: i32) -> (i32, i32) {
    %c0_i32 = arith.constant 0 : i32
    %c0_i32_0 = arith.constant 0 : i32
    %c0_i32_1 = arith.constant 0 : i32
    return %c0_i32, %c0_i32_0 : i32, i32
  }
  func.func @transform_7(%arg0: i32) -> (i32, i32) {
    %c0_i32 = arith.constant 0 : i32
    %c0_i32_0 = arith.constant 0 : i32
    %c0_i32_1 = arith.constant 0 : i32
    return %c0_i32, %c0_i32_0 : i32, i32
  }
  func.func @transform_8(%arg0: i32) -> (i32, i32) {
    %c0_i32 = arith.constant 0 : i32
    %c0_i32_0 = arith.constant 0 : i32
    %c0_i32_1 = arith.constant 0 : i32
    return %c0_i32, %c0_i32_0 : i32, i32
  }
  func.func @transform_9(%arg0: i32) -> (i32, i32) {
    %c0_i32 = arith.constant 0 : i32
    %c0_i32_0 = arith.constant 0 : i32
    %c0_i32_1 = arith.constant 0 : i32
    return %c0_i32, %c0_i32_0 : i32, i32
  }
  func.func @transform_10(%arg0: i32) -> (i32, i32) {
    %c0_i32 = arith.constant 0 : i32
    %c0_i32_0 = arith.constant 0 : i32
    %c0_i32_1 = arith.constant 0 : i32
    return %c0_i32, %c0_i32_0 : i32, i32
  }
  func.func @transform_11(%arg0: i32) -> (i32, i32) {
    %c0_i32 = arith.constant 0 : i32
    %c0_i32_0 = arith.constant 0 : i32
    %c0_i32_1 = arith.constant 0 : i32
    return %c0_i32, %c0_i32_0 : i32, i32
  }
  func.func @transform_12(%arg0: i32) -> (i32, i32) {
    %c0_i32 = arith.constant 0 : i32
    %c0_i32_0 = arith.constant 0 : i32
    return %arg0, %c0_i32 : i32, i32
  }
}

</mosaic_0001>

<llo_original>
// kernel: tpu_custom_call.1
$region0: #{tpu_custom_call.1}
  #allocation0 [shape = 'u32[]', space=smem, size = 0x4, offset = 0x4, fixed_abs, tag = 'smem constant byte address 0x4 - core index']
  #allocation1 [shape = 'u32[144,128]{1,0:T(1,128)}', space=vmem, size = 0x12000, scoped, tag = 'internal scratch']
  #allocation2 [shape = 'f32[208,160]{1,0:T(8,128)}', space=vmem, size = 0x34000, scoped, tag = 'scratch operand']
  %s0 = inlined_call_operand.vmem [shape: f32[384,20], index: 0, kind: input, shape index: {}]
  %s1 = inlined_call_operand.vmem [shape: f32[192,1], index: 1, kind: input, shape index: {}]
  %s2 = inlined_call_operand.vmem [shape: f32[20,160], index: 2, kind: input, shape index: {}]
  %s3 = inlined_call_operand.vmem [shape: f32[1,160], index: 3, kind: input, shape index: {}]
  %s4 = inlined_call_operand.vmem [shape: f32[160,160], index: 4, kind: input, shape index: {}]
  %s5 = inlined_call_operand.vmem [shape: f32[160,160], index: 5, kind: input, shape index: {}]
  %s6 = inlined_call_operand.hbm [shape: f32[160,160], index: 6, kind: input, shape index: {}]
  %s7 = inlined_call_operand.hbm [shape: f32[160,160], index: 7, kind: input, shape index: {}]
  %s8 = inlined_call_operand.hbm [shape: f32[160,160], index: 8, kind: input, shape index: {}]
  %s9 = inlined_call_operand.vmem [shape: f32[1,160], index: 9, kind: input, shape index: {}]
  %s10 = inlined_call_operand.vmem [shape: f32[160,4], index: 10, kind: input, shape index: {}]
  %s11 = inlined_call_operand.vmem [shape: f32[4,160], index: 11, kind: input, shape index: {}]
  %s12 = inlined_call_operand.vmem [shape: f32[384,160], index: 12, kind: output, shape index: {}]
  %s13 = sld [smem:[#allocation0]]
  $region93: #{tpu_custom_call.1} parent=0
    _
  %s15 = ssub.s32 1, %s13
  %s16 = scalar_select 0, %s15, %s13
  $region1: #{tpu_custom_call.1} parent=0
    #allocation3 [shape = 'u8[163840]{0}', space=vmem, size = 0x28000, scoped, tag = 'input window, operand 6, single buffered']
    #allocation4 [shape = 's32[2]{0}', space=sflag, size = 0x8, scoped, tag = 'scoped memory for tpu_custom_call.1']
    #allocation5 [shape = 'u8[163840]{0}', space=vmem, size = 0x28000, scoped, tag = 'input window, operand 7, single buffered']
    #allocation6 [shape = 's32[1]{0}', space=sflag, size = 0x4, scoped, tag = 'scoped memory for tpu_custom_call.1']
    #allocation7 [shape = 'u8[163840]{0}', space=vmem, size = 0x28000, scoped, tag = 'input window, operand 8, single buffered']
    %17 = vsyncpa [#allocation4], 0
    %18 = vsyncpa [#allocation6], 0
    loop: start=0, step=1, limit=4
    $region2: #{tpu_custom_call.1} parent=1 // loop_pre_header
      _
    $region3: #{tpu_custom_call.1} parent=1 // loop_header
      %s20 = sphi 0, %s24
      %p21 = scmp.ge.s32.totalorder %s20, 4
      %s30 = sphi 0, %s32
      %s33 = sphi 0, %s30
      %s34 = sphi 0, %s33
      %s50 = sphi 0, %s34
      %s54 = sphi 0, %s54
      %s56 = sphi 0, %s54
      %s57 = sphi 0, %s56
      %s71 = sphi 0, %s57
      %s75 = sphi 0, %s75
      %s77 = sphi 0, %s75
      %s78 = sphi 0, %s77
      %s92 = sphi 0, %s78
      %s96 = sphi 0, %s96
      %s98 = sphi 0, %s96
      %s99 = sphi 0, %s98
      %s113 = sphi 0, %s99
      %s117 = sphi 0, %s117
      %s119 = sphi 0, %s117
      %s120 = sphi 0, %s119
      %s134 = sphi 0, %s120
      %s138 = sphi 0, %s138
      %s140 = sphi 0, %s138
      %s141 = sphi 0, %s140
      %s155 = sphi 0, %s141
      %s159 = sphi 0, %s159
      %s161 = sphi 0, %s159
      %s162 = sphi 0, %s161
      %s176 = sphi 0, %s162
      %s180 = sphi 0, %s180
      %s182 = sphi 0, %s180
      %s183 = sphi 0, %s182
      %s197 = sphi 0, %s183
      %s201 = sphi 0, %s201
      %s203 = sphi 0, %s201
      %s204 = sphi 0, %s203
      %s218 = sphi 0, %s204
      %s222 = sphi 0, %s222
      %s224 = sphi 0, %s222
      %s225 = sphi 0, %s224
      %s239 = sphi 0, %s225
      %s243 = sphi 0, %s243
      %s245 = sphi 0, %s243
      %s246 = sphi 0, %s245
      %s260 = sphi 0, %s246
      %s264 = sphi 0, %s264
      %s266 = sphi 0, %s264
      %s267 = sphi 0, %s266
      %s281 = sphi 0, %s267
      %s287 = sphi 0, %s289
      %s290 = sphi 0, %s287
      %s291 = sphi 0, %s290
      %s307 = sphi 0, %s291
    $region4: #{tpu_custom_call.1} parent=1 // loop_header_branch
      %23 = sbr.rel (%p21) target = $region8
    $region5: #{tpu_custom_call.1} parent=1 // loop_body
      %s25 = ssub.s32 %s20, 1
      %s26 = ssub.s32 %s20, 2
      %s27 = sadd.s32 %s20, 1
      %s28 = ssub.s32 %s20, %s27
      %p29 = scmp.eq.s32.totalorder %s28, 0
      %s31 = sadd.s32 %s30, 1
      %s32 = scalar_select %p29, %s30, %s31
      %p35 = pneg %p29
      %p36 = scmp.eq.s32.totalorder %s20, 1
      %p37 = por %p35, %p36
      %p38 = scmp.ne.s32.totalorder %s30, %s33
      %p39 = scmp.eq.s32.totalorder %s20, 0
      %p40 = por %p38, %p39
      %p41 = scmp.ne.s32.totalorder %s30, %s33
      %p42 = scmp.eq.s32.totalorder %s25, 1
      %p43 = por %p41, %p42
      %p44 = scmp.ne.s32.totalorder %s33, %s34
      %p45 = scmp.eq.s32.totalorder %s25, 0
      %p46 = por %p44, %p45
      %p47 = scmp.ne.s32.totalorder %s33, %s34
      %p48 = scmp.eq.s32.totalorder %s26, 1
      %p49 = por %p47, %p48
      %p51 = scmp.ne.s32.totalorder %s34, %s50
      %p52 = scmp.eq.s32.totalorder %s26, 0
      %p53 = por %p51, %p52
      %s55 = sadd.s32 %s54, 1
      %p58 = scmp.eq.s32.totalorder %s20, 1
      %p59 = scmp.ne.s32.totalorder %s54, %s56
      %p60 = scmp.eq.s32.totalorder %s20, 0
      %p61 = por %p59, %p60
      %p62 = scmp.ne.s32.totalorder %s54, %s56
      %p63 = scmp.eq.s32.totalorder %s25, 1
      %p64 = por %p62, %p63
      %p65 = scmp.ne.s32.totalorder %s56, %s57
      %p66 = scmp.eq.s32.totalorder %s25, 0
      %p67 = por %p65, %p66
      %p68 = scmp.ne.s32.totalorder %s56, %s57
      %p69 = scmp.eq.s32.totalorder %s26, 1
      %p70 = por %p68, %p69
      %p72 = scmp.ne.s32.totalorder %s57, %s71
      %p73 = scmp.eq.s32.totalorder %s26, 0
      %p74 = por %p72, %p73
      %s76 = sadd.s32 %s75, 1
      %p79 = scmp.eq.s32.totalorder %s20, 1
      %p80 = scmp.ne.s32.totalorder %s75, %s77
      %p81 = scmp.eq.s32.totalorder %s20, 0
      %p82 = por %p80, %p81
      %p83 = scmp.ne.s32.totalorder %s75, %s77
      %p84 = scmp.eq.s32.totalorder %s25, 1
      %p85 = por %p83, %p84
      %p86 = scmp.ne.s32.totalorder %s77, %s78
      %p87 = scmp.eq.s32.totalorder %s25, 0
      %p88 = por %p86, %p87
      %p89 = scmp.ne.s32.totalorder %s77, %s78
      %p90 = scmp.eq.s32.totalorder %s26, 1
      %p91 = por %p89, %p90
      %p93 = scmp.ne.s32.totalorder %s78, %s92
      %p94 = scmp.eq.s32.totalorder %s26, 0
      %p95 = por %p93, %p94
      %s97 = sadd.s32 %s96, 1
      %p100 = scmp.eq.s32.totalorder %s20, 1
      %p101 = scmp.ne.s32.totalorder %s96, %s98
      %p102 = scmp.eq.s32.totalorder %s20, 0
      %p103 = por %p101, %p102
      %p104 = scmp.ne.s32.totalorder %s96, %s98
      %p105 = scmp.eq.s32.totalorder %s25, 1
      %p106 = por %p104, %p105
      %p107 = scmp.ne.s32.totalorder %s98, %s99
      %p108 = scmp.eq.s32.totalorder %s25, 0
      %p109 = por %p107, %p108
      %p110 = scmp.ne.s32.totalorder %s98, %s99
      %p111 = scmp.eq.s32.totalorder %s26, 1
      %p112 = por %p110, %p111
      %p114 = scmp.ne.s32.totalorder %s99, %s113
      %p115 = scmp.eq.s32.totalorder %s26, 0
      %p116 = por %p114, %p115
      %s118 = sadd.s32 %s117, 1
      %p121 = scmp.eq.s32.totalorder %s20, 1
      %p122 = scmp.ne.s32.totalorder %s117, %s119
      %p123 = scmp.eq.s32.totalorder %s20, 0
      %p124 = por %p122, %p123
      %p125 = scmp.ne.s32.totalorder %s117, %s119
      %p126 = scmp.eq.s32.totalorder %s25, 1
      %p127 = por %p125, %p126
      %p128 = scmp.ne.s32.totalorder %s119, %s120
      %p129 = scmp.eq.s32.totalorder %s25, 0
      %p130 = por %p128, %p129
      %p131 = scmp.ne.s32.totalorder %s119, %s120
      %p132 = scmp.eq.s32.totalorder %s26, 1
      %p133 = por %p131, %p132
      %p135 = scmp.ne.s32.totalorder %s120, %s134
      %p136 = scmp.eq.s32.totalorder %s26, 0
      %p137 = por %p135, %p136
      %s139 = sadd.s32 %s138, 1
      %p142 = scmp.eq.s32.totalorder %s20, 1
      %p143 = scmp.ne.s32.totalorder %s138, %s140
      %p144 = scmp.eq.s32.totalorder %s20, 0
      %p145 = por %p143, %p144
      %p146 = scmp.ne.s32.totalorder %s138, %s140
      %p147 = scmp.eq.s32.totalorder %s25, 1
      %p148 = por %p146, %p147
      %p149 = scmp.ne.s32.totalorder %s140, %s141
      %p150 = scmp.eq.s32.totalorder %s25, 0
      %p151 = por %p149, %p150
      %p152 = scmp.ne.s32.totalorder %s140, %s141
      %p153 = scmp.eq.s32.totalorder %s26, 1
      %p154 = por %p152, %p153
      %p156 = scmp.ne.s32.totalorder %s141, %s155
      %p157 = scmp.eq.s32.totalorder %s26, 0
      %p158 = por %p156, %p157
      %s160 = sadd.s32 %s159, 1
      %p163 = scmp.eq.s32.totalorder %s20, 1
      %p164 = scmp.ne.s32.totalorder %s159, %s161
      %p165 = scmp.eq.s32.totalorder %s20, 0
      %p166 = por %p164, %p165
      %p167 = scmp.ne.s32.totalorder %s159, %s161
      %p168 = scmp.eq.s32.totalorder %s25, 1
      %p169 = por %p167, %p168
      %p170 = scmp.ne.s32.totalorder %s161, %s162
      %p171 = scmp.eq.s32.totalorder %s25, 0
      %p172 = por %p170, %p171
      %p173 = scmp.ne.s32.totalorder %s161, %s162
      %p174 = scmp.eq.s32.totalorder %s26, 1
      %p175 = por %p173, %p174
      %p177 = scmp.ne.s32.totalorder %s162, %s176
      %p178 = scmp.eq.s32.totalorder %s26, 0
      %p179 = por %p177, %p178
      %s181 = sadd.s32 %s180, 1
      %p184 = scmp.eq.s32.totalorder %s20, 1
      %p185 = scmp.ne.s32.totalorder %s180, %s182
      %p186 = scmp.eq.s32.totalorder %s20, 0
      %p187 = por %p185, %p186
      %p188 = scmp.ne.s32.totalorder %s180, %s182
      %p189 = scmp.eq.s32.totalorder %s25, 1
      %p190 = por %p188, %p189
      %p191 = scmp.ne.s32.totalorder %s182, %s183
      %p192 = scmp.eq.s32.totalorder %s25, 0
      %p193 = por %p191, %p192
      %p194 = scmp.ne.s32.totalorder %s182, %s183
      %p195 = scmp.eq.s32.totalorder %s26, 1
      %p196 = por %p194, %p195
      %p198 = scmp.ne.s32.totalorder %s183, %s197
      %p199 = scmp.eq.s32.totalorder %s26, 0
      %p200 = por %p198, %p199
      %s202 = sadd.s32 %s201, 1
      %p205 = scmp.eq.s32.totalorder %s20, 1
      %p206 = scmp.ne.s32.totalorder %s201, %s203
      %p207 = scmp.eq.s32.totalorder %s20, 0
      %p208 = por %p206, %p207
      %p209 = scmp.ne.s32.totalorder %s201, %s203
      %p210 = scmp.eq.s32.totalorder %s25, 1
      %p211 = por %p209, %p210
      %p212 = scmp.ne.s32.totalorder %s203, %s204
      %p213 = scmp.eq.s32.totalorder %s25, 0
      %p214 = por %p212, %p213
      %p215 = scmp.ne.s32.totalorder %s203, %s204
      %p216 = scmp.eq.s32.totalorder %s26, 1
      %p217 = por %p215, %p216
      %p219 = scmp.ne.s32.totalorder %s204, %s218
      %p220 = scmp.eq.s32.totalorder %s26, 0
      %p221 = por %p219, %p220
      %s223 = sadd.s32 %s222, 1
      %p226 = scmp.eq.s32.totalorder %s20, 1
      %p227 = scmp.ne.s32.totalorder %s222, %s224
      %p228 = scmp.eq.s32.totalorder %s20, 0
      %p229 = por %p227, %p228
      %p230 = scmp.ne.s32.totalorder %s222, %s224
      %p231 = scmp.eq.s32.totalorder %s25, 1
      %p232 = por %p230, %p231
      %p233 = scmp.ne.s32.totalorder %s224, %s225
      %p234 = scmp.eq.s32.totalorder %s25, 0
      %p235 = por %p233, %p234
      %p236 = scmp.ne.s32.totalorder %s224, %s225
      %p237 = scmp.eq.s32.totalorder %s26, 1
      %p238 = por %p236, %p237
      %p240 = scmp.ne.s32.totalorder %s225, %s239
      %p241 = scmp.eq.s32.totalorder %s26, 0
      %p242 = por %p240, %p241
      %s244 = sadd.s32 %s243, 1
      %p247 = scmp.eq.s32.totalorder %s20, 1
      %p248 = scmp.ne.s32.totalorder %s243, %s245
      %p249 = scmp.eq.s32.totalorder %s20, 0
      %p250 = por %p248, %p249
      %p251 = scmp.ne.s32.totalorder %s243, %s245
      %p252 = scmp.eq.s32.totalorder %s25, 1
      %p253 = por %p251, %p252
      %p254 = scmp.ne.s32.totalorder %s245, %s246
      %p255 = scmp.eq.s32.totalorder %s25, 0
      %p256 = por %p254, %p255
      %p257 = scmp.ne.s32.totalorder %s245, %s246
      %p258 = scmp.eq.s32.totalorder %s26, 1
      %p259 = por %p257, %p258
      %p261 = scmp.ne.s32.totalorder %s246, %s260
      %p262 = scmp.eq.s32.totalorder %s26, 0
      %p263 = por %p261, %p262
      %s265 = sadd.s32 %s264, 1
      %p268 = scmp.eq.s32.totalorder %s20, 1
      %p269 = scmp.ne.s32.totalorder %s264, %s266
      %p270 = scmp.eq.s32.totalorder %s20, 0
      %p271 = por %p269, %p270
      %p272 = scmp.ne.s32.totalorder %s264, %s266
      %p273 = scmp.eq.s32.totalorder %s25, 1
      %p274 = por %p272, %p273
      %p275 = scmp.ne.s32.totalorder %s266, %s267
      %p276 = scmp.eq.s32.totalorder %s25, 0
      %p277 = por %p275, %p276
      %p278 = scmp.ne.s32.totalorder %s266, %s267
      %p279 = scmp.eq.s32.totalorder %s26, 1
      %p280 = por %p278, %p279
      %p282 = scmp.ne.s32.totalorder %s267, %s281
      %p283 = scmp.eq.s32.totalorder %s26, 0
      %p284 = por %p282, %p283
      %s285 = ssub.s32 %s20, %s27
      %p286 = scmp.eq.s32.totalorder %s285, 0
      %s288 = sadd.s32 %s287, 1
      %s289 = scalar_select %p286, %s287, %s288
      %p292 = pneg %p286
      %p293 = scmp.eq.s32.totalorder %s20, 1
      %p294 = por %p292, %p293
      %p295 = scmp.ne.s32.totalorder %s287, %s290
      %p296 = scmp.eq.s32.totalorder %s20, 0
      %p297 = por %p295, %p296
      %p298 = scmp.ne.s32.totalorder %s287, %s290
      %p299 = scmp.eq.s32.totalorder %s25, 1
      %p300 = por %p298, %p299
      %p301 = scmp.ne.s32.totalorder %s290, %s291
      %p302 = scmp.eq.s32.totalorder %s25, 0
      %p303 = por %p301, %p302
      %p304 = scmp.ne.s32.totalorder %s290, %s291
      %p305 = scmp.eq.s32.totalorder %s26, 1
      %p306 = por %p304, %p305
      %p308 = scmp.ne.s32.totalorder %s291, %s307
      %p309 = scmp.eq.s32.totalorder %s26, 0
      %p310 = por %p308, %p309
      %p311 = scmp.le.s32.totalorder 1, %s20
      %p312 = scmp.lt.s32.totalorder %s20, 3
      %p313 = pnand %p311, %p312
      %p314 = pneg %p313
      // Predicated region
      $region9: #{tpu_custom_call.1} parent=5 // pred_check
        _
      $region10: #{tpu_custom_call.1} parent=5 // pred_check_branch
        %316 = sbr.rel (%p313) target = $region12
      $region11: #{tpu_custom_call.1} parent=5 // pred_region
        %s317 = ssub.s32 %s20, 1
        // Predicated region
        $region13: #{tpu_custom_call.1} parent=11 // pred_check
          %p318 = pneg %p67
        $region14: #{tpu_custom_call.1} parent=11 // pred_check_branch
          %320 = sbr.rel (%p318) target = $region16
        $region15: #{tpu_custom_call.1} parent=11 // pred_region
          _
        $region16: #{tpu_custom_call.1} parent=11 // pred_fallthru
          _
        // Predicated region
        $region17: #{tpu_custom_call.1} parent=11 // pred_check
          %p321 = pneg %p88
        $region18: #{tpu_custom_call.1} parent=11 // pred_check_branch
          %323 = sbr.rel (%p321) target = $region20
        $region19: #{tpu_custom_call.1} parent=11 // pred_region
          _
        $region20: #{tpu_custom_call.1} parent=11 // pred_fallthru
          _
        // Predicated region
        $region21: #{tpu_custom_call.1} parent=11 // pred_check
          %p324 = pneg %p109
        $region22: #{tpu_custom_call.1} parent=11 // pred_check_branch
          %326 = sbr.rel (%p324) target = $region24
        $region23: #{tpu_custom_call.1} parent=11 // pred_region
          _
        $region24: #{tpu_custom_call.1} parent=11 // pred_fallthru
          _
        // Predicated region
        $region25: #{tpu_custom_call.1} parent=11 // pred_check
          %p327 = pneg %p130
        $region26: #{tpu_custom_call.1} parent=11 // pred_check_branch
          %329 = sbr.rel (%p327) target = $region28
        $region27: #{tpu_custom_call.1} parent=11 // pred_region
          _
        $region28: #{tpu_custom_call.1} parent=11 // pred_fallthru
          _
        // Predicated region
        $region29: #{tpu_custom_call.1} parent=11 // pred_check
          %p330 = pneg %p151
        $region30: #{tpu_custom_call.1} parent=11 // pred_check_branch
          %332 = sbr.rel (%p330) target = $region32
        $region31: #{tpu_custom_call.1} parent=11 // pred_region
          _
        $region32: #{tpu_custom_call.1} parent=11 // pred_fallthru
          _
        // Predicated region
        $region33: #{tpu_custom_call.1} parent=11 // pred_check
          %p333 = pneg %p172
        $region34: #{tpu_custom_call.1} parent=11 // pred_check_branch
          %335 = sbr.rel (%p333) target = $region36
        $region35: #{tpu_custom_call.1} parent=11 // pred_region
          %s337 = ssub.s32 5120, 5120
          %338 = vsyncadd [#allocation4], %s337
          %s339 = sshll.u32 [#allocation3], 4
          %s340 = int_to_ptr.vmem [resolvable:$true] %s339
          %345 = dma.hbm_to_vmem [thread:$0]  %s6, 5120, %s340, [#allocation4], 256, 256, 16
        $region36: #{tpu_custom_call.1} parent=11 // pred_fallthru
          _
        // Predicated region
        $region37: #{tpu_custom_call.1} parent=11 // pred_check
          %p346 = pneg %p193
        $region38: #{tpu_custom_call.1} parent=11 // pred_check_branch
          %348 = sbr.rel (%p346) target = $region40
        $region39: #{tpu_custom_call.1} parent=11 // pred_region
          %s350 = ssub.s32 5120, 5120
          %351 = vsyncadd [#allocation6], %s350
          %s352 = sshll.u32 [#allocation5], 4
          %s353 = int_to_ptr.vmem [resolvable:$true] %s352
          %358 = dma.hbm_to_vmem [thread:$0]  %s7, 5120, %s353, [#allocation6], 256, 256, 16
        $region40: #{tpu_custom_call.1} parent=11 // pred_fallthru
          _
        // Predicated region
        $region41: #{tpu_custom_call.1} parent=11 // pred_check
          %p359 = pneg %p214
        $region42: #{tpu_custom_call.1} parent=11 // pred_check_branch
          %361 = sbr.rel (%p359) target = $region44
        $region43: #{tpu_custom_call.1} parent=11 // pred_region
          %s363 = ssub.s32 5120, 5120
          %364 = vsyncadd [#allocation6], %s363
          %s365 = sshll.u32 [#allocation7], 4
          %s366 = int_to_ptr.vmem [resolvable:$true] %s365
          %371 = dma.hbm_to_vmem [thread:$0]  %s8, 5120, %s366, [#allocation6], 256, 256, 16
        $region44: #{tpu_custom_call.1} parent=11 // pred_fallthru
          _
        // Predicated region
        $region45: #{tpu_custom_call.1} parent=11 // pred_check
          %p372 = pneg %p235
        $region46: #{tpu_custom_call.1} parent=11 // pred_check_branch
          %374 = sbr.rel (%p372) target = $region48
        $region47: #{tpu_custom_call.1} parent=11 // pred_region
          _
        $region48: #{tpu_custom_call.1} parent=11 // pred_fallthru
          _
        // Predicated region
        $region49: #{tpu_custom_call.1} parent=11 // pred_check
          %p375 = pneg %p256
        $region50: #{tpu_custom_call.1} parent=11 // pred_check_branch
          %377 = sbr.rel (%p375) target = $region52
        $region51: #{tpu_custom_call.1} parent=11 // pred_region
          _
        $region52: #{tpu_custom_call.1} parent=11 // pred_fallthru
          _
        // Predicated region
        $region53: #{tpu_custom_call.1} parent=11 // pred_check
          %p378 = pneg %p277
        $region54: #{tpu_custom_call.1} parent=11 // pred_check_branch
          %380 = sbr.rel (%p378) target = $region56
        $region55: #{tpu_custom_call.1} parent=11 // pred_region
          _
        $region56: #{tpu_custom_call.1} parent=11 // pred_fallthru
          _
      $region12: #{tpu_custom_call.1} parent=5 // pred_fallthru
        _
      %p381 = scmp.lt.s32.totalorder %s20, 2
      // Predicated region
      $region57: #{tpu_custom_call.1} parent=5 // pred_check
        %p382 = pneg %p381
      $region58: #{tpu_custom_call.1} parent=5 // pred_check_branch
        %384 = sbr.rel (%p382) target = $region60
      $region59: #{tpu_custom_call.1} parent=5 // pred_region
        // Predicated region
        $region61: #{tpu_custom_call.1} parent=59 // pred_check
          %p385 = pneg %p40
        $region62: #{tpu_custom_call.1} parent=59 // pred_check_branch
          %387 = sbr.rel (%p385) target = $region64
        $region63: #{tpu_custom_call.1} parent=59 // pred_region
          %s388 = smul.u32 24, %s20
          %p389 = scmp.lt.s32.totalorder %s388, 47
          %s390 = scalar_select %p389, %s388, 47
          %s391 = smul.addr %s390, 8
          %s392 = scalar_lea.vmem %s0, %s391
          %s393 = smul.u32 24, %s20
        $region64: #{tpu_custom_call.1} parent=59 // pred_fallthru
          _
      $region60: #{tpu_custom_call.1} parent=5 // pred_fallthru
        _
      %p394 = scmp.le.s32.totalorder 1, %s20
      %p395 = scmp.lt.s32.totalorder %s20, 3
      %p396 = pnand %p394, %p395
      %p397 = pneg %p396
      // Predicated region
      $region65: #{tpu_custom_call.1} parent=5 // pred_check
        _
      $region66: #{tpu_custom_call.1} parent=5 // pred_check_branch
        %399 = sbr.rel (%p396) target = $region68
      $region67: #{tpu_custom_call.1} parent=5 // pred_region
        %s400 = ssub.s32 %s20, 1
        // Predicated region
        $region69: #{tpu_custom_call.1} parent=67 // pred_check
          %p401 = pneg %p172
        $region70: #{tpu_custom_call.1} parent=67 // pred_check_branch
          %403 = sbr.rel (%p401) target = $region72
        $region71: #{tpu_custom_call.1} parent=67 // pred_region
          %404 = dma.done [#allocation4], 5120
        $region72: #{tpu_custom_call.1} parent=67 // pred_fallthru
          _
        // Predicated region
        $region73: #{tpu_custom_call.1} parent=67 // pred_check
          %p405 = pneg %p193
        $region74: #{tpu_custom_call.1} parent=67 // pred_check_branch
          %407 = sbr.rel (%p405) target = $region76
        $region75: #{tpu_custom_call.1} parent=67 // pred_region
          %408 = dma.done [#allocation6], 5120
        $region76: #{tpu_custom_call.1} parent=67 // pred_fallthru
          _
        // Predicated region
        $region77: #{tpu_custom_call.1} parent=67 // pred_check
          %p409 = pneg %p214
        $region78: #{tpu_custom_call.1} parent=67 // pred_check_branch
          %411 = sbr.rel (%p409) target = $region80
        $region79: #{tpu_custom_call.1} parent=67 // pred_region
          %412 = dma.done [#allocation6], 5120
        $region80: #{tpu_custom_call.1} parent=67 // pred_fallthru
          _
        %s413 = smul.u32 24, %s25
        %p414 = scmp.lt.s32.totalorder %s413, 47
        %s415 = scalar_select %p414, %s413, 47
        %s416 = smul.addr %s415, 8
        %s417 = scalar_lea.vmem %s0, %s416
        %p418 = pneg %p46
        %p419 = pneg %p43
        %p420 = pneg %p67
        %p421 = pneg %p64
        %p422 = pneg %p88
        %p423 = pneg %p85
        %p424 = pneg %p109
        %p425 = pneg %p106
        %p426 = pneg %p130
        %p427 = pneg %p127
        %p428 = pneg %p151
        %p429 = pneg %p148
        %p430 = pneg %p172
        %p431 = pneg %p169
        %p432 = pneg %p193
        %p433 = pneg %p190
        %p434 = pneg %p214
        %p435 = pneg %p211
        %p436 = pneg %p235
        %p437 = pneg %p232
        %p438 = pneg %p256
        %p439 = pneg %p253
        %p440 = pneg %p277
        %p441 = pneg %p274
        %p442 = pneg %p303
        %p443 = pneg %p300
        %s444 = smul.u32 24, %s25
        %p445 = scmp.lt.s32.totalorder %s444, 47
        %s446 = scalar_select %p445, %s444, 47
        %s447 = smul.addr %s446, 2
        %s448 = smul.addr %s447, 8
        %s449 = scalar_lea.vmem %s12, %s448
        %s450 = smul.u32 24, %s25
        %p451 = scmp.lt.s32.totalorder %s450, 47
        %s452 = scalar_select %p451, %s450, 47
        %s453 = smul.addr %s452, 8
        %s454 = scalar_lea.vmem %s0, %s453
        %s455 = smul.u32 24, %s25
        %s456 = smul.u32 24, %s25
        %p457 = scmp.lt.s32.totalorder %s456, 47
        %s458 = scalar_select %p457, %s456, 47
        %s459 = smul.addr %s458, 2
        %s460 = smul.addr %s459, 8
        %s461 = scalar_lea.vmem %s12, %s460
        %s462 = smul.u32 24, %s25
        %463 = vst [vmem:[#allocation2] sm:$0xff] 0.0
        %vm464 = vcmask 261120
        %465 = vst.msk [vmem:[#allocation2 + $0x8] sm:$0xff] %vm464, 0.0
        %466 = vst [vmem:[#allocation2 + $0x190] sm:$0xff] 0.0
        %467 = vst.msk [vmem:[#allocation2 + $0x198] sm:$0xff] %vm464, 0.0
        %v468 = vld [vmem:[%s454] sm:$0xff]
        %v469 = vld [vmem:[%s454 + $0x8] sm:$0xff]
        %v470 = vld [vmem:[%s454 + $0x10] sm:$0xff]
        %v471 = vld [vmem:[%s454 + $0x18] sm:$0xff]
        %v472 = vld [vmem:[%s454 + $0x20] sm:$0xff]
        %v473 = vld [vmem:[%s454 + $0x28] sm:$0xff]
        %v474 = vld [vmem:[%s454 + $0x30] sm:$0xff]
        %v475 = vld [vmem:[%s454 + $0x38] sm:$0xff]
        %v476 = vld [vmem:[%s454 + $0x40] sm:$0xff]
        %v477 = vld [vmem:[%s454 + $0x48] sm:$0xff]
        %v478 = vld [vmem:[%s454 + $0x50] sm:$0xff]
        %v479 = vld [vmem:[%s454 + $0x58] sm:$0xff]
        %v480 = vld [vmem:[%s454 + $0x60] sm:$0xff]
        %v481 = vld [vmem:[%s454 + $0x68] sm:$0xff]
        %v482 = vld [vmem:[%s454 + $0x70] sm:$0xff]
        %v483 = vld [vmem:[%s454 + $0x78] sm:$0xff]
        %v484 = vld [vmem:[%s454 + $0x80] sm:$0xff]
        %v485 = vld [vmem:[%s454 + $0x88] sm:$0xff]
        %v486 = vld [vmem:[%s454 + $0x90] sm:$0xff]
        %v487 = vld [vmem:[%s454 + $0x98] sm:$0xff]
        %v488 = vld [vmem:[%s454 + $0xa0] sm:$0xff]
        %v489 = vld [vmem:[%s454 + $0xa8] sm:$0xff]
        %v490 = vld [vmem:[%s454 + $0xb0] sm:$0xff]
        %v491 = vld [vmem:[%s454 + $0xb8] sm:$0xff]
        %v492 = vld [vmem:[%s2] sm:$0xff]
        %v493 = vld [vmem:[%s2 + $0x8] sm:$0xff]
        %v494 = vld [vmem:[%s2 + $0x10] sm:$0xff]
        %v495 = vld [vmem:[%s2 + $0x18] sm:$0xff]
        %v496 = vld [vmem:[%s2 + $0x20] sm:$0xf]
        %v497 = vld [vmem:[%s2 + $0x28] sm:$0xf]
        %v498 = vld [vmem:[%s3] sm:$0x3]
        %v500 = vlaneseq
        %v501 = vshrl.u32 %v500, 7
        %v502 = vsub.s32 0, %v501
        %v503 = vrot.slane %v498, %v502
        %v504 = vlaneseq
        %v505 = vshrl.u32 %v504, 7
        %v506 = vsub.s32 1, %v505
        %v507 = vrot.slane %v498, %v506
        %vm510 = vcmask 162816
        %v512 = vsel %vm510, %v468, 0
        %v515 = vsel %vm510, %v469, 0
        %v518 = vsel %vm510, %v470, 0
        %v521 = vsel %vm510, %v471, 0
        %v524 = vsel %vm510, %v472, 0
        %v527 = vsel %vm510, %v473, 0
        %v530 = vsel %vm510, %v474, 0
        %v533 = vsel %vm510, %v475, 0
        %v536 = vsel %vm510, %v476, 0
        %v539 = vsel %vm510, %v477, 0
        %v542 = vsel %vm510, %v478, 0
        %v545 = vsel %vm510, %v479, 0
        %v548 = vsel %vm510, %v480, 0
        %v551 = vsel %vm510, %v481, 0
        %v554 = vsel %vm510, %v482, 0
        %v557 = vsel %vm510, %v483, 0
        %v560 = vsel %vm510, %v484, 0
        %v563 = vsel %vm510, %v485, 0
        %v566 = vsel %vm510, %v486, 0
        %v569 = vsel %vm510, %v487, 0
        %v572 = vsel %vm510, %v488, 0
        %v575 = vsel %vm510, %v489, 0
        %v578 = vsel %vm510, %v490, 0
        %v581 = vsel %vm510, %v491, 0
        %vm583 = vcmask 1043456
        %v585 = vsel %vm583, %v496, 0
        %v588 = vsel %vm583, %v497, 0
        %590 = vmatprep.subr.mxu0 %v493
        %591 = vmatpush1.msra.mxu0 %v492
        %592 = vmatprep.subr.mxu0 %v495
        %593 = vmatpush1.msra.mxu0 %v494
        %594 = vmatprep.subr.mxu0 %v588
        %595 = vmatpush1.msra.mxu0 %v585
        %596 = vmatprep.subr.mxu0 0.0
        %597 = vmatpush1.msra.mxu0 0.0
        %598 = vmatprep.subr.mxu0 0.0
        %599 = vmatpush1.msra.mxu0 0.0
        %600 = vmatprep.subr.mxu0 0.0
        %601 = vmatpush1.msra.mxu0 0.0
        %602 = vmatprep.subr.mxu0 0.0
        %603 = vmatpush1.msra.mxu0 0.0
        %604 = vmatprep.subr.mxu0 0.0
        %605 = vmatpush1.msra.mxu0 0.0
        %606 = vmatprep.subr.mxu0 0.0
        %607 = vmatpush1.msra.mxu0 0.0
        %608 = vmatprep.subr.mxu0 0.0
        %609 = vmatpush1.msra.mxu0 0.0
        %610 = vmatprep.subr.mxu0 0.0
        %611 = vmatpush1.msra.mxu0 0.0
        %612 = vmatprep.subr.mxu0 0.0
        %613 = vmatpush1.msra.mxu0 0.0
        %614 = vmatprep.subr.mxu0 0.0
        %615 = vmatpush1.msra.mxu0 0.0
        %616 = vmatprep.subr.mxu0 0.0
        %617 = vmatpush1.msra.mxu0 0.0
        %618 = vmatprep.subr.mxu0 0.0
        %619 = vmatpush1.msra.mxu0 0.0
        %620 = vmatprep.subr.mxu0 0.0
        %621 = vmatpush1.msra.mxu0 0.0
        %622 = vmatprep.subr.mxu0 0.0
        %623 = vmatpush1.msra.mxu0 0.0
        %624 = vmatprep.subr.mxu0 0.0
        %625 = vmatpush1.msra.mxu0 0.0
        %626 = vmatprep.subr.mxu0 0.0
        %627 = vmatpush1.msra.mxu0 0.0
        %628 = vmatprep.subr.mxu0 0.0
        %629 = vmatpush1.msra.mxu0 0.0
        %630 = vmatprep.subr.mxu0 0.0
        %631 = vmatpush1.msra.mxu0 0.0
        %632 = vmatprep.subr.mxu0 0.0
        %633 = vmatpush1.msra.mxu0 0.0
        %634 = vmatprep.subr.mxu0 0.0
        %635 = vmatpush1.msra.mxu0 0.0
        %636 = vmatprep.subr.mxu0 0.0
        %637 = vmatpush1.msra.mxu0 0.0
        %638 = vmatprep.subr.mxu0 0.0
        %639 = vmatpush1.msra.mxu0 0.0
        %640 = vmatprep.subr.mxu0 0.0
        %641 = vmatpush1.msra.mxu0 0.0
        %642 = vmatprep.subr.mxu0 0.0
        %643 = vmatpush1.msra.mxu0 0.0
        %644 = vmatprep.subr.mxu0 0.0
        %645 = vmatpush1.msra.mxu0 0.0
        %646 = vmatprep.subr.mxu0 0.0
        %647 = vmatpush1.msra.mxu0 0.0
        %648 = vmatprep.subr.mxu0 0.0
        %649 = vmatpush1.msra.mxu0 0.0
        %650 = vmatprep.subr.mxu0 0.0
        %651 = vmatpush1.msra.mxu0 0.0
        %652 = vmatprep.subr.mxu0 0.0
        %653 = vmatpush1.msra.mxu0 0.0
        %654 = vmatprep.mubr.f32.mxu0 0.0
        %655 = vmatmul.mubr.f32.gmra.mrb[0].mxu0 %v512
        %v656 = vpop.f32.mrb[0].mxu0
        %v657 = vadd.f32 %v503, %v656
        %v658 = vpop.f32.mrb[0].mxu0
        %v659 = vadd.f32 %v507, %v658
        %660 = vmatprep.mubr.f32.mxu0 0.0
        %661 = vmatmul.mubr.f32.gmra.mrb[0].mxu0 %v515
        %v662 = vpop.f32.mrb[0].mxu0
        %v663 = vadd.f32 %v503, %v662
        %v664 = vpop.f32.mrb[0].mxu0
        %v665 = vadd.f32 %v507, %v664
        %666 = vmatprep.mubr.f32.mxu0 0.0
        %667 = vmatmul.mubr.f32.gmra.mrb[0].mxu0 %v518
        %v668 = vpop.f32.mrb[0].mxu0
        %v669 = vadd.f32 %v503, %v668
        %v670 = vpop.f32.mrb[0].mxu0
        %v671 = vadd.f32 %v507, %v670
        %672 = vmatprep.mubr.f32.mxu0 0.0
        %673 = vmatmul.mubr.f32.gmra.mrb[0].mxu0 %v521
        %v674 = vpop.f32.mrb[0].mxu0
        %v675 = vadd.f32 %v503, %v674
        %v676 = vpop.f32.mrb[0].mxu0
        %v677 = vadd.f32 %v507, %v676
        %678 = vmatprep.mubr.f32.mxu0 0.0
        %679 = vmatmul.mubr.f32.gmra.mrb[0].mxu0 %v524
        %v680 = vpop.f32.mrb[0].mxu0
        %v681 = vadd.f32 %v503, %v680
        %v682 = vpop.f32.mrb[0].mxu0
        %v683 = vadd.f32 %v507, %v682
        %684 = vmatprep.mubr.f32.mxu0 0.0
        %685 = vmatmul.mubr.f32.gmra.mrb[0].mxu0 %v527
        %v686 = vpop.f32.mrb[0].mxu0
        %v687 = vadd.f32 %v503, %v686
        %v688 = vpop.f32.mrb[0].mxu0
        %v689 = vadd.f32 %v507, %v688
        %690 = vmatprep.mubr.f32.mxu0 0.0
        %691 = vmatmul.mubr.f32.gmra.mrb[0].mxu0 %v530
        %v692 = vpop.f32.mrb[0].mxu0
        %v693 = vadd.f32 %v503, %v692
        %v694 = vpop.f32.mrb[0].mxu0
        %v695 = vadd.f32 %v507, %v694
        %696 = vmatprep.mubr.f32.mxu0 0.0
        %697 = vmatmul.mubr.f32.gmra.mrb[0].mxu0 %v533
        %v698 = vpop.f32.mrb[0].mxu0
        %v699 = vadd.f32 %v503, %v698
        %v700 = vpop.f32.mrb[0].mxu0
        %v701 = vadd.f32 %v507, %v700
        %702 = vmatprep.mubr.f32.mxu0 0.0
        %703 = vmatmul.mubr.f32.gmra.mrb[0].mxu0 %v536
        %v704 = vpop.f32.mrb[0].mxu0
        %v705 = vadd.f32 %v503, %v704
        %v706 = vpop.f32.mrb[0].mxu0
        %v707 = vadd.f32 %v507, %v706
        %708 = vmatprep.mubr.f32.mxu0 0.0
        %709 = vmatmul.mubr.f32.gmra.mrb[0].mxu0 %v539
        %v710 = vpop.f32.mrb[0].mxu0
        %v711 = vadd.f32 %v503, %v710
        %v712 = vpop.f32.mrb[0].mxu0
        %v713 = vadd.f32 %v507, %v712
        %714 = vmatprep.mubr.f32.mxu0 0.0
        %715 = vmatmul.mubr.f32.gmra.mrb[0].mxu0 %v542
        %v716 = vpop.f32.mrb[0].mxu0
        %v717 = vadd.f32 %v503, %v716
        %v718 = vpop.f32.mrb[0].mxu0
        %v719 = vadd.f32 %v507, %v718
        %720 = vmatprep.mubr.f32.mxu0 0.0
        %721 = vmatmul.mubr.f32.gmra.mrb[0].mxu0 %v545
        %v722 = vpop.f32.mrb[0].mxu0
        %v723 = vadd.f32 %v503, %v722
        %v724 = vpop.f32.mrb[0].mxu0
        %v725 = vadd.f32 %v507, %v724
        %726 = vmatprep.mubr.f32.mxu0 0.0
        %727 = vmatmul.mubr.f32.gmra.mrb[0].mxu0 %v548
        %v728 = vpop.f32.mrb[0].mxu0
        %v729 = vadd.f32 %v503, %v728
        %v730 = vpop.f32.mrb[0].mxu0
        %v731 = vadd.f32 %v507, %v730
        %732 = vmatprep.mubr.f32.mxu0 0.0
        %733 = vmatmul.mubr.f32.gmra.mrb[0].mxu0 %v551
        %v734 = vpop.f32.mrb[0].mxu0
        %v735 = vadd.f32 %v503, %v734
        %v736 = vpop.f32.mrb[0].mxu0
        %v737 = vadd.f32 %v507, %v736
        %738 = vmatprep.mubr.f32.mxu0 0.0
        %739 = vmatmul.mubr.f32.gmra.mrb[0].mxu0 %v554
        %v740 = vpop.f32.mrb[0].mxu0
        %v741 = vadd.f32 %v503, %v740
        %v742 = vpop.f32.mrb[0].mxu0
        %v743 = vadd.f32 %v507, %v742
        %744 = vmatprep.mubr.f32.mxu0 0.0
        %745 = vmatmul.mubr.f32.gmra.mrb[0].mxu0 %v557
        %v746 = vpop.f32.mrb[0].mxu0
        %v747 = vadd.f32 %v503, %v746
        %v748 = vpop.f32.mrb[0].mxu0
        %v749 = vadd.f32 %v507, %v748
        %750 = vmatprep.mubr.f32.mxu0 0.0
        %751 = vmatmul.mubr.f32.gmra.mrb[0].mxu0 %v560
        %v752 = vpop.f32.mrb[0].mxu0
        %v753 = vadd.f32 %v503, %v752
        %v754 = vpop.f32.mrb[0].mxu0
        %v755 = vadd.f32 %v507, %v754
        %756 = vmatprep.mubr.f32.mxu0 0.0
        %757 = vmatmul.mubr.f32.gmra.mrb[0].mxu0 %v563
        %v758 = vpop.f32.mrb[0].mxu0
        %v759 = vadd.f32 %v503, %v758
        %v760 = vpop.f32.mrb[0].mxu0
        %v761 = vadd.f32 %v507, %v760
        %762 = vmatprep.mubr.f32.mxu0 0.0
        %763 = vmatmul.mubr.f32.gmra.mrb[0].mxu0 %v566
        %v764 = vpop.f32.mrb[0].mxu0
        %v765 = vadd.f32 %v503, %v764
        %v766 = vpop.f32.mrb[0].mxu0
        %v767 = vadd.f32 %v507, %v766
        %768 = vmatprep.mubr.f32.mxu0 0.0
        %769 = vmatmul.mubr.f32.gmra.mrb[0].mxu0 %v569
        %v770 = vpop.f32.mrb[0].mxu0
        %v771 = vadd.f32 %v503, %v770
        %v772 = vpop.f32.mrb[0].mxu0
        %v773 = vadd.f32 %v507, %v772
        %774 = vmatprep.mubr.f32.mxu0 0.0
        %775 = vmatmul.mubr.f32.gmra.mrb[0].mxu0 %v572
        %v776 = vpop.f32.mrb[0].mxu0
        %v777 = vadd.f32 %v503, %v776
        %v778 = vpop.f32.mrb[0].mxu0
        %v779 = vadd.f32 %v507, %v778
        %780 = vmatprep.mubr.f32.mxu0 0.0
        %781 = vmatmul.mubr.f32.gmra.mrb[0].mxu0 %v575
        %v782 = vpop.f32.mrb[0].mxu0
        %v783 = vadd.f32 %v503, %v782
        %v784 = vpop.f32.mrb[0].mxu0
        %v785 = vadd.f32 %v507, %v784
        %786 = vmatprep.mubr.f32.mxu0 0.0
        %787 = vmatmul.mubr.f32.gmra.mrb[0].mxu0 %v578
        %v788 = vpop.f32.mrb[0].mxu0
        %v789 = vadd.f32 %v503, %v788
        %v790 = vpop.f32.mrb[0].mxu0
        %v791 = vadd.f32 %v507, %v790
        %792 = vmatprep.mubr.f32.mxu0 0.0
        %793 = vmatmul.mubr.f32.gmra.mrb[0].mxu0 %v581
        %v794 = vpop.f32.mrb[0].mxu0
        %v795 = vadd.f32 %v503, %v794
        %v796 = vpop.f32.mrb[0].mxu0
        %v797 = vadd.f32 %v507, %v796
        %798 = vdwg.mxu0
        %v799 = vmax.f32 %v657, 0.0
        %v800 = vmax.f32 %v659, 0.0
        %v801 = vmax.f32 %v663, 0.0
        %v802 = vmax.f32 %v665, 0.0
        %v803 = vmax.f32 %v669, 0.0
        %v804 = vmax.f32 %v671, 0.0
        %v805 = vmax.f32 %v675, 0.0
        %v806 = vmax.f32 %v677, 0.0
        %v807 = vmax.f32 %v681, 0.0
        %v808 = vmax.f32 %v683, 0.0
        %v809 = vmax.f32 %v687, 0.0
        %v810 = vmax.f32 %v689, 0.0
        %v811 = vmax.f32 %v693, 0.0
        %v812 = vmax.f32 %v695, 0.0
        %v813 = vmax.f32 %v699, 0.0
        %v814 = vmax.f32 %v701, 0.0
        %v815 = vmax.f32 %v705, 0.0
        %v816 = vmax.f32 %v707, 0.0
        %v817 = vmax.f32 %v711, 0.0
        %v818 = vmax.f32 %v713, 0.0
        %v819 = vmax.f32 %v717, 0.0
        %v820 = vmax.f32 %v719, 0.0
        %v821 = vmax.f32 %v723, 0.0
        %v822 = vmax.f32 %v725, 0.0
        %v823 = vmax.f32 %v729, 0.0
        %v824 = vmax.f32 %v731, 0.0
        %v825 = vmax.f32 %v735, 0.0
        %v826 = vmax.f32 %v737, 0.0
        %v827 = vmax.f32 %v741, 0.0
        %v828 = vmax.f32 %v743, 0.0
        %v829 = vmax.f32 %v747, 0.0
        %v830 = vmax.f32 %v749, 0.0
        %v831 = vmax.f32 %v753, 0.0
        %v832 = vmax.f32 %v755, 0.0
        %v833 = vmax.f32 %v759, 0.0
        %v834 = vmax.f32 %v761, 0.0
        %v835 = vmax.f32 %v765, 0.0
        %v836 = vmax.f32 %v767, 0.0
        %v837 = vmax.f32 %v771, 0.0
        %v838 = vmax.f32 %v773, 0.0
        %v839 = vmax.f32 %v777, 0.0
        %v840 = vmax.f32 %v779, 0.0
        %v841 = vmax.f32 %v783, 0.0
        %v842 = vmax.f32 %v785, 0.0
        %v843 = vmax.f32 %v789, 0.0
        %v844 = vmax.f32 %v791, 0.0
        %v845 = vmax.f32 %v795, 0.0
        %v846 = vmax.f32 %v797, 0.0
        %847 = vst [vmem:[#allocation2 + $0x10] sm:$0xff] %v799
        %848 = vst.msk [vmem:[#allocation2 + $0x18] sm:$0xff] %vm464, %v800
        %849 = vst [vmem:[#allocation2 + $0x20] sm:$0xff] %v801
        %850 = vst.msk [vmem:[#allocation2 + $0x28] sm:$0xff] %vm464, %v802
        %851 = vst [vmem:[#allocation2 + $0x30] sm:$0xff] %v803
        %852 = vst.msk [vmem:[#allocation2 + $0x38] sm:$0xff] %vm464, %v804
        %853 = vst [vmem:[#allocation2 + $0x40] sm:$0xff] %v805
        %854 = vst.msk [vmem:[#allocation2 + $0x48] sm:$0xff] %vm464, %v806
        %855 = vst [vmem:[#allocation2 + $0x50] sm:$0xff] %v807
        %856 = vst.msk [vmem:[#allocation2 + $0x58] sm:$0xff] %vm464, %v808
        %857 = vst [vmem:[#allocation2 + $0x60] sm:$0xff] %v809
        %858 = vst.msk [vmem:[#allocation2 + $0x68] sm:$0xff] %vm464, %v810
        %859 = vst [vmem:[#allocation2 + $0x70] sm:$0xff] %v811
        %860 = vst.msk [vmem:[#allocation2 + $0x78] sm:$0xff] %vm464, %v812
        %861 = vst [vmem:[#allocation2 + $0x80] sm:$0xff] %v813
        %862 = vst.msk [vmem:[#allocation2 + $0x88] sm:$0xff] %vm464, %v814
        %863 = vst [vmem:[#allocation2 + $0x90] sm:$0xff] %v815
        %864 = vst.msk [vmem:[#allocation2 + $0x98] sm:$0xff] %vm464, %v816
        %865 = vst [vmem:[#allocation2 + $0xa0] sm:$0xff] %v817
        %866 = vst.msk [vmem:[#allocation2 + $0xa8] sm:$0xff] %vm464, %v818
        %867 = vst [vmem:[#allocation2 + $0xb0] sm:$0xff] %v819
        %868 = vst.msk [vmem:[#allocation2 + $0xb8] sm:$0xff] %vm464, %v820
        %869 = vst [vmem:[#allocation2 + $0xc0] sm:$0xff] %v821
        %870 = vst.msk [vmem:[#allocation2 + $0xc8] sm:$0xff] %vm464, %v822
        %871 = vst [vmem:[#allocation2 + $0xd0] sm:$0xff] %v823
        %872 = vst.msk [vmem:[#allocation2 + $0xd8] sm:$0xff] %vm464, %v824
        %873 = vst [vmem:[#allocation2 + $0xe0] sm:$0xff] %v825
        %874 = vst.msk [vmem:[#allocation2 + $0xe8] sm:$0xff] %vm464, %v826
        %875 = vst [vmem:[#allocation2 + $0xf0] sm:$0xff] %v827
        %876 = vst.msk [vmem:[#allocation2 + $0xf8] sm:$0xff] %vm464, %v828
        %877 = vst [vmem:[#allocation2 + $0x100] sm:$0xff] %v829
        %878 = vst.msk [vmem:[#allocation2 + $0x108] sm:$0xff] %vm464, %v830
        %879 = vst [vmem:[#allocation2 + $0x110] sm:$0xff] %v831
        %880 = vst.msk [vmem:[#allocation2 + $0x118] sm:$0xff] %vm464, %v832
        %881 = vst [vmem:[#allocation2 + $0x120] sm:$0xff] %v833
        %882 = vst.msk [vmem:[#allocation2 + $0x128] sm:$0xff] %vm464, %v834
        %883 = vst [vmem:[#allocation2 + $0x130] sm:$0xff] %v835
        %884 = vst.msk [vmem:[#allocation2 + $0x138] sm:$0xff] %vm464, %v836
        %885 = vst [vmem:[#allocation2 + $0x140] sm:$0xff] %v837
        %886 = vst.msk [vmem:[#allocation2 + $0x148] sm:$0xff] %vm464, %v838
        %887 = vst [vmem:[#allocation2 + $0x150] sm:$0xff] %v839
        %888 = vst.msk [vmem:[#allocation2 + $0x158] sm:$0xff] %vm464, %v840
        %889 = vst [vmem:[#allocation2 + $0x160] sm:$0xff] %v841
        %890 = vst.msk [vmem:[#allocation2 + $0x168] sm:$0xff] %vm464, %v842
        %891 = vst [vmem:[#allocation2 + $0x170] sm:$0xff] %v843
        %892 = vst.msk [vmem:[#allocation2 + $0x178] sm:$0xff] %vm464, %v844
        %893 = vst [vmem:[#allocation2 + $0x180] sm:$0xff] %v845
        %894 = vst.msk [vmem:[#allocation2 + $0x188] sm:$0xff] %vm464, %v846
        %v895 = vld [vmem:[#allocation2 + $0x10] sm:$0xfe]
        %v896 = vld [vmem:[#allocation2 + $0x18] sm:$0xfe]
        %v897 = vld [vmem:[#allocation2 + $0x20] sm:$0xff]
        %v898 = vld [vmem:[#allocation2 + $0x28] sm:$0xff]
        %v899 = vld [vmem:[#allocation2 + $0x30] sm:$0xff]
        %v900 = vld [vmem:[#allocation2 + $0x38] sm:$0xff]
        %v901 = vld [vmem:[#allocation2 + $0x40] sm:$0xff]
        %v902 = vld [vmem:[#allocation2 + $0x48] sm:$0xff]
        %v903 = vld [vmem:[#allocation2 + $0x50] sm:$0xff]
        %v904 = vld [vmem:[#allocation2 + $0x58] sm:$0xff]
        %v905 = vld [vmem:[#allocation2 + $0x60] sm:$0xff]
        %v906 = vld [vmem:[#allocation2 + $0x68] sm:$0xff]
        %v907 = vld [vmem:[#allocation2 + $0x70] sm:$0xff]
        %v908 = vld [vmem:[#allocation2 + $0x78] sm:$0xff]
        %v909 = vld [vmem:[#allocation2 + $0x80] sm:$0xff]
        %v910 = vld [vmem:[#allocation2 + $0x88] sm:$0xff]
        %v911 = vld [vmem:[#allocation2 + $0x90] sm:$0xff]
        %v912 = vld [vmem:[#allocation2 + $0x98] sm:$0xff]
        %v913 = vld [vmem:[#allocation2 + $0xa0] sm:$0xff]
        %v914 = vld [vmem:[#allocation2 + $0xa8] sm:$0xff]
        %v915 = vld [vmem:[#allocation2 + $0xb0] sm:$0xff]
        %v916 = vld [vmem:[#allocation2 + $0xb8] sm:$0xff]
        %v917 = vld [vmem:[#allocation2 + $0xc0] sm:$0xff]
        %v918 = vld [vmem:[#allocation2 + $0xc8] sm:$0xff]
        %v919 = vld [vmem:[#allocation2 + $0xd0] sm:$0xff]
        %v920 = vld [vmem:[#allocation2 + $0xd8] sm:$0xff]
        %v921 = vld [vmem:[#allocation2 + $0xe0] sm:$0xff]
        %v922 = vld [vmem:[#allocation2 + $0xe8] sm:$0xff]
        %v923 = vld [vmem:[#allocation2 + $0xf0] sm:$0xff]
        %v924 = vld [vmem:[#allocation2 + $0xf8] sm:$0xff]
        %v925 = vld [vmem:[#allocation2 + $0x100] sm:$0xff]
        %v926 = vld [vmem:[#allocation2 + $0x108] sm:$0xff]
        %v927 = vld [vmem:[#allocation2 + $0x110] sm:$0xff]
        %v928 = vld [vmem:[#allocation2 + $0x118] sm:$0xff]
        %v929 = vld [vmem:[#allocation2 + $0x120] sm:$0xff]
        %v930 = vld [vmem:[#allocation2 + $0x128] sm:$0xff]
        %v931 = vld [vmem:[#allocation2 + $0x130] sm:$0xff]
        %v932 = vld [vmem:[#allocation2 + $0x138] sm:$0xff]
        %v933 = vld [vmem:[#allocation2 + $0x140] sm:$0xff]
        %v934 = vld [vmem:[#allocation2 + $0x148] sm:$0xff]
        %v935 = vld [vmem:[#allocation2 + $0x150] sm:$0xff]
        %v936 = vld [vmem:[#allocation2 + $0x158] sm:$0xff]
        %v937 = vld [vmem:[#allocation2 + $0x160] sm:$0xff]
        %v938 = vld [vmem:[#allocation2 + $0x168] sm:$0xff]
        %v939 = vld [vmem:[#allocation2 + $0x170] sm:$0xff]
        %v940 = vld [vmem:[#allocation2 + $0x178] sm:$0xff]
        %v941 = vld [vmem:[#allocation2 + $0x180] sm:$0xff]
        %v942 = vld [vmem:[#allocation2 + $0x188] sm:$0xff]
        %v943 = vld [vmem:[#allocation2 + $0x190] sm:$0x1]
        %v944 = vld [vmem:[#allocation2 + $0x198] sm:$0x1]
        %vm995 = vcmask 1046528
        %v996 = vrot.slane %v895, 1
        %v997 = vrot.slane %v897, 1
        %v998 = vsel %vm995, %v996, %v997
        %v999 = vrot.slane %v896, 1
        %v1000 = vrot.slane %v898, 1
        %v1001 = vsel %vm995, %v999, %v1000
        %v1002 = vrot.slane %v899, 1
        %v1003 = vsel %vm995, %v997, %v1002
        %v1004 = vrot.slane %v900, 1
        %v1005 = vsel %vm995, %v1000, %v1004
        %v1006 = vrot.slane %v901, 1
        %v1007 = vsel %vm995, %v1002, %v1006
        %v1008 = vrot.slane %v902, 1
        %v1009 = vsel %vm995, %v1004, %v1008
        %v1010 = vrot.slane %v903, 1
        %v1011 = vsel %vm995, %v1006, %v1010
        %v1012 = vrot.slane %v904, 1
        %v1013 = vsel %vm995, %v1008, %v1012
        %v1014 = vrot.slane %v905, 1
        %v1015 = vsel %vm995, %v1010, %v1014
        %v1016 = vrot.slane %v906, 1
        %v1017 = vsel %vm995, %v1012, %v1016
        %v1018 = vrot.slane %v907, 1
        %v1019 = vsel %vm995, %v1014, %v1018
        %v1020 = vrot.slane %v908, 1
        %v1021 = vsel %vm995, %v1016, %v1020
        %v1022 = vrot.slane %v909, 1
        %v1023 = vsel %vm995, %v1018, %v1022
        %v1024 = vrot.slane %v910, 1
        %v1025 = vsel %vm995, %v1020, %v1024
        %v1026 = vrot.slane %v911, 1
        %v1027 = vsel %vm995, %v1022, %v1026
        %v1028 = vrot.slane %v912, 1
        %v1029 = vsel %vm995, %v1024, %v1028
        %v1030 = vrot.slane %v913, 1
        %v1031 = vsel %vm995, %v1026, %v1030
        %v1032 = vrot.slane %v914, 1
        %v1033 = vsel %vm995, %v1028, %v1032
        %v1034 = vrot.slane %v915, 1
        %v1035 = vsel %vm995, %v1030, %v1034
        %v1036 = vrot.slane %v916, 1
        %v1037 = vsel %vm995, %v1032, %v1036
        %v1038 = vrot.slane %v917, 1
        %v1039 = vsel %vm995, %v1034, %v1038
        %v1040 = vrot.slane %v918, 1
        %v1041 = vsel %vm995, %v1036, %v1040
        %v1042 = vrot.slane %v919, 1
        %v1043 = vsel %vm995, %v1038, %v1042
        %v1044 = vrot.slane %v920, 1
        %v1045 = vsel %vm995, %v1040, %v1044
        %v1046 = vrot.slane %v921, 1
        %v1047 = vsel %vm995, %v1042, %v1046
        %v1048 = vrot.slane %v922, 1
        %v1049 = vsel %vm995, %v1044, %v1048
        %v1050 = vrot.slane %v923, 1
        %v1051 = vsel %vm995, %v1046, %v1050
        %v1052 = vrot.slane %v924, 1
        %v1053 = vsel %vm995, %v1048, %v1052
        %v1054 = vrot.slane %v925, 1
        %v1055 = vsel %vm995, %v1050, %v1054
        %v1056 = vrot.slane %v926, 1
        %v1057 = vsel %vm995, %v1052, %v1056
        %v1058 = vrot.slane %v927, 1
        %v1059 = vsel %vm995, %v1054, %v1058
        %v1060 = vrot.slane %v928, 1
        %v1061 = vsel %vm995, %v1056, %v1060
        %v1062 = vrot.slane %v929, 1
        %v1063 = vsel %vm995, %v1058, %v1062
        %v1064 = vrot.slane %v930, 1
        %v1065 = vsel %vm995, %v1060, %v1064
        %v1066 = vrot.slane %v931, 1
        %v1067 = vsel %vm995, %v1062, %v1066
        %v1068 = vrot.slane %v932, 1
        %v1069 = vsel %vm995, %v1064, %v1068
        %v1070 = vrot.slane %v933, 1
        %v1071 = vsel %vm995, %v1066, %v1070
        %v1072 = vrot.slane %v934, 1
        %v1073 = vsel %vm995, %v1068, %v1072
        %v1074 = vrot.slane %v935, 1
        %v1075 = vsel %vm995, %v1070, %v1074
        %v1076 = vrot.slane %v936, 1
        %v1077 = vsel %vm995, %v1072, %v1076
        %v1078 = vrot.slane %v937, 1
        %v1079 = vsel %vm995, %v1074, %v1078
        %v1080 = vrot.slane %v938, 1
        %v1081 = vsel %vm995, %v1076, %v1080
        %v1082 = vrot.slane %v939, 1
        %v1083 = vsel %vm995, %v1078, %v1082
        %v1084 = vrot.slane %v940, 1
        %v1085 = vsel %vm995, %v1080, %v1084
        %v1086 = vrot.slane %v941, 1
        %v1087 = vsel %vm995, %v1082, %v1086
        %v1088 = vrot.slane %v942, 1
        %v1089 = vsel %vm995, %v1084, %v1088
        %v1090 = vrot.slane %v943, 1
        %v1091 = vsel %vm995, %v1086, %v1090
        %v1092 = vrot.slane %v944, 1
        %v1093 = vsel %vm995, %v1088, %v1092
        %v1142 = vmax.f32 %v799, %v998
        %v1143 = vmax.f32 %v800, %v1001
        %v1144 = vmax.f32 %v801, %v1003
        %v1145 = vmax.f32 %v802, %v1005
        %v1146 = vmax.f32 %v803, %v1007
        %v1147 = vmax.f32 %v804, %v1009
        %v1148 = vmax.f32 %v805, %v1011
        %v1149 = vmax.f32 %v806, %v1013
        %v1150 = vmax.f32 %v807, %v1015
        %v1151 = vmax.f32 %v808, %v1017
        %v1152 = vmax.f32 %v809, %v1019
        %v1153 = vmax.f32 %v810, %v1021
        %v1154 = vmax.f32 %v811, %v1023
        %v1155 = vmax.f32 %v812, %v1025
        %v1156 = vmax.f32 %v813, %v1027
        %v1157 = vmax.f32 %v814, %v1029
        %v1158 = vmax.f32 %v815, %v1031
        %v1159 = vmax.f32 %v816, %v1033
        %v1160 = vmax.f32 %v817, %v1035
        %v1161 = vmax.f32 %v818, %v1037
        %v1162 = vmax.f32 %v819, %v1039
        %v1163 = vmax.f32 %v820, %v1041
        %v1164 = vmax.f32 %v821, %v1043
        %v1165 = vmax.f32 %v822, %v1045
        %v1166 = vmax.f32 %v823, %v1047
        %v1167 = vmax.f32 %v824, %v1049
        %v1168 = vmax.f32 %v825, %v1051
        %v1169 = vmax.f32 %v826, %v1053
        %v1170 = vmax.f32 %v827, %v1055
        %v1171 = vmax.f32 %v828, %v1057
        %v1172 = vmax.f32 %v829, %v1059
        %v1173 = vmax.f32 %v830, %v1061
        %v1174 = vmax.f32 %v831, %v1063
        %v1175 = vmax.f32 %v832, %v1065
        %v1176 = vmax.f32 %v833, %v1067
        %v1177 = vmax.f32 %v834, %v1069
        %v1178 = vmax.f32 %v835, %v1071
        %v1179 = vmax.f32 %v836, %v1073
        %v1180 = vmax.f32 %v837, %v1075
        %v1181 = vmax.f32 %v838, %v1077
        %v1182 = vmax.f32 %v839, %v1079
        %v1183 = vmax.f32 %v840, %v1081
        %v1184 = vmax.f32 %v841, %v1083
        %v1185 = vmax.f32 %v842, %v1085
        %v1186 = vmax.f32 %v843, %v1087
        %v1187 = vmax.f32 %v844, %v1089
        %v1188 = vmax.f32 %v845, %v1091
        %v1189 = vmax.f32 %v846, %v1093
        %v1190 = vld [vmem:[#allocation2 + $0x10] sm:$0xfc]
        %v1191 = vld [vmem:[#allocation2 + $0x18] sm:$0xfc]
        %v1192 = vld [vmem:[#allocation2 + $0x190] sm:$0x3]
        %v1193 = vld [vmem:[#allocation2 + $0x198] sm:$0x3]
        %vm1198 = vcmask 1045504
        %v1199 = vrot.slane %v1190, 2
        %v1200 = vrot.slane %v897, 2
        %v1201 = vsel %vm1198, %v1199, %v1200
        %v1202 = vrot.slane %v1191, 2
        %v1203 = vrot.slane %v898, 2
        %v1204 = vsel %vm1198, %v1202, %v1203
        %v1205 = vrot.slane %v899, 2
        %v1206 = vsel %vm1198, %v1200, %v1205
        %v1207 = vrot.slane %v900, 2
        %v1208 = vsel %vm1198, %v1203, %v1207
        %v1209 = vrot.slane %v901, 2
        %v1210 = vsel %vm1198, %v1205, %v1209
        %v1211 = vrot.slane %v902, 2
        %v1212 = vsel %vm1198, %v1207, %v1211
        %v1213 = vrot.slane %v903, 2
        %v1214 = vsel %vm1198, %v1209, %v1213
        %v1215 = vrot.slane %v904, 2
        %v1216 = vsel %vm1198, %v1211, %v1215
        %v1217 = vrot.slane %v905, 2
        %v1218 = vsel %vm1198, %v1213, %v1217
        %v1219 = vrot.slane %v906, 2
        %v1220 = vsel %vm1198, %v1215, %v1219
        %v1221 = vrot.slane %v907, 2
        %v1222 = vsel %vm1198, %v1217, %v1221
        %v1223 = vrot.slane %v908, 2
        %v1224 = vsel %vm1198, %v1219, %v1223
        %v1225 = vrot.slane %v909, 2
        %v1226 = vsel %vm1198, %v1221, %v1225
        %v1227 = vrot.slane %v910, 2
        %v1228 = vsel %vm1198, %v1223, %v1227
        %v1229 = vrot.slane %v911, 2
        %v1230 = vsel %vm1198, %v1225, %v1229
        %v1231 = vrot.slane %v912, 2
        %v1232 = vsel %vm1198, %v1227, %v1231
        %v1233 = vrot.slane %v913, 2
        %v1234 = vsel %vm1198, %v1229, %v1233
        %v1235 = vrot.slane %v914, 2
        %v1236 = vsel %vm1198, %v1231, %v1235
        %v1237 = vrot.slane %v915, 2
        %v1238 = vsel %vm1198, %v1233, %v1237
        %v1239 = vrot.slane %v916, 2
        %v1240 = vsel %vm1198, %v1235, %v1239
        %v1241 = vrot.slane %v917, 2
        %v1242 = vsel %vm1198, %v1237, %v1241
        %v1243 = vrot.slane %v918, 2
        %v1244 = vsel %vm1198, %v1239, %v1243
        %v1245 = vrot.slane %v919, 2
        %v1246 = vsel %vm1198, %v1241, %v1245
        %v1247 = vrot.slane %v920, 2
        %v1248 = vsel %vm1198, %v1243, %v1247
        %v1249 = vrot.slane %v921, 2
        %v1250 = vsel %vm1198, %v1245, %v1249
        %v1251 = vrot.slane %v922, 2
        %v1252 = vsel %vm1198, %v1247, %v1251
        %v1253 = vrot.slane %v923, 2
        %v1254 = vsel %vm1198, %v1249, %v1253
        %v1255 = vrot.slane %v924, 2
        %v1256 = vsel %vm1198, %v1251, %v1255
        %v1257 = vrot.slane %v925, 2
        %v1258 = vsel %vm1198, %v1253, %v1257
        %v1259 = vrot.slane %v926, 2
        %v1260 = vsel %vm1198, %v1255, %v1259
        %v1261 = vrot.slane %v927, 2
        %v1262 = vsel %vm1198, %v1257, %v1261
        %v1263 = vrot.slane %v928, 2
        %v1264 = vsel %vm1198, %v1259, %v1263
        %v1265 = vrot.slane %v929, 2
        %v1266 = vsel %vm1198, %v1261, %v1265
        %v1267 = vrot.slane %v930, 2
        %v1268 = vsel %vm1198, %v1263, %v1267
        %v1269 = vrot.slane %v931, 2
        %v1270 = vsel %vm1198, %v1265, %v1269
        %v1271 = vrot.slane %v932, 2
        %v1272 = vsel %vm1198, %v1267, %v1271
        %v1273 = vrot.slane %v933, 2
        %v1274 = vsel %vm1198, %v1269, %v1273
        %v1275 = vrot.slane %v934, 2
        %v1276 = vsel %vm1198, %v1271, %v1275
        %v1277 = vrot.slane %v935, 2
        %v1278 = vsel %vm1198, %v1273, %v1277
        %v1279 = vrot.slane %v936, 2
        %v1280 = vsel %vm1198, %v1275, %v1279
        %v1281 = vrot.slane %v937, 2
        %v1282 = vsel %vm1198, %v1277, %v1281
        %v1283 = vrot.slane %v938, 2
        %v1284 = vsel %vm1198, %v1279, %v1283
        %v1285 = vrot.slane %v939, 2
        %v1286 = vsel %vm1198, %v1281, %v1285
        %v1287 = vrot.slane %v940, 2
        %v1288 = vsel %vm1198, %v1283, %v1287
        %v1289 = vrot.slane %v941, 2
        %v1290 = vsel %vm1198, %v1285, %v1289
        %v1291 = vrot.slane %v942, 2
        %v1292 = vsel %vm1198, %v1287, %v1291
        %v1293 = vrot.slane %v1192, 2
        %v1294 = vsel %vm1198, %v1289, %v1293
        %v1295 = vrot.slane %v1193, 2
        %v1296 = vsel %vm1198, %v1291, %v1295
        %v1345 = vmax.f32 %v1142, %v1201
        %v1346 = vmax.f32 %v1143, %v1204
        %v1347 = vmax.f32 %v1144, %v1206
        %v1348 = vmax.f32 %v1145, %v1208
        %v1349 = vmax.f32 %v1146, %v1210
        %v1350 = vmax.f32 %v1147, %v1212
        %v1351 = vmax.f32 %v1148, %v1214
        %v1352 = vmax.f32 %v1149, %v1216
        %v1353 = vmax.f32 %v1150, %v1218
        %v1354 = vmax.f32 %v1151, %v1220
        %v1355 = vmax.f32 %v1152, %v1222
        %v1356 = vmax.f32 %v1153, %v1224
        %v1357 = vmax.f32 %v1154, %v1226
        %v1358 = vmax.f32 %v1155, %v1228
        %v1359 = vmax.f32 %v1156, %v1230
        %v1360 = vmax.f32 %v1157, %v1232
        %v1361 = vmax.f32 %v1158, %v1234
        %v1362 = vmax.f32 %v1159, %v1236
        %v1363 = vmax.f32 %v1160, %v1238
        %v1364 = vmax.f32 %v1161, %v1240
        %v1365 = vmax.f32 %v1162, %v1242
        %v1366 = vmax.f32 %v1163, %v1244
        %v1367 = vmax.f32 %v1164, %v1246
        %v1368 = vmax.f32 %v1165, %v1248
        %v1369 = vmax.f32 %v1166, %v1250
        %v1370 = vmax.f32 %v1167, %v1252
        %v1371 = vmax.f32 %v1168, %v1254
        %v1372 = vmax.f32 %v1169, %v1256
        %v1373 = vmax.f32 %v1170, %v1258
        %v1374 = vmax.f32 %v1171, %v1260
        %v1375 = vmax.f32 %v1172, %v1262
        %v1376 = vmax.f32 %v1173, %v1264
        %v1377 = vmax.f32 %v1174, %v1266
        %v1378 = vmax.f32 %v1175, %v1268
        %v1379 = vmax.f32 %v1176, %v1270
        %v1380 = vmax.f32 %v1177, %v1272
        %v1381 = vmax.f32 %v1178, %v1274
        %v1382 = vmax.f32 %v1179, %v1276
        %v1383 = vmax.f32 %v1180, %v1278
        %v1384 = vmax.f32 %v1181, %v1280
        %v1385 = vmax.f32 %v1182, %v1282
        %v1386 = vmax.f32 %v1183, %v1284
        %v1387 = vmax.f32 %v1184, %v1286
        %v1388 = vmax.f32 %v1185, %v1288
        %v1389 = vmax.f32 %v1186, %v1290
        %v1390 = vmax.f32 %v1187, %v1292
        %v1391 = vmax.f32 %v1188, %v1294
        %v1392 = vmax.f32 %v1189, %v1296
        %v1393 = vld [vmem:[#allocation2 + $0x10] sm:$0xf8]
        %v1394 = vld [vmem:[#allocation2 + $0x18] sm:$0xf8]
        %v1395 = vld [vmem:[#allocation2 + $0x190] sm:$0x7]
        %v1396 = vld [vmem:[#allocation2 + $0x198] sm:$0x7]
        %vm1401 = vcmask 1044480
        %v1402 = vrot.slane %v1393, 3
        %v1403 = vrot.slane %v897, 3
        %v1404 = vsel %vm1401, %v1402, %v1403
        %v1405 = vrot.slane %v1394, 3
        %v1406 = vrot.slane %v898, 3
        %v1407 = vsel %vm1401, %v1405, %v1406
        %v1408 = vrot.slane %v899, 3
        %v1409 = vsel %vm1401, %v1403, %v1408
        %v1410 = vrot.slane %v900, 3
        %v1411 = vsel %vm1401, %v1406, %v1410
        %v1412 = vrot.slane %v901, 3
        %v1413 = vsel %vm1401, %v1408, %v1412
        %v1414 = vrot.slane %v902, 3
        %v1415 = vsel %vm1401, %v1410, %v1414
        %v1416 = vrot.slane %v903, 3
        %v1417 = vsel %vm1401, %v1412, %v1416
        %v1418 = vrot.slane %v904, 3
        %v1419 = vsel %vm1401, %v1414, %v1418
        %v1420 = vrot.slane %v905, 3
        %v1421 = vsel %vm1401, %v1416, %v1420
        %v1422 = vrot.slane %v906, 3
        %v1423 = vsel %vm1401, %v1418, %v1422
        %v1424 = vrot.slane %v907, 3
        %v1425 = vsel %vm1401, %v1420, %v1424
        %v1426 = vrot.slane %v908, 3
        %v1427 = vsel %vm1401, %v1422, %v1426
        %v1428 = vrot.slane %v909, 3
        %v1429 = vsel %vm1401, %v1424, %v1428
        %v1430 = vrot.slane %v910, 3
        %v1431 = vsel %vm1401, %v1426, %v1430
        %v1432 = vrot.slane %v911, 3
        %v1433 = vsel %vm1401, %v1428, %v1432
        %v1434 = vrot.slane %v912, 3
        %v1435 = vsel %vm1401, %v1430, %v1434
        %v1436 = vrot.slane %v913, 3
        %v1437 = vsel %vm1401, %v1432, %v1436
        %v1438 = vrot.slane %v914, 3
        %v1439 = vsel %vm1401, %v1434, %v1438
        %v1440 = vrot.slane %v915, 3
        %v1441 = vsel %vm1401, %v1436, %v1440
        %v1442 = vrot.slane %v916, 3
        %v1443 = vsel %vm1401, %v1438, %v1442
        %v1444 = vrot.slane %v917, 3
        %v1445 = vsel %vm1401, %v1440, %v1444
        %v1446 = vrot.slane %v918, 3
        %v1447 = vsel %vm1401, %v1442, %v1446
        %v1448 = vrot.slane %v919, 3
        %v1449 = vsel %vm1401, %v1444, %v1448
        %v1450 = vrot.slane %v920, 3
        %v1451 = vsel %vm1401, %v1446, %v1450
        %v1452 = vrot.slane %v921, 3
        %v1453 = vsel %vm1401, %v1448, %v1452
        %v1454 = vrot.slane %v922, 3
        %v1455 = vsel %vm1401, %v1450, %v1454
        %v1456 = vrot.slane %v923, 3
        %v1457 = vsel %vm1401, %v1452, %v1456
        %v1458 = vrot.slane %v924, 3
        %v1459 = vsel %vm1401, %v1454, %v1458
        %v1460 = vrot.slane %v925, 3
        %v1461 = vsel %vm1401, %v1456, %v1460
        %v1462 = vrot.slane %v926, 3
        %v1463 = vsel %vm1401, %v1458, %v1462
        %v1464 = vrot.slane %v927, 3
        %v1465 = vsel %vm1401, %v1460, %v1464
        %v1466 = vrot.slane %v928, 3
        %v1467 = vsel %vm1401, %v1462, %v1466
        %v1468 = vrot.slane %v929, 3
        %v1469 = vsel %vm1401, %v1464, %v1468
        %v1470 = vrot.slane %v930, 3
        %v1471 = vsel %vm1401, %v1466, %v1470
        %v1472 = vrot.slane %v931, 3
        %v1473 = vsel %vm1401, %v1468, %v1472
        %v1474 = vrot.slane %v932, 3
        %v1475 = vsel %vm1401, %v1470, %v1474
        %v1476 = vrot.slane %v933, 3
        %v1477 = vsel %vm1401, %v1472, %v1476
        %v1478 = vrot.slane %v934, 3
        %v1479 = vsel %vm1401, %v1474, %v1478
        %v1480 = vrot.slane %v935, 3
        %v1481 = vsel %vm1401, %v1476, %v1480
        %v1482 = vrot.slane %v936, 3
        %v1483 = vsel %vm1401, %v1478, %v1482
        %v1484 = vrot.slane %v937, 3
        %v1485 = vsel %vm1401, %v1480, %v1484
        %v1486 = vrot.slane %v938, 3
        %v1487 = vsel %vm1401, %v1482, %v1486
        %v1488 = vrot.slane %v939, 3
        %v1489 = vsel %vm1401, %v1484, %v1488
        %v1490 = vrot.slane %v940, 3
        %v1491 = vsel %vm1401, %v1486, %v1490
        %v1492 = vrot.slane %v941, 3
        %v1493 = vsel %vm1401, %v1488, %v1492
        %v1494 = vrot.slane %v942, 3
        %v1495 = vsel %vm1401, %v1490, %v1494
        %v1496 = vrot.slane %v1395, 3
        %v1497 = vsel %vm1401, %v1492, %v1496
        %v1498 = vrot.slane %v1396, 3
        %v1499 = vsel %vm1401, %v1494, %v1498
        %v1548 = vmax.f32 %v1345, %v1404
        %v1549 = vmax.f32 %v1346, %v1407
        %v1550 = vmax.f32 %v1347, %v1409
        %v1551 = vmax.f32 %v1348, %v1411
        %v1552 = vmax.f32 %v1349, %v1413
        %v1553 = vmax.f32 %v1350, %v1415
        %v1554 = vmax.f32 %v1351, %v1417
        %v1555 = vmax.f32 %v1352, %v1419
        %v1556 = vmax.f32 %v1353, %v1421
        %v1557 = vmax.f32 %v1354, %v1423
        %v1558 = vmax.f32 %v1355, %v1425
        %v1559 = vmax.f32 %v1356, %v1427
        %v1560 = vmax.f32 %v1357, %v1429
        %v1561 = vmax.f32 %v1358, %v1431
        %v1562 = vmax.f32 %v1359, %v1433
        %v1563 = vmax.f32 %v1360, %v1435
        %v1564 = vmax.f32 %v1361, %v1437
        %v1565 = vmax.f32 %v1362, %v1439
        %v1566 = vmax.f32 %v1363, %v1441
        %v1567 = vmax.f32 %v1364, %v1443
        %v1568 = vmax.f32 %v1365, %v1445
        %v1569 = vmax.f32 %v1366, %v1447
        %v1570 = vmax.f32 %v1367, %v1449
        %v1571 = vmax.f32 %v1368, %v1451
        %v1572 = vmax.f32 %v1369, %v1453
        %v1573 = vmax.f32 %v1370, %v1455
        %v1574 = vmax.f32 %v1371, %v1457
        %v1575 = vmax.f32 %v1372, %v1459
        %v1576 = vmax.f32 %v1373, %v1461
        %v1577 = vmax.f32 %v1374, %v1463
        %v1578 = vmax.f32 %v1375, %v1465
        %v1579 = vmax.f32 %v1376, %v1467
        %v1580 = vmax.f32 %v1377, %v1469
        %v1581 = vmax.f32 %v1378, %v1471
        %v1582 = vmax.f32 %v1379, %v1473
        %v1583 = vmax.f32 %v1380, %v1475
        %v1584 = vmax.f32 %v1381, %v1477
        %v1585 = vmax.f32 %v1382, %v1479
        %v1586 = vmax.f32 %v1383, %v1481
        %v1587 = vmax.f32 %v1384, %v1483
        %v1588 = vmax.f32 %v1385, %v1485
        %v1589 = vmax.f32 %v1386, %v1487
        %v1590 = vmax.f32 %v1387, %v1489
        %v1591 = vmax.f32 %v1388, %v1491
        %v1592 = vmax.f32 %v1389, %v1493
        %v1593 = vmax.f32 %v1390, %v1495
        %v1594 = vmax.f32 %v1391, %v1497
        %v1595 = vmax.f32 %v1392, %v1499
        %v1596 = vld [vmem:[#allocation2 + $0x10] sm:$0xf0]
        %v1597 = vld [vmem:[#allocation2 + $0x18] sm:$0xf0]
        %v1598 = vld [vmem:[#allocation2 + $0x190] sm:$0xf]
        %v1599 = vld [vmem:[#allocation2 + $0x198] sm:$0xf]
        %v1604 = vrot.slane %v1596, 4
        %v1605 = vrot.slane %v897, 4
        %v1606 = vsel %vm583, %v1604, %v1605
        %v1607 = vrot.slane %v1597, 4
        %v1608 = vrot.slane %v898, 4
        %v1609 = vsel %vm583, %v1607, %v1608
        %v1610 = vrot.slane %v899, 4
        %v1611 = vsel %vm583, %v1605, %v1610
        %v1612 = vrot.slane %v900, 4
        %v1613 = vsel %vm583, %v1608, %v1612
        %v1614 = vrot.slane %v901, 4
        %v1615 = vsel %vm583, %v1610, %v1614
        %v1616 = vrot.slane %v902, 4
        %v1617 = vsel %vm583, %v1612, %v1616
        %v1618 = vrot.slane %v903, 4
        %v1619 = vsel %vm583, %v1614, %v1618
        %v1620 = vrot.slane %v904, 4
        %v1621 = vsel %vm583, %v1616, %v1620
        %v1622 = vrot.slane %v905, 4
        %v1623 = vsel %vm583, %v1618, %v1622
        %v1624 = vrot.slane %v906, 4
        %v1625 = vsel %vm583, %v1620, %v1624
        %v1626 = vrot.slane %v907, 4
        %v1627 = vsel %vm583, %v1622, %v1626
        %v1628 = vrot.slane %v908, 4
        %v1629 = vsel %vm583, %v1624, %v1628
        %v1630 = vrot.slane %v909, 4
        %v1631 = vsel %vm583, %v1626, %v1630
        %v1632 = vrot.slane %v910, 4
        %v1633 = vsel %vm583, %v1628, %v1632
        %v1634 = vrot.slane %v911, 4
        %v1635 = vsel %vm583, %v1630, %v1634
        %v1636 = vrot.slane %v912, 4
        %v1637 = vsel %vm583, %v1632, %v1636
        %v1638 = vrot.slane %v913, 4
        %v1639 = vsel %vm583, %v1634, %v1638
        %v1640 = vrot.slane %v914, 4
        %v1641 = vsel %vm583, %v1636, %v1640
        %v1642 = vrot.slane %v915, 4
        %v1643 = vsel %vm583, %v1638, %v1642
        %v1644 = vrot.slane %v916, 4
        %v1645 = vsel %vm583, %v1640, %v1644
        %v1646 = vrot.slane %v917, 4
        %v1647 = vsel %vm583, %v1642, %v1646
        %v1648 = vrot.slane %v918, 4
        %v1649 = vsel %vm583, %v1644, %v1648
        %v1650 = vrot.slane %v919, 4
        %v1651 = vsel %vm583, %v1646, %v1650
        %v1652 = vrot.slane %v920, 4
        %v1653 = vsel %vm583, %v1648, %v1652
        %v1654 = vrot.slane %v921, 4
        %v1655 = vsel %vm583, %v1650, %v1654
        %v1656 = vrot.slane %v922, 4
        %v1657 = vsel %vm583, %v1652, %v1656
        %v1658 = vrot.slane %v923, 4
        %v1659 = vsel %vm583, %v1654, %v1658
        %v1660 = vrot.slane %v924, 4
        %v1661 = vsel %vm583, %v1656, %v1660
        %v1662 = vrot.slane %v925, 4
        %v1663 = vsel %vm583, %v1658, %v1662
        %v1664 = vrot.slane %v926, 4
        %v1665 = vsel %vm583, %v1660, %v1664
        %v1666 = vrot.slane %v927, 4
        %v1667 = vsel %vm583, %v1662, %v1666
        %v1668 = vrot.slane %v928, 4
        %v1669 = vsel %vm583, %v1664, %v1668
        %v1670 = vrot.slane %v929, 4
        %v1671 = vsel %vm583, %v1666, %v1670
        %v1672 = vrot.slane %v930, 4
        %v1673 = vsel %vm583, %v1668, %v1672
        %v1674 = vrot.slane %v931, 4
        %v1675 = vsel %vm583, %v1670, %v1674
        %v1676 = vrot.slane %v932, 4
        %v1677 = vsel %vm583, %v1672, %v1676
        %v1678 = vrot.slane %v933, 4
        %v1679 = vsel %vm583, %v1674, %v1678
        %v1680 = vrot.slane %v934, 4
        %v1681 = vsel %vm583, %v1676, %v1680
        %v1682 = vrot.slane %v935, 4
        %v1683 = vsel %vm583, %v1678, %v1682
        %v1684 = vrot.slane %v936, 4
        %v1685 = vsel %vm583, %v1680, %v1684
        %v1686 = vrot.slane %v937, 4
        %v1687 = vsel %vm583, %v1682, %v1686
        %v1688 = vrot.slane %v938, 4
        %v1689 = vsel %vm583, %v1684, %v1688
        %v1690 = vrot.slane %v939, 4
        %v1691 = vsel %vm583, %v1686, %v1690
        %v1692 = vrot.slane %v940, 4
        %v1693 = vsel %vm583, %v1688, %v1692
        %v1694 = vrot.slane %v941, 4
        %v1695 = vsel %vm583, %v1690, %v1694
        %v1696 = vrot.slane %v942, 4
        %v1697 = vsel %vm583, %v1692, %v1696
        %v1698 = vrot.slane %v1598, 4
        %v1699 = vsel %vm583, %v1694, %v1698
        %v1700 = vrot.slane %v1599, 4
        %v1701 = vsel %vm583, %v1696, %v1700
        %v1750 = vmax.f32 %v1548, %v1606
        %v1751 = vmax.f32 %v1549, %v1609
        %v1752 = vmax.f32 %v1550, %v1611
        %v1753 = vmax.f32 %v1551, %v1613
        %v1754 = vmax.f32 %v1552, %v1615
        %v1755 = vmax.f32 %v1553, %v1617
        %v1756 = vmax.f32 %v1554, %v1619
        %v1757 = vmax.f32 %v1555, %v1621
        %v1758 = vmax.f32 %v1556, %v1623
        %v1759 = vmax.f32 %v1557, %v1625
        %v1760 = vmax.f32 %v1558, %v1627
        %v1761 = vmax.f32 %v1559, %v1629
        %v1762 = vmax.f32 %v1560, %v1631
        %v1763 = vmax.f32 %v1561, %v1633
        %v1764 = vmax.f32 %v1562, %v1635
        %v1765 = vmax.f32 %v1563, %v1637
        %v1766 = vmax.f32 %v1564, %v1639
        %v1767 = vmax.f32 %v1565, %v1641
        %v1768 = vmax.f32 %v1566, %v1643
        %v1769 = vmax.f32 %v1567, %v1645
        %v1770 = vmax.f32 %v1568, %v1647
        %v1771 = vmax.f32 %v1569, %v1649
        %v1772 = vmax.f32 %v1570, %v1651
        %v1773 = vmax.f32 %v1571, %v1653
        %v1774 = vmax.f32 %v1572, %v1655
        %v1775 = vmax.f32 %v1573, %v1657
        %v1776 = vmax.f32 %v1574, %v1659
        %v1777 = vmax.f32 %v1575, %v1661
        %v1778 = vmax.f32 %v1576, %v1663
        %v1779 = vmax.f32 %v1577, %v1665
        %v1780 = vmax.f32 %v1578, %v1667
        %v1781 = vmax.f32 %v1579, %v1669
        %v1782 = vmax.f32 %v1580, %v1671
        %v1783 = vmax.f32 %v1581, %v1673
        %v1784 = vmax.f32 %v1582, %v1675
        %v1785 = vmax.f32 %v1583, %v1677
        %v1786 = vmax.f32 %v1584, %v1679
        %v1787 = vmax.f32 %v1585, %v1681
        %v1788 = vmax.f32 %v1586, %v1683
        %v1789 = vmax.f32 %v1587, %v1685
        %v1790 = vmax.f32 %v1588, %v1687
        %v1791 = vmax.f32 %v1589, %v1689
        %v1792 = vmax.f32 %v1590, %v1691
        %v1793 = vmax.f32 %v1591, %v1693
        %v1794 = vmax.f32 %v1592, %v1695
        %v1795 = vmax.f32 %v1593, %v1697
        %v1796 = vmax.f32 %v1594, %v1699
        %v1797 = vmax.f32 %v1595, %v1701
        %v1798 = vld [vmem:[%s1] sm:$0xff]
        %v1799 = vld [vmem:[%s1 + $0x8] sm:$0xff]
        %v1800 = vld [vmem:[%s1 + $0x10] sm:$0xff]
        %v1801 = vld [vmem:[%s1 + $0x18] sm:$0xff]
        %v1802 = vld [vmem:[%s1 + $0x20] sm:$0xff]
        %v1803 = vld [vmem:[%s1 + $0x28] sm:$0xff]
        %v1804 = vld [vmem:[%s1 + $0x30] sm:$0xff]
        %v1805 = vld [vmem:[%s1 + $0x38] sm:$0xff]
        %v1806 = vld [vmem:[%s1 + $0x40] sm:$0xff]
        %v1807 = vld [vmem:[%s1 + $0x48] sm:$0xff]
        %v1808 = vld [vmem:[%s1 + $0x50] sm:$0xff]
        %v1809 = vld [vmem:[%s1 + $0x58] sm:$0xff]
        %v1810 = vld [vmem:[%s1 + $0x60] sm:$0xff]
        %v1811 = vld [vmem:[%s1 + $0x68] sm:$0xff]
        %v1812 = vld [vmem:[%s1 + $0x70] sm:$0xff]
        %v1813 = vld [vmem:[%s1 + $0x78] sm:$0xff]
        %v1814 = vld [vmem:[%s1 + $0x80] sm:$0xff]
        %v1815 = vld [vmem:[%s1 + $0x88] sm:$0xff]
        %v1816 = vld [vmem:[%s1 + $0x90] sm:$0xff]
        %v1817 = vld [vmem:[%s1 + $0x98] sm:$0xff]
        %v1818 = vld [vmem:[%s1 + $0xa0] sm:$0xff]
        %v1819 = vld [vmem:[%s1 + $0xa8] sm:$0xff]
        %v1820 = vld [vmem:[%s1 + $0xb0] sm:$0xff]
        %v1821 = vld [vmem:[%s1 + $0xb8] sm:$0xff]
        %1823 = vset.pattern.permute.xlu0 0
        %1824 = vperm.xlu0 %1823, %v1798
        %v1825 = vpop.permute.xlu0 %1824
        %1828 = vset.pattern.permute.xlu0 0
        %1829 = vperm.xlu0 %1828, %v1799
        %v1830 = vpop.permute.xlu0 %1829
        %1833 = vset.pattern.permute.xlu0 0
        %1834 = vperm.xlu0 %1833, %v1800
        %v1835 = vpop.permute.xlu0 %1834
        %1838 = vset.pattern.permute.xlu0 0
        %1839 = vperm.xlu0 %1838, %v1801
        %v1840 = vpop.permute.xlu0 %1839
        %1843 = vset.pattern.permute.xlu0 0
        %1844 = vperm.xlu0 %1843, %v1802
        %v1845 = vpop.permute.xlu0 %1844
        %1848 = vset.pattern.permute.xlu0 0
        %1849 = vperm.xlu0 %1848, %v1803
        %v1850 = vpop.permute.xlu0 %1849
        %1853 = vset.pattern.permute.xlu0 0
        %1854 = vperm.xlu0 %1853, %v1804
        %v1855 = vpop.permute.xlu0 %1854
        %1858 = vset.pattern.permute.xlu0 0
        %1859 = vperm.xlu0 %1858, %v1805
        %v1860 = vpop.permute.xlu0 %1859
        %1863 = vset.pattern.permute.xlu0 0
        %1864 = vperm.xlu0 %1863, %v1806
        %v1865 = vpop.permute.xlu0 %1864
        %1868 = vset.pattern.permute.xlu0 0
        %1869 = vperm.xlu0 %1868, %v1807
        %v1870 = vpop.permute.xlu0 %1869
        %1873 = vset.pattern.permute.xlu0 0
        %1874 = vperm.xlu0 %1873, %v1808
        %v1875 = vpop.permute.xlu0 %1874
        %1878 = vset.pattern.permute.xlu0 0
        %1879 = vperm.xlu0 %1878, %v1809
        %v1880 = vpop.permute.xlu0 %1879
        %1883 = vset.pattern.permute.xlu0 0
        %1884 = vperm.xlu0 %1883, %v1810
        %v1885 = vpop.permute.xlu0 %1884
        %1888 = vset.pattern.permute.xlu0 0
        %1889 = vperm.xlu0 %1888, %v1811
        %v1890 = vpop.permute.xlu0 %1889
        %1893 = vset.pattern.permute.xlu0 0
        %1894 = vperm.xlu0 %1893, %v1812
        %v1895 = vpop.permute.xlu0 %1894
        %1898 = vset.pattern.permute.xlu0 0
        %1899 = vperm.xlu0 %1898, %v1813
        %v1900 = vpop.permute.xlu0 %1899
        %1903 = vset.pattern.permute.xlu0 0
        %1904 = vperm.xlu0 %1903, %v1814
        %v1905 = vpop.permute.xlu0 %1904
        %1908 = vset.pattern.permute.xlu0 0
        %1909 = vperm.xlu0 %1908, %v1815
        %v1910 = vpop.permute.xlu0 %1909
        %1913 = vset.pattern.permute.xlu0 0
        %1914 = vperm.xlu0 %1913, %v1816
        %v1915 = vpop.permute.xlu0 %1914
        %1918 = vset.pattern.permute.xlu0 0
        %1919 = vperm.xlu0 %1918, %v1817
        %v1920 = vpop.permute.xlu0 %1919
        %1923 = vset.pattern.permute.xlu0 0
        %1924 = vperm.xlu0 %1923, %v1818
        %v1925 = vpop.permute.xlu0 %1924
        %1928 = vset.pattern.permute.xlu0 0
        %1929 = vperm.xlu0 %1928, %v1819
        %v1930 = vpop.permute.xlu0 %1929
        %1933 = vset.pattern.permute.xlu0 0
        %1934 = vperm.xlu0 %1933, %v1820
        %v1935 = vpop.permute.xlu0 %1934
        %1938 = vset.pattern.permute.xlu0 0
        %1939 = vperm.xlu0 %1938, %v1821
        %v1940 = vpop.permute.xlu0 %1939
        %v1942 = vmul.f32 %v1750, %v1825
        %v1943 = vmul.f32 %v1751, %v1825
        %v1944 = vmul.f32 %v1752, %v1830
        %v1945 = vmul.f32 %v1753, %v1830
        %v1946 = vmul.f32 %v1754, %v1835
        %v1947 = vmul.f32 %v1755, %v1835
        %v1948 = vmul.f32 %v1756, %v1840
        %v1949 = vmul.f32 %v1757, %v1840
        %v1950 = vmul.f32 %v1758, %v1845
        %v1951 = vmul.f32 %v1759, %v1845
        %v1952 = vmul.f32 %v1760, %v1850
        %v1953 = vmul.f32 %v1761, %v1850
        %v1954 = vmul.f32 %v1762, %v1855
        %v1955 = vmul.f32 %v1763, %v1855
        %v1956 = vmul.f32 %v1764, %v1860
        %v1957 = vmul.f32 %v1765, %v1860
        %v1958 = vmul.f32 %v1766, %v1865
        %v1959 = vmul.f32 %v1767, %v1865
        %v1960 = vmul.f32 %v1768, %v1870
        %v1961 = vmul.f32 %v1769, %v1870
        %v1962 = vmul.f32 %v1770, %v1875
        %v1963 = vmul.f32 %v1771, %v1875
        %v1964 = vmul.f32 %v1772, %v1880
        %v1965 = vmul.f32 %v1773, %v1880
        %v1966 = vmul.f32 %v1774, %v1885
        %v1967 = vmul.f32 %v1775, %v1885
        %v1968 = vmul.f32 %v1776, %v1890
        %v1969 = vmul.f32 %v1777, %v1890
        %v1970 = vmul.f32 %v1778, %v1895
        %v1971 = vmul.f32 %v1779, %v1895
        %v1972 = vmul.f32 %v1780, %v1900
        %v1973 = vmul.f32 %v1781, %v1900
        %v1974 = vmul.f32 %v1782, %v1905
        %v1975 = vmul.f32 %v1783, %v1905
        %v1976 = vmul.f32 %v1784, %v1910
        %v1977 = vmul.f32 %v1785, %v1910
        %v1978 = vmul.f32 %v1786, %v1915
        %v1979 = vmul.f32 %v1787, %v1915
        %v1980 = vmul.f32 %v1788, %v1920
        %v1981 = vmul.f32 %v1789, %v1920
        %v1982 = vmul.f32 %v1790, %v1925
        %v1983 = vmul.f32 %v1791, %v1925
        %v1984 = vmul.f32 %v1792, %v1930
        %v1985 = vmul.f32 %v1793, %v1930
        %v1986 = vmul.f32 %v1794, %v1935
        %v1987 = vmul.f32 %v1795, %v1935
        %v1988 = vmul.f32 %v1796, %v1940
        %v1989 = vmul.f32 %v1797, %v1940
        %v1990 = vmul.f32 %v1942, %v1942
        %v1991 = vmul.f32 %v1943, %v1943
        %v1992 = vmul.f32 %v1944, %v1944
        %v1993 = vmul.f32 %v1945, %v1945
        %v1994 = vmul.f32 %v1946, %v1946
        %v1995 = vmul.f32 %v1947, %v1947
        %v1996 = vmul.f32 %v1948, %v1948
        %v1997 = vmul.f32 %v1949, %v1949
        %v1998 = vmul.f32 %v1950, %v1950
        %v1999 = vmul.f32 %v1951, %v1951
        %v2000 = vmul.f32 %v1952, %v1952
        %v2001 = vmul.f32 %v1953, %v1953
        %v2002 = vmul.f32 %v1954, %v1954
        %v2003 = vmul.f32 %v1955, %v1955
        %v2004 = vmul.f32 %v1956, %v1956
        %v2005 = vmul.f32 %v1957, %v1957
        %v2006 = vmul.f32 %v1958, %v1958
        %v2007 = vmul.f32 %v1959, %v1959
        %v2008 = vmul.f32 %v1960, %v1960
        %v2009 = vmul.f32 %v1961, %v1961
        %v2010 = vmul.f32 %v1962, %v1962
        %v2011 = vmul.f32 %v1963, %v1963
        %v2012 = vmul.f32 %v1964, %v1964
        %v2013 = vmul.f32 %v1965, %v1965
        %v2014 = vmul.f32 %v1966, %v1966
        %v2015 = vmul.f32 %v1967, %v1967
        %v2016 = vmul.f32 %v1968, %v1968
        %v2017 = vmul.f32 %v1969, %v1969
        %v2018 = vmul.f32 %v1970, %v1970
        %v2019 = vmul.f32 %v1971, %v1971
        %v2020 = vmul.f32 %v1972, %v1972
        %v2021 = vmul.f32 %v1973, %v1973
        %v2022 = vmul.f32 %v1974, %v1974
        %v2023 = vmul.f32 %v1975, %v1975
        %v2024 = vmul.f32 %v1976, %v1976
        %v2025 = vmul.f32 %v1977, %v1977
        %v2026 = vmul.f32 %v1978, %v1978
        %v2027 = vmul.f32 %v1979, %v1979
        %v2028 = vmul.f32 %v1980, %v1980
        %v2029 = vmul.f32 %v1981, %v1981
        %v2030 = vmul.f32 %v1982, %v1982
        %v2031 = vmul.f32 %v1983, %v1983
        %v2032 = vmul.f32 %v1984, %v1984
        %v2033 = vmul.f32 %v1985, %v1985
        %v2034 = vmul.f32 %v1986, %v1986
        %v2035 = vmul.f32 %v1987, %v1987
        %v2036 = vmul.f32 %v1988, %v1988
        %v2037 = vmul.f32 %v1989, %v1989
        %v2038 = vld [vmem:[%s10] sm:$0xff]
        %v2039 = vld [vmem:[%s10 + $0x8] sm:$0xff]
        %v2040 = vld [vmem:[%s10 + $0x10] sm:$0xff]
        %v2041 = vld [vmem:[%s10 + $0x18] sm:$0xff]
        %v2042 = vld [vmem:[%s10 + $0x20] sm:$0xff]
        %v2043 = vld [vmem:[%s10 + $0x28] sm:$0xff]
        %v2044 = vld [vmem:[%s10 + $0x30] sm:$0xff]
        %v2045 = vld [vmem:[%s10 + $0x38] sm:$0xff]
        %v2046 = vld [vmem:[%s10 + $0x40] sm:$0xff]
        %v2047 = vld [vmem:[%s10 + $0x48] sm:$0xff]
        %v2048 = vld [vmem:[%s10 + $0x50] sm:$0xff]
        %v2049 = vld [vmem:[%s10 + $0x58] sm:$0xff]
        %v2050 = vld [vmem:[%s10 + $0x60] sm:$0xff]
        %v2051 = vld [vmem:[%s10 + $0x68] sm:$0xff]
        %v2052 = vld [vmem:[%s10 + $0x70] sm:$0xff]
        %v2053 = vld [vmem:[%s10 + $0x78] sm:$0xff]
        %v2054 = vld [vmem:[%s10 + $0x80] sm:$0xff]
        %v2055 = vld [vmem:[%s10 + $0x88] sm:$0xff]
        %v2056 = vld [vmem:[%s10 + $0x90] sm:$0xff]
        %v2057 = vld [vmem:[%s10 + $0x98] sm:$0xff]
        %v2059 = vsel %vm464, %v1991, 0
        %v2062 = vsel %vm464, %v1993, 0
        %v2065 = vsel %vm464, %v1995, 0
        %v2068 = vsel %vm464, %v1997, 0
        %v2071 = vsel %vm464, %v1999, 0
        %v2074 = vsel %vm464, %v2001, 0
        %v2077 = vsel %vm464, %v2003, 0
        %v2080 = vsel %vm464, %v2005, 0
        %v2083 = vsel %vm464, %v2007, 0
        %v2086 = vsel %vm464, %v2009, 0
        %v2089 = vsel %vm464, %v2011, 0
        %v2092 = vsel %vm464, %v2013, 0
        %v2095 = vsel %vm464, %v2015, 0
        %v2098 = vsel %vm464, %v2017, 0
        %v2101 = vsel %vm464, %v2019, 0
        %v2104 = vsel %vm464, %v2021, 0
        %v2107 = vsel %vm464, %v2023, 0
        %v2110 = vsel %vm464, %v2025, 0
        %v2113 = vsel %vm464, %v2027, 0
        %v2116 = vsel %vm464, %v2029, 0
        %v2119 = vsel %vm464, %v2031, 0
        %v2122 = vsel %vm464, %v2033, 0
        %v2125 = vsel %vm464, %v2035, 0
        %v2128 = vsel %vm464, %v2037, 0
        %2130 = vmatprep.subr.mxu0 0.0
        %2131 = vmatpush1.msra.mxu0 %v2038
        %2132 = vmatprep.subr.mxu0 0.0
        %2133 = vmatpush1.msra.mxu0 %v2039
        %2134 = vmatprep.subr.mxu0 0.0
        %2135 = vmatpush1.msra.mxu0 %v2040
        %2136 = vmatprep.subr.mxu0 0.0
        %2137 = vmatpush1.msra.mxu0 %v2041
        %2138 = vmatprep.subr.mxu0 0.0
        %2139 = vmatpush1.msra.mxu0 %v2042
        %2140 = vmatprep.subr.mxu0 0.0
        %2141 = vmatpush1.msra.mxu0 %v2043
        %2142 = vmatprep.subr.mxu0 0.0
        %2143 = vmatpush1.msra.mxu0 %v2044
        %2144 = vmatprep.subr.mxu0 0.0
        %2145 = vmatpush1.msra.mxu0 %v2045
        %2146 = vmatprep.subr.mxu0 0.0
        %2147 = vmatpush1.msra.mxu0 %v2046
        %2148 = vmatprep.subr.mxu0 0.0
        %2149 = vmatpush1.msra.mxu0 %v2047
        %2150 = vmatprep.subr.mxu0 0.0
        %2151 = vmatpush1.msra.mxu0 %v2048
        %2152 = vmatprep.subr.mxu0 0.0
        %2153 = vmatpush1.msra.mxu0 %v2049
        %2154 = vmatprep.subr.mxu0 0.0
        %2155 = vmatpush1.msra.mxu0 %v2050
        %2156 = vmatprep.subr.mxu0 0.0
        %2157 = vmatpush1.msra.mxu0 %v2051
        %2158 = vmatprep.subr.mxu0 0.0
        %2159 = vmatpush1.msra.mxu0 %v2052
        %2160 = vmatprep.subr.mxu0 0.0
        %2161 = vmatpush1.msra.mxu0 %v2053
        %2162 = vmatprep.subr.mxu0 0.0
        %2163 = vmatpush1.msra.mxu0 %v2054
        %2164 = vmatprep.subr.mxu0 0.0
        %2165 = vmatpush1.msra.mxu0 %v2055
        %2166 = vmatprep.subr.mxu0 0.0
        %2167 = vmatpush1.msra.mxu0 %v2056
        %2168 = vmatprep.subr.mxu0 0.0
        %2169 = vmatpush1.msra.mxu0 %v2057
        %2170 = vmatprep.subr.mxu0 0.0
        %2171 = vmatpush1.msra.mxu0 0.0
        %2172 = vmatprep.subr.mxu0 0.0
        %2173 = vmatpush1.msra.mxu0 0.0
        %2174 = vmatprep.subr.mxu0 0.0
        %2175 = vmatpush1.msra.mxu0 0.0
        %2176 = vmatprep.subr.mxu0 0.0
        %2177 = vmatpush1.msra.mxu0 0.0
        %2178 = vmatprep.subr.mxu0 0.0
        %2179 = vmatpush1.msra.mxu0 0.0
        %2180 = vmatprep.subr.mxu0 0.0
        %2181 = vmatpush1.msra.mxu0 0.0
        %2182 = vmatprep.subr.mxu0 0.0
        %2183 = vmatpush1.msra.mxu0 0.0
        %2184 = vmatprep.subr.mxu0 0.0
        %2185 = vmatpush1.msra.mxu0 0.0
        %2186 = vmatprep.subr.mxu0 0.0
        %2187 = vmatpush1.msra.mxu0 0.0
        %2188 = vmatprep.subr.mxu0 0.0
        %2189 = vmatpush1.msra.mxu0 0.0
        %2190 = vmatprep.subr.mxu0 0.0
        %2191 = vmatpush1.msra.mxu0 0.0
        %2192 = vmatprep.subr.mxu0 0.0
        %2193 = vmatpush1.msra.mxu0 0.0
        %2194 = vmatprep.mubr.f32.mxu0 %v2059
        %2195 = vmatmul.mubr.f32.gmra.mrb[0].mxu0 %v1990
        %v2196 = vpop.f32.mrb[0].mxu0
        %v2197 = vadd.f32 0.0, %v2196
        %v2198 = vpop.f32.mrb[0].mxu0
        %2199 = vmatprep.mubr.f32.mxu0 %v2062
        %2200 = vmatmul.mubr.f32.gmra.mrb[0].mxu0 %v1992
        %v2201 = vpop.f32.mrb[0].mxu0
        %v2202 = vadd.f32 0.0, %v2201
        %v2203 = vpop.f32.mrb[0].mxu0
        %2204 = vmatprep.mubr.f32.mxu0 %v2065
        %2205 = vmatmul.mubr.f32.gmra.mrb[0].mxu0 %v1994
        %v2206 = vpop.f32.mrb[0].mxu0
        %v2207 = vadd.f32 0.0, %v2206
        %v2208 = vpop.f32.mrb[0].mxu0
        %2209 = vmatprep.mubr.f32.mxu0 %v2068
        %2210 = vmatmul.mubr.f32.gmra.mrb[0].mxu0 %v1996
        %v2211 = vpop.f32.mrb[0].mxu0
        %v2212 = vadd.f32 0.0, %v2211
        %v2213 = vpop.f32.mrb[0].mxu0
        %2214 = vmatprep.mubr.f32.mxu0 %v2071
        %2215 = vmatmul.mubr.f32.gmra.mrb[0].mxu0 %v1998
        %v2216 = vpop.f32.mrb[0].mxu0
        %v2217 = vadd.f32 0.0, %v2216
        %v2218 = vpop.f32.mrb[0].mxu0
        %2219 = vmatprep.mubr.f32.mxu0 %v2074
        %2220 = vmatmul.mubr.f32.gmra.mrb[0].mxu0 %v2000
        %v2221 = vpop.f32.mrb[0].mxu0
        %v2222 = vadd.f32 0.0, %v2221
        %v2223 = vpop.f32.mrb[0].mxu0
        %2224 = vmatprep.mubr.f32.mxu0 %v2077
        %2225 = vmatmul.mubr.f32.gmra.mrb[0].mxu0 %v2002
        %v2226 = vpop.f32.mrb[0].mxu0
        %v2227 = vadd.f32 0.0, %v2226
        %v2228 = vpop.f32.mrb[0].mxu0
        %2229 = vmatprep.mubr.f32.mxu0 %v2080
        %2230 = vmatmul.mubr.f32.gmra.mrb[0].mxu0 %v2004
        %v2231 = vpop.f32.mrb[0].mxu0
        %v2232 = vadd.f32 0.0, %v2231
        %v2233 = vpop.f32.mrb[0].mxu0
        %2234 = vmatprep.mubr.f32.mxu0 %v2083
        %2235 = vmatmul.mubr.f32.gmra.mrb[0].mxu0 %v2006
        %v2236 = vpop.f32.mrb[0].mxu0
        %v2237 = vadd.f32 0.0, %v2236
        %v2238 = vpop.f32.mrb[0].mxu0
        %2239 = vmatprep.mubr.f32.mxu0 %v2086
        %2240 = vmatmul.mubr.f32.gmra.mrb[0].mxu0 %v2008
        %v2241 = vpop.f32.mrb[0].mxu0
        %v2242 = vadd.f32 0.0, %v2241
        %v2243 = vpop.f32.mrb[0].mxu0
        %2244 = vmatprep.mubr.f32.mxu0 %v2089
        %2245 = vmatmul.mubr.f32.gmra.mrb[0].mxu0 %v2010
        %v2246 = vpop.f32.mrb[0].mxu0
        %v2247 = vadd.f32 0.0, %v2246
        %v2248 = vpop.f32.mrb[0].mxu0
        %2249 = vmatprep.mubr.f32.mxu0 %v2092
        %2250 = vmatmul.mubr.f32.gmra.mrb[0].mxu0 %v2012
        %v2251 = vpop.f32.mrb[0].mxu0
        %v2252 = vadd.f32 0.0, %v2251
        %v2253 = vpop.f32.mrb[0].mxu0
        %2254 = vmatprep.mubr.f32.mxu0 %v2095
        %2255 = vmatmul.mubr.f32.gmra.mrb[0].mxu0 %v2014
        %v2256 = vpop.f32.mrb[0].mxu0
        %v2257 = vadd.f32 0.0, %v2256
        %v2258 = vpop.f32.mrb[0].mxu0
        %2259 = vmatprep.mubr.f32.mxu0 %v2098
        %2260 = vmatmul.mubr.f32.gmra.mrb[0].mxu0 %v2016
        %v2261 = vpop.f32.mrb[0].mxu0
        %v2262 = vadd.f32 0.0, %v2261
        %v2263 = vpop.f32.mrb[0].mxu0
        %2264 = vmatprep.mubr.f32.mxu0 %v2101
        %2265 = vmatmul.mubr.f32.gmra.mrb[0].mxu0 %v2018
        %v2266 = vpop.f32.mrb[0].mxu0
        %v2267 = vadd.f32 0.0, %v2266
        %v2268 = vpop.f32.mrb[0].mxu0
        %2269 = vmatprep.mubr.f32.mxu0 %v2104
        %2270 = vmatmul.mubr.f32.gmra.mrb[0].mxu0 %v2020
        %v2271 = vpop.f32.mrb[0].mxu0
        %v2272 = vadd.f32 0.0, %v2271
        %v2273 = vpop.f32.mrb[0].mxu0
        %2274 = vmatprep.mubr.f32.mxu0 %v2107
        %2275 = vmatmul.mubr.f32.gmra.mrb[0].mxu0 %v2022
        %v2276 = vpop.f32.mrb[0].mxu0
        %v2277 = vadd.f32 0.0, %v2276
        %v2278 = vpop.f32.mrb[0].mxu0
        %2279 = vmatprep.mubr.f32.mxu0 %v2110
        %2280 = vmatmul.mubr.f32.gmra.mrb[0].mxu0 %v2024
        %v2281 = vpop.f32.mrb[0].mxu0
        %v2282 = vadd.f32 0.0, %v2281
        %v2283 = vpop.f32.mrb[0].mxu0
        %2284 = vmatprep.mubr.f32.mxu0 %v2113
        %2285 = vmatmul.mubr.f32.gmra.mrb[0].mxu0 %v2026
        %v2286 = vpop.f32.mrb[0].mxu0
        %v2287 = vadd.f32 0.0, %v2286
        %v2288 = vpop.f32.mrb[0].mxu0
        %2289 = vmatprep.mubr.f32.mxu0 %v2116
        %2290 = vmatmul.mubr.f32.gmra.mrb[0].mxu0 %v2028
        %v2291 = vpop.f32.mrb[0].mxu0
        %v2292 = vadd.f32 0.0, %v2291
        %v2293 = vpop.f32.mrb[0].mxu0
        %2294 = vmatprep.mubr.f32.mxu0 %v2119
        %2295 = vmatmul.mubr.f32.gmra.mrb[0].mxu0 %v2030
        %v2296 = vpop.f32.mrb[0].mxu0
        %v2297 = vadd.f32 0.0, %v2296
        %v2298 = vpop.f32.mrb[0].mxu0
        %2299 = vmatprep.mubr.f32.mxu0 %v2122
        %2300 = vmatmul.mubr.f32.gmra.mrb[0].mxu0 %v2032
        %v2301 = vpop.f32.mrb[0].mxu0
        %v2302 = vadd.f32 0.0, %v2301
        %v2303 = vpop.f32.mrb[0].mxu0
        %2304 = vmatprep.mubr.f32.mxu0 %v2125
        %2305 = vmatmul.mubr.f32.gmra.mrb[0].mxu0 %v2034
        %v2306 = vpop.f32.mrb[0].mxu0
        %v2307 = vadd.f32 0.0, %v2306
        %v2308 = vpop.f32.mrb[0].mxu0
        %2309 = vmatprep.mubr.f32.mxu0 %v2128
        %2310 = vmatmul.mubr.f32.gmra.mrb[0].mxu0 %v2036
        %v2311 = vpop.f32.mrb[0].mxu0
        %v2312 = vadd.f32 0.0, %v2311
        %v2313 = vpop.f32.mrb[0].mxu0
        %2314 = vdwg.mxu0
        %v2315 = vrsqrt.pop %v2197
        %v2316 = vmul.f32 %v2197, %v2315
        %vm2317 = vcmp.eq.f32.partialorder %v2197, inf
        %v2318 = vsel %vm2317, %v2197, %v2316
        %vm2319 = vcmp.eq.f32.partialorder %v2197, 0.0
        %v2320 = vand.u32 %v2197, 2147483648
        %v2321 = vsel %vm2319, %v2320, %v2318
        %v2322 = vrsqrt.pop %v2202
        %v2323 = vmul.f32 %v2202, %v2322
        %vm2324 = vcmp.eq.f32.partialorder %v2202, inf
        %v2325 = vsel %vm2324, %v2202, %v2323
        %vm2326 = vcmp.eq.f32.partialorder %v2202, 0.0
        %v2327 = vand.u32 %v2202, 2147483648
        %v2328 = vsel %vm2326, %v2327, %v2325
        %v2329 = vrsqrt.pop %v2207
        %v2330 = vmul.f32 %v2207, %v2329
        %vm2331 = vcmp.eq.f32.partialorder %v2207, inf
        %v2332 = vsel %vm2331, %v2207, %v2330
        %vm2333 = vcmp.eq.f32.partialorder %v2207, 0.0
        %v2334 = vand.u32 %v2207, 2147483648
        %v2335 = vsel %vm2333, %v2334, %v2332
        %v2336 = vrsqrt.pop %v2212
        %v2337 = vmul.f32 %v2212, %v2336
        %vm2338 = vcmp.eq.f32.partialorder %v2212, inf
        %v2339 = vsel %vm2338, %v2212, %v2337
        %vm2340 = vcmp.eq.f32.partialorder %v2212, 0.0
        %v2341 = vand.u32 %v2212, 2147483648
        %v2342 = vsel %vm2340, %v2341, %v2339
        %v2343 = vrsqrt.pop %v2217
        %v2344 = vmul.f32 %v2217, %v2343
        %vm2345 = vcmp.eq.f32.partialorder %v2217, inf
        %v2346 = vsel %vm2345, %v2217, %v2344
        %vm2347 = vcmp.eq.f32.partialorder %v2217, 0.0
        %v2348 = vand.u32 %v2217, 2147483648
        %v2349 = vsel %vm2347, %v2348, %v2346
        %v2350 = vrsqrt.pop %v2222
        %v2351 = vmul.f32 %v2222, %v2350
        %vm2352 = vcmp.eq.f32.partialorder %v2222, inf
        %v2353 = vsel %vm2352, %v2222, %v2351
        %vm2354 = vcmp.eq.f32.partialorder %v2222, 0.0
        %v2355 = vand.u32 %v2222, 2147483648
        %v2356 = vsel %vm2354, %v2355, %v2353
        %v2357 = vrsqrt.pop %v2227
        %v2358 = vmul.f32 %v2227, %v2357
        %vm2359 = vcmp.eq.f32.partialorder %v2227, inf
        %v2360 = vsel %vm2359, %v2227, %v2358
        %vm2361 = vcmp.eq.f32.partialorder %v2227, 0.0
        %v2362 = vand.u32 %v2227, 2147483648
        %v2363 = vsel %vm2361, %v2362, %v2360
        %v2364 = vrsqrt.pop %v2232
        %v2365 = vmul.f32 %v2232, %v2364
        %vm2366 = vcmp.eq.f32.partialorder %v2232, inf
        %v2367 = vsel %vm2366, %v2232, %v2365
        %vm2368 = vcmp.eq.f32.partialorder %v2232, 0.0
        %v2369 = vand.u32 %v2232, 2147483648
        %v2370 = vsel %vm2368, %v2369, %v2367
        %v2371 = vrsqrt.pop %v2237
        %v2372 = vmul.f32 %v2237, %v2371
        %vm2373 = vcmp.eq.f32.partialorder %v2237, inf
        %v2374 = vsel %vm2373, %v2237, %v2372
        %vm2375 = vcmp.eq.f32.partialorder %v2237, 0.0
        %v2376 = vand.u32 %v2237, 2147483648
        %v2377 = vsel %vm2375, %v2376, %v2374
        %v2378 = vrsqrt.pop %v2242
        %v2379 = vmul.f32 %v2242, %v2378
        %vm2380 = vcmp.eq.f32.partialorder %v2242, inf
        %v2381 = vsel %vm2380, %v2242, %v2379
        %vm2382 = vcmp.eq.f32.partialorder %v2242, 0.0
        %v2383 = vand.u32 %v2242, 2147483648
        %v2384 = vsel %vm2382, %v2383, %v2381
        %v2385 = vrsqrt.pop %v2247
        %v2386 = vmul.f32 %v2247, %v2385
        %vm2387 = vcmp.eq.f32.partialorder %v2247, inf
        %v2388 = vsel %vm2387, %v2247, %v2386
        %vm2389 = vcmp.eq.f32.partialorder %v2247, 0.0
        %v2390 = vand.u32 %v2247, 2147483648
        %v2391 = vsel %vm2389, %v2390, %v2388
        %v2392 = vrsqrt.pop %v2252
        %v2393 = vmul.f32 %v2252, %v2392
        %vm2394 = vcmp.eq.f32.partialorder %v2252, inf
        %v2395 = vsel %vm2394, %v2252, %v2393
        %vm2396 = vcmp.eq.f32.partialorder %v2252, 0.0
        %v2397 = vand.u32 %v2252, 2147483648
        %v2398 = vsel %vm2396, %v2397, %v2395
        %v2399 = vrsqrt.pop %v2257
        %v2400 = vmul.f32 %v2257, %v2399
        %vm2401 = vcmp.eq.f32.partialorder %v2257, inf
        %v2402 = vsel %vm2401, %v2257, %v2400
        %vm2403 = vcmp.eq.f32.partialorder %v2257, 0.0
        %v2404 = vand.u32 %v2257, 2147483648
        %v2405 = vsel %vm2403, %v2404, %v2402
        %v2406 = vrsqrt.pop %v2262
        %v2407 = vmul.f32 %v2262, %v2406
        %vm2408 = vcmp.eq.f32.partialorder %v2262, inf
        %v2409 = vsel %vm2408, %v2262, %v2407
        %vm2410 = vcmp.eq.f32.partialorder %v2262, 0.0
        %v2411 = vand.u32 %v2262, 2147483648
        %v2412 = vsel %vm2410, %v2411, %v2409
        %v2413 = vrsqrt.pop %v2267
        %v2414 = vmul.f32 %v2267, %v2413
        %vm2415 = vcmp.eq.f32.partialorder %v2267, inf
        %v2416 = vsel %vm2415, %v2267, %v2414
        %vm2417 = vcmp.eq.f32.partialorder %v2267, 0.0
        %v2418 = vand.u32 %v2267, 2147483648
        %v2419 = vsel %vm2417, %v2418, %v2416
        %v2420 = vrsqrt.pop %v2272
        %v2421 = vmul.f32 %v2272, %v2420
        %vm2422 = vcmp.eq.f32.partialorder %v2272, inf
        %v2423 = vsel %vm2422, %v2272, %v2421
        %vm2424 = vcmp.eq.f32.partialorder %v2272, 0.0
        %v2425 = vand.u32 %v2272, 2147483648
        %v2426 = vsel %vm2424, %v2425, %v2423
        %v2427 = vrsqrt.pop %v2277
        %v2428 = vmul.f32 %v2277, %v2427
        %vm2429 = vcmp.eq.f32.partialorder %v2277, inf
        %v2430 = vsel %vm2429, %v2277, %v2428
        %vm2431 = vcmp.eq.f32.partialorder %v2277, 0.0
        %v2432 = vand.u32 %v2277, 2147483648
        %v2433 = vsel %vm2431, %v2432, %v2430
        %v2434 = vrsqrt.pop %v2282
        %v2435 = vmul.f32 %v2282, %v2434
        %vm2436 = vcmp.eq.f32.partialorder %v2282, inf
        %v2437 = vsel %vm2436, %v2282, %v2435
        %vm2438 = vcmp.eq.f32.partialorder %v2282, 0.0
        %v2439 = vand.u32 %v2282, 2147483648
        %v2440 = vsel %vm2438, %v2439, %v2437
        %v2441 = vrsqrt.pop %v2287
        %v2442 = vmul.f32 %v2287, %v2441
        %vm2443 = vcmp.eq.f32.partialorder %v2287, inf
        %v2444 = vsel %vm2443, %v2287, %v2442
        %vm2445 = vcmp.eq.f32.partialorder %v2287, 0.0
        %v2446 = vand.u32 %v2287, 2147483648
        %v2447 = vsel %vm2445, %v2446, %v2444
        %v2448 = vrsqrt.pop %v2292
        %v2449 = vmul.f32 %v2292, %v2448
        %vm2450 = vcmp.eq.f32.partialorder %v2292, inf
        %v2451 = vsel %vm2450, %v2292, %v2449
        %vm2452 = vcmp.eq.f32.partialorder %v2292, 0.0
        %v2453 = vand.u32 %v2292, 2147483648
        %v2454 = vsel %vm2452, %v2453, %v2451
        %v2455 = vrsqrt.pop %v2297
        %v2456 = vmul.f32 %v2297, %v2455
        %vm2457 = vcmp.eq.f32.partialorder %v2297, inf
        %v2458 = vsel %vm2457, %v2297, %v2456
        %vm2459 = vcmp.eq.f32.partialorder %v2297, 0.0
        %v2460 = vand.u32 %v2297, 2147483648
        %v2461 = vsel %vm2459, %v2460, %v2458
        %v2462 = vrsqrt.pop %v2302
        %v2463 = vmul.f32 %v2302, %v2462
        %vm2464 = vcmp.eq.f32.partialorder %v2302, inf
        %v2465 = vsel %vm2464, %v2302, %v2463
        %vm2466 = vcmp.eq.f32.partialorder %v2302, 0.0
        %v2467 = vand.u32 %v2302, 2147483648
        %v2468 = vsel %vm2466, %v2467, %v2465
        %v2469 = vrsqrt.pop %v2307
        %v2470 = vmul.f32 %v2307, %v2469
        %vm2471 = vcmp.eq.f32.partialorder %v2307, inf
        %v2472 = vsel %vm2471, %v2307, %v2470
        %vm2473 = vcmp.eq.f32.partialorder %v2307, 0.0
        %v2474 = vand.u32 %v2307, 2147483648
        %v2475 = vsel %vm2473, %v2474, %v2472
        %v2476 = vrsqrt.pop %v2312
        %v2477 = vmul.f32 %v2312, %v2476
        %vm2478 = vcmp.eq.f32.partialorder %v2312, inf
        %v2479 = vsel %vm2478, %v2312, %v2477
        %vm2480 = vcmp.eq.f32.partialorder %v2312, 0.0
        %v2481 = vand.u32 %v2312, 2147483648
        %v2482 = vsel %vm2480, %v2481, %v2479
        %v2483 = vmax.f32 %v2321, 1e-12
        %v2484 = vmax.f32 %v2328, 1e-12
        %v2485 = vmax.f32 %v2335, 1e-12
        %v2486 = vmax.f32 %v2342, 1e-12
        %v2487 = vmax.f32 %v2349, 1e-12
        %v2488 = vmax.f32 %v2356, 1e-12
        %v2489 = vmax.f32 %v2363, 1e-12
        %v2490 = vmax.f32 %v2370, 1e-12
        %v2491 = vmax.f32 %v2377, 1e-12
        %v2492 = vmax.f32 %v2384, 1e-12
        %v2493 = vmax.f32 %v2391, 1e-12
        %v2494 = vmax.f32 %v2398, 1e-12
        %v2495 = vmax.f32 %v2405, 1e-12
        %v2496 = vmax.f32 %v2412, 1e-12
        %v2497 = vmax.f32 %v2419, 1e-12
        %v2498 = vmax.f32 %v2426, 1e-12
        %v2499 = vmax.f32 %v2433, 1e-12
        %v2500 = vmax.f32 %v2440, 1e-12
        %v2501 = vmax.f32 %v2447, 1e-12
        %v2502 = vmax.f32 %v2454, 1e-12
        %v2503 = vmax.f32 %v2461, 1e-12
        %v2504 = vmax.f32 %v2468, 1e-12
        %v2505 = vmax.f32 %v2475, 1e-12
        %v2506 = vmax.f32 %v2482, 1e-12
        %v2507 = vrcp.pop %v2483
        %v2508 = vmul.f32 1.0, %v2507
        %v2509 = vrcp.pop %v2484
        %v2510 = vmul.f32 1.0, %v2509
        %v2511 = vrcp.pop %v2485
        %v2512 = vmul.f32 1.0, %v2511
        %v2513 = vrcp.pop %v2486
        %v2514 = vmul.f32 1.0, %v2513
        %v2515 = vrcp.pop %v2487
        %v2516 = vmul.f32 1.0, %v2515
        %v2517 = vrcp.pop %v2488
        %v2518 = vmul.f32 1.0, %v2517
        %v2519 = vrcp.pop %v2489
        %v2520 = vmul.f32 1.0, %v2519
        %v2521 = vrcp.pop %v2490
        %v2522 = vmul.f32 1.0, %v2521
        %v2523 = vrcp.pop %v2491
        %v2524 = vmul.f32 1.0, %v2523
        %v2525 = vrcp.pop %v2492
        %v2526 = vmul.f32 1.0, %v2525
        %v2527 = vrcp.pop %v2493
        %v2528 = vmul.f32 1.0, %v2527
        %v2529 = vrcp.pop %v2494
        %v2530 = vmul.f32 1.0, %v2529
        %v2531 = vrcp.pop %v2495
        %v2532 = vmul.f32 1.0, %v2531
        %v2533 = vrcp.pop %v2496
        %v2534 = vmul.f32 1.0, %v2533
        %v2535 = vrcp.pop %v2497
        %v2536 = vmul.f32 1.0, %v2535
        %v2537 = vrcp.pop %v2498
        %v2538 = vmul.f32 1.0, %v2537
        %v2539 = vrcp.pop %v2499
        %v2540 = vmul.f32 1.0, %v2539
        %v2541 = vrcp.pop %v2500
        %v2542 = vmul.f32 1.0, %v2541
        %v2543 = vrcp.pop %v2501
        %v2544 = vmul.f32 1.0, %v2543
        %v2545 = vrcp.pop %v2502
        %v2546 = vmul.f32 1.0, %v2545
        %v2547 = vrcp.pop %v2503
        %v2548 = vmul.f32 1.0, %v2547
        %v2549 = vrcp.pop %v2504
        %v2550 = vmul.f32 1.0, %v2549
        %v2551 = vrcp.pop %v2505
        %v2552 = vmul.f32 1.0, %v2551
        %v2553 = vrcp.pop %v2506
        %v2554 = vmul.f32 1.0, %v2553
        %v2555 = vld [vmem:[%s11] sm:$0xff]
        %v2557 = vcombine.high %v2555, %v2555
        %vm2558 = vcmask 31744
        %v2560 = vsel %vm2558, %v2508, 0
        %v2563 = vsel %vm2558, %v2510, 0
        %v2566 = vsel %vm2558, %v2512, 0
        %v2569 = vsel %vm2558, %v2514, 0
        %v2572 = vsel %vm2558, %v2516, 0
        %v2575 = vsel %vm2558, %v2518, 0
        %v2578 = vsel %vm2558, %v2520, 0
        %v2581 = vsel %vm2558, %v2522, 0
        %v2584 = vsel %vm2558, %v2524, 0
        %v2587 = vsel %vm2558, %v2526, 0
        %v2590 = vsel %vm2558, %v2528, 0
        %v2593 = vsel %vm2558, %v2530, 0
        %v2596 = vsel %vm2558, %v2532, 0
        %v2599 = vsel %vm2558, %v2534, 0
        %v2602 = vsel %vm2558, %v2536, 0
        %v2605 = vsel %vm2558, %v2538, 0
        %v2608 = vsel %vm2558, %v2540, 0
        %v2611 = vsel %vm2558, %v2542, 0
        %v2614 = vsel %vm2558, %v2544, 0
        %v2617 = vsel %vm2558, %v2546, 0
        %v2620 = vsel %vm2558, %v2548, 0
        %v2623 = vsel %vm2558, %v2550, 0
        %v2626 = vsel %vm2558, %v2552, 0
        %v2629 = vsel %vm2558, %v2554, 0
        %v2631 = vsel %vm583, %v2555, 0
        %v2633 = vsel %vm583, %v2557, 0
        %2635 = vmatprep.subr.mxu0 %v2633
        %2636 = vmatpush1.msra.mxu0 %v2631
        %2637 = vmatprep.subr.mxu0 0.0
        %2638 = vmatpush1.msra.mxu0 0.0
        %2639 = vmatprep.subr.mxu0 0.0
        %2640 = vmatpush1.msra.mxu0 0.0
        %2641 = vmatprep.subr.mxu0 0.0
        %2642 = vmatpush1.msra.mxu0 0.0
        %2643 = vmatprep.subr.mxu0 0.0
        %2644 = vmatpush1.msra.mxu0 0.0
        %2645 = vmatprep.subr.mxu0 0.0
        %2646 = vmatpush1.msra.mxu0 0.0
        %2647 = vmatprep.subr.mxu0 0.0
        %2648 = vmatpush1.msra.mxu0 0.0
        %2649 = vmatprep.subr.mxu0 0.0
        %2650 = vmatpush1.msra.mxu0 0.0
        %2651 = vmatprep.subr.mxu0 0.0
        %2652 = vmatpush1.msra.mxu0 0.0
        %2653 = vmatprep.subr.mxu0 0.0
        %2654 = vmatpush1.msra.mxu0 0.0
        %2655 = vmatprep.subr.mxu0 0.0
        %2656 = vmatpush1.msra.mxu0 0.0
        %2657 = vmatprep.subr.mxu0 0.0
        %2658 = vmatpush1.msra.mxu0 0.0
        %2659 = vmatprep.subr.mxu0 0.0
        %2660 = vmatpush1.msra.mxu0 0.0
        %2661 = vmatprep.subr.mxu0 0.0
        %2662 = vmatpush1.msra.mxu0 0.0
        %2663 = vmatprep.subr.mxu0 0.0
        %2664 = vmatpush1.msra.mxu0 0.0
        %2665 = vmatprep.subr.mxu0 0.0
        %2666 = vmatpush1.msra.mxu0 0.0
        %2667 = vmatprep.subr.mxu0 0.0
        %2668 = vmatpush1.msra.mxu0 0.0
        %2669 = vmatprep.subr.mxu0 0.0
        %2670 = vmatpush1.msra.mxu0 0.0
        %2671 = vmatprep.subr.mxu0 0.0
        %2672 = vmatpush1.msra.mxu0 0.0
        %2673 = vmatprep.subr.mxu0 0.0
        %2674 = vmatpush1.msra.mxu0 0.0
        %2675 = vmatprep.subr.mxu0 0.0
        %2676 = vmatpush1.msra.mxu0 0.0
        %2677 = vmatprep.subr.mxu0 0.0
        %2678 = vmatpush1.msra.mxu0 0.0
        %2679 = vmatprep.subr.mxu0 0.0
        %2680 = vmatpush1.msra.mxu0 0.0
        %2681 = vmatprep.subr.mxu0 0.0
        %2682 = vmatpush1.msra.mxu0 0.0
        %2683 = vmatprep.subr.mxu0 0.0
        %2684 = vmatpush1.msra.mxu0 0.0
        %2685 = vmatprep.subr.mxu0 0.0
        %2686 = vmatpush1.msra.mxu0 0.0
        %2687 = vmatprep.subr.mxu0 0.0
        %2688 = vmatpush1.msra.mxu0 0.0
        %2689 = vmatprep.subr.mxu0 0.0
        %2690 = vmatpush1.msra.mxu0 0.0
        %2691 = vmatprep.subr.mxu0 0.0
        %2692 = vmatpush1.msra.mxu0 0.0
        %2693 = vmatprep.subr.mxu0 0.0
        %2694 = vmatpush1.msra.mxu0 0.0
        %2695 = vmatprep.subr.mxu0 0.0
        %2696 = vmatpush1.msra.mxu0 0.0
        %2697 = vmatprep.subr.mxu0 0.0
        %2698 = vmatpush1.msra.mxu0 0.0
        %2699 = vmatprep.mubr.f32.mxu0 0.0
        %2700 = vmatmul.mubr.f32.gmra.mrb[0].mxu0 %v2560
        %v2701 = vpop.f32.mrb[0].mxu0
        %v2702 = vadd.f32 0.0, %v2701
        %v2703 = vpop.f32.mrb[0].mxu0
        %v2704 = vadd.f32 0.0, %v2703
        %2705 = vmatprep.mubr.f32.mxu0 0.0
        %2706 = vmatmul.mubr.f32.gmra.mrb[0].mxu0 %v2563
        %v2707 = vpop.f32.mrb[0].mxu0
        %v2708 = vadd.f32 0.0, %v2707
        %v2709 = vpop.f32.mrb[0].mxu0
        %v2710 = vadd.f32 0.0, %v2709
        %2711 = vmatprep.mubr.f32.mxu0 0.0
        %2712 = vmatmul.mubr.f32.gmra.mrb[0].mxu0 %v2566
        %v2713 = vpop.f32.mrb[0].mxu0
        %v2714 = vadd.f32 0.0, %v2713
        %v2715 = vpop.f32.mrb[0].mxu0
        %v2716 = vadd.f32 0.0, %v2715
        %2717 = vmatprep.mubr.f32.mxu0 0.0
        %2718 = vmatmul.mubr.f32.gmra.mrb[0].mxu0 %v2569
        %v2719 = vpop.f32.mrb[0].mxu0
        %v2720 = vadd.f32 0.0, %v2719
        %v2721 = vpop.f32.mrb[0].mxu0
        %v2722 = vadd.f32 0.0, %v2721
        %2723 = vmatprep.mubr.f32.mxu0 0.0
        %2724 = vmatmul.mubr.f32.gmra.mrb[0].mxu0 %v2572
        %v2725 = vpop.f32.mrb[0].mxu0
        %v2726 = vadd.f32 0.0, %v2725
        %v2727 = vpop.f32.mrb[0].mxu0
        %v2728 = vadd.f32 0.0, %v2727
        %2729 = vmatprep.mubr.f32.mxu0 0.0
        %2730 = vmatmul.mubr.f32.gmra.mrb[0].mxu0 %v2575
        %v2731 = vpop.f32.mrb[0].mxu0
        %v2732 = vadd.f32 0.0, %v2731
        %v2733 = vpop.f32.mrb[0].mxu0
        %v2734 = vadd.f32 0.0, %v2733
        %2735 = vmatprep.mubr.f32.mxu0 0.0
        %2736 = vmatmul.mubr.f32.gmra.mrb[0].mxu0 %v2578
        %v2737 = vpop.f32.mrb[0].mxu0
        %v2738 = vadd.f32 0.0, %v2737
        %v2739 = vpop.f32.mrb[0].mxu0
        %v2740 = vadd.f32 0.0, %v2739
        %2741 = vmatprep.mubr.f32.mxu0 0.0
        %2742 = vmatmul.mubr.f32.gmra.mrb[0].mxu0 %v2581
        %v2743 = vpop.f32.mrb[0].mxu0
        %v2744 = vadd.f32 0.0, %v2743
        %v2745 = vpop.f32.mrb[0].mxu0
        %v2746 = vadd.f32 0.0, %v2745
        %2747 = vmatprep.mubr.f32.mxu0 0.0
        %2748 = vmatmul.mubr.f32.gmra.mrb[0].mxu0 %v2584
        %v2749 = vpop.f32.mrb[0].mxu0
        %v2750 = vadd.f32 0.0, %v2749
        %v2751 = vpop.f32.mrb[0].mxu0
        %v2752 = vadd.f32 0.0, %v2751
        %2753 = vmatprep.mubr.f32.mxu0 0.0
        %2754 = vmatmul.mubr.f32.gmra.mrb[0].mxu0 %v2587
        %v2755 = vpop.f32.mrb[0].mxu0
        %v2756 = vadd.f32 0.0, %v2755
        %v2757 = vpop.f32.mrb[0].mxu0
        %v2758 = vadd.f32 0.0, %v2757
        %2759 = vmatprep.mubr.f32.mxu0 0.0
        %2760 = vmatmul.mubr.f32.gmra.mrb[0].mxu0 %v2590
        %v2761 = vpop.f32.mrb[0].mxu0
        %v2762 = vadd.f32 0.0, %v2761
        %v2763 = vpop.f32.mrb[0].mxu0
        %v2764 = vadd.f32 0.0, %v2763
        %2765 = vmatprep.mubr.f32.mxu0 0.0
        %2766 = vmatmul.mubr.f32.gmra.mrb[0].mxu0 %v2593
        %v2767 = vpop.f32.mrb[0].mxu0
        %v2768 = vadd.f32 0.0, %v2767
        %v2769 = vpop.f32.mrb[0].mxu0
        %v2770 = vadd.f32 0.0, %v2769
        %2771 = vmatprep.mubr.f32.mxu0 0.0
        %2772 = vmatmul.mubr.f32.gmra.mrb[0].mxu0 %v2596
        %v2773 = vpop.f32.mrb[0].mxu0
        %v2774 = vadd.f32 0.0, %v2773
        %v2775 = vpop.f32.mrb[0].mxu0
        %v2776 = vadd.f32 0.0, %v2775
        %2777 = vmatprep.mubr.f32.mxu0 0.0
        %2778 = vmatmul.mubr.f32.gmra.mrb[0].mxu0 %v2599
        %v2779 = vpop.f32.mrb[0].mxu0
        %v2780 = vadd.f32 0.0, %v2779
        %v2781 = vpop.f32.mrb[0].mxu0
        %v2782 = vadd.f32 0.0, %v2781
        %2783 = vmatprep.mubr.f32.mxu0 0.0
        %2784 = vmatmul.mubr.f32.gmra.mrb[0].mxu0 %v2602
        %v2785 = vpop.f32.mrb[0].mxu0
        %v2786 = vadd.f32 0.0, %v2785
        %v2787 = vpop.f32.mrb[0].mxu0
        %v2788 = vadd.f32 0.0, %v2787
        %2789 = vmatprep.mubr.f32.mxu0 0.0
        %2790 = vmatmul.mubr.f32.gmra.mrb[0].mxu0 %v2605
        %v2791 = vpop.f32.mrb[0].mxu0
        %v2792 = vadd.f32 0.0, %v2791
        %v2793 = vpop.f32.mrb[0].mxu0
        %v2794 = vadd.f32 0.0, %v2793
        %2795 = vmatprep.mubr.f32.mxu0 0.0
        %2796 = vmatmul.mubr.f32.gmra.mrb[0].mxu0 %v2608
        %v2797 = vpop.f32.mrb[0].mxu0
        %v2798 = vadd.f32 0.0, %v2797
        %v2799 = vpop.f32.mrb[0].mxu0
        %v2800 = vadd.f32 0.0, %v2799
        %2801 = vmatprep.mubr.f32.mxu0 0.0
        %2802 = vmatmul.mubr.f32.gmra.mrb[0].mxu0 %v2611
        %v2803 = vpop.f32.mrb[0].mxu0
        %v2804 = vadd.f32 0.0, %v2803
        %v2805 = vpop.f32.mrb[0].mxu0
        %v2806 = vadd.f32 0.0, %v2805
        %2807 = vmatprep.mubr.f32.mxu0 0.0
        %2808 = vmatmul.mubr.f32.gmra.mrb[0].mxu0 %v2614
        %v2809 = vpop.f32.mrb[0].mxu0
        %v2810 = vadd.f32 0.0, %v2809
        %v2811 = vpop.f32.mrb[0].mxu0
        %v2812 = vadd.f32 0.0, %v2811
        %2813 = vmatprep.mubr.f32.mxu0 0.0
        %2814 = vmatmul.mubr.f32.gmra.mrb[0].mxu0 %v2617
        %v2815 = vpop.f32.mrb[0].mxu0
        %v2816 = vadd.f32 0.0, %v2815
        %v2817 = vpop.f32.mrb[0].mxu0
        %v2818 = vadd.f32 0.0, %v2817
        %2819 = vmatprep.mubr.f32.mxu0 0.0
        %2820 = vmatmul.mubr.f32.gmra.mrb[0].mxu0 %v2620
        %v2821 = vpop.f32.mrb[0].mxu0
        %v2822 = vadd.f32 0.0, %v2821
        %v2823 = vpop.f32.mrb[0].mxu0
        %v2824 = vadd.f32 0.0, %v2823
        %2825 = vmatprep.mubr.f32.mxu0 0.0
        %2826 = vmatmul.mubr.f32.gmra.mrb[0].mxu0 %v2623
        %v2827 = vpop.f32.mrb[0].mxu0
        %v2828 = vadd.f32 0.0, %v2827
        %v2829 = vpop.f32.mrb[0].mxu0
        %v2830 = vadd.f32 0.0, %v2829
        %2831 = vmatprep.mubr.f32.mxu0 0.0
        %2832 = vmatmul.mubr.f32.gmra.mrb[0].mxu0 %v2626
        %v2833 = vpop.f32.mrb[0].mxu0
        %v2834 = vadd.f32 0.0, %v2833
        %v2835 = vpop.f32.mrb[0].mxu0
        %v2836 = vadd.f32 0.0, %v2835
        %2837 = vmatprep.mubr.f32.mxu0 0.0
        %2838 = vmatmul.mubr.f32.gmra.mrb[0].mxu0 %v2629
        %v2839 = vpop.f32.mrb[0].mxu0
        %v2840 = vadd.f32 0.0, %v2839
        %v2841 = vpop.f32.mrb[0].mxu0
        %v2842 = vadd.f32 0.0, %v2841
        %2843 = vdwg.mxu0
        %v2844 = vmul.f32 %v1942, %v2702
        %v2845 = vmul.f32 %v1943, %v2704
        %v2846 = vmul.f32 %v1944, %v2708
        %v2847 = vmul.f32 %v1945, %v2710
        %v2848 = vmul.f32 %v1946, %v2714
        %v2849 = vmul.f32 %v1947, %v2716
        %v2850 = vmul.f32 %v1948, %v2720
        %v2851 = vmul.f32 %v1949, %v2722
        %v2852 = vmul.f32 %v1950, %v2726
        %v2853 = vmul.f32 %v1951, %v2728
        %v2854 = vmul.f32 %v1952, %v2732
        %v2855 = vmul.f32 %v1953, %v2734
        %v2856 = vmul.f32 %v1954, %v2738
        %v2857 = vmul.f32 %v1955, %v2740
        %v2858 = vmul.f32 %v1956, %v2744
        %v2859 = vmul.f32 %v1957, %v2746
        %v2860 = vmul.f32 %v1958, %v2750
        %v2861 = vmul.f32 %v1959, %v2752
        %v2862 = vmul.f32 %v1960, %v2756
        %v2863 = vmul.f32 %v1961, %v2758
        %v2864 = vmul.f32 %v1962, %v2762
        %v2865 = vmul.f32 %v1963, %v2764
        %v2866 = vmul.f32 %v1964, %v2768
        %v2867 = vmul.f32 %v1965, %v2770
        %v2868 = vmul.f32 %v1966, %v2774
        %v2869 = vmul.f32 %v1967, %v2776
        %v2870 = vmul.f32 %v1968, %v2780
        %v2871 = vmul.f32 %v1969, %v2782
        %v2872 = vmul.f32 %v1970, %v2786
        %v2873 = vmul.f32 %v1971, %v2788
        %v2874 = vmul.f32 %v1972, %v2792
        %v2875 = vmul.f32 %v1973, %v2794
        %v2876 = vmul.f32 %v1974, %v2798
        %v2877 = vmul.f32 %v1975, %v2800
        %v2878 = vmul.f32 %v1976, %v2804
        %v2879 = vmul.f32 %v1977, %v2806
        %v2880 = vmul.f32 %v1978, %v2810
        %v2881 = vmul.f32 %v1979, %v2812
        %v2882 = vmul.f32 %v1980, %v2816
        %v2883 = vmul.f32 %v1981, %v2818
        %v2884 = vmul.f32 %v1982, %v2822
        %v2885 = vmul.f32 %v1983, %v2824
        %v2886 = vmul.f32 %v1984, %v2828
        %v2887 = vmul.f32 %v1985, %v2830
        %v2888 = vmul.f32 %v1986, %v2834
        %v2889 = vmul.f32 %v1987, %v2836
        %v2890 = vmul.f32 %v1988, %v2840
        %v2891 = vmul.f32 %v1989, %v2842
        %2892 = vst [vmem:[#allocation2 + $0x10] sm:$0xff] %v2844
        %2893 = vst.msk [vmem:[#allocation2 + $0x18] sm:$0xff] %vm464, %v2845
        %2894 = vst [vmem:[#allocation2 + $0x20] sm:$0xff] %v2846
        %2895 = vst.msk [vmem:[#allocation2 + $0x28] sm:$0xff] %vm464, %v2847
        %2896 = vst [vmem:[#allocation2 + $0x30] sm:$0xff] %v2848
        %2897 = vst.msk [vmem:[#allocation2 + $0x38] sm:$0xff] %vm464, %v2849
        %2898 = vst [vmem:[#allocation2 + $0x40] sm:$0xff] %v2850
        %2899 = vst.msk [vmem:[#allocation2 + $0x48] sm:$0xff] %vm464, %v2851
        %2900 = vst [vmem:[#allocation2 + $0x50] sm:$0xff] %v2852
        %2901 = vst.msk [vmem:[#allocation2 + $0x58] sm:$0xff] %vm464, %v2853
        %2902 = vst [vmem:[#allocation2 + $0x60] sm:$0xff] %v2854
        %2903 = vst.msk [vmem:[#allocation2 + $0x68] sm:$0xff] %vm464, %v2855
        %2904 = vst [vmem:[#allocation2 + $0x70] sm:$0xff] %v2856
        %2905 = vst.msk [vmem:[#allocation2 + $0x78] sm:$0xff] %vm464, %v2857
        %2906 = vst [vmem:[#allocation2 + $0x80] sm:$0xff] %v2858
        %2907 = vst.msk [vmem:[#allocation2 + $0x88] sm:$0xff] %vm464, %v2859
        %2908 = vst [vmem:[#allocation2 + $0x90] sm:$0xff] %v2860
        %2909 = vst.msk [vmem:[#allocation2 + $0x98] sm:$0xff] %vm464, %v2861
        %2910 = vst [vmem:[#allocation2 + $0xa0] sm:$0xff] %v2862
        %2911 = vst.msk [vmem:[#allocation2 + $0xa8] sm:$0xff] %vm464, %v2863
        %2912 = vst [vmem:[#allocation2 + $0xb0] sm:$0xff] %v2864
        %2913 = vst.msk [vmem:[#allocation2 + $0xb8] sm:$0xff] %vm464, %v2865
        %2914 = vst [vmem:[#allocation2 + $0xc0] sm:$0xff] %v2866
        %2915 = vst.msk [vmem:[#allocation2 + $0xc8] sm:$0xff] %vm464, %v2867
        %2916 = vst [vmem:[#allocation2 + $0xd0] sm:$0xff] %v2868
        %2917 = vst.msk [vmem:[#allocation2 + $0xd8] sm:$0xff] %vm464, %v2869
        %2918 = vst [vmem:[#allocation2 + $0xe0] sm:$0xff] %v2870
        %2919 = vst.msk [vmem:[#allocation2 + $0xe8] sm:$0xff] %vm464, %v2871
        %2920 = vst [vmem:[#allocation2 + $0xf0] sm:$0xff] %v2872
        %2921 = vst.msk [vmem:[#allocation2 + $0xf8] sm:$0xff] %vm464, %v2873
        %2922 = vst [vmem:[#allocation2 + $0x100] sm:$0xff] %v2874
        %2923 = vst.msk [vmem:[#allocation2 + $0x108] sm:$0xff] %vm464, %v2875
        %2924 = vst [vmem:[#allocation2 + $0x110] sm:$0xff] %v2876
        %2925 = vst.msk [vmem:[#allocation2 + $0x118] sm:$0xff] %vm464, %v2877
        %2926 = vst [vmem:[#allocation2 + $0x120] sm:$0xff] %v2878
        %2927 = vst.msk [vmem:[#allocation2 + $0x128] sm:$0xff] %vm464, %v2879
        %2928 = vst [vmem:[#allocation2 + $0x130] sm:$0xff] %v2880
        %2929 = vst.msk [vmem:[#allocation2 + $0x138] sm:$0xff] %vm464, %v2881
        %2930 = vst [vmem:[#allocation2 + $0x140] sm:$0xff] %v2882
        %2931 = vst.msk [vmem:[#allocation2 + $0x148] sm:$0xff] %vm464, %v2883
        %2932 = vst [vmem:[#allocation2 + $0x150] sm:$0xff] %v2884
        %2933 = vst.msk [vmem:[#allocation2 + $0x158] sm:$0xff] %vm464, %v2885
        %2934 = vst [vmem:[#allocation2 + $0x160] sm:$0xff] %v2886
        %2935 = vst.msk [vmem:[#allocation2 + $0x168] sm:$0xff] %vm464, %v2887
        %2936 = vst [vmem:[#allocation2 + $0x170] sm:$0xff] %v2888
        %2937 = vst.msk [vmem:[#allocation2 + $0x178] sm:$0xff] %vm464, %v2889
        %2938 = vst [vmem:[#allocation2 + $0x180] sm:$0xff] %v2890
        %2939 = vst.msk [vmem:[#allocation2 + $0x188] sm:$0xff] %vm464, %v2891
        %v2940 = vld [vmem:[#allocation3] sm:$0xff]
        %v2941 = vld [vmem:[#allocation3 + $0x8] sm:$0xff]
        %v2942 = vld [vmem:[#allocation3 + $0x10] sm:$0xff]
        %v2943 = vld [vmem:[#allocation3 + $0x18] sm:$0xff]
        %v2944 = vld [vmem:[#allocation3 + $0x20] sm:$0xff]
        %v2945 = vld [vmem:[#allocation3 + $0x28] sm:$0xff]
        %v2946 = vld [vmem:[#allocation3 + $0x30] sm:$0xff]
        %v2947 = vld [vmem:[#allocation3 + $0x38] sm:$0xff]
        %v2948 = vld [vmem:[#allocation3 + $0x40] sm:$0xff]
        %v2949 = vld [vmem:[#allocation3 + $0x48] sm:$0xff]
        %v2950 = vld [vmem:[#allocation3 + $0x50] sm:$0xff]
        %v2951 = vld [vmem:[#allocation3 + $0x58] sm:$0xff]
        %v2952 = vld [vmem:[#allocation3 + $0x60] sm:$0xff]
        %v2953 = vld [vmem:[#allocation3 + $0x68] sm:$0xff]
        %v2954 = vld [vmem:[#allocation3 + $0x70] sm:$0xff]
        %v2955 = vld [vmem:[#allocation3 + $0x78] sm:$0xff]
        %v2956 = vld [vmem:[#allocation3 + $0x80] sm:$0xff]
        %v2957 = vld [vmem:[#allocation3 + $0x88] sm:$0xff]
        %v2958 = vld [vmem:[#allocation3 + $0x90] sm:$0xff]
        %v2959 = vld [vmem:[#allocation3 + $0x98] sm:$0xff]
        %v2960 = vld [vmem:[#allocation3 + $0xa0] sm:$0xff]
        %v2961 = vld [vmem:[#allocation3 + $0xa8] sm:$0xff]
        %v2962 = vld [vmem:[#allocation3 + $0xb0] sm:$0xff]
        %v2963 = vld [vmem:[#allocation3 + $0xb8] sm:$0xff]
        %v2964 = vld [vmem:[#allocation3 + $0xc0] sm:$0xff]
        %v2965 = vld [vmem:[#allocation3 + $0xc8] sm:$0xff]
        %v2966 = vld [vmem:[#allocation3 + $0xd0] sm:$0xff]
        %v2967 = vld [vmem:[#allocation3 + $0xd8] sm:$0xff]
        %v2968 = vld [vmem:[#allocation3 + $0xe0] sm:$0xff]
        %v2969 = vld [vmem:[#allocation3 + $0xe8] sm:$0xff]
        %v2970 = vld [vmem:[#allocation3 + $0xf0] sm:$0xff]
        %v2971 = vld [vmem:[#allocation3 + $0xf8] sm:$0xff]
        %v2972 = vld [vmem:[#allocation3 + $0x100] sm:$0xff]
        %v2973 = vld [vmem:[#allocation3 + $0x108] sm:$0xff]
        %v2974 = vld [vmem:[#allocation3 + $0x110] sm:$0xff]
        %v2975 = vld [vmem:[#allocation3 + $0x118] sm:$0xff]
        %v2976 = vld [vmem:[#allocation3 + $0x120] sm:$0xff]
        %v2977 = vld [vmem:[#allocation3 + $0x128] sm:$0xff]
        %v2978 = vld [vmem:[#allocation3 + $0x130] sm:$0xff]
        %v2979 = vld [vmem:[#allocation3 + $0x138] sm:$0xff]
        %v2980 = vld [vmem:[#allocation2] sm:$0xc0]
        %v2981 = vld [vmem:[#allocation2 + $0x8] sm:$0xc0]
        %v2982 = vld [vmem:[#allocation2 + $0x10] sm:$0xff]
        %v2983 = vld [vmem:[#allocation2 + $0x18] sm:$0xff]
        %v2984 = vld [vmem:[#allocation2 + $0x20] sm:$0xff]
        %v2985 = vld [vmem:[#allocation2 + $0x28] sm:$0xff]
        %v2986 = vld [vmem:[#allocation2 + $0x30] sm:$0xff]
        %v2987 = vld [vmem:[#allocation2 + $0x38] sm:$0xff]
        %v2988 = vld [vmem:[#allocation2 + $0x40] sm:$0xff]
        %v2989 = vld [vmem:[#allocation2 + $0x48] sm:$0xff]
        %v2990 = vld [vmem:[#allocation2 + $0x50] sm:$0xff]
        %v2991 = vld [vmem:[#allocation2 + $0x58] sm:$0xff]
        %v2992 = vld [vmem:[#allocation2 + $0x60] sm:$0xff]
        %v2993 = vld [vmem:[#allocation2 + $0x68] sm:$0xff]
        %v2994 = vld [vmem:[#allocation2 + $0x70] sm:$0xff]
        %v2995 = vld [vmem:[#allocation2 + $0x78] sm:$0xff]
        %v2996 = vld [vmem:[#allocation2 + $0x80] sm:$0xff]
        %v2997 = vld [vmem:[#allocation2 + $0x88] sm:$0xff]
        %v2998 = vld [vmem:[#allocation2 + $0x90] sm:$0xff]
        %v2999 = vld [vmem:[#allocation2 + $0x98] sm:$0xff]
        %v3000 = vld [vmem:[#allocation2 + $0xa0] sm:$0xff]
        %v3001 = vld [vmem:[#allocation2 + $0xa8] sm:$0xff]
        %v3002 = vld [vmem:[#allocation2 + $0xb0] sm:$0xff]
        %v3003 = vld [vmem:[#allocation2 + $0xb8] sm:$0xff]
        %v3004 = vld [vmem:[#allocation2 + $0xc0] sm:$0xff]
        %v3005 = vld [vmem:[#allocation2 + $0xc8] sm:$0xff]
        %v3006 = vld [vmem:[#allocation2 + $0xd0] sm:$0xff]
        %v3007 = vld [vmem:[#allocation2 + $0xd8] sm:$0xff]
        %v3008 = vld [vmem:[#allocation2 + $0xe0] sm:$0xff]
        %v3009 = vld [vmem:[#allocation2 + $0xe8] sm:$0xff]
        %v3010 = vld [vmem:[#allocation2 + $0xf0] sm:$0xff]
        %v3011 = vld [vmem:[#allocation2 + $0xf8] sm:$0xff]
        %v3012 = vld [vmem:[#allocation2 + $0x100] sm:$0xff]
        %v3013 = vld [vmem:[#allocation2 + $0x108] sm:$0xff]
        %v3014 = vld [vmem:[#allocation2 + $0x110] sm:$0xff]
        %v3015 = vld [vmem:[#allocation2 + $0x118] sm:$0xff]
        %v3016 = vld [vmem:[#allocation2 + $0x120] sm:$0xff]
        %v3017 = vld [vmem:[#allocation2 + $0x128] sm:$0xff]
        %v3018 = vld [vmem:[#allocation2 + $0x130] sm:$0xff]
        %v3019 = vld [vmem:[#allocation2 + $0x138] sm:$0xff]
        %v3020 = vld [vmem:[#allocation2 + $0x140] sm:$0xff]
        %v3021 = vld [vmem:[#allocation2 + $0x148] sm:$0xff]
        %v3022 = vld [vmem:[#allocation2 + $0x150] sm:$0xff]
        %v3023 = vld [vmem:[#allocation2 + $0x158] sm:$0xff]
        %v3024 = vld [vmem:[#allocation2 + $0x160] sm:$0xff]
        %v3025 = vld [vmem:[#allocation2 + $0x168] sm:$0xff]
        %v3026 = vld [vmem:[#allocation2 + $0x170] sm:$0xff]
        %v3027 = vld [vmem:[#allocation2 + $0x178] sm:$0xff]
        %v3028 = vld [vmem:[#allocation2 + $0x180] sm:$0x3f]
        %v3029 = vld [vmem:[#allocation2 + $0x188] sm:$0x3f]
        %v3030 = vld [vmem:[%s4] sm:$0xff]
        %v3031 = vld [vmem:[%s4 + $0x8] sm:$0xff]
        %v3032 = vld [vmem:[%s4 + $0x10] sm:$0xff]
        %v3033 = vld [vmem:[%s4 + $0x18] sm:$0xff]
        %v3034 = vld [vmem:[%s4 + $0x20] sm:$0xff]
        %v3035 = vld [vmem:[%s4 + $0x28] sm:$0xff]
        %v3036 = vld [vmem:[%s4 + $0x30] sm:$0xff]
        %v3037 = vld [vmem:[%s4 + $0x38] sm:$0xff]
        %v3038 = vld [vmem:[%s4 + $0x40] sm:$0xff]
        %v3039 = vld [vmem:[%s4 + $0x48] sm:$0xff]
        %v3040 = vld [vmem:[%s4 + $0x50] sm:$0xff]
        %v3041 = vld [vmem:[%s4 + $0x58] sm:$0xff]
        %v3042 = vld [vmem:[%s4 + $0x60] sm:$0xff]
        %v3043 = vld [vmem:[%s4 + $0x68] sm:$0xff]
        %v3044 = vld [vmem:[%s4 + $0x70] sm:$0xff]
        %v3045 = vld [vmem:[%s4 + $0x78] sm:$0xff]
        %v3046 = vld [vmem:[%s4 + $0x80] sm:$0xff]
        %v3047 = vld [vmem:[%s4 + $0x88] sm:$0xff]
        %v3048 = vld [vmem:[%s4 + $0x90] sm:$0xff]
        %v3049 = vld [vmem:[%s4 + $0x98] sm:$0xff]
        %v3050 = vld [vmem:[%s4 + $0xa0] sm:$0xff]
        %v3051 = vld [vmem:[%s4 + $0xa8] sm:$0xff]
        %v3052 = vld [vmem:[%s4 + $0xb0] sm:$0xff]
        %v3053 = vld [vmem:[%s4 + $0xb8] sm:$0xff]
        %v3054 = vld [vmem:[%s4 + $0xc0] sm:$0xff]
        %v3055 = vld [vmem:[%s4 + $0xc8] sm:$0xff]
        %v3056 = vld [vmem:[%s4 + $0xd0] sm:$0xff]
        %v3057 = vld [vmem:[%s4 + $0xd8] sm:$0xff]
        %v3058 = vld [vmem:[%s4 + $0xe0] sm:$0xff]
        %v3059 = vld [vmem:[%s4 + $0xe8] sm:$0xff]
        %v3060 = vld [vmem:[%s4 + $0xf0] sm:$0xff]
        %v3061 = vld [vmem:[%s4 + $0xf8] sm:$0xff]
        %v3062 = vld [vmem:[%s4 + $0x100] sm:$0xff]
        %v3063 = vld [vmem:[%s4 + $0x108] sm:$0xff]
        %v3064 = vld [vmem:[%s4 + $0x110] sm:$0xff]
        %v3065 = vld [vmem:[%s4 + $0x118] sm:$0xff]
        %v3066 = vld [vmem:[%s4 + $0x120] sm:$0xff]
        %v3067 = vld [vmem:[%s4 + $0x128] sm:$0xff]
        %v3068 = vld [vmem:[%s4 + $0x130] sm:$0xff]
        %v3069 = vld [vmem:[%s4 + $0x138] sm:$0xff]
        %vm3120 = vcmask 1041408
        %v3121 = vrot.slane %v2980, 6
        %v3122 = vrot.slane %v2982, 6
        %v3123 = vsel %vm3120, %v3121, %v3122
        %v3124 = vrot.slane %v2981, 6
        %v3125 = vrot.slane %v2983, 6
        %v3126 = vsel %vm3120, %v3124, %v3125
        %v3127 = vrot.slane %v2984, 6
        %v3128 = vsel %vm3120, %v3122, %v3127
        %v3129 = vrot.slane %v2985, 6
        %v3130 = vsel %vm3120, %v3125, %v3129
        %v3131 = vrot.slane %v2986, 6
        %v3132 = vsel %vm3120, %v3127, %v3131
        %v3133 = vrot.slane %v2987, 6
        %v3134 = vsel %vm3120, %v3129, %v3133
        %v3135 = vrot.slane %v2988, 6
        %v3136 = vsel %vm3120, %v3131, %v3135
        %v3137 = vrot.slane %v2989, 6
        %v3138 = vsel %vm3120, %v3133, %v3137
        %v3139 = vrot.slane %v2990, 6
        %v3140 = vsel %vm3120, %v3135, %v3139
        %v3141 = vrot.slane %v2991, 6
        %v3142 = vsel %vm3120, %v3137, %v3141
        %v3143 = vrot.slane %v2992, 6
        %v3144 = vsel %vm3120, %v3139, %v3143
        %v3145 = vrot.slane %v2993, 6
        %v3146 = vsel %vm3120, %v3141, %v3145
        %v3147 = vrot.slane %v2994, 6
        %v3148 = vsel %vm3120, %v3143, %v3147
        %v3149 = vrot.slane %v2995, 6
        %v3150 = vsel %vm3120, %v3145, %v3149
        %v3151 = vrot.slane %v2996, 6
        %v3152 = vsel %vm3120, %v3147, %v3151
        %v3153 = vrot.slane %v2997, 6
        %v3154 = vsel %vm3120, %v3149, %v3153
        %v3155 = vrot.slane %v2998, 6
        %v3156 = vsel %vm3120, %v3151, %v3155
        %v3157 = vrot.slane %v2999, 6
        %v3158 = vsel %vm3120, %v3153, %v3157
        %v3159 = vrot.slane %v3000, 6
        %v3160 = vsel %vm3120, %v3155, %v3159
        %v3161 = vrot.slane %v3001, 6
        %v3162 = vsel %vm3120, %v3157, %v3161
        %v3163 = vrot.slane %v3002, 6
        %v3164 = vsel %vm3120, %v3159, %v3163
        %v3165 = vrot.slane %v3003, 6
        %v3166 = vsel %vm3120, %v3161, %v3165
        %v3167 = vrot.slane %v3004, 6
        %v3168 = vsel %vm3120, %v3163, %v3167
        %v3169 = vrot.slane %v3005, 6
        %v3170 = vsel %vm3120, %v3165, %v3169
        %v3171 = vrot.slane %v3006, 6
        %v3172 = vsel %vm3120, %v3167, %v3171
        %v3173 = vrot.slane %v3007, 6
        %v3174 = vsel %vm3120, %v3169, %v3173
        %v3175 = vrot.slane %v3008, 6
        %v3176 = vsel %vm3120, %v3171, %v3175
        %v3177 = vrot.slane %v3009, 6
        %v3178 = vsel %vm3120, %v3173, %v3177
        %v3179 = vrot.slane %v3010, 6
        %v3180 = vsel %vm3120, %v3175, %v3179
        %v3181 = vrot.slane %v3011, 6
        %v3182 = vsel %vm3120, %v3177, %v3181
        %v3183 = vrot.slane %v3012, 6
        %v3184 = vsel %vm3120, %v3179, %v3183
        %v3185 = vrot.slane %v3013, 6
        %v3186 = vsel %vm3120, %v3181, %v3185
        %v3187 = vrot.slane %v3014, 6
        %v3188 = vsel %vm3120, %v3183, %v3187
        %v3189 = vrot.slane %v3015, 6
        %v3190 = vsel %vm3120, %v3185, %v3189
        %v3191 = vrot.slane %v3016, 6
        %v3192 = vsel %vm3120, %v3187, %v3191
        %v3193 = vrot.slane %v3017, 6
        %v3194 = vsel %vm3120, %v3189, %v3193
        %v3195 = vrot.slane %v3018, 6
        %v3196 = vsel %vm3120, %v3191, %v3195
        %v3197 = vrot.slane %v3019, 6
        %v3198 = vsel %vm3120, %v3193, %v3197
        %v3199 = vrot.slane %v3020, 6
        %v3200 = vsel %vm3120, %v3195, %v3199
        %v3201 = vrot.slane %v3021, 6
        %v3202 = vsel %vm3120, %v3197, %v3201
        %v3203 = vrot.slane %v3022, 6
        %v3204 = vsel %vm3120, %v3199, %v3203
        %v3205 = vrot.slane %v3023, 6
        %v3206 = vsel %vm3120, %v3201, %v3205
        %v3207 = vrot.slane %v3024, 6
        %v3208 = vsel %vm3120, %v3203, %v3207
        %v3209 = vrot.slane %v3025, 6
        %v3210 = vsel %vm3120, %v3205, %v3209
        %v3211 = vrot.slane %v3026, 6
        %v3212 = vsel %vm3120, %v3207, %v3211
        %v3213 = vrot.slane %v3027, 6
        %v3214 = vsel %vm3120, %v3209, %v3213
        %v3215 = vrot.slane %v3028, 6
        %v3216 = vsel %vm3120, %v3211, %v3215
        %v3217 = vrot.slane %v3029, 6
        %v3218 = vsel %vm3120, %v3213, %v3217
        %v3243 = vsel %vm464, %v3126, 0
        %v3245 = vsel %vm464, %v3130, 0
        %v3247 = vsel %vm464, %v3134, 0
        %v3249 = vsel %vm464, %v3138, 0
        %v3251 = vsel %vm464, %v3142, 0
        %v3253 = vsel %vm464, %v3146, 0
        %v3255 = vsel %vm464, %v3150, 0
        %v3257 = vsel %vm464, %v3154, 0
        %v3259 = vsel %vm464, %v3158, 0
        %v3261 = vsel %vm464, %v3162, 0
        %v3263 = vsel %vm464, %v3166, 0
        %v3265 = vsel %vm464, %v3170, 0
        %v3267 = vsel %vm464, %v3174, 0
        %v3269 = vsel %vm464, %v3178, 0
        %v3271 = vsel %vm464, %v3182, 0
        %v3273 = vsel %vm464, %v3186, 0
        %v3275 = vsel %vm464, %v3190, 0
        %v3277 = vsel %vm464, %v3194, 0
        %v3279 = vsel %vm464, %v3198, 0
        %v3281 = vsel %vm464, %v3202, 0
        %v3283 = vsel %vm464, %v3206, 0
        %v3285 = vsel %vm464, %v3210, 0
        %v3287 = vsel %vm464, %v3214, 0
        %v3289 = vsel %vm464, %v3218, 0
        %3291 = vmatprep.subr.mxu0 %v3031
        %3292 = vmatpush1.msra.mxu0 %v3030
        %3293 = vmatprep.subr.mxu0 %v3033
        %3294 = vmatpush1.msra.mxu0 %v3032
        %3295 = vmatprep.subr.mxu0 %v3035
        %3296 = vmatpush1.msra.mxu0 %v3034
        %3297 = vmatprep.subr.mxu0 %v3037
        %3298 = vmatpush1.msra.mxu0 %v3036
        %3299 = vmatprep.subr.mxu0 %v3039
        %3300 = vmatpush1.msra.mxu0 %v3038
        %3301 = vmatprep.subr.mxu0 %v3041
        %3302 = vmatpush1.msra.mxu0 %v3040
        %3303 = vmatprep.subr.mxu0 %v3043
        %3304 = vmatpush1.msra.mxu0 %v3042
        %3305 = vmatprep.subr.mxu0 %v3045
        %3306 = vmatpush1.msra.mxu0 %v3044
        %3307 = vmatprep.subr.mxu0 %v3047
        %3308 = vmatpush1.msra.mxu0 %v3046
        %3309 = vmatprep.subr.mxu0 %v3049
        %3310 = vmatpush1.msra.mxu0 %v3048
        %3311 = vmatprep.subr.mxu0 %v3051
        %3312 = vmatpush1.msra.mxu0 %v3050
        %3313 = vmatprep.subr.mxu0 %v3053
        %3314 = vmatpush1.msra.mxu0 %v3052
        %3315 = vmatprep.subr.mxu0 %v3055
        %3316 = vmatpush1.msra.mxu0 %v3054
        %3317 = vmatprep.subr.mxu0 %v3057
        %3318 = vmatpush1.msra.mxu0 %v3056
        %3319 = vmatprep.subr.mxu0 %v3059
        %3320 = vmatpush1.msra.mxu0 %v3058
        %3321 = vmatprep.subr.mxu0 %v3061
        %3322 = vmatpush1.msra.mxu0 %v3060
        %3323 = vmatprep.subr.mxu0 %v3063
        %3324 = vmatpush1.msra.mxu0 %v3062
        %3325 = vmatprep.subr.mxu0 %v3065
        %3326 = vmatpush1.msra.mxu0 %v3064
        %3327 = vmatprep.subr.mxu0 %v3067
        %3328 = vmatpush1.msra.mxu0 %v3066
        %3329 = vmatprep.subr.mxu0 %v3069
        %3330 = vmatpush1.msra.mxu0 %v3068
        %3331 = vmatprep.subr.mxu0 0.0
        %3332 = vmatpush1.msra.mxu0 0.0
        %3333 = vmatprep.subr.mxu0 0.0
        %3334 = vmatpush1.msra.mxu0 0.0
        %3335 = vmatprep.subr.mxu0 0.0
        %3336 = vmatpush1.msra.mxu0 0.0
        %3337 = vmatprep.subr.mxu0 0.0
        %3338 = vmatpush1.msra.mxu0 0.0
        %3339 = vmatprep.subr.mxu0 0.0
        %3340 = vmatpush1.msra.mxu0 0.0
        %3341 = vmatprep.subr.mxu0 0.0
        %3342 = vmatpush1.msra.mxu0 0.0
        %3343 = vmatprep.subr.mxu0 0.0
        %3344 = vmatpush1.msra.mxu0 0.0
        %3345 = vmatprep.subr.mxu0 0.0
        %3346 = vmatpush1.msra.mxu0 0.0
        %3347 = vmatprep.subr.mxu0 0.0
        %3348 = vmatpush1.msra.mxu0 0.0
        %3349 = vmatprep.subr.mxu0 0.0
        %3350 = vmatpush1.msra.mxu0 0.0
        %3351 = vmatprep.subr.mxu0 0.0
        %3352 = vmatpush1.msra.mxu0 0.0
        %3353 = vmatprep.subr.mxu0 0.0
        %3354 = vmatpush1.msra.mxu0 0.0
        %3355 = vmatprep.mubr.f32.mxu0 %v3243
        %3356 = vmatmul.mubr.f32.gmra.mrb[0].mxu0 %v3123
        %v3357 = vpop.f32.mrb[0].mxu0
        %v3358 = vadd.f32 0.0, %v3357
        %v3359 = vpop.f32.mrb[0].mxu0
        %v3360 = vadd.f32 0.0, %v3359
        %3361 = vmatprep.mubr.f32.mxu0 %v3245
        %3362 = vmatmul.mubr.f32.gmra.mrb[0].mxu0 %v3128
        %v3363 = vpop.f32.mrb[0].mxu0
        %v3364 = vadd.f32 0.0, %v3363
        %v3365 = vpop.f32.mrb[0].mxu0
        %v3366 = vadd.f32 0.0, %v3365
        %3367 = vmatprep.mubr.f32.mxu0 %v3247
        %3368 = vmatmul.mubr.f32.gmra.mrb[0].mxu0 %v3132
        %v3369 = vpop.f32.mrb[0].mxu0
        %v3370 = vadd.f32 0.0, %v3369
        %v3371 = vpop.f32.mrb[0].mxu0
        %v3372 = vadd.f32 0.0, %v3371
        %3373 = vmatprep.mubr.f32.mxu0 %v3249
        %3374 = vmatmul.mubr.f32.gmra.mrb[0].mxu0 %v3136
        %v3375 = vpop.f32.mrb[0].mxu0
        %v3376 = vadd.f32 0.0, %v3375
        %v3377 = vpop.f32.mrb[0].mxu0
        %v3378 = vadd.f32 0.0, %v3377
        %3379 = vmatprep.mubr.f32.mxu0 %v3251
        %3380 = vmatmul.mubr.f32.gmra.mrb[0].mxu0 %v3140
        %v3381 = vpop.f32.mrb[0].mxu0
        %v3382 = vadd.f32 0.0, %v3381
        %v3383 = vpop.f32.mrb[0].mxu0
        %v3384 = vadd.f32 0.0, %v3383
        %3385 = vmatprep.mubr.f32.mxu0 %v3253
        %3386 = vmatmul.mubr.f32.gmra.mrb[0].mxu0 %v3144
        %v3387 = vpop.f32.mrb[0].mxu0
        %v3388 = vadd.f32 0.0, %v3387
        %v3389 = vpop.f32.mrb[0].mxu0
        %v3390 = vadd.f32 0.0, %v3389
        %3391 = vmatprep.mubr.f32.mxu0 %v3255
        %3392 = vmatmul.mubr.f32.gmra.mrb[0].mxu0 %v3148
        %v3393 = vpop.f32.mrb[0].mxu0
        %v3394 = vadd.f32 0.0, %v3393
        %v3395 = vpop.f32.mrb[0].mxu0
        %v3396 = vadd.f32 0.0, %v3395
        %3397 = vmatprep.mubr.f32.mxu0 %v3257
        %3398 = vmatmul.mubr.f32.gmra.mrb[0].mxu0 %v3152
        %v3399 = vpop.f32.mrb[0].mxu0
        %v3400 = vadd.f32 0.0, %v3399
        %v3401 = vpop.f32.mrb[0].mxu0
        %v3402 = vadd.f32 0.0, %v3401
        %3403 = vmatprep.mubr.f32.mxu0 %v3259
        %3404 = vmatmul.mubr.f32.gmra.mrb[0].mxu0 %v3156
        %v3405 = vpop.f32.mrb[0].mxu0
        %v3406 = vadd.f32 0.0, %v3405
        %v3407 = vpop.f32.mrb[0].mxu0
        %v3408 = vadd.f32 0.0, %v3407
        %3409 = vmatprep.mubr.f32.mxu0 %v3261
        %3410 = vmatmul.mubr.f32.gmra.mrb[0].mxu0 %v3160
        %v3411 = vpop.f32.mrb[0].mxu0
        %v3412 = vadd.f32 0.0, %v3411
        %v3413 = vpop.f32.mrb[0].mxu0
        %v3414 = vadd.f32 0.0, %v3413
        %3415 = vmatprep.mubr.f32.mxu0 %v3263
        %3416 = vmatmul.mubr.f32.gmra.mrb[0].mxu0 %v3164
        %v3417 = vpop.f32.mrb[0].mxu0
        %v3418 = vadd.f32 0.0, %v3417
        %v3419 = vpop.f32.mrb[0].mxu0
        %v3420 = vadd.f32 0.0, %v3419
        %3421 = vmatprep.mubr.f32.mxu0 %v3265
        %3422 = vmatmul.mubr.f32.gmra.mrb[0].mxu0 %v3168
        %v3423 = vpop.f32.mrb[0].mxu0
        %v3424 = vadd.f32 0.0, %v3423
        %v3425 = vpop.f32.mrb[0].mxu0
        %v3426 = vadd.f32 0.0, %v3425
        %3427 = vmatprep.mubr.f32.mxu0 %v3267
        %3428 = vmatmul.mubr.f32.gmra.mrb[0].mxu0 %v3172
        %v3429 = vpop.f32.mrb[0].mxu0
        %v3430 = vadd.f32 0.0, %v3429
        %v3431 = vpop.f32.mrb[0].mxu0
        %v3432 = vadd.f32 0.0, %v3431
        %3433 = vmatprep.mubr.f32.mxu0 %v3269
        %3434 = vmatmul.mubr.f32.gmra.mrb[0].mxu0 %v3176
        %v3435 = vpop.f32.mrb[0].mxu0
        %v3436 = vadd.f32 0.0, %v3435
        %v3437 = vpop.f32.mrb[0].mxu0
        %v3438 = vadd.f32 0.0, %v3437
        %3439 = vmatprep.mubr.f32.mxu0 %v3271
        %3440 = vmatmul.mubr.f32.gmra.mrb[0].mxu0 %v3180
        %v3441 = vpop.f32.mrb[0].mxu0
        %v3442 = vadd.f32 0.0, %v3441
        %v3443 = vpop.f32.mrb[0].mxu0
        %v3444 = vadd.f32 0.0, %v3443
        %3445 = vmatprep.mubr.f32.mxu0 %v3273
        %3446 = vmatmul.mubr.f32.gmra.mrb[0].mxu0 %v3184
        %v3447 = vpop.f32.mrb[0].mxu0
        %v3448 = vadd.f32 0.0, %v3447
        %v3449 = vpop.f32.mrb[0].mxu0
        %v3450 = vadd.f32 0.0, %v3449
        %3451 = vmatprep.mubr.f32.mxu0 %v3275
        %3452 = vmatmul.mubr.f32.gmra.mrb[0].mxu0 %v3188
        %v3453 = vpop.f32.mrb[0].mxu0
        %v3454 = vadd.f32 0.0, %v3453
        %v3455 = vpop.f32.mrb[0].mxu0
        %v3456 = vadd.f32 0.0, %v3455
        %3457 = vmatprep.mubr.f32.mxu0 %v3277
        %3458 = vmatmul.mubr.f32.gmra.mrb[0].mxu0 %v3192
        %v3459 = vpop.f32.mrb[0].mxu0
        %v3460 = vadd.f32 0.0, %v3459
        %v3461 = vpop.f32.mrb[0].mxu0
        %v3462 = vadd.f32 0.0, %v3461
        %3463 = vmatprep.mubr.f32.mxu0 %v3279
        %3464 = vmatmul.mubr.f32.gmra.mrb[0].mxu0 %v3196
        %v3465 = vpop.f32.mrb[0].mxu0
        %v3466 = vadd.f32 0.0, %v3465
        %v3467 = vpop.f32.mrb[0].mxu0
        %v3468 = vadd.f32 0.0, %v3467
        %3469 = vmatprep.mubr.f32.mxu0 %v3281
        %3470 = vmatmul.mubr.f32.gmra.mrb[0].mxu0 %v3200
        %v3471 = vpop.f32.mrb[0].mxu0
        %v3472 = vadd.f32 0.0, %v3471
        %v3473 = vpop.f32.mrb[0].mxu0
        %v3474 = vadd.f32 0.0, %v3473
        %3475 = vmatprep.mubr.f32.mxu0 %v3283
        %3476 = vmatmul.mubr.f32.gmra.mrb[0].mxu0 %v3204
        %v3477 = vpop.f32.mrb[0].mxu0
        %v3478 = vadd.f32 0.0, %v3477
        %v3479 = vpop.f32.mrb[0].mxu0
        %v3480 = vadd.f32 0.0, %v3479
        %3481 = vmatprep.mubr.f32.mxu0 %v3285
        %3482 = vmatmul.mubr.f32.gmra.mrb[0].mxu0 %v3208
        %v3483 = vpop.f32.mrb[0].mxu0
        %v3484 = vadd.f32 0.0, %v3483
        %v3485 = vpop.f32.mrb[0].mxu0
        %v3486 = vadd.f32 0.0, %v3485
        %3487 = vmatprep.mubr.f32.mxu0 %v3287
        %3488 = vmatmul.mubr.f32.gmra.mrb[0].mxu0 %v3212
        %v3489 = vpop.f32.mrb[0].mxu0
        %v3490 = vadd.f32 0.0, %v3489
        %v3491 = vpop.f32.mrb[0].mxu0
        %v3492 = vadd.f32 0.0, %v3491
        %3493 = vmatprep.mubr.f32.mxu0 %v3289
        %3494 = vmatmul.mubr.f32.gmra.mrb[0].mxu0 %v3216
        %v3495 = vpop.f32.mrb[0].mxu0
        %v3496 = vadd.f32 0.0, %v3495
        %v3497 = vpop.f32.mrb[0].mxu0
        %v3498 = vadd.f32 0.0, %v3497
        %3499 = vdwg.mxu0
        %v3501 = vsel %vm464, %v2845, 0
        %v3504 = vsel %vm464, %v2847, 0
        %v3507 = vsel %vm464, %v2849, 0
        %v3510 = vsel %vm464, %v2851, 0
        %v3513 = vsel %vm464, %v2853, 0
        %v3516 = vsel %vm464, %v2855, 0
        %v3519 = vsel %vm464, %v2857, 0
        %v3522 = vsel %vm464, %v2859, 0
        %v3525 = vsel %vm464, %v2861, 0
        %v3528 = vsel %vm464, %v2863, 0
        %v3531 = vsel %vm464, %v2865, 0
        %v3534 = vsel %vm464, %v2867, 0
        %v3537 = vsel %vm464, %v2869, 0
        %v3540 = vsel %vm464, %v2871, 0
        %v3543 = vsel %vm464, %v2873, 0
        %v3546 = vsel %vm464, %v2875, 0
        %v3549 = vsel %vm464, %v2877, 0
        %v3552 = vsel %vm464, %v2879, 0
        %v3555 = vsel %vm464, %v2881, 0
        %v3558 = vsel %vm464, %v2883, 0
        %v3561 = vsel %vm464, %v2885, 0
        %v3564 = vsel %vm464, %v2887, 0
        %v3567 = vsel %vm464, %v2889, 0
        %v3570 = vsel %vm464, %v2891, 0
        %3572 = vmatprep.subr.mxu0 %v2941
        %3573 = vmatpush1.msra.mxu0 %v2940
        %3574 = vmatprep.subr.mxu0 %v2943
        %3575 = vmatpush1.msra.mxu0 %v2942
        %3576 = vmatprep.subr.mxu0 %v2945
        %3577 = vmatpush1.msra.mxu0 %v2944
        %3578 = vmatprep.subr.mxu0 %v2947
        %3579 = vmatpush1.msra.mxu0 %v2946
        %3580 = vmatprep.subr.mxu0 %v2949
        %3581 = vmatpush1.msra.mxu0 %v2948
        %3582 = vmatprep.subr.mxu0 %v2951
        %3583 = vmatpush1.msra.mxu0 %v2950
        %3584 = vmatprep.subr.mxu0 %v2953
        %3585 = vmatpush1.msra.mxu0 %v2952
        %3586 = vmatprep.subr.mxu0 %v2955
        %3587 = vmatpush1.msra.mxu0 %v2954
        %3588 = vmatprep.subr.mxu0 %v2957
        %3589 = vmatpush1.msra.mxu0 %v2956
        %3590 = vmatprep.subr.mxu0 %v2959
        %3591 = vmatpush1.msra.mxu0 %v2958
        %3592 = vmatprep.subr.mxu0 %v2961
        %3593 = vmatpush1.msra.mxu0 %v2960
        %3594 = vmatprep.subr.mxu0 %v2963
        %3595 = vmatpush1.msra.mxu0 %v2962
        %3596 = vmatprep.subr.mxu0 %v2965
        %3597 = vmatpush1.msra.mxu0 %v2964
        %3598 = vmatprep.subr.mxu0 %v2967
        %3599 = vmatpush1.msra.mxu0 %v2966
        %3600 = vmatprep.subr.mxu0 %v2969
        %3601 = vmatpush1.msra.mxu0 %v2968
        %3602 = vmatprep.subr.mxu0 %v2971
        %3603 = vmatpush1.msra.mxu0 %v2970
        %3604 = vmatprep.subr.mxu0 %v2973
        %3605 = vmatpush1.msra.mxu0 %v2972
        %3606 = vmatprep.subr.mxu0 %v2975
        %3607 = vmatpush1.msra.mxu0 %v2974
        %3608 = vmatprep.subr.mxu0 %v2977
        %3609 = vmatpush1.msra.mxu0 %v2976
        %3610 = vmatprep.subr.mxu0 %v2979
        %3611 = vmatpush1.msra.mxu0 %v2978
        %3612 = vmatprep.subr.mxu0 0.0
        %3613 = vmatpush1.msra.mxu0 0.0
        %3614 = vmatprep.subr.mxu0 0.0
        %3615 = vmatpush1.msra.mxu0 0.0
        %3616 = vmatprep.subr.mxu0 0.0
        %3617 = vmatpush1.msra.mxu0 0.0
        %3618 = vmatprep.subr.mxu0 0.0
        %3619 = vmatpush1.msra.mxu0 0.0
        %3620 = vmatprep.subr.mxu0 0.0
        %3621 = vmatpush1.msra.mxu0 0.0
        %3622 = vmatprep.subr.mxu0 0.0
        %3623 = vmatpush1.msra.mxu0 0.0
        %3624 = vmatprep.subr.mxu0 0.0
        %3625 = vmatpush1.msra.mxu0 0.0
        %3626 = vmatprep.subr.mxu0 0.0
        %3627 = vmatpush1.msra.mxu0 0.0
        %3628 = vmatprep.subr.mxu0 0.0
        %3629 = vmatpush1.msra.mxu0 0.0
        %3630 = vmatprep.subr.mxu0 0.0
        %3631 = vmatpush1.msra.mxu0 0.0
        %3632 = vmatprep.subr.mxu0 0.0
        %3633 = vmatpush1.msra.mxu0 0.0
        %3634 = vmatprep.subr.mxu0 0.0
        %3635 = vmatpush1.msra.mxu0 0.0
        %3636 = vmatprep.mubr.f32.mxu0 %v3501
        %3637 = vmatmul.mubr.f32.gmra.mrb[0].mxu0 %v2844
        %v3638 = vpop.f32.mrb[0].mxu0
        %v3639 = vadd.f32 %v3358, %v3638
        %v3640 = vpop.f32.mrb[0].mxu0
        %v3641 = vadd.f32 %v3360, %v3640
        %3642 = vmatprep.mubr.f32.mxu0 %v3504
        %3643 = vmatmul.mubr.f32.gmra.mrb[0].mxu0 %v2846
        %v3644 = vpop.f32.mrb[0].mxu0
        %v3645 = vadd.f32 %v3364, %v3644
        %v3646 = vpop.f32.mrb[0].mxu0
        %v3647 = vadd.f32 %v3366, %v3646
        %3648 = vmatprep.mubr.f32.mxu0 %v3507
        %3649 = vmatmul.mubr.f32.gmra.mrb[0].mxu0 %v2848
        %v3650 = vpop.f32.mrb[0].mxu0
        %v3651 = vadd.f32 %v3370, %v3650
        %v3652 = vpop.f32.mrb[0].mxu0
        %v3653 = vadd.f32 %v3372, %v3652
        %3654 = vmatprep.mubr.f32.mxu0 %v3510
        %3655 = vmatmul.mubr.f32.gmra.mrb[0].mxu0 %v2850
        %v3656 = vpop.f32.mrb[0].mxu0
        %v3657 = vadd.f32 %v3376, %v3656
        %v3658 = vpop.f32.mrb[0].mxu0
        %v3659 = vadd.f32 %v3378, %v3658
        %3660 = vmatprep.mubr.f32.mxu0 %v3513
        %3661 = vmatmul.mubr.f32.gmra.mrb[0].mxu0 %v2852
        %v3662 = vpop.f32.mrb[0].mxu0
        %v3663 = vadd.f32 %v3382, %v3662
        %v3664 = vpop.f32.mrb[0].mxu0
        %v3665 = vadd.f32 %v3384, %v3664
        %3666 = vmatprep.mubr.f32.mxu0 %v3516
        %3667 = vmatmul.mubr.f32.gmra.mrb[0].mxu0 %v2854
        %v3668 = vpop.f32.mrb[0].mxu0
        %v3669 = vadd.f32 %v3388, %v3668
        %v3670 = vpop.f32.mrb[0].mxu0
        %v3671 = vadd.f32 %v3390, %v3670
        %3672 = vmatprep.mubr.f32.mxu0 %v3519
        %3673 = vmatmul.mubr.f32.gmra.mrb[0].mxu0 %v2856
        %v3674 = vpop.f32.mrb[0].mxu0
        %v3675 = vadd.f32 %v3394, %v3674
        %v3676 = vpop.f32.mrb[0].mxu0
        %v3677 = vadd.f32 %v3396, %v3676
        %3678 = vmatprep.mubr.f32.mxu0 %v3522
        %3679 = vmatmul.mubr.f32.gmra.mrb[0].mxu0 %v2858
        %v3680 = vpop.f32.mrb[0].mxu0
        %v3681 = vadd.f32 %v3400, %v3680
        %v3682 = vpop.f32.mrb[0].mxu0
        %v3683 = vadd.f32 %v3402, %v3682
        %3684 = vmatprep.mubr.f32.mxu0 %v3525
        %3685 = vmatmul.mubr.f32.gmra.mrb[0].mxu0 %v2860
        %v3686 = vpop.f32.mrb[0].mxu0
        %v3687 = vadd.f32 %v3406, %v3686
        %v3688 = vpop.f32.mrb[0].mxu0
        %v3689 = vadd.f32 %v3408, %v3688
        %3690 = vmatprep.mubr.f32.mxu0 %v3528
        %3691 = vmatmul.mubr.f32.gmra.mrb[0].mxu0 %v2862
        %v3692 = vpop.f32.mrb[0].mxu0
        %v3693 = vadd.f32 %v3412, %v3692
        %v3694 = vpop.f32.mrb[0].mxu0
        %v3695 = vadd.f32 %v3414, %v3694
        %3696 = vmatprep.mubr.f32.mxu0 %v3531
        %3697 = vmatmul.mubr.f32.gmra.mrb[0].mxu0 %v2864
        %v3698 = vpop.f32.mrb[0].mxu0
        %v3699 = vadd.f32 %v3418, %v3698
        %v3700 = vpop.f32.mrb[0].mxu0
        %v3701 = vadd.f32 %v3420, %v3700
        %3702 = vmatprep.mubr.f32.mxu0 %v3534
        %3703 = vmatmul.mubr.f32.gmra.mrb[0].mxu0 %v2866
        %v3704 = vpop.f32.mrb[0].mxu0
        %v3705 = vadd.f32 %v3424, %v3704
        %v3706 = vpop.f32.mrb[0].mxu0
        %v3707 = vadd.f32 %v3426, %v3706
        %3708 = vmatprep.mubr.f32.mxu0 %v3537
        %3709 = vmatmul.mubr.f32.gmra.mrb[0].mxu0 %v2868
        %v3710 = vpop.f32.mrb[0].mxu0
        %v3711 = vadd.f32 %v3430, %v3710
        %v3712 = vpop.f32.mrb[0].mxu0
        %v3713 = vadd.f32 %v3432, %v3712
        %3714 = vmatprep.mubr.f32.mxu0 %v3540
        %3715 = vmatmul.mubr.f32.gmra.mrb[0].mxu0 %v2870
        %v3716 = vpop.f32.mrb[0].mxu0
        %v3717 = vadd.f32 %v3436, %v3716
        %v3718 = vpop.f32.mrb[0].mxu0
        %v3719 = vadd.f32 %v3438, %v3718
        %3720 = vmatprep.mubr.f32.mxu0 %v3543
        %3721 = vmatmul.mubr.f32.gmra.mrb[0].mxu0 %v2872
        %v3722 = vpop.f32.mrb[0].mxu0
        %v3723 = vadd.f32 %v3442, %v3722
        %v3724 = vpop.f32.mrb[0].mxu0
        %v3725 = vadd.f32 %v3444, %v3724
        %3726 = vmatprep.mubr.f32.mxu0 %v3546
        %3727 = vmatmul.mubr.f32.gmra.mrb[0].mxu0 %v2874
        %v3728 = vpop.f32.mrb[0].mxu0
        %v3729 = vadd.f32 %v3448, %v3728
        %v3730 = vpop.f32.mrb[0].mxu0
        %v3731 = vadd.f32 %v3450, %v3730
        %3732 = vmatprep.mubr.f32.mxu0 %v3549
        %3733 = vmatmul.mubr.f32.gmra.mrb[0].mxu0 %v2876
        %v3734 = vpop.f32.mrb[0].mxu0
        %v3735 = vadd.f32 %v3454, %v3734
        %v3736 = vpop.f32.mrb[0].mxu0
        %v3737 = vadd.f32 %v3456, %v3736
        %3738 = vmatprep.mubr.f32.mxu0 %v3552
        %3739 = vmatmul.mubr.f32.gmra.mrb[0].mxu0 %v2878
        %v3740 = vpop.f32.mrb[0].mxu0
        %v3741 = vadd.f32 %v3460, %v3740
        %v3742 = vpop.f32.mrb[0].mxu0
        %v3743 = vadd.f32 %v3462, %v3742
        %3744 = vmatprep.mubr.f32.mxu0 %v3555
        %3745 = vmatmul.mubr.f32.gmra.mrb[0].mxu0 %v2880
        %v3746 = vpop.f32.mrb[0].mxu0
        %v3747 = vadd.f32 %v3466, %v3746
        %v3748 = vpop.f32.mrb[0].mxu0
        %v3749 = vadd.f32 %v3468, %v3748
        %3750 = vmatprep.mubr.f32.mxu0 %v3558
        %3751 = vmatmul.mubr.f32.gmra.mrb[0].mxu0 %v2882
        %v3752 = vpop.f32.mrb[0].mxu0
        %v3753 = vadd.f32 %v3472, %v3752
        %v3754 = vpop.f32.mrb[0].mxu0
        %v3755 = vadd.f32 %v3474, %v3754
        %3756 = vmatprep.mubr.f32.mxu0 %v3561
        %3757 = vmatmul.mubr.f32.gmra.mrb[0].mxu0 %v2884
        %v3758 = vpop.f32.mrb[0].mxu0
        %v3759 = vadd.f32 %v3478, %v3758
        %v3760 = vpop.f32.mrb[0].mxu0
        %v3761 = vadd.f32 %v3480, %v3760
        %3762 = vmatprep.mubr.f32.mxu0 %v3564
        %3763 = vmatmul.mubr.f32.gmra.mrb[0].mxu0 %v2886
        %v3764 = vpop.f32.mrb[0].mxu0
        %v3765 = vadd.f32 %v3484, %v3764
        %v3766 = vpop.f32.mrb[0].mxu0
        %v3767 = vadd.f32 %v3486, %v3766
        %3768 = vmatprep.mubr.f32.mxu0 %v3567
        %3769 = vmatmul.mubr.f32.gmra.mrb[0].mxu0 %v2888
        %v3770 = vpop.f32.mrb[0].mxu0
        %v3771 = vadd.f32 %v3490, %v3770
        %v3772 = vpop.f32.mrb[0].mxu0
        %v3773 = vadd.f32 %v3492, %v3772
        %3774 = vmatprep.mubr.f32.mxu0 %v3570
        %3775 = vmatmul.mubr.f32.gmra.mrb[0].mxu0 %v2890
        %v3776 = vpop.f32.mrb[0].mxu0
        %v3777 = vadd.f32 %v3496, %v3776
        %v3778 = vpop.f32.mrb[0].mxu0
        %v3779 = vadd.f32 %v3498, %v3778
        %3780 = vdwg.mxu0
        %v3781 = vld [vmem:[#allocation2] sm:$0x80]
        %v3782 = vld [vmem:[#allocation2 + $0x8] sm:$0x80]
        %v3783 = vld [vmem:[#allocation2 + $0x180] sm:$0x7f]
        %v3784 = vld [vmem:[#allocation2 + $0x188] sm:$0x7f]
        %v3785 = vld [vmem:[%s5] sm:$0xff]
        %v3786 = vld [vmem:[%s5 + $0x8] sm:$0xff]
        %v3787 = vld [vmem:[%s5 + $0x10] sm:$0xff]
        %v3788 = vld [vmem:[%s5 + $0x18] sm:$0xff]
        %v3789 = vld [vmem:[%s5 + $0x20] sm:$0xff]
        %v3790 = vld [vmem:[%s5 + $0x28] sm:$0xff]
        %v3791 = vld [vmem:[%s5 + $0x30] sm:$0xff]
        %v3792 = vld [vmem:[%s5 + $0x38] sm:$0xff]
        %v3793 = vld [vmem:[%s5 + $0x40] sm:$0xff]
        %v3794 = vld [vmem:[%s5 + $0x48] sm:$0xff]
        %v3795 = vld [vmem:[%s5 + $0x50] sm:$0xff]
        %v3796 = vld [vmem:[%s5 + $0x58] sm:$0xff]
        %v3797 = vld [vmem:[%s5 + $0x60] sm:$0xff]
        %v3798 = vld [vmem:[%s5 + $0x68] sm:$0xff]
        %v3799 = vld [vmem:[%s5 + $0x70] sm:$0xff]
        %v3800 = vld [vmem:[%s5 + $0x78] sm:$0xff]
        %v3801 = vld [vmem:[%s5 + $0x80] sm:$0xff]
        %v3802 = vld [vmem:[%s5 + $0x88] sm:$0xff]
        %v3803 = vld [vmem:[%s5 + $0x90] sm:$0xff]
        %v3804 = vld [vmem:[%s5 + $0x98] sm:$0xff]
        %v3805 = vld [vmem:[%s5 + $0xa0] sm:$0xff]
        %v3806 = vld [vmem:[%s5 + $0xa8] sm:$0xff]
        %v3807 = vld [vmem:[%s5 + $0xb0] sm:$0xff]
        %v3808 = vld [vmem:[%s5 + $0xb8] sm:$0xff]
        %v3809 = vld [vmem:[%s5 + $0xc0] sm:$0xff]
        %v3810 = vld [vmem:[%s5 + $0xc8] sm:$0xff]
        %v3811 = vld [vmem:[%s5 + $0xd0] sm:$0xff]
        %v3812 = vld [vmem:[%s5 + $0xd8] sm:$0xff]
        %v3813 = vld [vmem:[%s5 + $0xe0] sm:$0xff]
        %v3814 = vld [vmem:[%s5 + $0xe8] sm:$0xff]
        %v3815 = vld [vmem:[%s5 + $0xf0] sm:$0xff]
        %v3816 = vld [vmem:[%s5 + $0xf8] sm:$0xff]
        %v3817 = vld [vmem:[%s5 + $0x100] sm:$0xff]
        %v3818 = vld [vmem:[%s5 + $0x108] sm:$0xff]
        %v3819 = vld [vmem:[%s5 + $0x110] sm:$0xff]
        %v3820 = vld [vmem:[%s5 + $0x118] sm:$0xff]
        %v3821 = vld [vmem:[%s5 + $0x120] sm:$0xff]
        %v3822 = vld [vmem:[%s5 + $0x128] sm:$0xff]
        %v3823 = vld [vmem:[%s5 + $0x130] sm:$0xff]
        %v3824 = vld [vmem:[%s5 + $0x138] sm:$0xff]
        %vm3829 = vcmask 1040384
        %v3830 = vrot.slane %v3781, 7
        %v3831 = vrot.slane %v2982, 7
        %v3832 = vsel %vm3829, %v3830, %v3831
        %v3833 = vrot.slane %v3782, 7
        %v3834 = vrot.slane %v2983, 7
        %v3835 = vsel %vm3829, %v3833, %v3834
        %v3836 = vrot.slane %v2984, 7
        %v3837 = vsel %vm3829, %v3831, %v3836
        %v3838 = vrot.slane %v2985, 7
        %v3839 = vsel %vm3829, %v3834, %v3838
        %v3840 = vrot.slane %v2986, 7
        %v3841 = vsel %vm3829, %v3836, %v3840
        %v3842 = vrot.slane %v2987, 7
        %v3843 = vsel %vm3829, %v3838, %v3842
        %v3844 = vrot.slane %v2988, 7
        %v3845 = vsel %vm3829, %v3840, %v3844
        %v3846 = vrot.slane %v2989, 7
        %v3847 = vsel %vm3829, %v3842, %v3846
        %v3848 = vrot.slane %v2990, 7
        %v3849 = vsel %vm3829, %v3844, %v3848
        %v3850 = vrot.slane %v2991, 7
        %v3851 = vsel %vm3829, %v3846, %v3850
        %v3852 = vrot.slane %v2992, 7
        %v3853 = vsel %vm3829, %v3848, %v3852
        %v3854 = vrot.slane %v2993, 7
        %v3855 = vsel %vm3829, %v3850, %v3854
        %v3856 = vrot.slane %v2994, 7
        %v3857 = vsel %vm3829, %v3852, %v3856
        %v3858 = vrot.slane %v2995, 7
        %v3859 = vsel %vm3829, %v3854, %v3858
        %v3860 = vrot.slane %v2996, 7
        %v3861 = vsel %vm3829, %v3856, %v3860
        %v3862 = vrot.slane %v2997, 7
        %v3863 = vsel %vm3829, %v3858, %v3862
        %v3864 = vrot.slane %v2998, 7
        %v3865 = vsel %vm3829, %v3860, %v3864
        %v3866 = vrot.slane %v2999, 7
        %v3867 = vsel %vm3829, %v3862, %v3866
        %v3868 = vrot.slane %v3000, 7
        %v3869 = vsel %vm3829, %v3864, %v3868
        %v3870 = vrot.slane %v3001, 7
        %v3871 = vsel %vm3829, %v3866, %v3870
        %v3872 = vrot.slane %v3002, 7
        %v3873 = vsel %vm3829, %v3868, %v3872
        %v3874 = vrot.slane %v3003, 7
        %v3875 = vsel %vm3829, %v3870, %v3874
        %v3876 = vrot.slane %v3004, 7
        %v3877 = vsel %vm3829, %v3872, %v3876
        %v3878 = vrot.slane %v3005, 7
        %v3879 = vsel %vm3829, %v3874, %v3878
        %v3880 = vrot.slane %v3006, 7
        %v3881 = vsel %vm3829, %v3876, %v3880
        %v3882 = vrot.slane %v3007, 7
        %v3883 = vsel %vm3829, %v3878, %v3882
        %v3884 = vrot.slane %v3008, 7
        %v3885 = vsel %vm3829, %v3880, %v3884
        %v3886 = vrot.slane %v3009, 7
        %v3887 = vsel %vm3829, %v3882, %v3886
        %v3888 = vrot.slane %v3010, 7
        %v3889 = vsel %vm3829, %v3884, %v3888
        %v3890 = vrot.slane %v3011, 7
        %v3891 = vsel %vm3829, %v3886, %v3890
        %v3892 = vrot.slane %v3012, 7
        %v3893 = vsel %vm3829, %v3888, %v3892
        %v3894 = vrot.slane %v3013, 7
        %v3895 = vsel %vm3829, %v3890, %v3894
        %v3896 = vrot.slane %v3014, 7
        %v3897 = vsel %vm3829, %v3892, %v3896
        %v3898 = vrot.slane %v3015, 7
        %v3899 = vsel %vm3829, %v3894, %v3898
        %v3900 = vrot.slane %v3016, 7
        %v3901 = vsel %vm3829, %v3896, %v3900
        %v3902 = vrot.slane %v3017, 7
        %v3903 = vsel %vm3829, %v3898, %v3902
        %v3904 = vrot.slane %v3018, 7
        %v3905 = vsel %vm3829, %v3900, %v3904
        %v3906 = vrot.slane %v3019, 7
        %v3907 = vsel %vm3829, %v3902, %v3906
        %v3908 = vrot.slane %v3020, 7
        %v3909 = vsel %vm3829, %v3904, %v3908
        %v3910 = vrot.slane %v3021, 7
        %v3911 = vsel %vm3829, %v3906, %v3910
        %v3912 = vrot.slane %v3022, 7
        %v3913 = vsel %vm3829, %v3908, %v3912
        %v3914 = vrot.slane %v3023, 7
        %v3915 = vsel %vm3829, %v3910, %v3914
        %v3916 = vrot.slane %v3024, 7
        %v3917 = vsel %vm3829, %v3912, %v3916
        %v3918 = vrot.slane %v3025, 7
        %v3919 = vsel %vm3829, %v3914, %v3918
        %v3920 = vrot.slane %v3026, 7
        %v3921 = vsel %vm3829, %v3916, %v3920
        %v3922 = vrot.slane %v3027, 7
        %v3923 = vsel %vm3829, %v3918, %v3922
        %v3924 = vrot.slane %v3783, 7
        %v3925 = vsel %vm3829, %v3920, %v3924
        %v3926 = vrot.slane %v3784, 7
        %v3927 = vsel %vm3829, %v3922, %v3926
        %v3952 = vsel %vm464, %v3835, 0
        %v3954 = vsel %vm464, %v3839, 0
        %v3956 = vsel %vm464, %v3843, 0
        %v3958 = vsel %vm464, %v3847, 0
        %v3960 = vsel %vm464, %v3851, 0
        %v3962 = vsel %vm464, %v3855, 0
        %v3964 = vsel %vm464, %v3859, 0
        %v3966 = vsel %vm464, %v3863, 0
        %v3968 = vsel %vm464, %v3867, 0
        %v3970 = vsel %vm464, %v3871, 0
        %v3972 = vsel %vm464, %v3875, 0
        %v3974 = vsel %vm464, %v3879, 0
        %v3976 = vsel %vm464, %v3883, 0
        %v3978 = vsel %vm464, %v3887, 0
        %v3980 = vsel %vm464, %v3891, 0
        %v3982 = vsel %vm464, %v3895, 0
        %v3984 = vsel %vm464, %v3899, 0
        %v3986 = vsel %vm464, %v3903, 0
        %v3988 = vsel %vm464, %v3907, 0
        %v3990 = vsel %vm464, %v3911, 0
        %v3992 = vsel %vm464, %v3915, 0
        %v3994 = vsel %vm464, %v3919, 0
        %v3996 = vsel %vm464, %v3923, 0
        %v3998 = vsel %vm464, %v3927, 0
        %4000 = vmatprep.subr.mxu0 %v3786
        %4001 = vmatpush1.msra.mxu0 %v3785
        %4002 = vmatprep.subr.mxu0 %v3788
        %4003 = vmatpush1.msra.mxu0 %v3787
        %4004 = vmatprep.subr.mxu0 %v3790
        %4005 = vmatpush1.msra.mxu0 %v3789
        %4006 = vmatprep.subr.mxu0 %v3792
        %4007 = vmatpush1.msra.mxu0 %v3791
        %4008 = vmatprep.subr.mxu0 %v3794
        %4009 = vmatpush1.msra.mxu0 %v3793
        %4010 = vmatprep.subr.mxu0 %v3796
        %4011 = vmatpush1.msra.mxu0 %v3795
        %4012 = vmatprep.subr.mxu0 %v3798
        %4013 = vmatpush1.msra.mxu0 %v3797
        %4014 = vmatprep.subr.mxu0 %v3800
        %4015 = vmatpush1.msra.mxu0 %v3799
        %4016 = vmatprep.subr.mxu0 %v3802
        %4017 = vmatpush1.msra.mxu0 %v3801
        %4018 = vmatprep.subr.mxu0 %v3804
        %4019 = vmatpush1.msra.mxu0 %v3803
        %4020 = vmatprep.subr.mxu0 %v3806
        %4021 = vmatpush1.msra.mxu0 %v3805
        %4022 = vmatprep.subr.mxu0 %v3808
        %4023 = vmatpush1.msra.mxu0 %v3807
        %4024 = vmatprep.subr.mxu0 %v3810
        %4025 = vmatpush1.msra.mxu0 %v3809
        %4026 = vmatprep.subr.mxu0 %v3812
        %4027 = vmatpush1.msra.mxu0 %v3811
        %4028 = vmatprep.subr.mxu0 %v3814
        %4029 = vmatpush1.msra.mxu0 %v3813
        %4030 = vmatprep.subr.mxu0 %v3816
        %4031 = vmatpush1.msra.mxu0 %v3815
        %4032 = vmatprep.subr.mxu0 %v3818
        %4033 = vmatpush1.msra.mxu0 %v3817
        %4034 = vmatprep.subr.mxu0 %v3820
        %4035 = vmatpush1.msra.mxu0 %v3819
        %4036 = vmatprep.subr.mxu0 %v3822
        %4037 = vmatpush1.msra.mxu0 %v3821
        %4038 = vmatprep.subr.mxu0 %v3824
        %4039 = vmatpush1.msra.mxu0 %v3823
        %4040 = vmatprep.subr.mxu0 0.0
        %4041 = vmatpush1.msra.mxu0 0.0
        %4042 = vmatprep.subr.mxu0 0.0
        %4043 = vmatpush1.msra.mxu0 0.0
        %4044 = vmatprep.subr.mxu0 0.0
        %4045 = vmatpush1.msra.mxu0 0.0
        %4046 = vmatprep.subr.mxu0 0.0
        %4047 = vmatpush1.msra.mxu0 0.0
        %4048 = vmatprep.subr.mxu0 0.0
        %4049 = vmatpush1.msra.mxu0 0.0
        %4050 = vmatprep.subr.mxu0 0.0
        %4051 = vmatpush1.msra.mxu0 0.0
        %4052 = vmatprep.subr.mxu0 0.0
        %4053 = vmatpush1.msra.mxu0 0.0
        %4054 = vmatprep.subr.mxu0 0.0
        %4055 = vmatpush1.msra.mxu0 0.0
        %4056 = vmatprep.subr.mxu0 0.0
        %4057 = vmatpush1.msra.mxu0 0.0
        %4058 = vmatprep.subr.mxu0 0.0
        %4059 = vmatpush1.msra.mxu0 0.0
        %4060 = vmatprep.subr.mxu0 0.0
        %4061 = vmatpush1.msra.mxu0 0.0
        %4062 = vmatprep.subr.mxu0 0.0
        %4063 = vmatpush1.msra.mxu0 0.0
        %4064 = vmatprep.mubr.f32.mxu0 %v3952
        %4065 = vmatmul.mubr.f32.gmra.mrb[0].mxu0 %v3832
        %v4066 = vpop.f32.mrb[0].mxu0
        %v4067 = vadd.f32 0.0, %v4066
        %v4068 = vpop.f32.mrb[0].mxu0
        %v4069 = vadd.f32 0.0, %v4068
        %4070 = vmatprep.mubr.f32.mxu0 %v3954
        %4071 = vmatmul.mubr.f32.gmra.mrb[0].mxu0 %v3837
        %v4072 = vpop.f32.mrb[0].mxu0
        %v4073 = vadd.f32 0.0, %v4072
        %v4074 = vpop.f32.mrb[0].mxu0
        %v4075 = vadd.f32 0.0, %v4074
        %4076 = vmatprep.mubr.f32.mxu0 %v3956
        %4077 = vmatmul.mubr.f32.gmra.mrb[0].mxu0 %v3841
        %v4078 = vpop.f32.mrb[0].mxu0
        %v4079 = vadd.f32 0.0, %v4078
        %v4080 = vpop.f32.mrb[0].mxu0
        %v4081 = vadd.f32 0.0, %v4080
        %4082 = vmatprep.mubr.f32.mxu0 %v3958
        %4083 = vmatmul.mubr.f32.gmra.mrb[0].mxu0 %v3845
        %v4084 = vpop.f32.mrb[0].mxu0
        %v4085 = vadd.f32 0.0, %v4084
        %v4086 = vpop.f32.mrb[0].mxu0
        %v4087 = vadd.f32 0.0, %v4086
        %4088 = vmatprep.mubr.f32.mxu0 %v3960
        %4089 = vmatmul.mubr.f32.gmra.mrb[0].mxu0 %v3849
        %v4090 = vpop.f32.mrb[0].mxu0
        %v4091 = vadd.f32 0.0, %v4090
        %v4092 = vpop.f32.mrb[0].mxu0
        %v4093 = vadd.f32 0.0, %v4092
        %4094 = vmatprep.mubr.f32.mxu0 %v3962
        %4095 = vmatmul.mubr.f32.gmra.mrb[0].mxu0 %v3853
        %v4096 = vpop.f32.mrb[0].mxu0
        %v4097 = vadd.f32 0.0, %v4096
        %v4098 = vpop.f32.mrb[0].mxu0
        %v4099 = vadd.f32 0.0, %v4098
        %4100 = vmatprep.mubr.f32.mxu0 %v3964
        %4101 = vmatmul.mubr.f32.gmra.mrb[0].mxu0 %v3857
        %v4102 = vpop.f32.mrb[0].mxu0
        %v4103 = vadd.f32 0.0, %v4102
        %v4104 = vpop.f32.mrb[0].mxu0
        %v4105 = vadd.f32 0.0, %v4104
        %4106 = vmatprep.mubr.f32.mxu0 %v3966
        %4107 = vmatmul.mubr.f32.gmra.mrb[0].mxu0 %v3861
        %v4108 = vpop.f32.mrb[0].mxu0
        %v4109 = vadd.f32 0.0, %v4108
        %v4110 = vpop.f32.mrb[0].mxu0
        %v4111 = vadd.f32 0.0, %v4110
        %4112 = vmatprep.mubr.f32.mxu0 %v3968
        %4113 = vmatmul.mubr.f32.gmra.mrb[0].mxu0 %v3865
        %v4114 = vpop.f32.mrb[0].mxu0
        %v4115 = vadd.f32 0.0, %v4114
        %v4116 = vpop.f32.mrb[0].mxu0
        %v4117 = vadd.f32 0.0, %v4116
        %4118 = vmatprep.mubr.f32.mxu0 %v3970
        %4119 = vmatmul.mubr.f32.gmra.mrb[0].mxu0 %v3869
        %v4120 = vpop.f32.mrb[0].mxu0
        %v4121 = vadd.f32 0.0, %v4120
        %v4122 = vpop.f32.mrb[0].mxu0
        %v4123 = vadd.f32 0.0, %v4122
        %4124 = vmatprep.mubr.f32.mxu0 %v3972
        %4125 = vmatmul.mubr.f32.gmra.mrb[0].mxu0 %v3873
        %v4126 = vpop.f32.mrb[0].mxu0
        %v4127 = vadd.f32 0.0, %v4126
        %v4128 = vpop.f32.mrb[0].mxu0
        %v4129 = vadd.f32 0.0, %v4128
        %4130 = vmatprep.mubr.f32.mxu0 %v3974
        %4131 = vmatmul.mubr.f32.gmra.mrb[0].mxu0 %v3877
        %v4132 = vpop.f32.mrb[0].mxu0
        %v4133 = vadd.f32 0.0, %v4132
        %v4134 = vpop.f32.mrb[0].mxu0
        %v4135 = vadd.f32 0.0, %v4134
        %4136 = vmatprep.mubr.f32.mxu0 %v3976
        %4137 = vmatmul.mubr.f32.gmra.mrb[0].mxu0 %v3881
        %v4138 = vpop.f32.mrb[0].mxu0
        %v4139 = vadd.f32 0.0, %v4138
        %v4140 = vpop.f32.mrb[0].mxu0
        %v4141 = vadd.f32 0.0, %v4140
        %4142 = vmatprep.mubr.f32.mxu0 %v3978
        %4143 = vmatmul.mubr.f32.gmra.mrb[0].mxu0 %v3885
        %v4144 = vpop.f32.mrb[0].mxu0
        %v4145 = vadd.f32 0.0, %v4144
        %v4146 = vpop.f32.mrb[0].mxu0
        %v4147 = vadd.f32 0.0, %v4146
        %4148 = vmatprep.mubr.f32.mxu0 %v3980
        %4149 = vmatmul.mubr.f32.gmra.mrb[0].mxu0 %v3889
        %v4150 = vpop.f32.mrb[0].mxu0
        %v4151 = vadd.f32 0.0, %v4150
        %v4152 = vpop.f32.mrb[0].mxu0
        %v4153 = vadd.f32 0.0, %v4152
        %4154 = vmatprep.mubr.f32.mxu0 %v3982
        %4155 = vmatmul.mubr.f32.gmra.mrb[0].mxu0 %v3893
        %v4156 = vpop.f32.mrb[0].mxu0
        %v4157 = vadd.f32 0.0, %v4156
        %v4158 = vpop.f32.mrb[0].mxu0
        %v4159 = vadd.f32 0.0, %v4158
        %4160 = vmatprep.mubr.f32.mxu0 %v3984
        %4161 = vmatmul.mubr.f32.gmra.mrb[0].mxu0 %v3897
        %v4162 = vpop.f32.mrb[0].mxu0
        %v4163 = vadd.f32 0.0, %v4162
        %v4164 = vpop.f32.mrb[0].mxu0
        %v4165 = vadd.f32 0.0, %v4164
        %4166 = vmatprep.mubr.f32.mxu0 %v3986
        %4167 = vmatmul.mubr.f32.gmra.mrb[0].mxu0 %v3901
        %v4168 = vpop.f32.mrb[0].mxu0
        %v4169 = vadd.f32 0.0, %v4168
        %v4170 = vpop.f32.mrb[0].mxu0
        %v4171 = vadd.f32 0.0, %v4170
        %4172 = vmatprep.mubr.f32.mxu0 %v3988
        %4173 = vmatmul.mubr.f32.gmra.mrb[0].mxu0 %v3905
        %v4174 = vpop.f32.mrb[0].mxu0
        %v4175 = vadd.f32 0.0, %v4174
        %v4176 = vpop.f32.mrb[0].mxu0
        %v4177 = vadd.f32 0.0, %v4176
        %4178 = vmatprep.mubr.f32.mxu0 %v3990
        %4179 = vmatmul.mubr.f32.gmra.mrb[0].mxu0 %v3909
        %v4180 = vpop.f32.mrb[0].mxu0
        %v4181 = vadd.f32 0.0, %v4180
        %v4182 = vpop.f32.mrb[0].mxu0
        %v4183 = vadd.f32 0.0, %v4182
        %4184 = vmatprep.mubr.f32.mxu0 %v3992
        %4185 = vmatmul.mubr.f32.gmra.mrb[0].mxu0 %v3913
        %v4186 = vpop.f32.mrb[0].mxu0
        %v4187 = vadd.f32 0.0, %v4186
        %v4188 = vpop.f32.mrb[0].mxu0
        %v4189 = vadd.f32 0.0, %v4188
        %4190 = vmatprep.mubr.f32.mxu0 %v3994
        %4191 = vmatmul.mubr.f32.gmra.mrb[0].mxu0 %v3917
        %v4192 = vpop.f32.mrb[0].mxu0
        %v4193 = vadd.f32 0.0, %v4192
        %v4194 = vpop.f32.mrb[0].mxu0
        %v4195 = vadd.f32 0.0, %v4194
        %4196 = vmatprep.mubr.f32.mxu0 %v3996
        %4197 = vmatmul.mubr.f32.gmra.mrb[0].mxu0 %v3921
        %v4198 = vpop.f32.mrb[0].mxu0
        %v4199 = vadd.f32 0.0, %v4198
        %v4200 = vpop.f32.mrb[0].mxu0
        %v4201 = vadd.f32 0.0, %v4200
        %4202 = vmatprep.mubr.f32.mxu0 %v3998
        %4203 = vmatmul.mubr.f32.gmra.mrb[0].mxu0 %v3925
        %v4204 = vpop.f32.mrb[0].mxu0
        %v4205 = vadd.f32 0.0, %v4204
        %v4206 = vpop.f32.mrb[0].mxu0
        %v4207 = vadd.f32 0.0, %v4206
        %4208 = vdwg.mxu0
        %v4209 = vadd.f32 %v3639, %v4067
        %v4210 = vadd.f32 %v3641, %v4069
        %v4211 = vadd.f32 %v3645, %v4073
        %v4212 = vadd.f32 %v3647, %v4075
        %v4213 = vadd.f32 %v3651, %v4079
        %v4214 = vadd.f32 %v3653, %v4081
        %v4215 = vadd.f32 %v3657, %v4085
        %v4216 = vadd.f32 %v3659, %v4087
        %v4217 = vadd.f32 %v3663, %v4091
        %v4218 = vadd.f32 %v3665, %v4093
        %v4219 = vadd.f32 %v3669, %v4097
        %v4220 = vadd.f32 %v3671, %v4099
        %v4221 = vadd.f32 %v3675, %v4103
        %v4222 = vadd.f32 %v3677, %v4105
        %v4223 = vadd.f32 %v3681, %v4109
        %v4224 = vadd.f32 %v3683, %v4111
        %v4225 = vadd.f32 %v3687, %v4115
        %v4226 = vadd.f32 %v3689, %v4117
        %v4227 = vadd.f32 %v3693, %v4121
        %v4228 = vadd.f32 %v3695, %v4123
        %v4229 = vadd.f32 %v3699, %v4127
        %v4230 = vadd.f32 %v3701, %v4129
        %v4231 = vadd.f32 %v3705, %v4133
        %v4232 = vadd.f32 %v3707, %v4135
        %v4233 = vadd.f32 %v3711, %v4139
        %v4234 = vadd.f32 %v3713, %v4141
        %v4235 = vadd.f32 %v3717, %v4145
        %v4236 = vadd.f32 %v3719, %v4147
        %v4237 = vadd.f32 %v3723, %v4151
        %v4238 = vadd.f32 %v3725, %v4153
        %v4239 = vadd.f32 %v3729, %v4157
        %v4240 = vadd.f32 %v3731, %v4159
        %v4241 = vadd.f32 %v3735, %v4163
        %v4242 = vadd.f32 %v3737, %v4165
        %v4243 = vadd.f32 %v3741, %v4169
        %v4244 = vadd.f32 %v3743, %v4171
        %v4245 = vadd.f32 %v3747, %v4175
        %v4246 = vadd.f32 %v3749, %v4177
        %v4247 = vadd.f32 %v3753, %v4181
        %v4248 = vadd.f32 %v3755, %v4183
        %v4249 = vadd.f32 %v3759, %v4187
        %v4250 = vadd.f32 %v3761, %v4189
        %v4251 = vadd.f32 %v3765, %v4193
        %v4252 = vadd.f32 %v3767, %v4195
        %v4253 = vadd.f32 %v3771, %v4199
        %v4254 = vadd.f32 %v3773, %v4201
        %v4255 = vadd.f32 %v3777, %v4205
        %v4256 = vadd.f32 %v3779, %v4207
        %v4257 = vld [vmem:[#allocation2 + $0x10] sm:$0xfe]
        %v4258 = vld [vmem:[#allocation2 + $0x18] sm:$0xfe]
        %v4259 = vld [vmem:[#allocation2 + $0x20] sm:$0xff]
        %v4260 = vld [vmem:[#allocation2 + $0x28] sm:$0xff]
        %v4261 = vld [vmem:[#allocation2 + $0x30] sm:$0xff]
        %v4262 = vld [vmem:[#allocation2 + $0x38] sm:$0xff]
        %v4263 = vld [vmem:[#allocation2 + $0x40] sm:$0xff]
        %v4264 = vld [vmem:[#allocation2 + $0x48] sm:$0xff]
        %v4265 = vld [vmem:[#allocation2 + $0x50] sm:$0xff]
        %v4266 = vld [vmem:[#allocation2 + $0x58] sm:$0xff]
        %v4267 = vld [vmem:[#allocation2 + $0x60] sm:$0xff]
        %v4268 = vld [vmem:[#allocation2 + $0x68] sm:$0xff]
        %v4269 = vld [vmem:[#allocation2 + $0x70] sm:$0xff]
        %v4270 = vld [vmem:[#allocation2 + $0x78] sm:$0xff]
        %v4271 = vld [vmem:[#allocation2 + $0x80] sm:$0xff]
        %v4272 = vld [vmem:[#allocation2 + $0x88] sm:$0xff]
        %v4273 = vld [vmem:[#allocation2 + $0x90] sm:$0xff]
        %v4274 = vld [vmem:[#allocation2 + $0x98] sm:$0xff]
        %v4275 = vld [vmem:[#allocation2 + $0xa0] sm:$0xff]
        %v4276 = vld [vmem:[#allocation2 + $0xa8] sm:$0xff]
        %v4277 = vld [vmem:[#allocation2 + $0xb0] sm:$0xff]
        %v4278 = vld [vmem:[#allocation2 + $0xb8] sm:$0xff]
        %v4279 = vld [vmem:[#allocation2 + $0xc0] sm:$0xff]
        %v4280 = vld [vmem:[#allocation2 + $0xc8] sm:$0xff]
        %v4281 = vld [vmem:[#allocation2 + $0xd0] sm:$0xff]
        %v4282 = vld [vmem:[#allocation2 + $0xd8] sm:$0xff]
        %v4283 = vld [vmem:[#allocation2 + $0xe0] sm:$0xff]
        %v4284 = vld [vmem:[#allocation2 + $0xe8] sm:$0xff]
        %v4285 = vld [vmem:[#allocation2 + $0xf0] sm:$0xff]
        %v4286 = vld [vmem:[#allocation2 + $0xf8] sm:$0xff]
        %v4287 = vld [vmem:[#allocation2 + $0x100] sm:$0xff]
        %v4288 = vld [vmem:[#allocation2 + $0x108] sm:$0xff]
        %v4289 = vld [vmem:[#allocation2 + $0x110] sm:$0xff]
        %v4290 = vld [vmem:[#allocation2 + $0x118] sm:$0xff]
        %v4291 = vld [vmem:[#allocation2 + $0x120] sm:$0xff]
        %v4292 = vld [vmem:[#allocation2 + $0x128] sm:$0xff]
        %v4293 = vld [vmem:[#allocation2 + $0x130] sm:$0xff]
        %v4294 = vld [vmem:[#allocation2 + $0x138] sm:$0xff]
        %v4295 = vld [vmem:[#allocation2 + $0x140] sm:$0xff]
        %v4296 = vld [vmem:[#allocation2 + $0x148] sm:$0xff]
        %v4297 = vld [vmem:[#allocation2 + $0x150] sm:$0xff]
        %v4298 = vld [vmem:[#allocation2 + $0x158] sm:$0xff]
        %v4299 = vld [vmem:[#allocation2 + $0x160] sm:$0xff]
        %v4300 = vld [vmem:[#allocation2 + $0x168] sm:$0xff]
        %v4301 = vld [vmem:[#allocation2 + $0x170] sm:$0xff]
        %v4302 = vld [vmem:[#allocation2 + $0x178] sm:$0xff]
        %v4303 = vld [vmem:[#allocation2 + $0x180] sm:$0xff]
        %v4304 = vld [vmem:[#allocation2 + $0x188] sm:$0xff]
        %v4305 = vld [vmem:[#allocation2 + $0x190] sm:$0x1]
        %v4306 = vld [vmem:[#allocation2 + $0x198] sm:$0x1]
        %v4307 = vld [vmem:[#allocation5] sm:$0xff]
        %v4308 = vld [vmem:[#allocation5 + $0x8] sm:$0xff]
        %v4309 = vld [vmem:[#allocation5 + $0x10] sm:$0xff]
        %v4310 = vld [vmem:[#allocation5 + $0x18] sm:$0xff]
        %v4311 = vld [vmem:[#allocation5 + $0x20] sm:$0xff]
        %v4312 = vld [vmem:[#allocation5 + $0x28] sm:$0xff]
        %v4313 = vld [vmem:[#allocation5 + $0x30] sm:$0xff]
        %v4314 = vld [vmem:[#allocation5 + $0x38] sm:$0xff]
        %v4315 = vld [vmem:[#allocation5 + $0x40] sm:$0xff]
        %v4316 = vld [vmem:[#allocation5 + $0x48] sm:$0xff]
        %v4317 = vld [vmem:[#allocation5 + $0x50] sm:$0xff]
        %v4318 = vld [vmem:[#allocation5 + $0x58] sm:$0xff]
        %v4319 = vld [vmem:[#allocation5 + $0x60] sm:$0xff]
        %v4320 = vld [vmem:[#allocation5 + $0x68] sm:$0xff]
        %v4321 = vld [vmem:[#allocation5 + $0x70] sm:$0xff]
        %v4322 = vld [vmem:[#allocation5 + $0x78] sm:$0xff]
        %v4323 = vld [vmem:[#allocation5 + $0x80] sm:$0xff]
        %v4324 = vld [vmem:[#allocation5 + $0x88] sm:$0xff]
        %v4325 = vld [vmem:[#allocation5 + $0x90] sm:$0xff]
        %v4326 = vld [vmem:[#allocation5 + $0x98] sm:$0xff]
        %v4327 = vld [vmem:[#allocation5 + $0xa0] sm:$0xff]
        %v4328 = vld [vmem:[#allocation5 + $0xa8] sm:$0xff]
        %v4329 = vld [vmem:[#allocation5 + $0xb0] sm:$0xff]
        %v4330 = vld [vmem:[#allocation5 + $0xb8] sm:$0xff]
        %v4331 = vld [vmem:[#allocation5 + $0xc0] sm:$0xff]
        %v4332 = vld [vmem:[#allocation5 + $0xc8] sm:$0xff]
        %v4333 = vld [vmem:[#allocation5 + $0xd0] sm:$0xff]
        %v4334 = vld [vmem:[#allocation5 + $0xd8] sm:$0xff]
        %v4335 = vld [vmem:[#allocation5 + $0xe0] sm:$0xff]
        %v4336 = vld [vmem:[#allocation5 + $0xe8] sm:$0xff]
        %v4337 = vld [vmem:[#allocation5 + $0xf0] sm:$0xff]
        %v4338 = vld [vmem:[#allocation5 + $0xf8] sm:$0xff]
        %v4339 = vld [vmem:[#allocation5 + $0x100] sm:$0xff]
        %v4340 = vld [vmem:[#allocation5 + $0x108] sm:$0xff]
        %v4341 = vld [vmem:[#allocation5 + $0x110] sm:$0xff]
        %v4342 = vld [vmem:[#allocation5 + $0x118] sm:$0xff]
        %v4343 = vld [vmem:[#allocation5 + $0x120] sm:$0xff]
        %v4344 = vld [vmem:[#allocation5 + $0x128] sm:$0xff]
        %v4345 = vld [vmem:[#allocation5 + $0x130] sm:$0xff]
        %v4346 = vld [vmem:[#allocation5 + $0x138] sm:$0xff]
        %v4397 = vrot.slane %v4257, 1
        %v4398 = vrot.slane %v4259, 1
        %v4399 = vsel %vm995, %v4397, %v4398
        %v4400 = vrot.slane %v4258, 1
        %v4401 = vrot.slane %v4260, 1
        %v4402 = vsel %vm995, %v4400, %v4401
        %v4403 = vrot.slane %v4261, 1
        %v4404 = vsel %vm995, %v4398, %v4403
        %v4405 = vrot.slane %v4262, 1
        %v4406 = vsel %vm995, %v4401, %v4405
        %v4407 = vrot.slane %v4263, 1
        %v4408 = vsel %vm995, %v4403, %v4407
        %v4409 = vrot.slane %v4264, 1
        %v4410 = vsel %vm995, %v4405, %v4409
        %v4411 = vrot.slane %v4265, 1
        %v4412 = vsel %vm995, %v4407, %v4411
        %v4413 = vrot.slane %v4266, 1
        %v4414 = vsel %vm995, %v4409, %v4413
        %v4415 = vrot.slane %v4267, 1
        %v4416 = vsel %vm995, %v4411, %v4415
        %v4417 = vrot.slane %v4268, 1
        %v4418 = vsel %vm995, %v4413, %v4417
        %v4419 = vrot.slane %v4269, 1
        %v4420 = vsel %vm995, %v4415, %v4419
        %v4421 = vrot.slane %v4270, 1
        %v4422 = vsel %vm995, %v4417, %v4421
        %v4423 = vrot.slane %v4271, 1
        %v4424 = vsel %vm995, %v4419, %v4423
        %v4425 = vrot.slane %v4272, 1
        %v4426 = vsel %vm995, %v4421, %v4425
        %v4427 = vrot.slane %v4273, 1
        %v4428 = vsel %vm995, %v4423, %v4427
        %v4429 = vrot.slane %v4274, 1
        %v4430 = vsel %vm995, %v4425, %v4429
        %v4431 = vrot.slane %v4275, 1
        %v4432 = vsel %vm995, %v4427, %v4431
        %v4433 = vrot.slane %v4276, 1
        %v4434 = vsel %vm995, %v4429, %v4433
        %v4435 = vrot.slane %v4277, 1
        %v4436 = vsel %vm995, %v4431, %v4435
        %v4437 = vrot.slane %v4278, 1
        %v4438 = vsel %vm995, %v4433, %v4437
        %v4439 = vrot.slane %v4279, 1
        %v4440 = vsel %vm995, %v4435, %v4439
        %v4441 = vrot.slane %v4280, 1
        %v4442 = vsel %vm995, %v4437, %v4441
        %v4443 = vrot.slane %v4281, 1
        %v4444 = vsel %vm995, %v4439, %v4443
        %v4445 = vrot.slane %v4282, 1
        %v4446 = vsel %vm995, %v4441, %v4445
        %v4447 = vrot.slane %v4283, 1
        %v4448 = vsel %vm995, %v4443, %v4447
        %v4449 = vrot.slane %v4284, 1
        %v4450 = vsel %vm995, %v4445, %v4449
        %v4451 = vrot.slane %v4285, 1
        %v4452 = vsel %vm995, %v4447, %v4451
        %v4453 = vrot.slane %v4286, 1
        %v4454 = vsel %vm995, %v4449, %v4453
        %v4455 = vrot.slane %v4287, 1
        %v4456 = vsel %vm995, %v4451, %v4455
        %v4457 = vrot.slane %v4288, 1
        %v4458 = vsel %vm995, %v4453, %v4457
        %v4459 = vrot.slane %v4289, 1
        %v4460 = vsel %vm995, %v4455, %v4459
        %v4461 = vrot.slane %v4290, 1
        %v4462 = vsel %vm995, %v4457, %v4461
        %v4463 = vrot.slane %v4291, 1
        %v4464 = vsel %vm995, %v4459, %v4463
        %v4465 = vrot.slane %v4292, 1
        %v4466 = vsel %vm995, %v4461, %v4465
        %v4467 = vrot.slane %v4293, 1
        %v4468 = vsel %vm995, %v4463, %v4467
        %v4469 = vrot.slane %v4294, 1
        %v4470 = vsel %vm995, %v4465, %v4469
        %v4471 = vrot.slane %v4295, 1
        %v4472 = vsel %vm995, %v4467, %v4471
        %v4473 = vrot.slane %v4296, 1
        %v4474 = vsel %vm995, %v4469, %v4473
        %v4475 = vrot.slane %v4297, 1
        %v4476 = vsel %vm995, %v4471, %v4475
        %v4477 = vrot.slane %v4298, 1
        %v4478 = vsel %vm995, %v4473, %v4477
        %v4479 = vrot.slane %v4299, 1
        %v4480 = vsel %vm995, %v4475, %v4479
        %v4481 = vrot.slane %v4300, 1
        %v4482 = vsel %vm995, %v4477, %v4481
        %v4483 = vrot.slane %v4301, 1
        %v4484 = vsel %vm995, %v4479, %v4483
        %v4485 = vrot.slane %v4302, 1
        %v4486 = vsel %vm995, %v4481, %v4485
        %v4487 = vrot.slane %v4303, 1
        %v4488 = vsel %vm995, %v4483, %v4487
        %v4489 = vrot.slane %v4304, 1
        %v4490 = vsel %vm995, %v4485, %v4489
        %v4491 = vrot.slane %v4305, 1
        %v4492 = vsel %vm995, %v4487, %v4491
        %v4493 = vrot.slane %v4306, 1
        %v4494 = vsel %vm995, %v4489, %v4493
        %v4519 = vsel %vm464, %v4402, 0
        %v4521 = vsel %vm464, %v4406, 0
        %v4523 = vsel %vm464, %v4410, 0
        %v4525 = vsel %vm464, %v4414, 0
        %v4527 = vsel %vm464, %v4418, 0
        %v4529 = vsel %vm464, %v4422, 0
        %v4531 = vsel %vm464, %v4426, 0
        %v4533 = vsel %vm464, %v4430, 0
        %v4535 = vsel %vm464, %v4434, 0
        %v4537 = vsel %vm464, %v4438, 0
        %v4539 = vsel %vm464, %v4442, 0
        %v4541 = vsel %vm464, %v4446, 0
        %v4543 = vsel %vm464, %v4450, 0
        %v4545 = vsel %vm464, %v4454, 0
        %v4547 = vsel %vm464, %v4458, 0
        %v4549 = vsel %vm464, %v4462, 0
        %v4551 = vsel %vm464, %v4466, 0
        %v4553 = vsel %vm464, %v4470, 0
        %v4555 = vsel %vm464, %v4474, 0
        %v4557 = vsel %vm464, %v4478, 0
        %v4559 = vsel %vm464, %v4482, 0
        %v4561 = vsel %vm464, %v4486, 0
        %v4563 = vsel %vm464, %v4490, 0
        %v4565 = vsel %vm464, %v4494, 0
        %4567 = vmatprep.subr.mxu0 %v4308
        %4568 = vmatpush1.msra.mxu0 %v4307
        %4569 = vmatprep.subr.mxu0 %v4310
        %4570 = vmatpush1.msra.mxu0 %v4309
        %4571 = vmatprep.subr.mxu0 %v4312
        %4572 = vmatpush1.msra.mxu0 %v4311
        %4573 = vmatprep.subr.mxu0 %v4314
        %4574 = vmatpush1.msra.mxu0 %v4313
        %4575 = vmatprep.subr.mxu0 %v4316
        %4576 = vmatpush1.msra.mxu0 %v4315
        %4577 = vmatprep.subr.mxu0 %v4318
        %4578 = vmatpush1.msra.mxu0 %v4317
        %4579 = vmatprep.subr.mxu0 %v4320
        %4580 = vmatpush1.msra.mxu0 %v4319
        %4581 = vmatprep.subr.mxu0 %v4322
        %4582 = vmatpush1.msra.mxu0 %v4321
        %4583 = vmatprep.subr.mxu0 %v4324
        %4584 = vmatpush1.msra.mxu0 %v4323
        %4585 = vmatprep.subr.mxu0 %v4326
        %4586 = vmatpush1.msra.mxu0 %v4325
        %4587 = vmatprep.subr.mxu0 %v4328
        %4588 = vmatpush1.msra.mxu0 %v4327
        %4589 = vmatprep.subr.mxu0 %v4330
        %4590 = vmatpush1.msra.mxu0 %v4329
        %4591 = vmatprep.subr.mxu0 %v4332
        %4592 = vmatpush1.msra.mxu0 %v4331
        %4593 = vmatprep.subr.mxu0 %v4334
        %4594 = vmatpush1.msra.mxu0 %v4333
        %4595 = vmatprep.subr.mxu0 %v4336
        %4596 = vmatpush1.msra.mxu0 %v4335
        %4597 = vmatprep.subr.mxu0 %v4338
        %4598 = vmatpush1.msra.mxu0 %v4337
        %4599 = vmatprep.subr.mxu0 %v4340
        %4600 = vmatpush1.msra.mxu0 %v4339
        %4601 = vmatprep.subr.mxu0 %v4342
        %4602 = vmatpush1.msra.mxu0 %v4341
        %4603 = vmatprep.subr.mxu0 %v4344
        %4604 = vmatpush1.msra.mxu0 %v4343
        %4605 = vmatprep.subr.mxu0 %v4346
        %4606 = vmatpush1.msra.mxu0 %v4345
        %4607 = vmatprep.subr.mxu0 0.0
        %4608 = vmatpush1.msra.mxu0 0.0
        %4609 = vmatprep.subr.mxu0 0.0
        %4610 = vmatpush1.msra.mxu0 0.0
        %4611 = vmatprep.subr.mxu0 0.0
        %4612 = vmatpush1.msra.mxu0 0.0
        %4613 = vmatprep.subr.mxu0 0.0
        %4614 = vmatpush1.msra.mxu0 0.0
        %4615 = vmatprep.subr.mxu0 0.0
        %4616 = vmatpush1.msra.mxu0 0.0
        %4617 = vmatprep.subr.mxu0 0.0
        %4618 = vmatpush1.msra.mxu0 0.0
        %4619 = vmatprep.subr.mxu0 0.0
        %4620 = vmatpush1.msra.mxu0 0.0
        %4621 = vmatprep.subr.mxu0 0.0
        %4622 = vmatpush1.msra.mxu0 0.0
        %4623 = vmatprep.subr.mxu0 0.0
        %4624 = vmatpush1.msra.mxu0 0.0
        %4625 = vmatprep.subr.mxu0 0.0
        %4626 = vmatpush1.msra.mxu0 0.0
        %4627 = vmatprep.subr.mxu0 0.0
        %4628 = vmatpush1.msra.mxu0 0.0
        %4629 = vmatprep.subr.mxu0 0.0
        %4630 = vmatpush1.msra.mxu0 0.0
        %4631 = vmatprep.mubr.f32.mxu0 %v4519
        %4632 = vmatmul.mubr.f32.gmra.mrb[0].mxu0 %v4399
        %v4633 = vpop.f32.mrb[0].mxu0
        %v4634 = vadd.f32 0.0, %v4633
        %v4635 = vpop.f32.mrb[0].mxu0
        %v4636 = vadd.f32 0.0, %v4635
        %4637 = vmatprep.mubr.f32.mxu0 %v4521
        %4638 = vmatmul.mubr.f32.gmra.mrb[0].mxu0 %v4404
        %v4639 = vpop.f32.mrb[0].mxu0
        %v4640 = vadd.f32 0.0, %v4639
        %v4641 = vpop.f32.mrb[0].mxu0
        %v4642 = vadd.f32 0.0, %v4641
        %4643 = vmatprep.mubr.f32.mxu0 %v4523
        %4644 = vmatmul.mubr.f32.gmra.mrb[0].mxu0 %v4408
        %v4645 = vpop.f32.mrb[0].mxu0
        %v4646 = vadd.f32 0.0, %v4645
        %v4647 = vpop.f32.mrb[0].mxu0
        %v4648 = vadd.f32 0.0, %v4647
        %4649 = vmatprep.mubr.f32.mxu0 %v4525
        %4650 = vmatmul.mubr.f32.gmra.mrb[0].mxu0 %v4412
        %v4651 = vpop.f32.mrb[0].mxu0
        %v4652 = vadd.f32 0.0, %v4651
        %v4653 = vpop.f32.mrb[0].mxu0
        %v4654 = vadd.f32 0.0, %v4653
        %4655 = vmatprep.mubr.f32.mxu0 %v4527
        %4656 = vmatmul.mubr.f32.gmra.mrb[0].mxu0 %v4416
        %v4657 = vpop.f32.mrb[0].mxu0
        %v4658 = vadd.f32 0.0, %v4657
        %v4659 = vpop.f32.mrb[0].mxu0
        %v4660 = vadd.f32 0.0, %v4659
        %4661 = vmatprep.mubr.f32.mxu0 %v4529
        %4662 = vmatmul.mubr.f32.gmra.mrb[0].mxu0 %v4420
        %v4663 = vpop.f32.mrb[0].mxu0
        %v4664 = vadd.f32 0.0, %v4663
        %v4665 = vpop.f32.mrb[0].mxu0
        %v4666 = vadd.f32 0.0, %v4665
        %4667 = vmatprep.mubr.f32.mxu0 %v4531
        %4668 = vmatmul.mubr.f32.gmra.mrb[0].mxu0 %v4424
        %v4669 = vpop.f32.mrb[0].mxu0
        %v4670 = vadd.f32 0.0, %v4669
        %v4671 = vpop.f32.mrb[0].mxu0
        %v4672 = vadd.f32 0.0, %v4671
        %4673 = vmatprep.mubr.f32.mxu0 %v4533
        %4674 = vmatmul.mubr.f32.gmra.mrb[0].mxu0 %v4428
        %v4675 = vpop.f32.mrb[0].mxu0
        %v4676 = vadd.f32 0.0, %v4675
        %v4677 = vpop.f32.mrb[0].mxu0
        %v4678 = vadd.f32 0.0, %v4677
        %4679 = vmatprep.mubr.f32.mxu0 %v4535
        %4680 = vmatmul.mubr.f32.gmra.mrb[0].mxu0 %v4432
        %v4681 = vpop.f32.mrb[0].mxu0
        %v4682 = vadd.f32 0.0, %v4681
        %v4683 = vpop.f32.mrb[0].mxu0
        %v4684 = vadd.f32 0.0, %v4683
        %4685 = vmatprep.mubr.f32.mxu0 %v4537
        %4686 = vmatmul.mubr.f32.gmra.mrb[0].mxu0 %v4436
        %v4687 = vpop.f32.mrb[0].mxu0
        %v4688 = vadd.f32 0.0, %v4687
        %v4689 = vpop.f32.mrb[0].mxu0
        %v4690 = vadd.f32 0.0, %v4689
        %4691 = vmatprep.mubr.f32.mxu0 %v4539
        %4692 = vmatmul.mubr.f32.gmra.mrb[0].mxu0 %v4440
        %v4693 = vpop.f32.mrb[0].mxu0
        %v4694 = vadd.f32 0.0, %v4693
        %v4695 = vpop.f32.mrb[0].mxu0
        %v4696 = vadd.f32 0.0, %v4695
        %4697 = vmatprep.mubr.f32.mxu0 %v4541
        %4698 = vmatmul.mubr.f32.gmra.mrb[0].mxu0 %v4444
        %v4699 = vpop.f32.mrb[0].mxu0
        %v4700 = vadd.f32 0.0, %v4699
        %v4701 = vpop.f32.mrb[0].mxu0
        %v4702 = vadd.f32 0.0, %v4701
        %4703 = vmatprep.mubr.f32.mxu0 %v4543
        %4704 = vmatmul.mubr.f32.gmra.mrb[0].mxu0 %v4448
        %v4705 = vpop.f32.mrb[0].mxu0
        %v4706 = vadd.f32 0.0, %v4705
        %v4707 = vpop.f32.mrb[0].mxu0
        %v4708 = vadd.f32 0.0, %v4707
        %4709 = vmatprep.mubr.f32.mxu0 %v4545
        %4710 = vmatmul.mubr.f32.gmra.mrb[0].mxu0 %v4452
        %v4711 = vpop.f32.mrb[0].mxu0
        %v4712 = vadd.f32 0.0, %v4711
        %v4713 = vpop.f32.mrb[0].mxu0
        %v4714 = vadd.f32 0.0, %v4713
        %4715 = vmatprep.mubr.f32.mxu0 %v4547
        %4716 = vmatmul.mubr.f32.gmra.mrb[0].mxu0 %v4456
        %v4717 = vpop.f32.mrb[0].mxu0
        %v4718 = vadd.f32 0.0, %v4717
        %v4719 = vpop.f32.mrb[0].mxu0
        %v4720 = vadd.f32 0.0, %v4719
        %4721 = vmatprep.mubr.f32.mxu0 %v4549
        %4722 = vmatmul.mubr.f32.gmra.mrb[0].mxu0 %v4460
        %v4723 = vpop.f32.mrb[0].mxu0
        %v4724 = vadd.f32 0.0, %v4723
        %v4725 = vpop.f32.mrb[0].mxu0
        %v4726 = vadd.f32 0.0, %v4725
        %4727 = vmatprep.mubr.f32.mxu0 %v4551
        %4728 = vmatmul.mubr.f32.gmra.mrb[0].mxu0 %v4464
        %v4729 = vpop.f32.mrb[0].mxu0
        %v4730 = vadd.f32 0.0, %v4729
        %v4731 = vpop.f32.mrb[0].mxu0
        %v4732 = vadd.f32 0.0, %v4731
        %4733 = vmatprep.mubr.f32.mxu0 %v4553
        %4734 = vmatmul.mubr.f32.gmra.mrb[0].mxu0 %v4468
        %v4735 = vpop.f32.mrb[0].mxu0
        %v4736 = vadd.f32 0.0, %v4735
        %v4737 = vpop.f32.mrb[0].mxu0
        %v4738 = vadd.f32 0.0, %v4737
        %4739 = vmatprep.mubr.f32.mxu0 %v4555
        %4740 = vmatmul.mubr.f32.gmra.mrb[0].mxu0 %v4472
        %v4741 = vpop.f32.mrb[0].mxu0
        %v4742 = vadd.f32 0.0, %v4741
        %v4743 = vpop.f32.mrb[0].mxu0
        %v4744 = vadd.f32 0.0, %v4743
        %4745 = vmatprep.mubr.f32.mxu0 %v4557
        %4746 = vmatmul.mubr.f32.gmra.mrb[0].mxu0 %v4476
        %v4747 = vpop.f32.mrb[0].mxu0
        %v4748 = vadd.f32 0.0, %v4747
        %v4749 = vpop.f32.mrb[0].mxu0
        %v4750 = vadd.f32 0.0, %v4749
        %4751 = vmatprep.mubr.f32.mxu0 %v4559
        %4752 = vmatmul.mubr.f32.gmra.mrb[0].mxu0 %v4480
        %v4753 = vpop.f32.mrb[0].mxu0
        %v4754 = vadd.f32 0.0, %v4753
        %v4755 = vpop.f32.mrb[0].mxu0
        %v4756 = vadd.f32 0.0, %v4755
        %4757 = vmatprep.mubr.f32.mxu0 %v4561
        %4758 = vmatmul.mubr.f32.gmra.mrb[0].mxu0 %v4484
        %v4759 = vpop.f32.mrb[0].mxu0
        %v4760 = vadd.f32 0.0, %v4759
        %v4761 = vpop.f32.mrb[0].mxu0
        %v4762 = vadd.f32 0.0, %v4761
        %4763 = vmatprep.mubr.f32.mxu0 %v4563
        %4764 = vmatmul.mubr.f32.gmra.mrb[0].mxu0 %v4488
        %v4765 = vpop.f32.mrb[0].mxu0
        %v4766 = vadd.f32 0.0, %v4765
        %v4767 = vpop.f32.mrb[0].mxu0
        %v4768 = vadd.f32 0.0, %v4767
        %4769 = vmatprep.mubr.f32.mxu0 %v4565
        %4770 = vmatmul.mubr.f32.gmra.mrb[0].mxu0 %v4492
        %v4771 = vpop.f32.mrb[0].mxu0
        %v4772 = vadd.f32 0.0, %v4771
        %v4773 = vpop.f32.mrb[0].mxu0
        %v4774 = vadd.f32 0.0, %v4773
        %4775 = vdwg.mxu0
        %v4776 = vadd.f32 %v4209, %v4634
        %v4777 = vadd.f32 %v4210, %v4636
        %v4778 = vadd.f32 %v4211, %v4640
        %v4779 = vadd.f32 %v4212, %v4642
        %v4780 = vadd.f32 %v4213, %v4646
        %v4781 = vadd.f32 %v4214, %v4648
        %v4782 = vadd.f32 %v4215, %v4652
        %v4783 = vadd.f32 %v4216, %v4654
        %v4784 = vadd.f32 %v4217, %v4658
        %v4785 = vadd.f32 %v4218, %v4660
        %v4786 = vadd.f32 %v4219, %v4664
        %v4787 = vadd.f32 %v4220, %v4666
        %v4788 = vadd.f32 %v4221, %v4670
        %v4789 = vadd.f32 %v4222, %v4672
        %v4790 = vadd.f32 %v4223, %v4676
        %v4791 = vadd.f32 %v4224, %v4678
        %v4792 = vadd.f32 %v4225, %v4682
        %v4793 = vadd.f32 %v4226, %v4684
        %v4794 = vadd.f32 %v4227, %v4688
        %v4795 = vadd.f32 %v4228, %v4690
        %v4796 = vadd.f32 %v4229, %v4694
        %v4797 = vadd.f32 %v4230, %v4696
        %v4798 = vadd.f32 %v4231, %v4700
        %v4799 = vadd.f32 %v4232, %v4702
        %v4800 = vadd.f32 %v4233, %v4706
        %v4801 = vadd.f32 %v4234, %v4708
        %v4802 = vadd.f32 %v4235, %v4712
        %v4803 = vadd.f32 %v4236, %v4714
        %v4804 = vadd.f32 %v4237, %v4718
        %v4805 = vadd.f32 %v4238, %v4720
        %v4806 = vadd.f32 %v4239, %v4724
        %v4807 = vadd.f32 %v4240, %v4726
        %v4808 = vadd.f32 %v4241, %v4730
        %v4809 = vadd.f32 %v4242, %v4732
        %v4810 = vadd.f32 %v4243, %v4736
        %v4811 = vadd.f32 %v4244, %v4738
        %v4812 = vadd.f32 %v4245, %v4742
        %v4813 = vadd.f32 %v4246, %v4744
        %v4814 = vadd.f32 %v4247, %v4748
        %v4815 = vadd.f32 %v4248, %v4750
        %v4816 = vadd.f32 %v4249, %v4754
        %v4817 = vadd.f32 %v4250, %v4756
        %v4818 = vadd.f32 %v4251, %v4760
        %v4819 = vadd.f32 %v4252, %v4762
        %v4820 = vadd.f32 %v4253, %v4766
        %v4821 = vadd.f32 %v4254, %v4768
        %v4822 = vadd.f32 %v4255, %v4772
        %v4823 = vadd.f32 %v4256, %v4774
        %v4824 = vld [vmem:[#allocation2 + $0x10] sm:$0xfc]
        %v4825 = vld [vmem:[#allocation2 + $0x18] sm:$0xfc]
        %v4826 = vld [vmem:[#allocation2 + $0x190] sm:$0x3]
        %v4827 = vld [vmem:[#allocation2 + $0x198] sm:$0x3]
        %v4828 = vld [vmem:[#allocation7] sm:$0xff]
        %v4829 = vld [vmem:[#allocation7 + $0x8] sm:$0xff]
        %v4830 = vld [vmem:[#allocation7 + $0x10] sm:$0xff]
        %v4831 = vld [vmem:[#allocation7 + $0x18] sm:$0xff]
        %v4832 = vld [vmem:[#allocation7 + $0x20] sm:$0xff]
        %v4833 = vld [vmem:[#allocation7 + $0x28] sm:$0xff]
        %v4834 = vld [vmem:[#allocation7 + $0x30] sm:$0xff]
        %v4835 = vld [vmem:[#allocation7 + $0x38] sm:$0xff]
        %v4836 = vld [vmem:[#allocation7 + $0x40] sm:$0xff]
        %v4837 = vld [vmem:[#allocation7 + $0x48] sm:$0xff]
        %v4838 = vld [vmem:[#allocation7 + $0x50] sm:$0xff]
        %v4839 = vld [vmem:[#allocation7 + $0x58] sm:$0xff]
        %v4840 = vld [vmem:[#allocation7 + $0x60] sm:$0xff]
        %v4841 = vld [vmem:[#allocation7 + $0x68] sm:$0xff]
        %v4842 = vld [vmem:[#allocation7 + $0x70] sm:$0xff]
        %v4843 = vld [vmem:[#allocation7 + $0x78] sm:$0xff]
        %v4844 = vld [vmem:[#allocation7 + $0x80] sm:$0xff]
        %v4845 = vld [vmem:[#allocation7 + $0x88] sm:$0xff]
        %v4846 = vld [vmem:[#allocation7 + $0x90] sm:$0xff]
        %v4847 = vld [vmem:[#allocation7 + $0x98] sm:$0xff]
        %v4848 = vld [vmem:[#allocation7 + $0xa0] sm:$0xff]
        %v4849 = vld [vmem:[#allocation7 + $0xa8] sm:$0xff]
        %v4850 = vld [vmem:[#allocation7 + $0xb0] sm:$0xff]
        %v4851 = vld [vmem:[#allocation7 + $0xb8] sm:$0xff]
        %v4852 = vld [vmem:[#allocation7 + $0xc0] sm:$0xff]
        %v4853 = vld [vmem:[#allocation7 + $0xc8] sm:$0xff]
        %v4854 = vld [vmem:[#allocation7 + $0xd0] sm:$0xff]
        %v4855 = vld [vmem:[#allocation7 + $0xd8] sm:$0xff]
        %v4856 = vld [vmem:[#allocation7 + $0xe0] sm:$0xff]
        %v4857 = vld [vmem:[#allocation7 + $0xe8] sm:$0xff]
        %v4858 = vld [vmem:[#allocation7 + $0xf0] sm:$0xff]
        %v4859 = vld [vmem:[#allocation7 + $0xf8] sm:$0xff]
        %v4860 = vld [vmem:[#allocation7 + $0x100] sm:$0xff]
        %v4861 = vld [vmem:[#allocation7 + $0x108] sm:$0xff]
        %v4862 = vld [vmem:[#allocation7 + $0x110] sm:$0xff]
        %v4863 = vld [vmem:[#allocation7 + $0x118] sm:$0xff]
        %v4864 = vld [vmem:[#allocation7 + $0x120] sm:$0xff]
        %v4865 = vld [vmem:[#allocation7 + $0x128] sm:$0xff]
        %v4866 = vld [vmem:[#allocation7 + $0x130] sm:$0xff]
        %v4867 = vld [vmem:[#allocation7 + $0x138] sm:$0xff]
        %v4872 = vrot.slane %v4824, 2
        %v4873 = vrot.slane %v4259, 2
        %v4874 = vsel %vm1198, %v4872, %v4873
        %v4875 = vrot.slane %v4825, 2
        %v4876 = vrot.slane %v4260, 2
        %v4877 = vsel %vm1198, %v4875, %v4876
        %v4878 = vrot.slane %v4261, 2
        %v4879 = vsel %vm1198, %v4873, %v4878
        %v4880 = vrot.slane %v4262, 2
        %v4881 = vsel %vm1198, %v4876, %v4880
        %v4882 = vrot.slane %v4263, 2
        %v4883 = vsel %vm1198, %v4878, %v4882
        %v4884 = vrot.slane %v4264, 2
        %v4885 = vsel %vm1198, %v4880, %v4884
        %v4886 = vrot.slane %v4265, 2
        %v4887 = vsel %vm1198, %v4882, %v4886
        %v4888 = vrot.slane %v4266, 2
        %v4889 = vsel %vm1198, %v4884, %v4888
        %v4890 = vrot.slane %v4267, 2
        %v4891 = vsel %vm1198, %v4886, %v4890
        %v4892 = vrot.slane %v4268, 2
        %v4893 = vsel %vm1198, %v4888, %v4892
        %v4894 = vrot.slane %v4269, 2
        %v4895 = vsel %vm1198, %v4890, %v4894
        %v4896 = vrot.slane %v4270, 2
        %v4897 = vsel %vm1198, %v4892, %v4896
        %v4898 = vrot.slane %v4271, 2
        %v4899 = vsel %vm1198, %v4894, %v4898
        %v4900 = vrot.slane %v4272, 2
        %v4901 = vsel %vm1198, %v4896, %v4900
        %v4902 = vrot.slane %v4273, 2
        %v4903 = vsel %vm1198, %v4898, %v4902
        %v4904 = vrot.slane %v4274, 2
        %v4905 = vsel %vm1198, %v4900, %v4904
        %v4906 = vrot.slane %v4275, 2
        %v4907 = vsel %vm1198, %v4902, %v4906
        %v4908 = vrot.slane %v4276, 2
        %v4909 = vsel %vm1198, %v4904, %v4908
        %v4910 = vrot.slane %v4277, 2
        %v4911 = vsel %vm1198, %v4906, %v4910
        %v4912 = vrot.slane %v4278, 2
        %v4913 = vsel %vm1198, %v4908, %v4912
        %v4914 = vrot.slane %v4279, 2
        %v4915 = vsel %vm1198, %v4910, %v4914
        %v4916 = vrot.slane %v4280, 2
        %v4917 = vsel %vm1198, %v4912, %v4916
        %v4918 = vrot.slane %v4281, 2
        %v4919 = vsel %vm1198, %v4914, %v4918
        %v4920 = vrot.slane %v4282, 2
        %v4921 = vsel %vm1198, %v4916, %v4920
        %v4922 = vrot.slane %v4283, 2
        %v4923 = vsel %vm1198, %v4918, %v4922
        %v4924 = vrot.slane %v4284, 2
        %v4925 = vsel %vm1198, %v4920, %v4924
        %v4926 = vrot.slane %v4285, 2
        %v4927 = vsel %vm1198, %v4922, %v4926
        %v4928 = vrot.slane %v4286, 2
        %v4929 = vsel %vm1198, %v4924, %v4928
        %v4930 = vrot.slane %v4287, 2
        %v4931 = vsel %vm1198, %v4926, %v4930
        %v4932 = vrot.slane %v4288, 2
        %v4933 = vsel %vm1198, %v4928, %v4932
        %v4934 = vrot.slane %v4289, 2
        %v4935 = vsel %vm1198, %v4930, %v4934
        %v4936 = vrot.slane %v4290, 2
        %v4937 = vsel %vm1198, %v4932, %v4936
        %v4938 = vrot.slane %v4291, 2
        %v4939 = vsel %vm1198, %v4934, %v4938
        %v4940 = vrot.slane %v4292, 2
        %v4941 = vsel %vm1198, %v4936, %v4940
        %v4942 = vrot.slane %v4293, 2
        %v4943 = vsel %vm1198, %v4938, %v4942
        %v4944 = vrot.slane %v4294, 2
        %v4945 = vsel %vm1198, %v4940, %v4944
        %v4946 = vrot.slane %v4295, 2
        %v4947 = vsel %vm1198, %v4942, %v4946
        %v4948 = vrot.slane %v4296, 2
        %v4949 = vsel %vm1198, %v4944, %v4948
        %v4950 = vrot.slane %v4297, 2
        %v4951 = vsel %vm1198, %v4946, %v4950
        %v4952 = vrot.slane %v4298, 2
        %v4953 = vsel %vm1198, %v4948, %v4952
        %v4954 = vrot.slane %v4299, 2
        %v4955 = vsel %vm1198, %v4950, %v4954
        %v4956 = vrot.slane %v4300, 2
        %v4957 = vsel %vm1198, %v4952, %v4956
        %v4958 = vrot.slane %v4301, 2
        %v4959 = vsel %vm1198, %v4954, %v4958
        %v4960 = vrot.slane %v4302, 2
        %v4961 = vsel %vm1198, %v4956, %v4960
        %v4962 = vrot.slane %v4303, 2
        %v4963 = vsel %vm1198, %v4958, %v4962
        %v4964 = vrot.slane %v4304, 2
        %v4965 = vsel %vm1198, %v4960, %v4964
        %v4966 = vrot.slane %v4826, 2
        %v4967 = vsel %vm1198, %v4962, %v4966
        %v4968 = vrot.slane %v4827, 2
        %v4969 = vsel %vm1198, %v4964, %v4968
        %v4994 = vsel %vm464, %v4877, 0
        %v4996 = vsel %vm464, %v4881, 0
        %v4998 = vsel %vm464, %v4885, 0
        %v5000 = vsel %vm464, %v4889, 0
        %v5002 = vsel %vm464, %v4893, 0
        %v5004 = vsel %vm464, %v4897, 0
        %v5006 = vsel %vm464, %v4901, 0
        %v5008 = vsel %vm464, %v4905, 0
        %v5010 = vsel %vm464, %v4909, 0
        %v5012 = vsel %vm464, %v4913, 0
        %v5014 = vsel %vm464, %v4917, 0
        %v5016 = vsel %vm464, %v4921, 0
        %v5018 = vsel %vm464, %v4925, 0
        %v5020 = vsel %vm464, %v4929, 0
        %v5022 = vsel %vm464, %v4933, 0
        %v5024 = vsel %vm464, %v4937, 0
        %v5026 = vsel %vm464, %v4941, 0
        %v5028 = vsel %vm464, %v4945, 0
        %v5030 = vsel %vm464, %v4949, 0
        %v5032 = vsel %vm464, %v4953, 0
        %v5034 = vsel %vm464, %v4957, 0
        %v5036 = vsel %vm464, %v4961, 0
        %v5038 = vsel %vm464, %v4965, 0
        %v5040 = vsel %vm464, %v4969, 0
        %5042 = vmatprep.subr.mxu0 %v4829
        %5043 = vmatpush1.msra.mxu0 %v4828
        %5044 = vmatprep.subr.mxu0 %v4831
        %5045 = vmatpush1.msra.mxu0 %v4830
        %5046 = vmatprep.subr.mxu0 %v4833
        %5047 = vmatpush1.msra.mxu0 %v4832
        %5048 = vmatprep.subr.mxu0 %v4835
        %5049 = vmatpush1.msra.mxu0 %v4834
        %5050 = vmatprep.subr.mxu0 %v4837
        %5051 = vmatpush1.msra.mxu0 %v4836
        %5052 = vmatprep.subr.mxu0 %v4839
        %5053 = vmatpush1.msra.mxu0 %v4838
        %5054 = vmatprep.subr.mxu0 %v4841
        %5055 = vmatpush1.msra.mxu0 %v4840
        %5056 = vmatprep.subr.mxu0 %v4843
        %5057 = vmatpush1.msra.mxu0 %v4842
        %5058 = vmatprep.subr.mxu0 %v4845
        %5059 = vmatpush1.msra.mxu0 %v4844
        %5060 = vmatprep.subr.mxu0 %v4847
        %5061 = vmatpush1.msra.mxu0 %v4846
        %5062 = vmatprep.subr.mxu0 %v4849
        %5063 = vmatpush1.msra.mxu0 %v4848
        %5064 = vmatprep.subr.mxu0 %v4851
        %5065 = vmatpush1.msra.mxu0 %v4850
        %5066 = vmatprep.subr.mxu0 %v4853
        %5067 = vmatpush1.msra.mxu0 %v4852
        %5068 = vmatprep.subr.mxu0 %v4855
        %5069 = vmatpush1.msra.mxu0 %v4854
        %5070 = vmatprep.subr.mxu0 %v4857
        %5071 = vmatpush1.msra.mxu0 %v4856
        %5072 = vmatprep.subr.mxu0 %v4859
        %5073 = vmatpush1.msra.mxu0 %v4858
        %5074 = vmatprep.subr.mxu0 %v4861
        %5075 = vmatpush1.msra.mxu0 %v4860
        %5076 = vmatprep.subr.mxu0 %v4863
        %5077 = vmatpush1.msra.mxu0 %v4862
        %5078 = vmatprep.subr.mxu0 %v4865
        %5079 = vmatpush1.msra.mxu0 %v4864
        %5080 = vmatprep.subr.mxu0 %v4867
        %5081 = vmatpush1.msra.mxu0 %v4866
        %5082 = vmatprep.subr.mxu0 0.0
        %5083 = vmatpush1.msra.mxu0 0.0
        %5084 = vmatprep.subr.mxu0 0.0
        %5085 = vmatpush1.msra.mxu0 0.0
        %5086 = vmatprep.subr.mxu0 0.0
        %5087 = vmatpush1.msra.mxu0 0.0
        %5088 = vmatprep.subr.mxu0 0.0
        %5089 = vmatpush1.msra.mxu0 0.0
        %5090 = vmatprep.subr.mxu0 0.0
        %5091 = vmatpush1.msra.mxu0 0.0
        %5092 = vmatprep.subr.mxu0 0.0
        %5093 = vmatpush1.msra.mxu0 0.0
        %5094 = vmatprep.subr.mxu0 0.0
        %5095 = vmatpush1.msra.mxu0 0.0
        %5096 = vmatprep.subr.mxu0 0.0
        %5097 = vmatpush1.msra.mxu0 0.0
        %5098 = vmatprep.subr.mxu0 0.0
        %5099 = vmatpush1.msra.mxu0 0.0
        %5100 = vmatprep.subr.mxu0 0.0
        %5101 = vmatpush1.msra.mxu0 0.0
        %5102 = vmatprep.subr.mxu0 0.0
        %5103 = vmatpush1.msra.mxu0 0.0
        %5104 = vmatprep.subr.mxu0 0.0
        %5105 = vmatpush1.msra.mxu0 0.0
        %5106 = vmatprep.mubr.f32.mxu0 %v4994
        %5107 = vmatmul.mubr.f32.gmra.mrb[0].mxu0 %v4874
        %v5108 = vpop.f32.mrb[0].mxu0
        %v5109 = vadd.f32 0.0, %v5108
        %v5110 = vpop.f32.mrb[0].mxu0
        %v5111 = vadd.f32 0.0, %v5110
        %5112 = vmatprep.mubr.f32.mxu0 %v4996
        %5113 = vmatmul.mubr.f32.gmra.mrb[0].mxu0 %v4879
        %v5114 = vpop.f32.mrb[0].mxu0
        %v5115 = vadd.f32 0.0, %v5114
        %v5116 = vpop.f32.mrb[0].mxu0
        %v5117 = vadd.f32 0.0, %v5116
        %5118 = vmatprep.mubr.f32.mxu0 %v4998
        %5119 = vmatmul.mubr.f32.gmra.mrb[0].mxu0 %v4883
        %v5120 = vpop.f32.mrb[0].mxu0
        %v5121 = vadd.f32 0.0, %v5120
        %v5122 = vpop.f32.mrb[0].mxu0
        %v5123 = vadd.f32 0.0, %v5122
        %5124 = vmatprep.mubr.f32.mxu0 %v5000
        %5125 = vmatmul.mubr.f32.gmra.mrb[0].mxu0 %v4887
        %v5126 = vpop.f32.mrb[0].mxu0
        %v5127 = vadd.f32 0.0, %v5126
        %v5128 = vpop.f32.mrb[0].mxu0
        %v5129 = vadd.f32 0.0, %v5128
        %5130 = vmatprep.mubr.f32.mxu0 %v5002
        %5131 = vmatmul.mubr.f32.gmra.mrb[0].mxu0 %v4891
        %v5132 = vpop.f32.mrb[0].mxu0
        %v5133 = vadd.f32 0.0, %v5132
        %v5134 = vpop.f32.mrb[0].mxu0
        %v5135 = vadd.f32 0.0, %v5134
        %5136 = vmatprep.mubr.f32.mxu0 %v5004
        %5137 = vmatmul.mubr.f32.gmra.mrb[0].mxu0 %v4895
        %v5138 = vpop.f32.mrb[0].mxu0
        %v5139 = vadd.f32 0.0, %v5138
        %v5140 = vpop.f32.mrb[0].mxu0
        %v5141 = vadd.f32 0.0, %v5140
        %5142 = vmatprep.mubr.f32.mxu0 %v5006
        %5143 = vmatmul.mubr.f32.gmra.mrb[0].mxu0 %v4899
        %v5144 = vpop.f32.mrb[0].mxu0
        %v5145 = vadd.f32 0.0, %v5144
        %v5146 = vpop.f32.mrb[0].mxu0
        %v5147 = vadd.f32 0.0, %v5146
        %5148 = vmatprep.mubr.f32.mxu0 %v5008
        %5149 = vmatmul.mubr.f32.gmra.mrb[0].mxu0 %v4903
        %v5150 = vpop.f32.mrb[0].mxu0
        %v5151 = vadd.f32 0.0, %v5150
        %v5152 = vpop.f32.mrb[0].mxu0
        %v5153 = vadd.f32 0.0, %v5152
        %5154 = vmatprep.mubr.f32.mxu0 %v5010
        %5155 = vmatmul.mubr.f32.gmra.mrb[0].mxu0 %v4907
        %v5156 = vpop.f32.mrb[0].mxu0
        %v5157 = vadd.f32 0.0, %v5156
        %v5158 = vpop.f32.mrb[0].mxu0
        %v5159 = vadd.f32 0.0, %v5158
        %5160 = vmatprep.mubr.f32.mxu0 %v5012
        %5161 = vmatmul.mubr.f32.gmra.mrb[0].mxu0 %v4911
        %v5162 = vpop.f32.mrb[0].mxu0
        %v5163 = vadd.f32 0.0, %v5162
        %v5164 = vpop.f32.mrb[0].mxu0
        %v5165 = vadd.f32 0.0, %v5164
        %5166 = vmatprep.mubr.f32.mxu0 %v5014
        %5167 = vmatmul.mubr.f32.gmra.mrb[0].mxu0 %v4915
        %v5168 = vpop.f32.mrb[0].mxu0
        %v5169 = vadd.f32 0.0, %v5168
        %v5170 = vpop.f32.mrb[0].mxu0
        %v5171 = vadd.f32 0.0, %v5170
        %5172 = vmatprep.mubr.f32.mxu0 %v5016
        %5173 = vmatmul.mubr.f32.gmra.mrb[0].mxu0 %v4919
        %v5174 = vpop.f32.mrb[0].mxu0
        %v5175 = vadd.f32 0.0, %v5174
        %v5176 = vpop.f32.mrb[0].mxu0
        %v5177 = vadd.f32 0.0, %v5176
        %5178 = vmatprep.mubr.f32.mxu0 %v5018
        %5179 = vmatmul.mubr.f32.gmra.mrb[0].mxu0 %v4923
        %v5180 = vpop.f32.mrb[0].mxu0
        %v5181 = vadd.f32 0.0, %v5180
        %v5182 = vpop.f32.mrb[0].mxu0
        %v5183 = vadd.f32 0.0, %v5182
        %5184 = vmatprep.mubr.f32.mxu0 %v5020
        %5185 = vmatmul.mubr.f32.gmra.mrb[0].mxu0 %v4927
        %v5186 = vpop.f32.mrb[0].mxu0
        %v5187 = vadd.f32 0.0, %v5186
        %v5188 = vpop.f32.mrb[0].mxu0
        %v5189 = vadd.f32 0.0, %v5188
        %5190 = vmatprep.mubr.f32.mxu0 %v5022
        %5191 = vmatmul.mubr.f32.gmra.mrb[0].mxu0 %v4931
        %v5192 = vpop.f32.mrb[0].mxu0
        %v5193 = vadd.f32 0.0, %v5192
        %v5194 = vpop.f32.mrb[0].mxu0
        %v5195 = vadd.f32 0.0, %v5194
        %5196 = vmatprep.mubr.f32.mxu0 %v5024
        %5197 = vmatmul.mubr.f32.gmra.mrb[0].mxu0 %v4935
        %v5198 = vpop.f32.mrb[0].mxu0
        %v5199 = vadd.f32 0.0, %v5198
        %v5200 = vpop.f32.mrb[0].mxu0
        %v5201 = vadd.f32 0.0, %v5200
        %5202 = vmatprep.mubr.f32.mxu0 %v5026
        %5203 = vmatmul.mubr.f32.gmra.mrb[0].mxu0 %v4939
        %v5204 = vpop.f32.mrb[0].mxu0
        %v5205 = vadd.f32 0.0, %v5204
        %v5206 = vpop.f32.mrb[0].mxu0
        %v5207 = vadd.f32 0.0, %v5206
        %5208 = vmatprep.mubr.f32.mxu0 %v5028
        %5209 = vmatmul.mubr.f32.gmra.mrb[0].mxu0 %v4943
        %v5210 = vpop.f32.mrb[0].mxu0
        %v5211 = vadd.f32 0.0, %v5210
        %v5212 = vpop.f32.mrb[0].mxu0
        %v5213 = vadd.f32 0.0, %v5212
        %5214 = vmatprep.mubr.f32.mxu0 %v5030
        %5215 = vmatmul.mubr.f32.gmra.mrb[0].mxu0 %v4947
        %v5216 = vpop.f32.mrb[0].mxu0
        %v5217 = vadd.f32 0.0, %v5216
        %v5218 = vpop.f32.mrb[0].mxu0
        %v5219 = vadd.f32 0.0, %v5218
        %5220 = vmatprep.mubr.f32.mxu0 %v5032
        %5221 = vmatmul.mubr.f32.gmra.mrb[0].mxu0 %v4951
        %v5222 = vpop.f32.mrb[0].mxu0
        %v5223 = vadd.f32 0.0, %v5222
        %v5224 = vpop.f32.mrb[0].mxu0
        %v5225 = vadd.f32 0.0, %v5224
        %5226 = vmatprep.mubr.f32.mxu0 %v5034
        %5227 = vmatmul.mubr.f32.gmra.mrb[0].mxu0 %v4955
        %v5228 = vpop.f32.mrb[0].mxu0
        %v5229 = vadd.f32 0.0, %v5228
        %v5230 = vpop.f32.mrb[0].mxu0
        %v5231 = vadd.f32 0.0, %v5230
        %5232 = vmatprep.mubr.f32.mxu0 %v5036
        %5233 = vmatmul.mubr.f32.gmra.mrb[0].mxu0 %v4959
        %v5234 = vpop.f32.mrb[0].mxu0
        %v5235 = vadd.f32 0.0, %v5234
        %v5236 = vpop.f32.mrb[0].mxu0
        %v5237 = vadd.f32 0.0, %v5236
        %5238 = vmatprep.mubr.f32.mxu0 %v5038
        %5239 = vmatmul.mubr.f32.gmra.mrb[0].mxu0 %v4963
        %v5240 = vpop.f32.mrb[0].mxu0
        %v5241 = vadd.f32 0.0, %v5240
        %v5242 = vpop.f32.mrb[0].mxu0
        %v5243 = vadd.f32 0.0, %v5242
        %5244 = vmatprep.mubr.f32.mxu0 %v5040
        %5245 = vmatmul.mubr.f32.gmra.mrb[0].mxu0 %v4967
        %v5246 = vpop.f32.mrb[0].mxu0
        %v5247 = vadd.f32 0.0, %v5246
        %v5248 = vpop.f32.mrb[0].mxu0
        %v5249 = vadd.f32 0.0, %v5248
        %5250 = vdwg.mxu0
        %v5251 = vadd.f32 %v4776, %v5109
        %v5252 = vadd.f32 %v4777, %v5111
        %v5253 = vadd.f32 %v4778, %v5115
        %v5254 = vadd.f32 %v4779, %v5117
        %v5255 = vadd.f32 %v4780, %v5121
        %v5256 = vadd.f32 %v4781, %v5123
        %v5257 = vadd.f32 %v4782, %v5127
        %v5258 = vadd.f32 %v4783, %v5129
        %v5259 = vadd.f32 %v4784, %v5133
        %v5260 = vadd.f32 %v4785, %v5135
        %v5261 = vadd.f32 %v4786, %v5139
        %v5262 = vadd.f32 %v4787, %v5141
        %v5263 = vadd.f32 %v4788, %v5145
        %v5264 = vadd.f32 %v4789, %v5147
        %v5265 = vadd.f32 %v4790, %v5151
        %v5266 = vadd.f32 %v4791, %v5153
        %v5267 = vadd.f32 %v4792, %v5157
        %v5268 = vadd.f32 %v4793, %v5159
        %v5269 = vadd.f32 %v4794, %v5163
        %v5270 = vadd.f32 %v4795, %v5165
        %v5271 = vadd.f32 %v4796, %v5169
        %v5272 = vadd.f32 %v4797, %v5171
        %v5273 = vadd.f32 %v4798, %v5175
        %v5274 = vadd.f32 %v4799, %v5177
        %v5275 = vadd.f32 %v4800, %v5181
        %v5276 = vadd.f32 %v4801, %v5183
        %v5277 = vadd.f32 %v4802, %v5187
        %v5278 = vadd.f32 %v4803, %v5189
        %v5279 = vadd.f32 %v4804, %v5193
        %v5280 = vadd.f32 %v4805, %v5195
        %v5281 = vadd.f32 %v4806, %v5199
        %v5282 = vadd.f32 %v4807, %v5201
        %v5283 = vadd.f32 %v4808, %v5205
        %v5284 = vadd.f32 %v4809, %v5207
        %v5285 = vadd.f32 %v4810, %v5211
        %v5286 = vadd.f32 %v4811, %v5213
        %v5287 = vadd.f32 %v4812, %v5217
        %v5288 = vadd.f32 %v4813, %v5219
        %v5289 = vadd.f32 %v4814, %v5223
        %v5290 = vadd.f32 %v4815, %v5225
        %v5291 = vadd.f32 %v4816, %v5229
        %v5292 = vadd.f32 %v4817, %v5231
        %v5293 = vadd.f32 %v4818, %v5235
        %v5294 = vadd.f32 %v4819, %v5237
        %v5295 = vadd.f32 %v4820, %v5241
        %v5296 = vadd.f32 %v4821, %v5243
        %v5297 = vadd.f32 %v4822, %v5247
        %v5298 = vadd.f32 %v4823, %v5249
        %v5299 = vld [vmem:[%s9] sm:$0x3]
        %v5301 = vlaneseq
        %v5302 = vshrl.u32 %v5301, 7
        %v5303 = vsub.s32 0, %v5302
        %v5304 = vrot.slane %v5299, %v5303
        %v5305 = vlaneseq
        %v5306 = vshrl.u32 %v5305, 7
        %v5307 = vsub.s32 1, %v5306
        %v5308 = vrot.slane %v5299, %v5307
        %v5311 = vadd.f32 %v5251, %v5304
        %v5312 = vadd.f32 %v5252, %v5308
        %v5313 = vadd.f32 %v5253, %v5304
        %v5314 = vadd.f32 %v5254, %v5308
        %v5315 = vadd.f32 %v5255, %v5304
        %v5316 = vadd.f32 %v5256, %v5308
        %v5317 = vadd.f32 %v5257, %v5304
        %v5318 = vadd.f32 %v5258, %v5308
        %v5319 = vadd.f32 %v5259, %v5304
        %v5320 = vadd.f32 %v5260, %v5308
        %v5321 = vadd.f32 %v5261, %v5304
        %v5322 = vadd.f32 %v5262, %v5308
        %v5323 = vadd.f32 %v5263, %v5304
        %v5324 = vadd.f32 %v5264, %v5308
        %v5325 = vadd.f32 %v5265, %v5304
        %v5326 = vadd.f32 %v5266, %v5308
        %v5327 = vadd.f32 %v5267, %v5304
        %v5328 = vadd.f32 %v5268, %v5308
        %v5329 = vadd.f32 %v5269, %v5304
        %v5330 = vadd.f32 %v5270, %v5308
        %v5331 = vadd.f32 %v5271, %v5304
        %v5332 = vadd.f32 %v5272, %v5308
        %v5333 = vadd.f32 %v5273, %v5304
        %v5334 = vadd.f32 %v5274, %v5308
        %v5335 = vadd.f32 %v5275, %v5304
        %v5336 = vadd.f32 %v5276, %v5308
        %v5337 = vadd.f32 %v5277, %v5304
        %v5338 = vadd.f32 %v5278, %v5308
        %v5339 = vadd.f32 %v5279, %v5304
        %v5340 = vadd.f32 %v5280, %v5308
        %v5341 = vadd.f32 %v5281, %v5304
        %v5342 = vadd.f32 %v5282, %v5308
        %v5343 = vadd.f32 %v5283, %v5304
        %v5344 = vadd.f32 %v5284, %v5308
        %v5345 = vadd.f32 %v5285, %v5304
        %v5346 = vadd.f32 %v5286, %v5308
        %v5347 = vadd.f32 %v5287, %v5304
        %v5348 = vadd.f32 %v5288, %v5308
        %v5349 = vadd.f32 %v5289, %v5304
        %v5350 = vadd.f32 %v5290, %v5308
        %v5351 = vadd.f32 %v5291, %v5304
        %v5352 = vadd.f32 %v5292, %v5308
        %v5353 = vadd.f32 %v5293, %v5304
        %v5354 = vadd.f32 %v5294, %v5308
        %v5355 = vadd.f32 %v5295, %v5304
        %v5356 = vadd.f32 %v5296, %v5308
        %v5357 = vadd.f32 %v5297, %v5304
        %v5358 = vadd.f32 %v5298, %v5308
        %v5359 = vmax.f32 %v5311, 0.0
        %v5360 = vmax.f32 %v5312, 0.0
        %v5361 = vmax.f32 %v5313, 0.0
        %v5362 = vmax.f32 %v5314, 0.0
        %v5363 = vmax.f32 %v5315, 0.0
        %v5364 = vmax.f32 %v5316, 0.0
        %v5365 = vmax.f32 %v5317, 0.0
        %v5366 = vmax.f32 %v5318, 0.0
        %v5367 = vmax.f32 %v5319, 0.0
        %v5368 = vmax.f32 %v5320, 0.0
        %v5369 = vmax.f32 %v5321, 0.0
        %v5370 = vmax.f32 %v5322, 0.0
        %v5371 = vmax.f32 %v5323, 0.0
        %v5372 = vmax.f32 %v5324, 0.0
        %v5373 = vmax.f32 %v5325, 0.0
        %v5374 = vmax.f32 %v5326, 0.0
        %v5375 = vmax.f32 %v5327, 0.0
        %v5376 = vmax.f32 %v5328, 0.0
        %v5377 = vmax.f32 %v5329, 0.0
        %v5378 = vmax.f32 %v5330, 0.0
        %v5379 = vmax.f32 %v5331, 0.0
        %v5380 = vmax.f32 %v5332, 0.0
        %v5381 = vmax.f32 %v5333, 0.0
        %v5382 = vmax.f32 %v5334, 0.0
        %v5383 = vmax.f32 %v5335, 0.0
        %v5384 = vmax.f32 %v5336, 0.0
        %v5385 = vmax.f32 %v5337, 0.0
        %v5386 = vmax.f32 %v5338, 0.0
        %v5387 = vmax.f32 %v5339, 0.0
        %v5388 = vmax.f32 %v5340, 0.0
        %v5389 = vmax.f32 %v5341, 0.0
        %v5390 = vmax.f32 %v5342, 0.0
        %v5391 = vmax.f32 %v5343, 0.0
        %v5392 = vmax.f32 %v5344, 0.0
        %v5393 = vmax.f32 %v5345, 0.0
        %v5394 = vmax.f32 %v5346, 0.0
        %v5395 = vmax.f32 %v5347, 0.0
        %v5396 = vmax.f32 %v5348, 0.0
        %v5397 = vmax.f32 %v5349, 0.0
        %v5398 = vmax.f32 %v5350, 0.0
        %v5399 = vmax.f32 %v5351, 0.0
        %v5400 = vmax.f32 %v5352, 0.0
        %v5401 = vmax.f32 %v5353, 0.0
        %v5402 = vmax.f32 %v5354, 0.0
        %v5403 = vmax.f32 %v5355, 0.0
        %v5404 = vmax.f32 %v5356, 0.0
        %v5405 = vmax.f32 %v5357, 0.0
        %v5406 = vmax.f32 %v5358, 0.0
        %5407 = vst [vmem:[#allocation2 + $0x10] sm:$0xff] %v5359
        %5408 = vst.msk [vmem:[#allocation2 + $0x18] sm:$0xff] %vm464, %v5360
        %5409 = vst [vmem:[#allocation2 + $0x20] sm:$0xff] %v5361
        %5410 = vst.msk [vmem:[#allocation2 + $0x28] sm:$0xff] %vm464, %v5362
        %5411 = vst [vmem:[#allocation2 + $0x30] sm:$0xff] %v5363
        %5412 = vst.msk [vmem:[#allocation2 + $0x38] sm:$0xff] %vm464, %v5364
        %5413 = vst [vmem:[#allocation2 + $0x40] sm:$0xff] %v5365
        %5414 = vst.msk [vmem:[#allocation2 + $0x48] sm:$0xff] %vm464, %v5366
        %5415 = vst [vmem:[#allocation2 + $0x50] sm:$0xff] %v5367
        %5416 = vst.msk [vmem:[#allocation2 + $0x58] sm:$0xff] %vm464, %v5368
        %5417 = vst [vmem:[#allocation2 + $0x60] sm:$0xff] %v5369
        %5418 = vst.msk [vmem:[#allocation2 + $0x68] sm:$0xff] %vm464, %v5370
        %5419 = vst [vmem:[#allocation2 + $0x70] sm:$0xff] %v5371
        %5420 = vst.msk [vmem:[#allocation2 + $0x78] sm:$0xff] %vm464, %v5372
        %5421 = vst [vmem:[#allocation2 + $0x80] sm:$0xff] %v5373
        %5422 = vst.msk [vmem:[#allocation2 + $0x88] sm:$0xff] %vm464, %v5374
        %5423 = vst [vmem:[#allocation2 + $0x90] sm:$0xff] %v5375
        %5424 = vst.msk [vmem:[#allocation2 + $0x98] sm:$0xff] %vm464, %v5376
        %5425 = vst [vmem:[#allocation2 + $0xa0] sm:$0xff] %v5377
        %5426 = vst.msk [vmem:[#allocation2 + $0xa8] sm:$0xff] %vm464, %v5378
        %5427 = vst [vmem:[#allocation2 + $0xb0] sm:$0xff] %v5379
        %5428 = vst.msk [vmem:[#allocation2 + $0xb8] sm:$0xff] %vm464, %v5380
        %5429 = vst [vmem:[#allocation2 + $0xc0] sm:$0xff] %v5381
        %5430 = vst.msk [vmem:[#allocation2 + $0xc8] sm:$0xff] %vm464, %v5382
        %5431 = vst [vmem:[#allocation2 + $0xd0] sm:$0xff] %v5383
        %5432 = vst.msk [vmem:[#allocation2 + $0xd8] sm:$0xff] %vm464, %v5384
        %5433 = vst [vmem:[#allocation2 + $0xe0] sm:$0xff] %v5385
        %5434 = vst.msk [vmem:[#allocation2 + $0xe8] sm:$0xff] %vm464, %v5386
        %5435 = vst [vmem:[#allocation2 + $0xf0] sm:$0xff] %v5387
        %5436 = vst.msk [vmem:[#allocation2 + $0xf8] sm:$0xff] %vm464, %v5388
        %5437 = vst [vmem:[#allocation2 + $0x100] sm:$0xff] %v5389
        %5438 = vst.msk [vmem:[#allocation2 + $0x108] sm:$0xff] %vm464, %v5390
        %5439 = vst [vmem:[#allocation2 + $0x110] sm:$0xff] %v5391
        %5440 = vst.msk [vmem:[#allocation2 + $0x118] sm:$0xff] %vm464, %v5392
        %5441 = vst [vmem:[#allocation2 + $0x120] sm:$0xff] %v5393
        %5442 = vst.msk [vmem:[#allocation2 + $0x128] sm:$0xff] %vm464, %v5394
        %5443 = vst [vmem:[#allocation2 + $0x130] sm:$0xff] %v5395
        %5444 = vst.msk [vmem:[#allocation2 + $0x138] sm:$0xff] %vm464, %v5396
        %5445 = vst [vmem:[#allocation2 + $0x140] sm:$0xff] %v5397
        %5446 = vst.msk [vmem:[#allocation2 + $0x148] sm:$0xff] %vm464, %v5398
        %5447 = vst [vmem:[#allocation2 + $0x150] sm:$0xff] %v5399
        %5448 = vst.msk [vmem:[#allocation2 + $0x158] sm:$0xff] %vm464, %v5400
        %5449 = vst [vmem:[#allocation2 + $0x160] sm:$0xff] %v5401
        %5450 = vst.msk [vmem:[#allocation2 + $0x168] sm:$0xff] %vm464, %v5402
        %5451 = vst [vmem:[#allocation2 + $0x170] sm:$0xff] %v5403
        %5452 = vst.msk [vmem:[#allocation2 + $0x178] sm:$0xff] %vm464, %v5404
        %5453 = vst [vmem:[#allocation2 + $0x180] sm:$0xff] %v5405
        %5454 = vst.msk [vmem:[#allocation2 + $0x188] sm:$0xff] %vm464, %v5406
        %v5455 = vld [vmem:[#allocation2 + $0x10] sm:$0xfe]
        %v5456 = vld [vmem:[#allocation2 + $0x18] sm:$0xfe]
        %v5457 = vld [vmem:[#allocation2 + $0x20] sm:$0xff]
        %v5458 = vld [vmem:[#allocation2 + $0x28] sm:$0xff]
        %v5459 = vld [vmem:[#allocation2 + $0x30] sm:$0xff]
        %v5460 = vld [vmem:[#allocation2 + $0x38] sm:$0xff]
        %v5461 = vld [vmem:[#allocation2 + $0x40] sm:$0xff]
        %v5462 = vld [vmem:[#allocation2 + $0x48] sm:$0xff]
        %v5463 = vld [vmem:[#allocation2 + $0x50] sm:$0xff]
        %v5464 = vld [vmem:[#allocation2 + $0x58] sm:$0xff]
        %v5465 = vld [vmem:[#allocation2 + $0x60] sm:$0xff]
        %v5466 = vld [vmem:[#allocation2 + $0x68] sm:$0xff]
        %v5467 = vld [vmem:[#allocation2 + $0x70] sm:$0xff]
        %v5468 = vld [vmem:[#allocation2 + $0x78] sm:$0xff]
        %v5469 = vld [vmem:[#allocation2 + $0x80] sm:$0xff]
        %v5470 = vld [vmem:[#allocation2 + $0x88] sm:$0xff]
        %v5471 = vld [vmem:[#allocation2 + $0x90] sm:$0xff]
        %v5472 = vld [vmem:[#allocation2 + $0x98] sm:$0xff]
        %v5473 = vld [vmem:[#allocation2 + $0xa0] sm:$0xff]
        %v5474 = vld [vmem:[#allocation2 + $0xa8] sm:$0xff]
        %v5475 = vld [vmem:[#allocation2 + $0xb0] sm:$0xff]
        %v5476 = vld [vmem:[#allocation2 + $0xb8] sm:$0xff]
        %v5477 = vld [vmem:[#allocation2 + $0xc0] sm:$0xff]
        %v5478 = vld [vmem:[#allocation2 + $0xc8] sm:$0xff]
        %v5479 = vld [vmem:[#allocation2 + $0xd0] sm:$0xff]
        %v5480 = vld [vmem:[#allocation2 + $0xd8] sm:$0xff]
        %v5481 = vld [vmem:[#allocation2 + $0xe0] sm:$0xff]
        %v5482 = vld [vmem:[#allocation2 + $0xe8] sm:$0xff]
        %v5483 = vld [vmem:[#allocation2 + $0xf0] sm:$0xff]
        %v5484 = vld [vmem:[#allocation2 + $0xf8] sm:$0xff]
        %v5485 = vld [vmem:[#allocation2 + $0x100] sm:$0xff]
        %v5486 = vld [vmem:[#allocation2 + $0x108] sm:$0xff]
        %v5487 = vld [vmem:[#allocation2 + $0x110] sm:$0xff]
        %v5488 = vld [vmem:[#allocation2 + $0x118] sm:$0xff]
        %v5489 = vld [vmem:[#allocation2 + $0x120] sm:$0xff]
        %v5490 = vld [vmem:[#allocation2 + $0x128] sm:$0xff]
        %v5491 = vld [vmem:[#allocation2 + $0x130] sm:$0xff]
        %v5492 = vld [vmem:[#allocation2 + $0x138] sm:$0xff]
        %v5493 = vld [vmem:[#allocation2 + $0x140] sm:$0xff]
        %v5494 = vld [vmem:[#allocation2 + $0x148] sm:$0xff]
        %v5495 = vld [vmem:[#allocation2 + $0x150] sm:$0xff]
        %v5496 = vld [vmem:[#allocation2 + $0x158] sm:$0xff]
        %v5497 = vld [vmem:[#allocation2 + $0x160] sm:$0xff]
        %v5498 = vld [vmem:[#allocation2 + $0x168] sm:$0xff]
        %v5499 = vld [vmem:[#allocation2 + $0x170] sm:$0xff]
        %v5500 = vld [vmem:[#allocation2 + $0x178] sm:$0xff]
        %v5501 = vld [vmem:[#allocation2 + $0x180] sm:$0xff]
        %v5502 = vld [vmem:[#allocation2 + $0x188] sm:$0xff]
        %v5503 = vld [vmem:[#allocation2 + $0x190] sm:$0x1]
        %v5504 = vld [vmem:[#allocation2 + $0x198] sm:$0x1]
        %v5555 = vrot.slane %v5455, 1
        %v5556 = vrot.slane %v5457, 1
        %v5557 = vsel %vm995, %v5555, %v5556
        %v5558 = vrot.slane %v5456, 1
        %v5559 = vrot.slane %v5458, 1
        %v5560 = vsel %vm995, %v5558, %v5559
        %v5561 = vrot.slane %v5459, 1
        %v5562 = vsel %vm995, %v5556, %v5561
        %v5563 = vrot.slane %v5460, 1
        %v5564 = vsel %vm995, %v5559, %v5563
        %v5565 = vrot.slane %v5461, 1
        %v5566 = vsel %vm995, %v5561, %v5565
        %v5567 = vrot.slane %v5462, 1
        %v5568 = vsel %vm995, %v5563, %v5567
        %v5569 = vrot.slane %v5463, 1
        %v5570 = vsel %vm995, %v5565, %v5569
        %v5571 = vrot.slane %v5464, 1
        %v5572 = vsel %vm995, %v5567, %v5571
        %v5573 = vrot.slane %v5465, 1
        %v5574 = vsel %vm995, %v5569, %v5573
        %v5575 = vrot.slane %v5466, 1
        %v5576 = vsel %vm995, %v5571, %v5575
        %v5577 = vrot.slane %v5467, 1
        %v5578 = vsel %vm995, %v5573, %v5577
        %v5579 = vrot.slane %v5468, 1
        %v5580 = vsel %vm995, %v5575, %v5579
        %v5581 = vrot.slane %v5469, 1
        %v5582 = vsel %vm995, %v5577, %v5581
        %v5583 = vrot.slane %v5470, 1
        %v5584 = vsel %vm995, %v5579, %v5583
        %v5585 = vrot.slane %v5471, 1
        %v5586 = vsel %vm995, %v5581, %v5585
        %v5587 = vrot.slane %v5472, 1
        %v5588 = vsel %vm995, %v5583, %v5587
        %v5589 = vrot.slane %v5473, 1
        %v5590 = vsel %vm995, %v5585, %v5589
        %v5591 = vrot.slane %v5474, 1
        %v5592 = vsel %vm995, %v5587, %v5591
        %v5593 = vrot.slane %v5475, 1
        %v5594 = vsel %vm995, %v5589, %v5593
        %v5595 = vrot.slane %v5476, 1
        %v5596 = vsel %vm995, %v5591, %v5595
        %v5597 = vrot.slane %v5477, 1
        %v5598 = vsel %vm995, %v5593, %v5597
        %v5599 = vrot.slane %v5478, 1
        %v5600 = vsel %vm995, %v5595, %v5599
        %v5601 = vrot.slane %v5479, 1
        %v5602 = vsel %vm995, %v5597, %v5601
        %v5603 = vrot.slane %v5480, 1
        %v5604 = vsel %vm995, %v5599, %v5603
        %v5605 = vrot.slane %v5481, 1
        %v5606 = vsel %vm995, %v5601, %v5605
        %v5607 = vrot.slane %v5482, 1
        %v5608 = vsel %vm995, %v5603, %v5607
        %v5609 = vrot.slane %v5483, 1
        %v5610 = vsel %vm995, %v5605, %v5609
        %v5611 = vrot.slane %v5484, 1
        %v5612 = vsel %vm995, %v5607, %v5611
        %v5613 = vrot.slane %v5485, 1
        %v5614 = vsel %vm995, %v5609, %v5613
        %v5615 = vrot.slane %v5486, 1
        %v5616 = vsel %vm995, %v5611, %v5615
        %v5617 = vrot.slane %v5487, 1
        %v5618 = vsel %vm995, %v5613, %v5617
        %v5619 = vrot.slane %v5488, 1
        %v5620 = vsel %vm995, %v5615, %v5619
        %v5621 = vrot.slane %v5489, 1
        %v5622 = vsel %vm995, %v5617, %v5621
        %v5623 = vrot.slane %v5490, 1
        %v5624 = vsel %vm995, %v5619, %v5623
        %v5625 = vrot.slane %v5491, 1
        %v5626 = vsel %vm995, %v5621, %v5625
        %v5627 = vrot.slane %v5492, 1
        %v5628 = vsel %vm995, %v5623, %v5627
        %v5629 = vrot.slane %v5493, 1
        %v5630 = vsel %vm995, %v5625, %v5629
        %v5631 = vrot.slane %v5494, 1
        %v5632 = vsel %vm995, %v5627, %v5631
        %v5633 = vrot.slane %v5495, 1
        %v5634 = vsel %vm995, %v5629, %v5633
        %v5635 = vrot.slane %v5496, 1
        %v5636 = vsel %vm995, %v5631, %v5635
        %v5637 = vrot.slane %v5497, 1
        %v5638 = vsel %vm995, %v5633, %v5637
        %v5639 = vrot.slane %v5498, 1
        %v5640 = vsel %vm995, %v5635, %v5639
        %v5641 = vrot.slane %v5499, 1
        %v5642 = vsel %vm995, %v5637, %v5641
        %v5643 = vrot.slane %v5500, 1
        %v5644 = vsel %vm995, %v5639, %v5643
        %v5645 = vrot.slane %v5501, 1
        %v5646 = vsel %vm995, %v5641, %v5645
        %v5647 = vrot.slane %v5502, 1
        %v5648 = vsel %vm995, %v5643, %v5647
        %v5649 = vrot.slane %v5503, 1
        %v5650 = vsel %vm995, %v5645, %v5649
        %v5651 = vrot.slane %v5504, 1
        %v5652 = vsel %vm995, %v5647, %v5651
        %v5701 = vmax.f32 %v5359, %v5557
        %v5702 = vmax.f32 %v5360, %v5560
        %v5703 = vmax.f32 %v5361, %v5562
        %v5704 = vmax.f32 %v5362, %v5564
        %v5705 = vmax.f32 %v5363, %v5566
        %v5706 = vmax.f32 %v5364, %v5568
        %v5707 = vmax.f32 %v5365, %v5570
        %v5708 = vmax.f32 %v5366, %v5572
        %v5709 = vmax.f32 %v5367, %v5574
        %v5710 = vmax.f32 %v5368, %v5576
        %v5711 = vmax.f32 %v5369, %v5578
        %v5712 = vmax.f32 %v5370, %v5580
        %v5713 = vmax.f32 %v5371, %v5582
        %v5714 = vmax.f32 %v5372, %v5584
        %v5715 = vmax.f32 %v5373, %v5586
        %v5716 = vmax.f32 %v5374, %v5588
        %v5717 = vmax.f32 %v5375, %v5590
        %v5718 = vmax.f32 %v5376, %v5592
        %v5719 = vmax.f32 %v5377, %v5594
        %v5720 = vmax.f32 %v5378, %v5596
        %v5721 = vmax.f32 %v5379, %v5598
        %v5722 = vmax.f32 %v5380, %v5600
        %v5723 = vmax.f32 %v5381, %v5602
        %v5724 = vmax.f32 %v5382, %v5604
        %v5725 = vmax.f32 %v5383, %v5606
        %v5726 = vmax.f32 %v5384, %v5608
        %v5727 = vmax.f32 %v5385, %v5610
        %v5728 = vmax.f32 %v5386, %v5612
        %v5729 = vmax.f32 %v5387, %v5614
        %v5730 = vmax.f32 %v5388, %v5616
        %v5731 = vmax.f32 %v5389, %v5618
        %v5732 = vmax.f32 %v5390, %v5620
        %v5733 = vmax.f32 %v5391, %v5622
        %v5734 = vmax.f32 %v5392, %v5624
        %v5735 = vmax.f32 %v5393, %v5626
        %v5736 = vmax.f32 %v5394, %v5628
        %v5737 = vmax.f32 %v5395, %v5630
        %v5738 = vmax.f32 %v5396, %v5632
        %v5739 = vmax.f32 %v5397, %v5634
        %v5740 = vmax.f32 %v5398, %v5636
        %v5741 = vmax.f32 %v5399, %v5638
        %v5742 = vmax.f32 %v5400, %v5640
        %v5743 = vmax.f32 %v5401, %v5642
        %v5744 = vmax.f32 %v5402, %v5644
        %v5745 = vmax.f32 %v5403, %v5646
        %v5746 = vmax.f32 %v5404, %v5648
        %v5747 = vmax.f32 %v5405, %v5650
        %v5748 = vmax.f32 %v5406, %v5652
        %v5749 = vld [vmem:[#allocation2 + $0x10] sm:$0xfc]
        %v5750 = vld [vmem:[#allocation2 + $0x18] sm:$0xfc]
        %v5751 = vld [vmem:[#allocation2 + $0x190] sm:$0x3]
        %v5752 = vld [vmem:[#allocation2 + $0x198] sm:$0x3]
        %v5757 = vrot.slane %v5749, 2
        %v5758 = vrot.slane %v5457, 2
        %v5759 = vsel %vm1198, %v5757, %v5758
        %v5760 = vrot.slane %v5750, 2
        %v5761 = vrot.slane %v5458, 2
        %v5762 = vsel %vm1198, %v5760, %v5761
        %v5763 = vrot.slane %v5459, 2
        %v5764 = vsel %vm1198, %v5758, %v5763
        %v5765 = vrot.slane %v5460, 2
        %v5766 = vsel %vm1198, %v5761, %v5765
        %v5767 = vrot.slane %v5461, 2
        %v5768 = vsel %vm1198, %v5763, %v5767
        %v5769 = vrot.slane %v5462, 2
        %v5770 = vsel %vm1198, %v5765, %v5769
        %v5771 = vrot.slane %v5463, 2
        %v5772 = vsel %vm1198, %v5767, %v5771
        %v5773 = vrot.slane %v5464, 2
        %v5774 = vsel %vm1198, %v5769, %v5773
        %v5775 = vrot.slane %v5465, 2
        %v5776 = vsel %vm1198, %v5771, %v5775
        %v5777 = vrot.slane %v5466, 2
        %v5778 = vsel %vm1198, %v5773, %v5777
        %v5779 = vrot.slane %v5467, 2
        %v5780 = vsel %vm1198, %v5775, %v5779
        %v5781 = vrot.slane %v5468, 2
        %v5782 = vsel %vm1198, %v5777, %v5781
        %v5783 = vrot.slane %v5469, 2
        %v5784 = vsel %vm1198, %v5779, %v5783
        %v5785 = vrot.slane %v5470, 2
        %v5786 = vsel %vm1198, %v5781, %v5785
        %v5787 = vrot.slane %v5471, 2
        %v5788 = vsel %vm1198, %v5783, %v5787
        %v5789 = vrot.slane %v5472, 2
        %v5790 = vsel %vm1198, %v5785, %v5789
        %v5791 = vrot.slane %v5473, 2
        %v5792 = vsel %vm1198, %v5787, %v5791
        %v5793 = vrot.slane %v5474, 2
        %v5794 = vsel %vm1198, %v5789, %v5793
        %v5795 = vrot.slane %v5475, 2
        %v5796 = vsel %vm1198, %v5791, %v5795
        %v5797 = vrot.slane %v5476, 2
        %v5798 = vsel %vm1198, %v5793, %v5797
        %v5799 = vrot.slane %v5477, 2
        %v5800 = vsel %vm1198, %v5795, %v5799
        %v5801 = vrot.slane %v5478, 2
        %v5802 = vsel %vm1198, %v5797, %v5801
        %v5803 = vrot.slane %v5479, 2
        %v5804 = vsel %vm1198, %v5799, %v5803
        %v5805 = vrot.slane %v5480, 2
        %v5806 = vsel %vm1198, %v5801, %v5805
        %v5807 = vrot.slane %v5481, 2
        %v5808 = vsel %vm1198, %v5803, %v5807
        %v5809 = vrot.slane %v5482, 2
        %v5810 = vsel %vm1198, %v5805, %v5809
        %v5811 = vrot.slane %v5483, 2
        %v5812 = vsel %vm1198, %v5807, %v5811
        %v5813 = vrot.slane %v5484, 2
        %v5814 = vsel %vm1198, %v5809, %v5813
        %v5815 = vrot.slane %v5485, 2
        %v5816 = vsel %vm1198, %v5811, %v5815
        %v5817 = vrot.slane %v5486, 2
        %v5818 = vsel %vm1198, %v5813, %v5817
        %v5819 = vrot.slane %v5487, 2
        %v5820 = vsel %vm1198, %v5815, %v5819
        %v5821 = vrot.slane %v5488, 2
        %v5822 = vsel %vm1198, %v5817, %v5821
        %v5823 = vrot.slane %v5489, 2
        %v5824 = vsel %vm1198, %v5819, %v5823
        %v5825 = vrot.slane %v5490, 2
        %v5826 = vsel %vm1198, %v5821, %v5825
        %v5827 = vrot.slane %v5491, 2
        %v5828 = vsel %vm1198, %v5823, %v5827
        %v5829 = vrot.slane %v5492, 2
        %v5830 = vsel %vm1198, %v5825, %v5829
        %v5831 = vrot.slane %v5493, 2
        %v5832 = vsel %vm1198, %v5827, %v5831
        %v5833 = vrot.slane %v5494, 2
        %v5834 = vsel %vm1198, %v5829, %v5833
        %v5835 = vrot.slane %v5495, 2
        %v5836 = vsel %vm1198, %v5831, %v5835
        %v5837 = vrot.slane %v5496, 2
        %v5838 = vsel %vm1198, %v5833, %v5837
        %v5839 = vrot.slane %v5497, 2
        %v5840 = vsel %vm1198, %v5835, %v5839
        %v5841 = vrot.slane %v5498, 2
        %v5842 = vsel %vm1198, %v5837, %v5841
        %v5843 = vrot.slane %v5499, 2
        %v5844 = vsel %vm1198, %v5839, %v5843
        %v5845 = vrot.slane %v5500, 2
        %v5846 = vsel %vm1198, %v5841, %v5845
        %v5847 = vrot.slane %v5501, 2
        %v5848 = vsel %vm1198, %v5843, %v5847
        %v5849 = vrot.slane %v5502, 2
        %v5850 = vsel %vm1198, %v5845, %v5849
        %v5851 = vrot.slane %v5751, 2
        %v5852 = vsel %vm1198, %v5847, %v5851
        %v5853 = vrot.slane %v5752, 2
        %v5854 = vsel %vm1198, %v5849, %v5853
        %v5903 = vmax.f32 %v5701, %v5759
        %v5904 = vmax.f32 %v5702, %v5762
        %v5905 = vmax.f32 %v5703, %v5764
        %v5906 = vmax.f32 %v5704, %v5766
        %v5907 = vmax.f32 %v5705, %v5768
        %v5908 = vmax.f32 %v5706, %v5770
        %v5909 = vmax.f32 %v5707, %v5772
        %v5910 = vmax.f32 %v5708, %v5774
        %v5911 = vmax.f32 %v5709, %v5776
        %v5912 = vmax.f32 %v5710, %v5778
        %v5913 = vmax.f32 %v5711, %v5780
        %v5914 = vmax.f32 %v5712, %v5782
        %v5915 = vmax.f32 %v5713, %v5784
        %v5916 = vmax.f32 %v5714, %v5786
        %v5917 = vmax.f32 %v5715, %v5788
        %v5918 = vmax.f32 %v5716, %v5790
        %v5919 = vmax.f32 %v5717, %v5792
        %v5920 = vmax.f32 %v5718, %v5794
        %v5921 = vmax.f32 %v5719, %v5796
        %v5922 = vmax.f32 %v5720, %v5798
        %v5923 = vmax.f32 %v5721, %v5800
        %v5924 = vmax.f32 %v5722, %v5802
        %v5925 = vmax.f32 %v5723, %v5804
        %v5926 = vmax.f32 %v5724, %v5806
        %v5927 = vmax.f32 %v5725, %v5808
        %v5928 = vmax.f32 %v5726, %v5810
        %v5929 = vmax.f32 %v5727, %v5812
        %v5930 = vmax.f32 %v5728, %v5814
        %v5931 = vmax.f32 %v5729, %v5816
        %v5932 = vmax.f32 %v5730, %v5818
        %v5933 = vmax.f32 %v5731, %v5820
        %v5934 = vmax.f32 %v5732, %v5822
        %v5935 = vmax.f32 %v5733, %v5824
        %v5936 = vmax.f32 %v5734, %v5826
        %v5937 = vmax.f32 %v5735, %v5828
        %v5938 = vmax.f32 %v5736, %v5830
        %v5939 = vmax.f32 %v5737, %v5832
        %v5940 = vmax.f32 %v5738, %v5834
        %v5941 = vmax.f32 %v5739, %v5836
        %v5942 = vmax.f32 %v5740, %v5838
        %v5943 = vmax.f32 %v5741, %v5840
        %v5944 = vmax.f32 %v5742, %v5842
        %v5945 = vmax.f32 %v5743, %v5844
        %v5946 = vmax.f32 %v5744, %v5846
        %v5947 = vmax.f32 %v5745, %v5848
        %v5948 = vmax.f32 %v5746, %v5850
        %v5949 = vmax.f32 %v5747, %v5852
        %v5950 = vmax.f32 %v5748, %v5854
        %v5951 = vmul.f32 %v5903, %v5903
        %v5952 = vmul.f32 %v5904, %v5904
        %v5953 = vmul.f32 %v5905, %v5905
        %v5954 = vmul.f32 %v5906, %v5906
        %v5955 = vmul.f32 %v5907, %v5907
        %v5956 = vmul.f32 %v5908, %v5908
        %v5957 = vmul.f32 %v5909, %v5909
        %v5958 = vmul.f32 %v5910, %v5910
        %v5959 = vmul.f32 %v5911, %v5911
        %v5960 = vmul.f32 %v5912, %v5912
        %v5961 = vmul.f32 %v5913, %v5913
        %v5962 = vmul.f32 %v5914, %v5914
        %v5963 = vmul.f32 %v5915, %v5915
        %v5964 = vmul.f32 %v5916, %v5916
        %v5965 = vmul.f32 %v5917, %v5917
        %v5966 = vmul.f32 %v5918, %v5918
        %v5967 = vmul.f32 %v5919, %v5919
        %v5968 = vmul.f32 %v5920, %v5920
        %v5969 = vmul.f32 %v5921, %v5921
        %v5970 = vmul.f32 %v5922, %v5922
        %v5971 = vmul.f32 %v5923, %v5923
        %v5972 = vmul.f32 %v5924, %v5924
        %v5973 = vmul.f32 %v5925, %v5925
        %v5974 = vmul.f32 %v5926, %v5926
        %v5975 = vmul.f32 %v5927, %v5927
        %v5976 = vmul.f32 %v5928, %v5928
        %v5977 = vmul.f32 %v5929, %v5929
        %v5978 = vmul.f32 %v5930, %v5930
        %v5979 = vmul.f32 %v5931, %v5931
        %v5980 = vmul.f32 %v5932, %v5932
        %v5981 = vmul.f32 %v5933, %v5933
        %v5982 = vmul.f32 %v5934, %v5934
        %v5983 = vmul.f32 %v5935, %v5935
        %v5984 = vmul.f32 %v5936, %v5936
        %v5985 = vmul.f32 %v5937, %v5937
        %v5986 = vmul.f32 %v5938, %v5938
        %v5987 = vmul.f32 %v5939, %v5939
        %v5988 = vmul.f32 %v5940, %v5940
        %v5989 = vmul.f32 %v5941, %v5941
        %v5990 = vmul.f32 %v5942, %v5942
        %v5991 = vmul.f32 %v5943, %v5943
        %v5992 = vmul.f32 %v5944, %v5944
        %v5993 = vmul.f32 %v5945, %v5945
        %v5994 = vmul.f32 %v5946, %v5946
        %v5995 = vmul.f32 %v5947, %v5947
        %v5996 = vmul.f32 %v5948, %v5948
        %v5997 = vmul.f32 %v5949, %v5949
        %v5998 = vmul.f32 %v5950, %v5950
        %v5999 = vld [vmem:[%s10] sm:$0xff]
        %v6000 = vld [vmem:[%s10 + $0x8] sm:$0xff]
        %v6001 = vld [vmem:[%s10 + $0x10] sm:$0xff]
        %v6002 = vld [vmem:[%s10 + $0x18] sm:$0xff]
        %v6003 = vld [vmem:[%s10 + $0x20] sm:$0xff]
        %v6004 = vld [vmem:[%s10 + $0x28] sm:$0xff]
        %v6005 = vld [vmem:[%s10 + $0x30] sm:$0xff]
        %v6006 = vld [vmem:[%s10 + $0x38] sm:$0xff]
        %v6007 = vld [vmem:[%s10 + $0x40] sm:$0xff]
        %v6008 = vld [vmem:[%s10 + $0x48] sm:$0xff]
        %v6009 = vld [vmem:[%s10 + $0x50] sm:$0xff]
        %v6010 = vld [vmem:[%s10 + $0x58] sm:$0xff]
        %v6011 = vld [vmem:[%s10 + $0x60] sm:$0xff]
        %v6012 = vld [vmem:[%s10 + $0x68] sm:$0xff]
        %v6013 = vld [vmem:[%s10 + $0x70] sm:$0xff]
        %v6014 = vld [vmem:[%s10 + $0x78] sm:$0xff]
        %v6015 = vld [vmem:[%s10 + $0x80] sm:$0xff]
        %v6016 = vld [vmem:[%s10 + $0x88] sm:$0xff]
        %v6017 = vld [vmem:[%s10 + $0x90] sm:$0xff]
        %v6018 = vld [vmem:[%s10 + $0x98] sm:$0xff]
        %v6020 = vsel %vm464, %v5952, 0
        %v6023 = vsel %vm464, %v5954, 0
        %v6026 = vsel %vm464, %v5956, 0
        %v6029 = vsel %vm464, %v5958, 0
        %v6032 = vsel %vm464, %v5960, 0
        %v6035 = vsel %vm464, %v5962, 0
        %v6038 = vsel %vm464, %v5964, 0
        %v6041 = vsel %vm464, %v5966, 0
        %v6044 = vsel %vm464, %v5968, 0
        %v6047 = vsel %vm464, %v5970, 0
        %v6050 = vsel %vm464, %v5972, 0
        %v6053 = vsel %vm464, %v5974, 0
        %v6056 = vsel %vm464, %v5976, 0
        %v6059 = vsel %vm464, %v5978, 0
        %v6062 = vsel %vm464, %v5980, 0
        %v6065 = vsel %vm464, %v5982, 0
        %v6068 = vsel %vm464, %v5984, 0
        %v6071 = vsel %vm464, %v5986, 0
        %v6074 = vsel %vm464, %v5988, 0
        %v6077 = vsel %vm464, %v5990, 0
        %v6080 = vsel %vm464, %v5992, 0
        %v6083 = vsel %vm464, %v5994, 0
        %v6086 = vsel %vm464, %v5996, 0
        %v6089 = vsel %vm464, %v5998, 0
        %6091 = vmatprep.subr.mxu0 0.0
        %6092 = vmatpush1.msra.mxu0 %v5999
        %6093 = vmatprep.subr.mxu0 0.0
        %6094 = vmatpush1.msra.mxu0 %v6000
        %6095 = vmatprep.subr.mxu0 0.0
        %6096 = vmatpush1.msra.mxu0 %v6001
        %6097 = vmatprep.subr.mxu0 0.0
        %6098 = vmatpush1.msra.mxu0 %v6002
        %6099 = vmatprep.subr.mxu0 0.0
        %6100 = vmatpush1.msra.mxu0 %v6003
        %6101 = vmatprep.subr.mxu0 0.0
        %6102 = vmatpush1.msra.mxu0 %v6004
        %6103 = vmatprep.subr.mxu0 0.0
        %6104 = vmatpush1.msra.mxu0 %v6005
        %6105 = vmatprep.subr.mxu0 0.0
        %6106 = vmatpush1.msra.mxu0 %v6006
        %6107 = vmatprep.subr.mxu0 0.0
        %6108 = vmatpush1.msra.mxu0 %v6007
        %6109 = vmatprep.subr.mxu0 0.0
        %6110 = vmatpush1.msra.mxu0 %v6008
        %6111 = vmatprep.subr.mxu0 0.0
        %6112 = vmatpush1.msra.mxu0 %v6009
        %6113 = vmatprep.subr.mxu0 0.0
        %6114 = vmatpush1.msra.mxu0 %v6010
        %6115 = vmatprep.subr.mxu0 0.0
        %6116 = vmatpush1.msra.mxu0 %v6011
        %6117 = vmatprep.subr.mxu0 0.0
        %6118 = vmatpush1.msra.mxu0 %v6012
        %6119 = vmatprep.subr.mxu0 0.0
        %6120 = vmatpush1.msra.mxu0 %v6013
        %6121 = vmatprep.subr.mxu0 0.0
        %6122 = vmatpush1.msra.mxu0 %v6014
        %6123 = vmatprep.subr.mxu0 0.0
        %6124 = vmatpush1.msra.mxu0 %v6015
        %6125 = vmatprep.subr.mxu0 0.0
        %6126 = vmatpush1.msra.mxu0 %v6016
        %6127 = vmatprep.subr.mxu0 0.0
        %6128 = vmatpush1.msra.mxu0 %v6017
        %6129 = vmatprep.subr.mxu0 0.0
        %6130 = vmatpush1.msra.mxu0 %v6018
        %6131 = vmatprep.subr.mxu0 0.0
        %6132 = vmatpush1.msra.mxu0 0.0
        %6133 = vmatprep.subr.mxu0 0.0
        %6134 = vmatpush1.msra.mxu0 0.0
        %6135 = vmatprep.subr.mxu0 0.0
        %6136 = vmatpush1.msra.mxu0 0.0
        %6137 = vmatprep.subr.mxu0 0.0
        %6138 = vmatpush1.msra.mxu0 0.0
        %6139 = vmatprep.subr.mxu0 0.0
        %6140 = vmatpush1.msra.mxu0 0.0
        %6141 = vmatprep.subr.mxu0 0.0
        %6142 = vmatpush1.msra.mxu0 0.0
        %6143 = vmatprep.subr.mxu0 0.0
        %6144 = vmatpush1.msra.mxu0 0.0
        %6145 = vmatprep.subr.mxu0 0.0
        %6146 = vmatpush1.msra.mxu0 0.0
        %6147 = vmatprep.subr.mxu0 0.0
        %6148 = vmatpush1.msra.mxu0 0.0
        %6149 = vmatprep.subr.mxu0 0.0
        %6150 = vmatpush1.msra.mxu0 0.0
        %6151 = vmatprep.subr.mxu0 0.0
        %6152 = vmatpush1.msra.mxu0 0.0
        %6153 = vmatprep.subr.mxu0 0.0
        %6154 = vmatpush1.msra.mxu0 0.0
        %6155 = vmatprep.mubr.f32.mxu0 %v6020
        %6156 = vmatmul.mubr.f32.gmra.mrb[0].mxu0 %v5951
        %v6157 = vpop.f32.mrb[0].mxu0
        %v6158 = vadd.f32 0.0, %v6157
        %v6159 = vpop.f32.mrb[0].mxu0
        %6160 = vmatprep.mubr.f32.mxu0 %v6023
        %6161 = vmatmul.mubr.f32.gmra.mrb[0].mxu0 %v5953
        %v6162 = vpop.f32.mrb[0].mxu0
        %v6163 = vadd.f32 0.0, %v6162
        %v6164 = vpop.f32.mrb[0].mxu0
        %6165 = vmatprep.mubr.f32.mxu0 %v6026
        %6166 = vmatmul.mubr.f32.gmra.mrb[0].mxu0 %v5955
        %v6167 = vpop.f32.mrb[0].mxu0
        %v6168 = vadd.f32 0.0, %v6167
        %v6169 = vpop.f32.mrb[0].mxu0
        %6170 = vmatprep.mubr.f32.mxu0 %v6029
        %6171 = vmatmul.mubr.f32.gmra.mrb[0].mxu0 %v5957
        %v6172 = vpop.f32.mrb[0].mxu0
        %v6173 = vadd.f32 0.0, %v6172
        %v6174 = vpop.f32.mrb[0].mxu0
        %6175 = vmatprep.mubr.f32.mxu0 %v6032
        %6176 = vmatmul.mubr.f32.gmra.mrb[0].mxu0 %v5959
        %v6177 = vpop.f32.mrb[0].mxu0
        %v6178 = vadd.f32 0.0, %v6177
        %v6179 = vpop.f32.mrb[0].mxu0
        %6180 = vmatprep.mubr.f32.mxu0 %v6035
        %6181 = vmatmul.mubr.f32.gmra.mrb[0].mxu0 %v5961
        %v6182 = vpop.f32.mrb[0].mxu0
        %v6183 = vadd.f32 0.0, %v6182
        %v6184 = vpop.f32.mrb[0].mxu0
        %6185 = vmatprep.mubr.f32.mxu0 %v6038
        %6186 = vmatmul.mubr.f32.gmra.mrb[0].mxu0 %v5963
        %v6187 = vpop.f32.mrb[0].mxu0
        %v6188 = vadd.f32 0.0, %v6187
        %v6189 = vpop.f32.mrb[0].mxu0
        %6190 = vmatprep.mubr.f32.mxu0 %v6041
        %6191 = vmatmul.mubr.f32.gmra.mrb[0].mxu0 %v5965
        %v6192 = vpop.f32.mrb[0].mxu0
        %v6193 = vadd.f32 0.0, %v6192
        %v6194 = vpop.f32.mrb[0].mxu0
        %6195 = vmatprep.mubr.f32.mxu0 %v6044
        %6196 = vmatmul.mubr.f32.gmra.mrb[0].mxu0 %v5967
        %v6197 = vpop.f32.mrb[0].mxu0
        %v6198 = vadd.f32 0.0, %v6197
        %v6199 = vpop.f32.mrb[0].mxu0
        %6200 = vmatprep.mubr.f32.mxu0 %v6047
        %6201 = vmatmul.mubr.f32.gmra.mrb[0].mxu0 %v5969
        %v6202 = vpop.f32.mrb[0].mxu0
        %v6203 = vadd.f32 0.0, %v6202
        %v6204 = vpop.f32.mrb[0].mxu0
        %6205 = vmatprep.mubr.f32.mxu0 %v6050
        %6206 = vmatmul.mubr.f32.gmra.mrb[0].mxu0 %v5971
        %v6207 = vpop.f32.mrb[0].mxu0
        %v6208 = vadd.f32 0.0, %v6207
        %v6209 = vpop.f32.mrb[0].mxu0
        %6210 = vmatprep.mubr.f32.mxu0 %v6053
        %6211 = vmatmul.mubr.f32.gmra.mrb[0].mxu0 %v5973
        %v6212 = vpop.f32.mrb[0].mxu0
        %v6213 = vadd.f32 0.0, %v6212
        %v6214 = vpop.f32.mrb[0].mxu0
        %6215 = vmatprep.mubr.f32.mxu0 %v6056
        %6216 = vmatmul.mubr.f32.gmra.mrb[0].mxu0 %v5975
        %v6217 = vpop.f32.mrb[0].mxu0
        %v6218 = vadd.f32 0.0, %v6217
        %v6219 = vpop.f32.mrb[0].mxu0
        %6220 = vmatprep.mubr.f32.mxu0 %v6059
        %6221 = vmatmul.mubr.f32.gmra.mrb[0].mxu0 %v5977
        %v6222 = vpop.f32.mrb[0].mxu0
        %v6223 = vadd.f32 0.0, %v6222
        %v6224 = vpop.f32.mrb[0].mxu0
        %6225 = vmatprep.mubr.f32.mxu0 %v6062
        %6226 = vmatmul.mubr.f32.gmra.mrb[0].mxu0 %v5979
        %v6227 = vpop.f32.mrb[0].mxu0
        %v6228 = vadd.f32 0.0, %v6227
        %v6229 = vpop.f32.mrb[0].mxu0
        %6230 = vmatprep.mubr.f32.mxu0 %v6065
        %6231 = vmatmul.mubr.f32.gmra.mrb[0].mxu0 %v5981
        %v6232 = vpop.f32.mrb[0].mxu0
        %v6233 = vadd.f32 0.0, %v6232
        %v6234 = vpop.f32.mrb[0].mxu0
        %6235 = vmatprep.mubr.f32.mxu0 %v6068
        %6236 = vmatmul.mubr.f32.gmra.mrb[0].mxu0 %v5983
        %v6237 = vpop.f32.mrb[0].mxu0
        %v6238 = vadd.f32 0.0, %v6237
        %v6239 = vpop.f32.mrb[0].mxu0
        %6240 = vmatprep.mubr.f32.mxu0 %v6071
        %6241 = vmatmul.mubr.f32.gmra.mrb[0].mxu0 %v5985
        %v6242 = vpop.f32.mrb[0].mxu0
        %v6243 = vadd.f32 0.0, %v6242
        %v6244 = vpop.f32.mrb[0].mxu0
        %6245 = vmatprep.mubr.f32.mxu0 %v6074
        %6246 = vmatmul.mubr.f32.gmra.mrb[0].mxu0 %v5987
        %v6247 = vpop.f32.mrb[0].mxu0
        %v6248 = vadd.f32 0.0, %v6247
        %v6249 = vpop.f32.mrb[0].mxu0
        %6250 = vmatprep.mubr.f32.mxu0 %v6077
        %6251 = vmatmul.mubr.f32.gmra.mrb[0].mxu0 %v5989
        %v6252 = vpop.f32.mrb[0].mxu0
        %v6253 = vadd.f32 0.0, %v6252
        %v6254 = vpop.f32.mrb[0].mxu0
        %6255 = vmatprep.mubr.f32.mxu0 %v6080
        %6256 = vmatmul.mubr.f32.gmra.mrb[0].mxu0 %v5991
        %v6257 = vpop.f32.mrb[0].mxu0
        %v6258 = vadd.f32 0.0, %v6257
        %v6259 = vpop.f32.mrb[0].mxu0
        %6260 = vmatprep.mubr.f32.mxu0 %v6083
        %6261 = vmatmul.mubr.f32.gmra.mrb[0].mxu0 %v5993
        %v6262 = vpop.f32.mrb[0].mxu0
        %v6263 = vadd.f32 0.0, %v6262
        %v6264 = vpop.f32.mrb[0].mxu0
        %6265 = vmatprep.mubr.f32.mxu0 %v6086
        %6266 = vmatmul.mubr.f32.gmra.mrb[0].mxu0 %v5995
        %v6267 = vpop.f32.mrb[0].mxu0
        %v6268 = vadd.f32 0.0, %v6267
        %v6269 = vpop.f32.mrb[0].mxu0
        %6270 = vmatprep.mubr.f32.mxu0 %v6089
        %6271 = vmatmul.mubr.f32.gmra.mrb[0].mxu0 %v5997
        %v6272 = vpop.f32.mrb[0].mxu0
        %v6273 = vadd.f32 0.0, %v6272
        %v6274 = vpop.f32.mrb[0].mxu0
        %6275 = vdwg.mxu0
        %v6276 = vrsqrt.pop %v6158
        %v6277 = vmul.f32 %v6158, %v6276
        %vm6278 = vcmp.eq.f32.partialorder %v6158, inf
        %v6279 = vsel %vm6278, %v6158, %v6277
        %vm6280 = vcmp.eq.f32.partialorder %v6158, 0.0
        %v6281 = vand.u32 %v6158, 2147483648
        %v6282 = vsel %vm6280, %v6281, %v6279
        %v6283 = vrsqrt.pop %v6163
        %v6284 = vmul.f32 %v6163, %v6283
        %vm6285 = vcmp.eq.f32.partialorder %v6163, inf
        %v6286 = vsel %vm6285, %v6163, %v6284
        %vm6287 = vcmp.eq.f32.partialorder %v6163, 0.0
        %v6288 = vand.u32 %v6163, 2147483648
        %v6289 = vsel %vm6287, %v6288, %v6286
        %v6290 = vrsqrt.pop %v6168
        %v6291 = vmul.f32 %v6168, %v6290
        %vm6292 = vcmp.eq.f32.partialorder %v6168, inf
        %v6293 = vsel %vm6292, %v6168, %v6291
        %vm6294 = vcmp.eq.f32.partialorder %v6168, 0.0
        %v6295 = vand.u32 %v6168, 2147483648
        %v6296 = vsel %vm6294, %v6295, %v6293
        %v6297 = vrsqrt.pop %v6173
        %v6298 = vmul.f32 %v6173, %v6297
        %vm6299 = vcmp.eq.f32.partialorder %v6173, inf
        %v6300 = vsel %vm6299, %v6173, %v6298
        %vm6301 = vcmp.eq.f32.partialorder %v6173, 0.0
        %v6302 = vand.u32 %v6173, 2147483648
        %v6303 = vsel %vm6301, %v6302, %v6300
        %v6304 = vrsqrt.pop %v6178
        %v6305 = vmul.f32 %v6178, %v6304
        %vm6306 = vcmp.eq.f32.partialorder %v6178, inf
        %v6307 = vsel %vm6306, %v6178, %v6305
        %vm6308 = vcmp.eq.f32.partialorder %v6178, 0.0
        %v6309 = vand.u32 %v6178, 2147483648
        %v6310 = vsel %vm6308, %v6309, %v6307
        %v6311 = vrsqrt.pop %v6183
        %v6312 = vmul.f32 %v6183, %v6311
        %vm6313 = vcmp.eq.f32.partialorder %v6183, inf
        %v6314 = vsel %vm6313, %v6183, %v6312
        %vm6315 = vcmp.eq.f32.partialorder %v6183, 0.0
        %v6316 = vand.u32 %v6183, 2147483648
        %v6317 = vsel %vm6315, %v6316, %v6314
        %v6318 = vrsqrt.pop %v6188
        %v6319 = vmul.f32 %v6188, %v6318
        %vm6320 = vcmp.eq.f32.partialorder %v6188, inf
        %v6321 = vsel %vm6320, %v6188, %v6319
        %vm6322 = vcmp.eq.f32.partialorder %v6188, 0.0
        %v6323 = vand.u32 %v6188, 2147483648
        %v6324 = vsel %vm6322, %v6323, %v6321
        %v6325 = vrsqrt.pop %v6193
        %v6326 = vmul.f32 %v6193, %v6325
        %vm6327 = vcmp.eq.f32.partialorder %v6193, inf
        %v6328 = vsel %vm6327, %v6193, %v6326
        %vm6329 = vcmp.eq.f32.partialorder %v6193, 0.0
        %v6330 = vand.u32 %v6193, 2147483648
        %v6331 = vsel %vm6329, %v6330, %v6328
        %v6332 = vrsqrt.pop %v6198
        %v6333 = vmul.f32 %v6198, %v6332
        %vm6334 = vcmp.eq.f32.partialorder %v6198, inf
        %v6335 = vsel %vm6334, %v6198, %v6333
        %vm6336 = vcmp.eq.f32.partialorder %v6198, 0.0
        %v6337 = vand.u32 %v6198, 2147483648
        %v6338 = vsel %vm6336, %v6337, %v6335
        %v6339 = vrsqrt.pop %v6203
        %v6340 = vmul.f32 %v6203, %v6339
        %vm6341 = vcmp.eq.f32.partialorder %v6203, inf
        %v6342 = vsel %vm6341, %v6203, %v6340
        %vm6343 = vcmp.eq.f32.partialorder %v6203, 0.0
        %v6344 = vand.u32 %v6203, 2147483648
        %v6345 = vsel %vm6343, %v6344, %v6342
        %v6346 = vrsqrt.pop %v6208
        %v6347 = vmul.f32 %v6208, %v6346
        %vm6348 = vcmp.eq.f32.partialorder %v6208, inf
        %v6349 = vsel %vm6348, %v6208, %v6347
        %vm6350 = vcmp.eq.f32.partialorder %v6208, 0.0
        %v6351 = vand.u32 %v6208, 2147483648
        %v6352 = vsel %vm6350, %v6351, %v6349
        %v6353 = vrsqrt.pop %v6213
        %v6354 = vmul.f32 %v6213, %v6353
        %vm6355 = vcmp.eq.f32.partialorder %v6213, inf
        %v6356 = vsel %vm6355, %v6213, %v6354
        %vm6357 = vcmp.eq.f32.partialorder %v6213, 0.0
        %v6358 = vand.u32 %v6213, 2147483648
        %v6359 = vsel %vm6357, %v6358, %v6356
        %v6360 = vrsqrt.pop %v6218
        %v6361 = vmul.f32 %v6218, %v6360
        %vm6362 = vcmp.eq.f32.partialorder %v6218, inf
        %v6363 = vsel %vm6362, %v6218, %v6361
        %vm6364 = vcmp.eq.f32.partialorder %v6218, 0.0
        %v6365 = vand.u32 %v6218, 2147483648
        %v6366 = vsel %vm6364, %v6365, %v6363
        %v6367 = vrsqrt.pop %v6223
        %v6368 = vmul.f32 %v6223, %v6367
        %vm6369 = vcmp.eq.f32.partialorder %v6223, inf
        %v6370 = vsel %vm6369, %v6223, %v6368
        %vm6371 = vcmp.eq.f32.partialorder %v6223, 0.0
        %v6372 = vand.u32 %v6223, 2147483648
        %v6373 = vsel %vm6371, %v6372, %v6370
        %v6374 = vrsqrt.pop %v6228
        %v6375 = vmul.f32 %v6228, %v6374
        %vm6376 = vcmp.eq.f32.partialorder %v6228, inf
        %v6377 = vsel %vm6376, %v6228, %v6375
        %vm6378 = vcmp.eq.f32.partialorder %v6228, 0.0
        %v6379 = vand.u32 %v6228, 2147483648
        %v6380 = vsel %vm6378, %v6379, %v6377
        %v6381 = vrsqrt.pop %v6233
        %v6382 = vmul.f32 %v6233, %v6381
        %vm6383 = vcmp.eq.f32.partialorder %v6233, inf
        %v6384 = vsel %vm6383, %v6233, %v6382
        %vm6385 = vcmp.eq.f32.partialorder %v6233, 0.0
        %v6386 = vand.u32 %v6233, 2147483648
        %v6387 = vsel %vm6385, %v6386, %v6384
        %v6388 = vrsqrt.pop %v6238
        %v6389 = vmul.f32 %v6238, %v6388
        %vm6390 = vcmp.eq.f32.partialorder %v6238, inf
        %v6391 = vsel %vm6390, %v6238, %v6389
        %vm6392 = vcmp.eq.f32.partialorder %v6238, 0.0
        %v6393 = vand.u32 %v6238, 2147483648
        %v6394 = vsel %vm6392, %v6393, %v6391
        %v6395 = vrsqrt.pop %v6243
        %v6396 = vmul.f32 %v6243, %v6395
        %vm6397 = vcmp.eq.f32.partialorder %v6243, inf
        %v6398 = vsel %vm6397, %v6243, %v6396
        %vm6399 = vcmp.eq.f32.partialorder %v6243, 0.0
        %v6400 = vand.u32 %v6243, 2147483648
        %v6401 = vsel %vm6399, %v6400, %v6398
        %v6402 = vrsqrt.pop %v6248
        %v6403 = vmul.f32 %v6248, %v6402
        %vm6404 = vcmp.eq.f32.partialorder %v6248, inf
        %v6405 = vsel %vm6404, %v6248, %v6403
        %vm6406 = vcmp.eq.f32.partialorder %v6248, 0.0
        %v6407 = vand.u32 %v6248, 2147483648
        %v6408 = vsel %vm6406, %v6407, %v6405
        %v6409 = vrsqrt.pop %v6253
        %v6410 = vmul.f32 %v6253, %v6409
        %vm6411 = vcmp.eq.f32.partialorder %v6253, inf
        %v6412 = vsel %vm6411, %v6253, %v6410
        %vm6413 = vcmp.eq.f32.partialorder %v6253, 0.0
        %v6414 = vand.u32 %v6253, 2147483648
        %v6415 = vsel %vm6413, %v6414, %v6412
        %v6416 = vrsqrt.pop %v6258
        %v6417 = vmul.f32 %v6258, %v6416
        %vm6418 = vcmp.eq.f32.partialorder %v6258, inf
        %v6419 = vsel %vm6418, %v6258, %v6417
        %vm6420 = vcmp.eq.f32.partialorder %v6258, 0.0
        %v6421 = vand.u32 %v6258, 2147483648
        %v6422 = vsel %vm6420, %v6421, %v6419
        %v6423 = vrsqrt.pop %v6263
        %v6424 = vmul.f32 %v6263, %v6423
        %vm6425 = vcmp.eq.f32.partialorder %v6263, inf
        %v6426 = vsel %vm6425, %v6263, %v6424
        %vm6427 = vcmp.eq.f32.partialorder %v6263, 0.0
        %v6428 = vand.u32 %v6263, 2147483648
        %v6429 = vsel %vm6427, %v6428, %v6426
        %v6430 = vrsqrt.pop %v6268
        %v6431 = vmul.f32 %v6268, %v6430
        %vm6432 = vcmp.eq.f32.partialorder %v6268, inf
        %v6433 = vsel %vm6432, %v6268, %v6431
        %vm6434 = vcmp.eq.f32.partialorder %v6268, 0.0
        %v6435 = vand.u32 %v6268, 2147483648
        %v6436 = vsel %vm6434, %v6435, %v6433
        %v6437 = vrsqrt.pop %v6273
        %v6438 = vmul.f32 %v6273, %v6437
        %vm6439 = vcmp.eq.f32.partialorder %v6273, inf
        %v6440 = vsel %vm6439, %v6273, %v6438
        %vm6441 = vcmp.eq.f32.partialorder %v6273, 0.0
        %v6442 = vand.u32 %v6273, 2147483648
        %v6443 = vsel %vm6441, %v6442, %v6440
        %v6444 = vmax.f32 %v6282, 1e-12
        %v6445 = vmax.f32 %v6289, 1e-12
        %v6446 = vmax.f32 %v6296, 1e-12
        %v6447 = vmax.f32 %v6303, 1e-12
        %v6448 = vmax.f32 %v6310, 1e-12
        %v6449 = vmax.f32 %v6317, 1e-12
        %v6450 = vmax.f32 %v6324, 1e-12
        %v6451 = vmax.f32 %v6331, 1e-12
        %v6452 = vmax.f32 %v6338, 1e-12
        %v6453 = vmax.f32 %v6345, 1e-12
        %v6454 = vmax.f32 %v6352, 1e-12
        %v6455 = vmax.f32 %v6359, 1e-12
        %v6456 = vmax.f32 %v6366, 1e-12
        %v6457 = vmax.f32 %v6373, 1e-12
        %v6458 = vmax.f32 %v6380, 1e-12
        %v6459 = vmax.f32 %v6387, 1e-12
        %v6460 = vmax.f32 %v6394, 1e-12
        %v6461 = vmax.f32 %v6401, 1e-12
        %v6462 = vmax.f32 %v6408, 1e-12
        %v6463 = vmax.f32 %v6415, 1e-12
        %v6464 = vmax.f32 %v6422, 1e-12
        %v6465 = vmax.f32 %v6429, 1e-12
        %v6466 = vmax.f32 %v6436, 1e-12
        %v6467 = vmax.f32 %v6443, 1e-12
        %v6468 = vrcp.pop %v6444
        %v6469 = vmul.f32 1.0, %v6468
        %v6470 = vrcp.pop %v6445
        %v6471 = vmul.f32 1.0, %v6470
        %v6472 = vrcp.pop %v6446
        %v6473 = vmul.f32 1.0, %v6472
        %v6474 = vrcp.pop %v6447
        %v6475 = vmul.f32 1.0, %v6474
        %v6476 = vrcp.pop %v6448
        %v6477 = vmul.f32 1.0, %v6476
        %v6478 = vrcp.pop %v6449
        %v6479 = vmul.f32 1.0, %v6478
        %v6480 = vrcp.pop %v6450
        %v6481 = vmul.f32 1.0, %v6480
        %v6482 = vrcp.pop %v6451
        %v6483 = vmul.f32 1.0, %v6482
        %v6484 = vrcp.pop %v6452
        %v6485 = vmul.f32 1.0, %v6484
        %v6486 = vrcp.pop %v6453
        %v6487 = vmul.f32 1.0, %v6486
        %v6488 = vrcp.pop %v6454
        %v6489 = vmul.f32 1.0, %v6488
        %v6490 = vrcp.pop %v6455
        %v6491 = vmul.f32 1.0, %v6490
        %v6492 = vrcp.pop %v6456
        %v6493 = vmul.f32 1.0, %v6492
        %v6494 = vrcp.pop %v6457
        %v6495 = vmul.f32 1.0, %v6494
        %v6496 = vrcp.pop %v6458
        %v6497 = vmul.f32 1.0, %v6496
        %v6498 = vrcp.pop %v6459
        %v6499 = vmul.f32 1.0, %v6498
        %v6500 = vrcp.pop %v6460
        %v6501 = vmul.f32 1.0, %v6500
        %v6502 = vrcp.pop %v6461
        %v6503 = vmul.f32 1.0, %v6502
        %v6504 = vrcp.pop %v6462
        %v6505 = vmul.f32 1.0, %v6504
        %v6506 = vrcp.pop %v6463
        %v6507 = vmul.f32 1.0, %v6506
        %v6508 = vrcp.pop %v6464
        %v6509 = vmul.f32 1.0, %v6508
        %v6510 = vrcp.pop %v6465
        %v6511 = vmul.f32 1.0, %v6510
        %v6512 = vrcp.pop %v6466
        %v6513 = vmul.f32 1.0, %v6512
        %v6514 = vrcp.pop %v6467
        %v6515 = vmul.f32 1.0, %v6514
        %v6516 = vld [vmem:[%s11] sm:$0xff]
        %v6518 = vcombine.high %v6516, %v6516
        %v6520 = vsel %vm2558, %v6469, 0
        %v6523 = vsel %vm2558, %v6471, 0
        %v6526 = vsel %vm2558, %v6473, 0
        %v6529 = vsel %vm2558, %v6475, 0
        %v6532 = vsel %vm2558, %v6477, 0
        %v6535 = vsel %vm2558, %v6479, 0
        %v6538 = vsel %vm2558, %v6481, 0
        %v6541 = vsel %vm2558, %v6483, 0
        %v6544 = vsel %vm2558, %v6485, 0
        %v6547 = vsel %vm2558, %v6487, 0
        %v6550 = vsel %vm2558, %v6489, 0
        %v6553 = vsel %vm2558, %v6491, 0
        %v6556 = vsel %vm2558, %v6493, 0
        %v6559 = vsel %vm2558, %v6495, 0
        %v6562 = vsel %vm2558, %v6497, 0
        %v6565 = vsel %vm2558, %v6499, 0
        %v6568 = vsel %vm2558, %v6501, 0
        %v6571 = vsel %vm2558, %v6503, 0
        %v6574 = vsel %vm2558, %v6505, 0
        %v6577 = vsel %vm2558, %v6507, 0
        %v6580 = vsel %vm2558, %v6509, 0
        %v6583 = vsel %vm2558, %v6511, 0
        %v6586 = vsel %vm2558, %v6513, 0
        %v6589 = vsel %vm2558, %v6515, 0
        %v6591 = vsel %vm583, %v6516, 0
        %v6593 = vsel %vm583, %v6518, 0
        %6595 = vmatprep.subr.mxu0 %v6593
        %6596 = vmatpush1.msra.mxu0 %v6591
        %6597 = vmatprep.subr.mxu0 0.0
        %6598 = vmatpush1.msra.mxu0 0.0
        %6599 = vmatprep.subr.mxu0 0.0
        %6600 = vmatpush1.msra.mxu0 0.0
        %6601 = vmatprep.subr.mxu0 0.0
        %6602 = vmatpush1.msra.mxu0 0.0
        %6603 = vmatprep.subr.mxu0 0.0
        %6604 = vmatpush1.msra.mxu0 0.0
        %6605 = vmatprep.subr.mxu0 0.0
        %6606 = vmatpush1.msra.mxu0 0.0
        %6607 = vmatprep.subr.mxu0 0.0
        %6608 = vmatpush1.msra.mxu0 0.0
        %6609 = vmatprep.subr.mxu0 0.0
        %6610 = vmatpush1.msra.mxu0 0.0
        %6611 = vmatprep.subr.mxu0 0.0
        %6612 = vmatpush1.msra.mxu0 0.0
        %6613 = vmatprep.subr.mxu0 0.0
        %6614 = vmatpush1.msra.mxu0 0.0
        %6615 = vmatprep.subr.mxu0 0.0
        %6616 = vmatpush1.msra.mxu0 0.0
        %6617 = vmatprep.subr.mxu0 0.0
        %6618 = vmatpush1.msra.mxu0 0.0
        %6619 = vmatprep.subr.mxu0 0.0
        %6620 = vmatpush1.msra.mxu0 0.0
        %6621 = vmatprep.subr.mxu0 0.0
        %6622 = vmatpush1.msra.mxu0 0.0
        %6623 = vmatprep.subr.mxu0 0.0
        %6624 = vmatpush1.msra.mxu0 0.0
        %6625 = vmatprep.subr.mxu0 0.0
        %6626 = vmatpush1.msra.mxu0 0.0
        %6627 = vmatprep.subr.mxu0 0.0
        %6628 = vmatpush1.msra.mxu0 0.0
        %6629 = vmatprep.subr.mxu0 0.0
        %6630 = vmatpush1.msra.mxu0 0.0
        %6631 = vmatprep.subr.mxu0 0.0
        %6632 = vmatpush1.msra.mxu0 0.0
        %6633 = vmatprep.subr.mxu0 0.0
        %6634 = vmatpush1.msra.mxu0 0.0
        %6635 = vmatprep.subr.mxu0 0.0
        %6636 = vmatpush1.msra.mxu0 0.0
        %6637 = vmatprep.subr.mxu0 0.0
        %6638 = vmatpush1.msra.mxu0 0.0
        %6639 = vmatprep.subr.mxu0 0.0
        %6640 = vmatpush1.msra.mxu0 0.0
        %6641 = vmatprep.subr.mxu0 0.0
        %6642 = vmatpush1.msra.mxu0 0.0
        %6643 = vmatprep.subr.mxu0 0.0
        %6644 = vmatpush1.msra.mxu0 0.0
        %6645 = vmatprep.subr.mxu0 0.0
        %6646 = vmatpush1.msra.mxu0 0.0
        %6647 = vmatprep.subr.mxu0 0.0
        %6648 = vmatpush1.msra.mxu0 0.0
        %6649 = vmatprep.subr.mxu0 0.0
        %6650 = vmatpush1.msra.mxu0 0.0
        %6651 = vmatprep.subr.mxu0 0.0
        %6652 = vmatpush1.msra.mxu0 0.0
        %6653 = vmatprep.subr.mxu0 0.0
        %6654 = vmatpush1.msra.mxu0 0.0
        %6655 = vmatprep.subr.mxu0 0.0
        %6656 = vmatpush1.msra.mxu0 0.0
        %6657 = vmatprep.subr.mxu0 0.0
        %6658 = vmatpush1.msra.mxu0 0.0
        %6659 = vmatprep.mubr.f32.mxu0 0.0
        %6660 = vmatmul.mubr.f32.gmra.mrb[0].mxu0 %v6520
        %v6661 = vpop.f32.mrb[0].mxu0
        %v6662 = vadd.f32 0.0, %v6661
        %v6663 = vpop.f32.mrb[0].mxu0
        %v6664 = vadd.f32 0.0, %v6663
        %6665 = vmatprep.mubr.f32.mxu0 0.0
        %6666 = vmatmul.mubr.f32.gmra.mrb[0].mxu0 %v6523
        %v6667 = vpop.f32.mrb[0].mxu0
        %v6668 = vadd.f32 0.0, %v6667
        %v6669 = vpop.f32.mrb[0].mxu0
        %v6670 = vadd.f32 0.0, %v6669
        %6671 = vmatprep.mubr.f32.mxu0 0.0
        %6672 = vmatmul.mubr.f32.gmra.mrb[0].mxu0 %v6526
        %v6673 = vpop.f32.mrb[0].mxu0
        %v6674 = vadd.f32 0.0, %v6673
        %v6675 = vpop.f32.mrb[0].mxu0
        %v6676 = vadd.f32 0.0, %v6675
        %6677 = vmatprep.mubr.f32.mxu0 0.0
        %6678 = vmatmul.mubr.f32.gmra.mrb[0].mxu0 %v6529
        %v6679 = vpop.f32.mrb[0].mxu0
        %v6680 = vadd.f32 0.0, %v6679
        %v6681 = vpop.f32.mrb[0].mxu0
        %v6682 = vadd.f32 0.0, %v6681
        %6683 = vmatprep.mubr.f32.mxu0 0.0
        %6684 = vmatmul.mubr.f32.gmra.mrb[0].mxu0 %v6532
        %v6685 = vpop.f32.mrb[0].mxu0
        %v6686 = vadd.f32 0.0, %v6685
        %v6687 = vpop.f32.mrb[0].mxu0
        %v6688 = vadd.f32 0.0, %v6687
        %6689 = vmatprep.mubr.f32.mxu0 0.0
        %6690 = vmatmul.mubr.f32.gmra.mrb[0].mxu0 %v6535
        %v6691 = vpop.f32.mrb[0].mxu0
        %v6692 = vadd.f32 0.0, %v6691
        %v6693 = vpop.f32.mrb[0].mxu0
        %v6694 = vadd.f32 0.0, %v6693
        %6695 = vmatprep.mubr.f32.mxu0 0.0
        %6696 = vmatmul.mubr.f32.gmra.mrb[0].mxu0 %v6538
        %v6697 = vpop.f32.mrb[0].mxu0
        %v6698 = vadd.f32 0.0, %v6697
        %v6699 = vpop.f32.mrb[0].mxu0
        %v6700 = vadd.f32 0.0, %v6699
        %6701 = vmatprep.mubr.f32.mxu0 0.0
        %6702 = vmatmul.mubr.f32.gmra.mrb[0].mxu0 %v6541
        %v6703 = vpop.f32.mrb[0].mxu0
        %v6704 = vadd.f32 0.0, %v6703
        %v6705 = vpop.f32.mrb[0].mxu0
        %v6706 = vadd.f32 0.0, %v6705
        %6707 = vmatprep.mubr.f32.mxu0 0.0
        %6708 = vmatmul.mubr.f32.gmra.mrb[0].mxu0 %v6544
        %v6709 = vpop.f32.mrb[0].mxu0
        %v6710 = vadd.f32 0.0, %v6709
        %v6711 = vpop.f32.mrb[0].mxu0
        %v6712 = vadd.f32 0.0, %v6711
        %6713 = vmatprep.mubr.f32.mxu0 0.0
        %6714 = vmatmul.mubr.f32.gmra.mrb[0].mxu0 %v6547
        %v6715 = vpop.f32.mrb[0].mxu0
        %v6716 = vadd.f32 0.0, %v6715
        %v6717 = vpop.f32.mrb[0].mxu0
        %v6718 = vadd.f32 0.0, %v6717
        %6719 = vmatprep.mubr.f32.mxu0 0.0
        %6720 = vmatmul.mubr.f32.gmra.mrb[0].mxu0 %v6550
        %v6721 = vpop.f32.mrb[0].mxu0
        %v6722 = vadd.f32 0.0, %v6721
        %v6723 = vpop.f32.mrb[0].mxu0
        %v6724 = vadd.f32 0.0, %v6723
        %6725 = vmatprep.mubr.f32.mxu0 0.0
        %6726 = vmatmul.mubr.f32.gmra.mrb[0].mxu0 %v6553
        %v6727 = vpop.f32.mrb[0].mxu0
        %v6728 = vadd.f32 0.0, %v6727
        %v6729 = vpop.f32.mrb[0].mxu0
        %v6730 = vadd.f32 0.0, %v6729
        %6731 = vmatprep.mubr.f32.mxu0 0.0
        %6732 = vmatmul.mubr.f32.gmra.mrb[0].mxu0 %v6556
        %v6733 = vpop.f32.mrb[0].mxu0
        %v6734 = vadd.f32 0.0, %v6733
        %v6735 = vpop.f32.mrb[0].mxu0
        %v6736 = vadd.f32 0.0, %v6735
        %6737 = vmatprep.mubr.f32.mxu0 0.0
        %6738 = vmatmul.mubr.f32.gmra.mrb[0].mxu0 %v6559
        %v6739 = vpop.f32.mrb[0].mxu0
        %v6740 = vadd.f32 0.0, %v6739
        %v6741 = vpop.f32.mrb[0].mxu0
        %v6742 = vadd.f32 0.0, %v6741
        %6743 = vmatprep.mubr.f32.mxu0 0.0
        %6744 = vmatmul.mubr.f32.gmra.mrb[0].mxu0 %v6562
        %v6745 = vpop.f32.mrb[0].mxu0
        %v6746 = vadd.f32 0.0, %v6745
        %v6747 = vpop.f32.mrb[0].mxu0
        %v6748 = vadd.f32 0.0, %v6747
        %6749 = vmatprep.mubr.f32.mxu0 0.0
        %6750 = vmatmul.mubr.f32.gmra.mrb[0].mxu0 %v6565
        %v6751 = vpop.f32.mrb[0].mxu0
        %v6752 = vadd.f32 0.0, %v6751
        %v6753 = vpop.f32.mrb[0].mxu0
        %v6754 = vadd.f32 0.0, %v6753
        %6755 = vmatprep.mubr.f32.mxu0 0.0
        %6756 = vmatmul.mubr.f32.gmra.mrb[0].mxu0 %v6568
        %v6757 = vpop.f32.mrb[0].mxu0
        %v6758 = vadd.f32 0.0, %v6757
        %v6759 = vpop.f32.mrb[0].mxu0
        %v6760 = vadd.f32 0.0, %v6759
        %6761 = vmatprep.mubr.f32.mxu0 0.0
        %6762 = vmatmul.mubr.f32.gmra.mrb[0].mxu0 %v6571
        %v6763 = vpop.f32.mrb[0].mxu0
        %v6764 = vadd.f32 0.0, %v6763
        %v6765 = vpop.f32.mrb[0].mxu0
        %v6766 = vadd.f32 0.0, %v6765
        %6767 = vmatprep.mubr.f32.mxu0 0.0
        %6768 = vmatmul.mubr.f32.gmra.mrb[0].mxu0 %v6574
        %v6769 = vpop.f32.mrb[0].mxu0
        %v6770 = vadd.f32 0.0, %v6769
        %v6771 = vpop.f32.mrb[0].mxu0
        %v6772 = vadd.f32 0.0, %v6771
        %6773 = vmatprep.mubr.f32.mxu0 0.0
        %6774 = vmatmul.mubr.f32.gmra.mrb[0].mxu0 %v6577
        %v6775 = vpop.f32.mrb[0].mxu0
        %v6776 = vadd.f32 0.0, %v6775
        %v6777 = vpop.f32.mrb[0].mxu0
        %v6778 = vadd.f32 0.0, %v6777
        %6779 = vmatprep.mubr.f32.mxu0 0.0
        %6780 = vmatmul.mubr.f32.gmra.mrb[0].mxu0 %v6580
        %v6781 = vpop.f32.mrb[0].mxu0
        %v6782 = vadd.f32 0.0, %v6781
        %v6783 = vpop.f32.mrb[0].mxu0
        %v6784 = vadd.f32 0.0, %v6783
        %6785 = vmatprep.mubr.f32.mxu0 0.0
        %6786 = vmatmul.mubr.f32.gmra.mrb[0].mxu0 %v6583
        %v6787 = vpop.f32.mrb[0].mxu0
        %v6788 = vadd.f32 0.0, %v6787
        %v6789 = vpop.f32.mrb[0].mxu0
        %v6790 = vadd.f32 0.0, %v6789
        %6791 = vmatprep.mubr.f32.mxu0 0.0
        %6792 = vmatmul.mubr.f32.gmra.mrb[0].mxu0 %v6586
        %v6793 = vpop.f32.mrb[0].mxu0
        %v6794 = vadd.f32 0.0, %v6793
        %v6795 = vpop.f32.mrb[0].mxu0
        %v6796 = vadd.f32 0.0, %v6795
        %6797 = vmatprep.mubr.f32.mxu0 0.0
        %6798 = vmatmul.mubr.f32.gmra.mrb[0].mxu0 %v6589
        %v6799 = vpop.f32.mrb[0].mxu0
        %v6800 = vadd.f32 0.0, %v6799
        %v6801 = vpop.f32.mrb[0].mxu0
        %v6802 = vadd.f32 0.0, %v6801
        %6803 = vdwg.mxu0
        %v6804 = vmul.f32 %v5903, %v6662
        %v6805 = vmul.f32 %v5904, %v6664
        %v6806 = vmul.f32 %v5905, %v6668
        %v6807 = vmul.f32 %v5906, %v6670
        %v6808 = vmul.f32 %v5907, %v6674
        %v6809 = vmul.f32 %v5908, %v6676
        %v6810 = vmul.f32 %v5909, %v6680
        %v6811 = vmul.f32 %v5910, %v6682
        %v6812 = vmul.f32 %v5911, %v6686
        %v6813 = vmul.f32 %v5912, %v6688
        %v6814 = vmul.f32 %v5913, %v6692
        %v6815 = vmul.f32 %v5914, %v6694
        %v6816 = vmul.f32 %v5915, %v6698
        %v6817 = vmul.f32 %v5916, %v6700
        %v6818 = vmul.f32 %v5917, %v6704
        %v6819 = vmul.f32 %v5918, %v6706
        %v6820 = vmul.f32 %v5919, %v6710
        %v6821 = vmul.f32 %v5920, %v6712
        %v6822 = vmul.f32 %v5921, %v6716
        %v6823 = vmul.f32 %v5922, %v6718
        %v6824 = vmul.f32 %v5923, %v6722
        %v6825 = vmul.f32 %v5924, %v6724
        %v6826 = vmul.f32 %v5925, %v6728
        %v6827 = vmul.f32 %v5926, %v6730
        %v6828 = vmul.f32 %v5927, %v6734
        %v6829 = vmul.f32 %v5928, %v6736
        %v6830 = vmul.f32 %v5929, %v6740
        %v6831 = vmul.f32 %v5930, %v6742
        %v6832 = vmul.f32 %v5931, %v6746
        %v6833 = vmul.f32 %v5932, %v6748
        %v6834 = vmul.f32 %v5933, %v6752
        %v6835 = vmul.f32 %v5934, %v6754
        %v6836 = vmul.f32 %v5935, %v6758
        %v6837 = vmul.f32 %v5936, %v6760
        %v6838 = vmul.f32 %v5937, %v6764
        %v6839 = vmul.f32 %v5938, %v6766
        %v6840 = vmul.f32 %v5939, %v6770
        %v6841 = vmul.f32 %v5940, %v6772
        %v6842 = vmul.f32 %v5941, %v6776
        %v6843 = vmul.f32 %v5942, %v6778
        %v6844 = vmul.f32 %v5943, %v6782
        %v6845 = vmul.f32 %v5944, %v6784
        %v6846 = vmul.f32 %v5945, %v6788
        %v6847 = vmul.f32 %v5946, %v6790
        %v6848 = vmul.f32 %v5947, %v6794
        %v6849 = vmul.f32 %v5948, %v6796
        %v6850 = vmul.f32 %v5949, %v6800
        %v6851 = vmul.f32 %v5950, %v6802
        %6852 = vst [vmem:[%s461] sm:$0xff] %v6804
        %6853 = vst.msk [vmem:[%s461 + $0x8] sm:$0xff] %vm464, %v6805
        %6854 = vst [vmem:[%s461 + $0x10] sm:$0xff] %v6806
        %6855 = vst.msk [vmem:[%s461 + $0x18] sm:$0xff] %vm464, %v6807
        %6856 = vst [vmem:[%s461 + $0x20] sm:$0xff] %v6808
        %6857 = vst.msk [vmem:[%s461 + $0x28] sm:$0xff] %vm464, %v6809
        %6858 = vst [vmem:[%s461 + $0x30] sm:$0xff] %v6810
        %6859 = vst.msk [vmem:[%s461 + $0x38] sm:$0xff] %vm464, %v6811
        %6860 = vst [vmem:[%s461 + $0x40] sm:$0xff] %v6812
        %6861 = vst.msk [vmem:[%s461 + $0x48] sm:$0xff] %vm464, %v6813
        %6862 = vst [vmem:[%s461 + $0x50] sm:$0xff] %v6814
        %6863 = vst.msk [vmem:[%s461 + $0x58] sm:$0xff] %vm464, %v6815
        %6864 = vst [vmem:[%s461 + $0x60] sm:$0xff] %v6816
        %6865 = vst.msk [vmem:[%s461 + $0x68] sm:$0xff] %vm464, %v6817
        %6866 = vst [vmem:[%s461 + $0x70] sm:$0xff] %v6818
        %6867 = vst.msk [vmem:[%s461 + $0x78] sm:$0xff] %vm464, %v6819
        %6868 = vst [vmem:[%s461 + $0x80] sm:$0xff] %v6820
        %6869 = vst.msk [vmem:[%s461 + $0x88] sm:$0xff] %vm464, %v6821
        %6870 = vst [vmem:[%s461 + $0x90] sm:$0xff] %v6822
        %6871 = vst.msk [vmem:[%s461 + $0x98] sm:$0xff] %vm464, %v6823
        %6872 = vst [vmem:[%s461 + $0xa0] sm:$0xff] %v6824
        %6873 = vst.msk [vmem:[%s461 + $0xa8] sm:$0xff] %vm464, %v6825
        %6874 = vst [vmem:[%s461 + $0xb0] sm:$0xff] %v6826
        %6875 = vst.msk [vmem:[%s461 + $0xb8] sm:$0xff] %vm464, %v6827
        %6876 = vst [vmem:[%s461 + $0xc0] sm:$0xff] %v6828
        %6877 = vst.msk [vmem:[%s461 + $0xc8] sm:$0xff] %vm464, %v6829
        %6878 = vst [vmem:[%s461 + $0xd0] sm:$0xff] %v6830
        %6879 = vst.msk [vmem:[%s461 + $0xd8] sm:$0xff] %vm464, %v6831
        %6880 = vst [vmem:[%s461 + $0xe0] sm:$0xff] %v6832
        %6881 = vst.msk [vmem:[%s461 + $0xe8] sm:$0xff] %vm464, %v6833
        %6882 = vst [vmem:[%s461 + $0xf0] sm:$0xff] %v6834
        %6883 = vst.msk [vmem:[%s461 + $0xf8] sm:$0xff] %vm464, %v6835
        %6884 = vst [vmem:[%s461 + $0x100] sm:$0xff] %v6836
        %6885 = vst.msk [vmem:[%s461 + $0x108] sm:$0xff] %vm464, %v6837
        %6886 = vst [vmem:[%s461 + $0x110] sm:$0xff] %v6838
        %6887 = vst.msk [vmem:[%s461 + $0x118] sm:$0xff] %vm464, %v6839
        %6888 = vst [vmem:[%s461 + $0x120] sm:$0xff] %v6840
        %6889 = vst.msk [vmem:[%s461 + $0x128] sm:$0xff] %vm464, %v6841
        %6890 = vst [vmem:[%s461 + $0x130] sm:$0xff] %v6842
        %6891 = vst.msk [vmem:[%s461 + $0x138] sm:$0xff] %vm464, %v6843
        %6892 = vst [vmem:[%s461 + $0x140] sm:$0xff] %v6844
        %6893 = vst.msk [vmem:[%s461 + $0x148] sm:$0xff] %vm464, %v6845
        %6894 = vst [vmem:[%s461 + $0x150] sm:$0xff] %v6846
        %6895 = vst.msk [vmem:[%s461 + $0x158] sm:$0xff] %vm464, %v6847
        %6896 = vst [vmem:[%s461 + $0x160] sm:$0xff] %v6848
        %6897 = vst.msk [vmem:[%s461 + $0x168] sm:$0xff] %vm464, %v6849
        %6898 = vst [vmem:[%s461 + $0x170] sm:$0xff] %v6850
        %6899 = vst.msk [vmem:[%s461 + $0x178] sm:$0xff] %vm464, %v6851
        %s6900 = smul.u32 24, %s25
        %p6901 = scmp.lt.s32.totalorder %s6900, 47
        %s6902 = scalar_select %p6901, %s6900, 47
        %s6903 = smul.addr %s6902, 2
        %s6904 = smul.addr %s6903, 8
        %s6905 = scalar_lea.vmem %s12, %s6904
        // Predicated region
        $region81: #{tpu_custom_call.1} parent=67 // pred_check
          %p6906 = pneg %p300
        $region82: #{tpu_custom_call.1} parent=67 // pred_check_branch
          %6908 = sbr.rel (%p6906) target = $region84
        $region83: #{tpu_custom_call.1} parent=67 // pred_region
          %s6909 = smul.u32 24, %s25
        $region84: #{tpu_custom_call.1} parent=67 // pred_fallthru
          _
      $region68: #{tpu_custom_call.1} parent=5 // pred_fallthru
        _
      %p6910 = scmp.le.s32.totalorder 2, %s20
      // Predicated region
      $region85: #{tpu_custom_call.1} parent=5 // pred_check
        %p6911 = pneg %p6910
      $region86: #{tpu_custom_call.1} parent=5 // pred_check_branch
        %6913 = sbr.rel (%p6911) target = $region88
      $region87: #{tpu_custom_call.1} parent=5 // pred_region
        %s6914 = ssub.s32 %s20, 2
        // Predicated region
        $region89: #{tpu_custom_call.1} parent=87 // pred_check
          %p6915 = pneg %p306
        $region90: #{tpu_custom_call.1} parent=87 // pred_check_branch
          %6917 = sbr.rel (%p6915) target = $region92
        $region91: #{tpu_custom_call.1} parent=87 // pred_region
          %s6918 = smul.u32 24, %s26
          %p6919 = scmp.lt.s32.totalorder %s6918, 47
          %s6920 = scalar_select %p6919, %s6918, 47
          %s6921 = smul.addr %s6920, 2
          %s6922 = smul.addr %s6921, 8
          %s6923 = scalar_lea.vmem %s12, %s6922
        $region92: #{tpu_custom_call.1} parent=87 // pred_fallthru
          _
      $region88: #{tpu_custom_call.1} parent=5 // pred_fallthru
        _
    $region6: #{tpu_custom_call.1} parent=1 // loop_footer
      %s24 = sadd.s32 1, %s20
    $region7: #{tpu_custom_call.1} parent=1 // loop_footer_branch
      %19 = sbr.rel target = $region3
    $region8: #{tpu_custom_call.1} parent=1 // loop_exit
      _
    %6924 = vsyncpa [#allocation4], 1
    %s6925 = scalar_lea.sflag [#allocation4], 1
    %6926 = vsyncpa %s6925, 1
    %6927 = vsyncpa [#allocation6], 1

</llo_original>
